<compile_context>
chip_gen: v6e
topology: v6e:2x2x1
jax: 0.10.0
libtpu: 0.0.40
codegen_flags: <defaults>
</compile_context>

<pallas_src>
import math
import functools

import jax
import jax.numpy as jnp
from jax.experimental import pallas as pl
from jax.experimental.pallas import tpu as pltpu

PAD_ID = 0
NEG_BIG = -1e30          # large-negative instead of -inf: same softmax result, no inf math
LN_EPS = 1e-5


# ----------------------------------------------------------------------------
# In-kernel helpers (pure jnp, traced inside the Pallas kernels)
# ----------------------------------------------------------------------------

def _ln_rows(x, g, b):
    # x: (R, E) f32; g, b: (1, E)
    mu = jnp.mean(x, axis=-1, keepdims=True)
    xc = x - mu
    var = jnp.mean(xc * xc, axis=-1, keepdims=True)
    return xc * jax.lax.rsqrt(var + LN_EPS) * g + b


def _attn_core(q, k, v, wo, bo, *, nhead, causal):
    # q: (Lq, E) f32, k/v: (Lk, E) f32, wo: (E, E), bo: (1, E)
    Lq, E = q.shape
    Lk = k.shape[0]
    Dh = E // nhead
    scale = 1.0 / math.sqrt(Dh)

    keep = None
    if causal:  # mask built ONCE per kernel (hoisted out of the per-head loop)
        row = jax.lax.broadcasted_iota(jnp.int32, (Lq, Lk), 0)
        col = jax.lax.broadcasted_iota(jnp.int32, (Lq, Lk), 1)
        keep = col <= row

    qb = q.astype(jnp.bfloat16)
    kb = k.astype(jnp.bfloat16)
    vb = v.astype(jnp.bfloat16)

    heads = []
    for h in range(nhead):          # static unrolled loop over heads (H small)
        lo, hi = h * Dh, (h + 1) * Dh
        s = jax.lax.dot_general(qb[:, lo:hi], kb[:, lo:hi],
                                (((1,), (1,)), ((), ())),
                                preferred_element_type=jnp.float32) * scale
        if causal:
            s = jnp.where(keep, s, NEG_BIG)
        s = s - jnp.max(s, axis=-1, keepdims=True)
        p = jnp.exp(s)
        p = p * pl.reciprocal(jnp.sum(p, axis=-1, keepdims=True), approx=True)
        heads.append(jnp.dot(p.astype(jnp.bfloat16), vb[:, lo:hi],
                             preferred_element_type=jnp.float32))      # (Lq, Dh)

    o = jnp.concatenate(heads, axis=-1)                                # (Lq, E)
    # single K=E out-projection matmul (replaces H K=Dh matmuls + add chain)
    return jnp.dot(o.astype(jnp.bfloat16), wo.astype(jnp.bfloat16),
                   preferred_element_type=jnp.float32) + bo


def _self_attention(x, wqkv, bqkv, wo, bo, *, nhead, causal):
    # x: (L, E);  wqkv: (E, 3E) packed [Wq | Wk | Wv];  bqkv: (1, 3E)
    E = x.shape[1]
    qkv = jnp.dot(x.astype(jnp.bfloat16), wqkv.astype(jnp.bfloat16),
                  preferred_element_type=jnp.float32) + bqkv           # (L, 3E), lane-dense
    return _attn_core(qkv[:, :E], qkv[:, E:2 * E], qkv[:, 2 * E:],
                      wo, bo, nhead=nhead, causal=causal)


def _ffn(x, w1, b1, w2, b2):
    h = jnp.dot(x.astype(jnp.bfloat16), w1.astype(jnp.bfloat16),
                preferred_element_type=jnp.float32) + b1
    h = jnp.maximum(h, 0.0)
    return jnp.dot(h.astype(jnp.bfloat16), w2.astype(jnp.bfloat16),
                   preferred_element_type=jnp.float32) + b2


# ----------------------------------------------------------------------------
# Pallas kernels
# ----------------------------------------------------------------------------

def _enc_layer_kernel(x_ref, wqkv_ref, bqkv_ref, wo_ref,
                      w1_ref, b1_ref, w2_ref,
                      vec_ref, encnorm_ref,
                      o_ref, *, nhead, apply_final_ln):
    # vec_ref rows: 0=bo, 1=b2, 2=ln1_g, 3=ln1_b, 4=ln2_g, 5=ln2_b
    x = x_ref[0].astype(jnp.float32)                                   # (L, E)
    vec = vec_ref[...]
    sa = _self_attention(x, wqkv_ref[...], bqkv_ref[...], wo_ref[...], vec[0:1],
                         nhead=nhead, causal=False)
    x = _ln_rows(x + sa, vec[2:3], vec[3:4])
    ff = _ffn(x, w1_ref[...], b1_ref[...], w2_ref[...], vec[1:2])
    x = _ln_rows(x + ff, vec[4:5], vec[5:6])
    if apply_final_ln:                      # encoder final LayerNorm fused in-kernel
        en = encnorm_ref[...]
        x = _ln_rows(x, en[0:1], en[1:2])
    o_ref[0] = x.astype(o_ref.dtype)


def _dec_layer_kernel(x_ref, mem_ref,
                      wqkv_s_ref, bqkv_s_ref, wo_s_ref,
                      wq_c_ref, wkv_c_ref, bkv_c_ref, wo_c_ref,
                      w1_ref, b1_ref, w2_ref,
                      vec_ref, o_ref, *, nhead):
    # vec_ref rows: 0=bo_s, 1=bq_c, 2=bo_c, 3=b2,
    #               4=ln1_g, 5=ln1_b, 6=ln2_g, 7=ln2_b, 8=ln3_g, 9=ln3_b
    x = x_ref[0].astype(jnp.float32)                                   # (T, E)
    mem = mem_ref[0].astype(jnp.float32)                               # (S, E)
    vec = vec_ref[...]
    E = x.shape[1]

    # masked (causal) self-attention
    sa = _self_attention(x, wqkv_s_ref[...], bqkv_s_ref[...], wo_s_ref[...], vec[0:1],
                         nhead=nhead, causal=True)
    x = _ln_rows(x + sa, vec[4:5], vec[5:6])

    # cross-attention: Q from decoder state (E->E), K/V from memory (E->2E), both lane-dense
    q = jnp.dot(x.astype(jnp.bfloat16), wq_c_ref[...].astype(jnp.bfloat16),
                preferred_element_type=jnp.float32) + vec[1:2]
    kv = jnp.dot(mem.astype(jnp.bfloat16), wkv_c_ref[...].astype(jnp.bfloat16),
                 preferred_element_type=jnp.float32) + bkv_c_ref[...]
    ca = _attn_core(q, kv[:, :E], kv[:, E:], wo_c_ref[...], vec[2:3],
                    nhead=nhead, causal=False)
    x = _ln_rows(x + ca, vec[6:7], vec[7:8])

    ff = _ffn(x, w1_ref[...], b1_ref[...], w2_ref[...], vec[3:4])
    x = _ln_rows(x + ff, vec[8:9], vec[9:10])
    o_ref[0] = x.astype(o_ref.dtype)


def _final_kernel(x_ref, norm_ref, w_ref, bo_ref, o_ref):
    # fused: decoder final LayerNorm + output linear + log_softmax
    nv = norm_ref[...]
    x = _ln_rows(x_ref[...].astype(jnp.float32), nv[0:1], nv[1:2])
    logits = jnp.dot(x.astype(jnp.bfloat16), w_ref[...].astype(jnp.bfloat16),
                     preferred_element_type=jnp.float32) + bo_ref[...]
    m = jnp.max(logits, axis=-1, keepdims=True)
    z = logits - m
    lse = jnp.log(jnp.sum(jnp.exp(z), axis=-1, keepdims=True))
    o_ref[...] = (z - lse).astype(o_ref.dtype)


# ----------------------------------------------------------------------------
# pallas_call wrappers
# ----------------------------------------------------------------------------

def _full_spec(shape):
    nd = len(shape)
    return pl.BlockSpec(shape, lambda i: (0,) * nd)


def _row_block(M, cap=512):
    # largest multiple-of-8 divisor of M up to `cap`; whole M if it already fits
    if M <= cap:
        return M
    for rb in range(cap, 7, -8):
        if M % rb == 0:
            return rb
    return M


def pallas_encoder_layer(x, p, enc_norm, nhead, apply_final_ln):
    # x: (N, L, E)
    N, L, E = x.shape
    F = p["w1"].shape[1]
    kern = functools.partial(_enc_layer_kernel, nhead=nhead,
                             apply_final_ln=apply_final_ln)
    return pl.pallas_call(
        kern,
        out_shape=jax.ShapeDtypeStruct((N, L, E), x.dtype),
        grid=(N,),
        in_specs=[
            pl.BlockSpec((1, L, E), lambda i: (i, 0, 0)),      # x (per-batch block)
            _full_spec((E, 3 * E)),                            # wqkv (fused, lane-dense)
            _full_spec((1, 3 * E)),                            # bqkv
            _full_spec((E, E)),                                # wo
            _full_spec((E, F)), _full_spec((1, F)),            # w1, b1
            _full_spec((F, E)),                                # w2
            _full_spec((6, E)),                                # packed biases + LN params
            _full_spec((2, E)),                                # encoder final-norm g/b
        ],
        out_specs=pl.BlockSpec((1, L, E), lambda i: (i, 0, 0)),
        compiler_params=pltpu.CompilerParams(dimension_semantics=("parallel",)),
    )(x, p["wqkv"], p["bqkv"], p["wo"], p["w1"], p["b1"], p["w2"], p["vec"], enc_norm)


def pallas_decoder_layer(x, mem, p, nhead):
    # x: (N, T, E), mem: (N, S, E)
    N, T, E = x.shape
    S = mem.shape[1]
    F = p["w1"].shape[1]
    kern = functools.partial(_dec_layer_kernel, nhead=nhead)
    return pl.pallas_call(
        kern,
        out_shape=jax.ShapeDtypeStruct((N, T, E), x.dtype),
        grid=(N,),
        in_specs=[
            pl.BlockSpec((1, T, E), lambda i: (i, 0, 0)),      # x
            pl.BlockSpec((1, S, E), lambda i: (i, 0, 0)),      # memory
            _full_spec((E, 3 * E)), _full_spec((1, 3 * E)),    # self-attn fused qkv
            _full_spec((E, E)),                                # self-attn out proj
            _full_spec((E, E)),                                # cross-attn Wq
            _full_spec((E, 2 * E)), _full_spec((1, 2 * E)),    # cross-attn Wkv / bkv
            _full_spec((E, E)),                                # cross-attn out proj
            _full_spec((E, F)), _full_spec((1, F)),            # w1, b1
            _full_spec((F, E)),                                # w2
            _full_spec((10, E)),                               # packed biases + LN params
        ],
        out_specs=pl.BlockSpec((1, T, E), lambda i: (i, 0, 0)),
        compiler_params=pltpu.CompilerParams(dimension_semantics=("parallel",)),
    )(x, mem,
      p["wqkv_s"], p["bqkv_s"], p["wo_s"],
      p["wq_c"], p["wkv_c"], p["bkv_c"], p["wo_c"],
      p["w1"], p["b1"], p["w2"], p["vec"])


def pallas_final(x, norm, w, b):
    # fused final LN + linear + log_softmax.  x: (M, E) -> (M, V)
    M, E = x.shape
    V = w.shape[1]
    rb = _row_block(M)
    return pl.pallas_call(
        _final_kernel,
        out_shape=jax.ShapeDtypeStruct((M, V), x.dtype),
        grid=(M // rb,),
        in_specs=[pl.BlockSpec((rb, E), lambda i: (i, 0)),
                  _full_spec((2, E)),
                  _full_spec((E, V)), _full_spec((1, V))],
        out_specs=pl.BlockSpec((rb, V), lambda i: (i, 0)),
        compiler_params=pltpu.CompilerParams(dimension_semantics=("parallel",)),
    )(x, norm, w, b)


# ----------------------------------------------------------------------------
# Parameter initialization (deterministic, xavier_uniform for matrices)
# ----------------------------------------------------------------------------

def _xavier(key, fan_in, fan_out, shape=None):
    if shape is None:
        shape = (fan_in, fan_out)
    bound = math.sqrt(6.0 / (fan_in + fan_out))
    return jax.random.uniform(key, shape, jnp.float32, -bound, bound)


def _ones(E):
    return jnp.ones((1, E), jnp.float32)


def _zeros(E):
    return jnp.zeros((1, E), jnp.float32)


def _init_enc_layer(key, E, F, H):
    ks = jax.random.split(key, 4)
    # vec rows: 0=bo, 1=b2, 2=ln1_g, 3=ln1_b, 4=ln2_g, 5=ln2_b
    vec = jnp.concatenate([_zeros(E), _zeros(E),
                           _ones(E), _zeros(E), _ones(E), _zeros(E)], axis=0)
    return {
        "wqkv": _xavier(ks[0], E, 3 * E),               # (E, 3E) packed [Wq|Wk|Wv]
        "bqkv": jnp.zeros((1, 3 * E), jnp.float32),
        "wo": _xavier(ks[1], E, E),
        "w1": _xavier(ks[2], E, F), "b1": jnp.zeros((1, F), jnp.float32),
        "w2": _xavier(ks[3], F, E),
        "vec": vec,
    }


def _init_dec_layer(key, E, F, H):
    ks = jax.random.split(key, 5)
    w_in_c = _xavier(ks[2], E, 3 * E)                   # cross-attn in-proj, PyTorch-style pack
    # vec rows: 0=bo_s, 1=bq_c, 2=bo_c, 3=b2, 4..9 = ln1/2/3 g,b
    vec = jnp.concatenate([_zeros(E), _zeros(E), _zeros(E), _zeros(E),
                           _ones(E), _zeros(E), _ones(E), _zeros(E),
                           _ones(E), _zeros(E)], axis=0)
    return {
        "wqkv_s": _xavier(ks[0], E, 3 * E),
        "bqkv_s": jnp.zeros((1, 3 * E), jnp.float32),
        "wo_s": _xavier(ks[1], E, E),
        "wq_c": w_in_c[:, :E],
        "wkv_c": w_in_c[:, E:],
        "bkv_c": jnp.zeros((1, 2 * E), jnp.float32),
        "wo_c": _xavier(ks[3], E, E),
        "w1": _xavier(ks[4], E, F), "b1": jnp.zeros((1, F), jnp.float32),
        "w2": _xavier(jax.random.fold_in(key, 99), F, E),
        "vec": vec,
    }


def init_transformer_params(key, src_vocab=128, tgt_vocab=128, E=128, F=128,
                            num_heads=4, num_layers=2):
    keys = jax.random.split(key, 3 + 2 * num_layers)
    src_emb = _xavier(keys[0], src_vocab, E).at[PAD_ID].set(0.0)   # padding_idx row = 0
    tgt_emb = _xavier(keys[1], tgt_vocab, E).at[PAD_ID].set(0.0)
    enc_layers = [_init_enc_layer(keys[2 + i], E, F, num_heads) for i in range(num_layers)]
    dec_layers = [_init_dec_layer(keys[2 + num_layers + i], E, F, num_heads)
                  for i in range(num_layers)]
    return {
        "src_emb": src_emb,
        "tgt_emb": tgt_emb,
        "enc_layers": enc_layers,
        "enc_norm": jnp.concatenate([_ones(E), _zeros(E)], axis=0),    # (2, E) [gamma; beta]
        "dec_layers": dec_layers,
        "dec_norm": jnp.concatenate([_ones(E), _zeros(E)], axis=0),
        "out_w": _xavier(keys[2 + 2 * num_layers], E, tgt_vocab),
        "out_b": jnp.zeros((1, tgt_vocab), jnp.float32),
    }


# ----------------------------------------------------------------------------
# Model (embedding / positional glue in plain JAX, all heavy compute in Pallas)
# ----------------------------------------------------------------------------

def positional_encoding(L, E):
    pos = jnp.arange(L, dtype=jnp.float32)[:, None]
    div = jnp.exp(jnp.arange(0, E, 2, dtype=jnp.float32) * (-math.log(10000.0) / E))
    pe = jnp.zeros((L, E), jnp.float32)
    pe = pe.at[:, 0::2].set(jnp.sin(pos * div))
    pe = pe.at[:, 1::2].set(jnp.cos(pos * div))
    return pe


def transformer_forward(params, src, tgt, nhead=4):
    # src: (N, S) int32, tgt: (N, T) int32 -> (N, T, tgt_vocab) log-probs
    N, S = src.shape
    T = tgt.shape[1]
    E = params["src_emb"].shape[1]
    V = params["out_w"].shape[1]
    assert E % nhead == 0

    # ---- encode ----  (batch-first layout; same math as the reference's seq-first)
    src_e = jnp.take(params["src_emb"], src, axis=0) + positional_encoding(S, E)[None]
    mem = src_e
    n_enc = len(params["enc_layers"])
    for li, lp in enumerate(params["enc_layers"]):
        mem = pallas_encoder_layer(mem, lp, params["enc_norm"], nhead,
                                   apply_final_ln=(li == n_enc - 1))

    # ---- decode ----  (causal mask generated inside the decoder-layer kernels)
    tgt_e = jnp.take(params["tgt_emb"], tgt, axis=0) + positional_encoding(T, E)[None]
    x = tgt_e
    for lp in params["dec_layers"]:
        x = pallas_decoder_layer(x, mem, lp, nhead)

    # final LayerNorm + linear + log_softmax fused in one kernel
    logp = pallas_final(x.reshape(N * T, E), params["dec_norm"],
                        params["out_w"], params["out_b"])
    return logp.reshape(N, T, V)


# ----------------------------------------------------------------------------
if __name__ == "__main__":
    SRC_VOCAB = 128
    TGT_VOCAB = 128
    EMBED_DIM = 128
    FCN_HIDDEN = 128
    NUM_HEADS = 4
    NUM_LAYERS = 2
    N, S, T = 2, 8, 8

    root = jax.random.PRNGKey(0)
    k_params, k_src, k_tgt = jax.random.split(root, 3)

    params = init_transformer_params(k_params, SRC_VOCAB, TGT_VOCAB,
                                     EMBED_DIM, FCN_HIDDEN, NUM_HEADS, NUM_LAYERS)

    src = jax.random.randint(k_src, (N, S), 1, SRC_VOCAB, dtype=jnp.int32)
    tgt = jax.random.randint(k_tgt, (N, T), 1, TGT_VOCAB, dtype=jnp.int32)

    fwd = jax.jit(functools.partial(transformer_forward, nhead=NUM_HEADS))
    out = fwd(params, src, tgt)
    out = jax.block_until_ready(out)

    assert out.shape == (N, T, TGT_VOCAB), out.shape
    assert bool(jnp.all(jnp.isfinite(out))), "non-finite output"
    # log-softmax rows must sum to ~1 in prob space
    prob_sums = jnp.sum(jnp.exp(out), axis=-1)
    assert bool(jnp.all(jnp.abs(prob_sums - 1.0) < 1e-3)), "log_softmax not normalized"

    print("KERNEL_OK")
</pallas_src>

<mosaic_0001>
module attributes {stable_mosaic.version = 11 : i64} {
  func.func @_enc_layer_kernel(%arg0: i32, %arg1: memref<1x8x128xf32, #tpu.memory_space<vmem>>, %arg2: memref<128x384xf32, #tpu.memory_space<vmem>>, %arg3: memref<1x384xf32, #tpu.memory_space<vmem>>, %arg4: memref<128x128xf32, #tpu.memory_space<vmem>>, %arg5: memref<128x128xf32, #tpu.memory_space<vmem>>, %arg6: memref<1x128xf32, #tpu.memory_space<vmem>>, %arg7: memref<128x128xf32, #tpu.memory_space<vmem>>, %arg8: memref<6x128xf32, #tpu.memory_space<vmem>>, %arg9: memref<2x128xf32, #tpu.memory_space<vmem>>, %arg10: memref<1x8x128xf32, #tpu.memory_space<vmem>>) attributes {dimension_semantics = [#tpu.dimension_semantics<parallel>], iteration_bounds = array<i64: 2>, scalar_prefetch = 0 : i64, scratch_operands = 0 : i64, tpu.core_type = #tpu.core_type<tc>, window_params = [{transform_indices = @transform_0, window_bounds = array<i64: 1, 8, 128>}, {pipeline_mode = #tpu.pipeline_mode<synchronous>, transform_indices = @transform_1, window_bounds = array<i64: 128, 384>}, {pipeline_mode = #tpu.pipeline_mode<synchronous>, transform_indices = @transform_2, window_bounds = array<i64: 1, 384>}, {pipeline_mode = #tpu.pipeline_mode<synchronous>, transform_indices = @transform_3, window_bounds = array<i64: 128, 128>}, {pipeline_mode = #tpu.pipeline_mode<synchronous>, transform_indices = @transform_4, window_bounds = array<i64: 128, 128>}, {pipeline_mode = #tpu.pipeline_mode<synchronous>, transform_indices = @transform_5, window_bounds = array<i64: 1, 128>}, {pipeline_mode = #tpu.pipeline_mode<synchronous>, transform_indices = @transform_6, window_bounds = array<i64: 128, 128>}, {pipeline_mode = #tpu.pipeline_mode<synchronous>, transform_indices = @transform_7, window_bounds = array<i64: 6, 128>}, {pipeline_mode = #tpu.pipeline_mode<synchronous>, transform_indices = @transform_8, window_bounds = array<i64: 2, 128>}, {transform_indices = @transform_9, window_bounds = array<i64: 1, 8, 128>}]} {
    %c0 = arith.constant 0 : index
    %c0_0 = arith.constant 0 : index
    %c0_1 = arith.constant 0 : index
    %0 = vector.load %arg1[%c0, %c0_0, %c0_1] : memref<1x8x128xf32, #tpu.memory_space<vmem>>, vector<1x8x128xf32>
    %1 = vector.shape_cast %0 : vector<1x8x128xf32> to vector<8x128xf32>
    %c0_2 = arith.constant 0 : index
    %c0_3 = arith.constant 0 : index
    %2 = vector.load %arg8[%c0_2, %c0_3] : memref<6x128xf32, #tpu.memory_space<vmem>>, vector<6x128xf32>
    %c0_4 = arith.constant 0 : index
    %c0_5 = arith.constant 0 : index
    %3 = vector.load %arg2[%c0_4, %c0_5] : memref<128x384xf32, #tpu.memory_space<vmem>>, vector<128x384xf32>
    %c0_6 = arith.constant 0 : index
    %c0_7 = arith.constant 0 : index
    %4 = vector.load %arg3[%c0_6, %c0_7] : memref<1x384xf32, #tpu.memory_space<vmem>>, vector<1x384xf32>
    %c0_8 = arith.constant 0 : index
    %c0_9 = arith.constant 0 : index
    %5 = vector.load %arg4[%c0_8, %c0_9] : memref<128x128xf32, #tpu.memory_space<vmem>>, vector<128x128xf32>
    %6 = vector.extract_strided_slice %2 {offsets = [0, 0], sizes = [1, 128], strides = [1, 1]} : vector<6x128xf32> to vector<1x128xf32>
    %7 = arith.truncf %1 : vector<8x128xf32> to vector<8x128xbf16>
    %8 = arith.truncf %3 : vector<128x384xf32> to vector<128x384xbf16>
    %cst = arith.constant dense<0.000000e+00> : vector<8x384xf32>
    %9 = tpu.matmul %7, %8, %cst {dimension_numbers = #tpu.dot_dimension_numbers<[1], [0], [0], [1], [0, 0, 1, 1], [], []>} : vector<8x128xbf16>, vector<128x384xbf16>, vector<8x384xf32> -> vector<8x384xf32>
    %10 = vector.broadcast %4 : vector<1x384xf32> to vector<8x384xf32>
    %11 = arith.addf %9, %10 : vector<8x384xf32>
    %12 = vector.extract_strided_slice %11 {offsets = [0, 0], sizes = [8, 128], strides = [1, 1]} : vector<8x384xf32> to vector<8x128xf32>
    %13 = vector.extract_strided_slice %11 {offsets = [0, 128], sizes = [8, 128], strides = [1, 1]} : vector<8x384xf32> to vector<8x128xf32>
    %14 = vector.extract_strided_slice %11 {offsets = [0, 256], sizes = [8, 128], strides = [1, 1]} : vector<8x384xf32> to vector<8x128xf32>
    %15 = arith.truncf %12 : vector<8x128xf32> to vector<8x128xbf16>
    %16 = arith.truncf %13 : vector<8x128xf32> to vector<8x128xbf16>
    %17 = arith.truncf %14 : vector<8x128xf32> to vector<8x128xbf16>
    %18 = vector.extract_strided_slice %15 {offsets = [0, 0], sizes = [8, 32], strides = [1, 1]} : vector<8x128xbf16> to vector<8x32xbf16>
    %19 = vector.extract_strided_slice %16 {offsets = [0, 0], sizes = [8, 32], strides = [1, 1]} : vector<8x128xbf16> to vector<8x32xbf16>
    %cst_10 = arith.constant dense<0.000000e+00> : vector<8x8xf32>
    %20 = tpu.matmul %18, %19, %cst_10 {dimension_numbers = #tpu.dot_dimension_numbers<[1], [1], [0], [0], [0, 0, 1, 0], [], []>} : vector<8x32xbf16>, vector<8x32xbf16>, vector<8x8xf32> -> vector<8x8xf32>
    %cst_11 = arith.constant 0.176776692 : f32
    %21 = vector.broadcast %cst_11 : f32 to vector<8x8xf32>
    %22 = arith.mulf %20, %21 : vector<8x8xf32>
    %cst_12 = arith.constant dense<0xFF800000> : vector<8xf32>
    %23 = vector.multi_reduction <maximumf>, %22, %cst_12 [1] : vector<8x8xf32> to vector<8xf32>
    %24 = vector.shape_cast %23 : vector<8xf32> to vector<8x1xf32>
    %25 = vector.broadcast %24 : vector<8x1xf32> to vector<8x8xf32>
    %26 = arith.subf %22, %25 : vector<8x8xf32>
    %27 = math.exp %26 : vector<8x8xf32>
    %cst_13 = arith.constant dense<0.000000e+00> : vector<8xf32>
    %28 = vector.multi_reduction <add>, %27, %cst_13 [1] : vector<8x8xf32> to vector<8xf32>
    %29 = vector.shape_cast %28 : vector<8xf32> to vector<8x1xf32>
    %30 = tpu.reciprocal %29 {approx = true} : vector<8x1xf32> -> vector<8x1xf32>
    %31 = vector.broadcast %30 : vector<8x1xf32> to vector<8x8xf32>
    %32 = arith.mulf %27, %31 : vector<8x8xf32>
    %33 = arith.truncf %32 : vector<8x8xf32> to vector<8x8xbf16>
    %34 = vector.extract_strided_slice %17 {offsets = [0, 0], sizes = [8, 32], strides = [1, 1]} : vector<8x128xbf16> to vector<8x32xbf16>
    %cst_14 = arith.constant dense<0.000000e+00> : vector<8x32xf32>
    %35 = tpu.matmul %33, %34, %cst_14 {dimension_numbers = #tpu.dot_dimension_numbers<[1], [0], [0], [1], [0, 0, 1, 1], [], []>} : vector<8x8xbf16>, vector<8x32xbf16>, vector<8x32xf32> -> vector<8x32xf32>
    %36 = vector.extract_strided_slice %15 {offsets = [0, 32], sizes = [8, 32], strides = [1, 1]} : vector<8x128xbf16> to vector<8x32xbf16>
    %37 = vector.extract_strided_slice %16 {offsets = [0, 32], sizes = [8, 32], strides = [1, 1]} : vector<8x128xbf16> to vector<8x32xbf16>
    %cst_15 = arith.constant dense<0.000000e+00> : vector<8x8xf32>
    %38 = tpu.matmul %36, %37, %cst_15 {dimension_numbers = #tpu.dot_dimension_numbers<[1], [1], [0], [0], [0, 0, 1, 0], [], []>} : vector<8x32xbf16>, vector<8x32xbf16>, vector<8x8xf32> -> vector<8x8xf32>
    %cst_16 = arith.constant 0.176776692 : f32
    %39 = vector.broadcast %cst_16 : f32 to vector<8x8xf32>
    %40 = arith.mulf %38, %39 : vector<8x8xf32>
    %cst_17 = arith.constant dense<0xFF800000> : vector<8xf32>
    %41 = vector.multi_reduction <maximumf>, %40, %cst_17 [1] : vector<8x8xf32> to vector<8xf32>
    %42 = vector.shape_cast %41 : vector<8xf32> to vector<8x1xf32>
    %43 = vector.broadcast %42 : vector<8x1xf32> to vector<8x8xf32>
    %44 = arith.subf %40, %43 : vector<8x8xf32>
    %45 = math.exp %44 : vector<8x8xf32>
    %cst_18 = arith.constant dense<0.000000e+00> : vector<8xf32>
    %46 = vector.multi_reduction <add>, %45, %cst_18 [1] : vector<8x8xf32> to vector<8xf32>
    %47 = vector.shape_cast %46 : vector<8xf32> to vector<8x1xf32>
    %48 = tpu.reciprocal %47 {approx = true} : vector<8x1xf32> -> vector<8x1xf32>
    %49 = vector.broadcast %48 : vector<8x1xf32> to vector<8x8xf32>
    %50 = arith.mulf %45, %49 : vector<8x8xf32>
    %51 = arith.truncf %50 : vector<8x8xf32> to vector<8x8xbf16>
    %52 = vector.extract_strided_slice %17 {offsets = [0, 32], sizes = [8, 32], strides = [1, 1]} : vector<8x128xbf16> to vector<8x32xbf16>
    %cst_19 = arith.constant dense<0.000000e+00> : vector<8x32xf32>
    %53 = tpu.matmul %51, %52, %cst_19 {dimension_numbers = #tpu.dot_dimension_numbers<[1], [0], [0], [1], [0, 0, 1, 1], [], []>} : vector<8x8xbf16>, vector<8x32xbf16>, vector<8x32xf32> -> vector<8x32xf32>
    %54 = vector.extract_strided_slice %15 {offsets = [0, 64], sizes = [8, 32], strides = [1, 1]} : vector<8x128xbf16> to vector<8x32xbf16>
    %55 = vector.extract_strided_slice %16 {offsets = [0, 64], sizes = [8, 32], strides = [1, 1]} : vector<8x128xbf16> to vector<8x32xbf16>
    %cst_20 = arith.constant dense<0.000000e+00> : vector<8x8xf32>
    %56 = tpu.matmul %54, %55, %cst_20 {dimension_numbers = #tpu.dot_dimension_numbers<[1], [1], [0], [0], [0, 0, 1, 0], [], []>} : vector<8x32xbf16>, vector<8x32xbf16>, vector<8x8xf32> -> vector<8x8xf32>
    %cst_21 = arith.constant 0.176776692 : f32
    %57 = vector.broadcast %cst_21 : f32 to vector<8x8xf32>
    %58 = arith.mulf %56, %57 : vector<8x8xf32>
    %cst_22 = arith.constant dense<0xFF800000> : vector<8xf32>
    %59 = vector.multi_reduction <maximumf>, %58, %cst_22 [1] : vector<8x8xf32> to vector<8xf32>
    %60 = vector.shape_cast %59 : vector<8xf32> to vector<8x1xf32>
    %61 = vector.broadcast %60 : vector<8x1xf32> to vector<8x8xf32>
    %62 = arith.subf %58, %61 : vector<8x8xf32>
    %63 = math.exp %62 : vector<8x8xf32>
    %cst_23 = arith.constant dense<0.000000e+00> : vector<8xf32>
    %64 = vector.multi_reduction <add>, %63, %cst_23 [1] : vector<8x8xf32> to vector<8xf32>
    %65 = vector.shape_cast %64 : vector<8xf32> to vector<8x1xf32>
    %66 = tpu.reciprocal %65 {approx = true} : vector<8x1xf32> -> vector<8x1xf32>
    %67 = vector.broadcast %66 : vector<8x1xf32> to vector<8x8xf32>
    %68 = arith.mulf %63, %67 : vector<8x8xf32>
    %69 = arith.truncf %68 : vector<8x8xf32> to vector<8x8xbf16>
    %70 = vector.extract_strided_slice %17 {offsets = [0, 64], sizes = [8, 32], strides = [1, 1]} : vector<8x128xbf16> to vector<8x32xbf16>
    %cst_24 = arith.constant dense<0.000000e+00> : vector<8x32xf32>
    %71 = tpu.matmul %69, %70, %cst_24 {dimension_numbers = #tpu.dot_dimension_numbers<[1], [0], [0], [1], [0, 0, 1, 1], [], []>} : vector<8x8xbf16>, vector<8x32xbf16>, vector<8x32xf32> -> vector<8x32xf32>
    %72 = vector.extract_strided_slice %15 {offsets = [0, 96], sizes = [8, 32], strides = [1, 1]} : vector<8x128xbf16> to vector<8x32xbf16>
    %73 = vector.extract_strided_slice %16 {offsets = [0, 96], sizes = [8, 32], strides = [1, 1]} : vector<8x128xbf16> to vector<8x32xbf16>
    %cst_25 = arith.constant dense<0.000000e+00> : vector<8x8xf32>
    %74 = tpu.matmul %72, %73, %cst_25 {dimension_numbers = #tpu.dot_dimension_numbers<[1], [1], [0], [0], [0, 0, 1, 0], [], []>} : vector<8x32xbf16>, vector<8x32xbf16>, vector<8x8xf32> -> vector<8x8xf32>
    %cst_26 = arith.constant 0.176776692 : f32
    %75 = vector.broadcast %cst_26 : f32 to vector<8x8xf32>
    %76 = arith.mulf %74, %75 : vector<8x8xf32>
    %cst_27 = arith.constant dense<0xFF800000> : vector<8xf32>
    %77 = vector.multi_reduction <maximumf>, %76, %cst_27 [1] : vector<8x8xf32> to vector<8xf32>
    %78 = vector.shape_cast %77 : vector<8xf32> to vector<8x1xf32>
    %79 = vector.broadcast %78 : vector<8x1xf32> to vector<8x8xf32>
    %80 = arith.subf %76, %79 : vector<8x8xf32>
    %81 = math.exp %80 : vector<8x8xf32>
    %cst_28 = arith.constant dense<0.000000e+00> : vector<8xf32>
    %82 = vector.multi_reduction <add>, %81, %cst_28 [1] : vector<8x8xf32> to vector<8xf32>
    %83 = vector.shape_cast %82 : vector<8xf32> to vector<8x1xf32>
    %84 = tpu.reciprocal %83 {approx = true} : vector<8x1xf32> -> vector<8x1xf32>
    %85 = vector.broadcast %84 : vector<8x1xf32> to vector<8x8xf32>
    %86 = arith.mulf %81, %85 : vector<8x8xf32>
    %87 = arith.truncf %86 : vector<8x8xf32> to vector<8x8xbf16>
    %88 = vector.extract_strided_slice %17 {offsets = [0, 96], sizes = [8, 32], strides = [1, 1]} : vector<8x128xbf16> to vector<8x32xbf16>
    %cst_29 = arith.constant dense<0.000000e+00> : vector<8x32xf32>
    %89 = tpu.matmul %87, %88, %cst_29 {dimension_numbers = #tpu.dot_dimension_numbers<[1], [0], [0], [1], [0, 0, 1, 1], [], []>} : vector<8x8xbf16>, vector<8x32xbf16>, vector<8x32xf32> -> vector<8x32xf32>
    %90 = tpu.concatenate %35, %53, %71, %89 in 1 : vector<8x32xf32>, vector<8x32xf32>, vector<8x32xf32>, vector<8x32xf32> -> vector<8x128xf32>
    %91 = arith.truncf %90 : vector<8x128xf32> to vector<8x128xbf16>
    %92 = arith.truncf %5 : vector<128x128xf32> to vector<128x128xbf16>
    %cst_30 = arith.constant dense<0.000000e+00> : vector<8x128xf32>
    %93 = tpu.matmul %91, %92, %cst_30 {dimension_numbers = #tpu.dot_dimension_numbers<[1], [0], [0], [1], [0, 0, 1, 1], [], []>} : vector<8x128xbf16>, vector<128x128xbf16>, vector<8x128xf32> -> vector<8x128xf32>
    %94 = vector.broadcast %6 : vector<1x128xf32> to vector<8x128xf32>
    %95 = arith.addf %93, %94 : vector<8x128xf32>
    %96 = arith.addf %1, %95 : vector<8x128xf32>
    %97 = vector.extract_strided_slice %2 {offsets = [2, 0], sizes = [1, 128], strides = [1, 1]} : vector<6x128xf32> to vector<1x128xf32>
    %98 = vector.extract_strided_slice %2 {offsets = [3, 0], sizes = [1, 128], strides = [1, 1]} : vector<6x128xf32> to vector<1x128xf32>
    %cst_31 = arith.constant dense<0.000000e+00> : vector<8xf32>
    %99 = vector.multi_reduction <add>, %96, %cst_31 [1] : vector<8x128xf32> to vector<8xf32>
    %100 = vector.shape_cast %99 : vector<8xf32> to vector<8x1xf32>
    %cst_32 = arith.constant 1.280000e+02 : f32
    %101 = vector.broadcast %cst_32 : f32 to vector<8x1xf32>
    %102 = arith.divf %100, %101 : vector<8x1xf32>
    %103 = vector.broadcast %102 : vector<8x1xf32> to vector<8x128xf32>
    %104 = arith.subf %96, %103 : vector<8x128xf32>
    %105 = arith.mulf %104, %104 : vector<8x128xf32>
    %cst_33 = arith.constant dense<0.000000e+00> : vector<8xf32>
    %106 = vector.multi_reduction <add>, %105, %cst_33 [1] : vector<8x128xf32> to vector<8xf32>
    %107 = vector.shape_cast %106 : vector<8xf32> to vector<8x1xf32>
    %cst_34 = arith.constant 1.280000e+02 : f32
    %108 = vector.broadcast %cst_34 : f32 to vector<8x1xf32>
    %109 = arith.divf %107, %108 : vector<8x1xf32>
    %cst_35 = arith.constant 9.99999974E-6 : f32
    %110 = vector.broadcast %cst_35 : f32 to vector<8x1xf32>
    %111 = arith.addf %109, %110 : vector<8x1xf32>
    %112 = math.rsqrt %111 : vector<8x1xf32>
    %113 = vector.broadcast %112 : vector<8x1xf32> to vector<8x128xf32>
    %114 = arith.mulf %104, %113 : vector<8x128xf32>
    %115 = vector.broadcast %97 : vector<1x128xf32> to vector<8x128xf32>
    %116 = arith.mulf %114, %115 : vector<8x128xf32>
    %117 = vector.broadcast %98 : vector<1x128xf32> to vector<8x128xf32>
    %118 = arith.addf %116, %117 : vector<8x128xf32>
    %c0_36 = arith.constant 0 : index
    %c0_37 = arith.constant 0 : index
    %119 = vector.load %arg5[%c0_36, %c0_37] : memref<128x128xf32, #tpu.memory_space<vmem>>, vector<128x128xf32>
    %c0_38 = arith.constant 0 : index
    %c0_39 = arith.constant 0 : index
    %120 = vector.load %arg6[%c0_38, %c0_39] : memref<1x128xf32, #tpu.memory_space<vmem>>, vector<1x128xf32>
    %c0_40 = arith.constant 0 : index
    %c0_41 = arith.constant 0 : index
    %121 = vector.load %arg7[%c0_40, %c0_41] : memref<128x128xf32, #tpu.memory_space<vmem>>, vector<128x128xf32>
    %122 = vector.extract_strided_slice %2 {offsets = [1, 0], sizes = [1, 128], strides = [1, 1]} : vector<6x128xf32> to vector<1x128xf32>
    %123 = arith.truncf %118 : vector<8x128xf32> to vector<8x128xbf16>
    %124 = arith.truncf %119 : vector<128x128xf32> to vector<128x128xbf16>
    %cst_42 = arith.constant dense<0.000000e+00> : vector<8x128xf32>
    %125 = tpu.matmul %123, %124, %cst_42 {dimension_numbers = #tpu.dot_dimension_numbers<[1], [0], [0], [1], [0, 0, 1, 1], [], []>} : vector<8x128xbf16>, vector<128x128xbf16>, vector<8x128xf32> -> vector<8x128xf32>
    %126 = vector.broadcast %120 : vector<1x128xf32> to vector<8x128xf32>
    %127 = arith.addf %125, %126 : vector<8x128xf32>
    %cst_43 = arith.constant 0.000000e+00 : f32
    %128 = vector.broadcast %cst_43 : f32 to vector<8x128xf32>
    %129 = arith.maximumf %127, %128 : vector<8x128xf32>
    %130 = arith.truncf %129 : vector<8x128xf32> to vector<8x128xbf16>
    %131 = arith.truncf %121 : vector<128x128xf32> to vector<128x128xbf16>
    %cst_44 = arith.constant dense<0.000000e+00> : vector<8x128xf32>
    %132 = tpu.matmul %130, %131, %cst_44 {dimension_numbers = #tpu.dot_dimension_numbers<[1], [0], [0], [1], [0, 0, 1, 1], [], []>} : vector<8x128xbf16>, vector<128x128xbf16>, vector<8x128xf32> -> vector<8x128xf32>
    %133 = vector.broadcast %122 : vector<1x128xf32> to vector<8x128xf32>
    %134 = arith.addf %132, %133 : vector<8x128xf32>
    %135 = arith.addf %118, %134 : vector<8x128xf32>
    %136 = vector.extract_strided_slice %2 {offsets = [4, 0], sizes = [1, 128], strides = [1, 1]} : vector<6x128xf32> to vector<1x128xf32>
    %137 = vector.extract_strided_slice %2 {offsets = [5, 0], sizes = [1, 128], strides = [1, 1]} : vector<6x128xf32> to vector<1x128xf32>
    %cst_45 = arith.constant dense<0.000000e+00> : vector<8xf32>
    %138 = vector.multi_reduction <add>, %135, %cst_45 [1] : vector<8x128xf32> to vector<8xf32>
    %139 = vector.shape_cast %138 : vector<8xf32> to vector<8x1xf32>
    %cst_46 = arith.constant 1.280000e+02 : f32
    %140 = vector.broadcast %cst_46 : f32 to vector<8x1xf32>
    %141 = arith.divf %139, %140 : vector<8x1xf32>
    %142 = vector.broadcast %141 : vector<8x1xf32> to vector<8x128xf32>
    %143 = arith.subf %135, %142 : vector<8x128xf32>
    %144 = arith.mulf %143, %143 : vector<8x128xf32>
    %cst_47 = arith.constant dense<0.000000e+00> : vector<8xf32>
    %145 = vector.multi_reduction <add>, %144, %cst_47 [1] : vector<8x128xf32> to vector<8xf32>
    %146 = vector.shape_cast %145 : vector<8xf32> to vector<8x1xf32>
    %cst_48 = arith.constant 1.280000e+02 : f32
    %147 = vector.broadcast %cst_48 : f32 to vector<8x1xf32>
    %148 = arith.divf %146, %147 : vector<8x1xf32>
    %cst_49 = arith.constant 9.99999974E-6 : f32
    %149 = vector.broadcast %cst_49 : f32 to vector<8x1xf32>
    %150 = arith.addf %148, %149 : vector<8x1xf32>
    %151 = math.rsqrt %150 : vector<8x1xf32>
    %152 = vector.broadcast %151 : vector<8x1xf32> to vector<8x128xf32>
    %153 = arith.mulf %143, %152 : vector<8x128xf32>
    %154 = vector.broadcast %136 : vector<1x128xf32> to vector<8x128xf32>
    %155 = arith.mulf %153, %154 : vector<8x128xf32>
    %156 = vector.broadcast %137 : vector<1x128xf32> to vector<8x128xf32>
    %157 = arith.addf %155, %156 : vector<8x128xf32>
    %c0_50 = arith.constant 0 : index
    %c0_51 = arith.constant 0 : index
    %c0_52 = arith.constant 0 : index
    %158 = vector.load %arg10[%c0_50, %c0_51, %c0_52] : memref<1x8x128xf32, #tpu.memory_space<vmem>>, vector<1x8x128xf32>
    %159 = vector.shape_cast %158 : vector<1x8x128xf32> to vector<8x128xf32>
    %160 = vector.shape_cast %157 : vector<8x128xf32> to vector<1x8x128xf32>
    tpu.vector_store %arg10[%c0_50, %c0_51, %c0_52], %160 {strides = array<i32>} : memref<1x8x128xf32, #tpu.memory_space<vmem>>, vector<1x8x128xf32>,
    return
  }
  func.func @transform_0(%arg0: i32) -> (i32, i32, i32) {
    %c0_i32 = arith.constant 0 : i32
    %c0_i32_0 = arith.constant 0 : i32
    %c0_i32_1 = arith.constant 0 : i32
    return %arg0, %c0_i32, %c0_i32_0 : i32, i32, i32
  }
  func.func @transform_1(%arg0: i32) -> (i32, i32) {
    %c0_i32 = arith.constant 0 : i32
    %c0_i32_0 = arith.constant 0 : i32
    %c0_i32_1 = arith.constant 0 : i32
    return %c0_i32, %c0_i32_0 : i32, i32
  }
  func.func @transform_2(%arg0: i32) -> (i32, i32) {
    %c0_i32 = arith.constant 0 : i32
    %c0_i32_0 = arith.constant 0 : i32
    %c0_i32_1 = arith.constant 0 : i32
    return %c0_i32, %c0_i32_0 : i32, i32
  }
  func.func @transform_3(%arg0: i32) -> (i32, i32) {
    %c0_i32 = arith.constant 0 : i32
    %c0_i32_0 = arith.constant 0 : i32
    %c0_i32_1 = arith.constant 0 : i32
    return %c0_i32, %c0_i32_0 : i32, i32
  }
  func.func @transform_4(%arg0: i32) -> (i32, i32) {
    %c0_i32 = arith.constant 0 : i32
    %c0_i32_0 = arith.constant 0 : i32
    %c0_i32_1 = arith.constant 0 : i32
    return %c0_i32, %c0_i32_0 : i32, i32
  }
  func.func @transform_5(%arg0: i32) -> (i32, i32) {
    %c0_i32 = arith.constant 0 : i32
    %c0_i32_0 = arith.constant 0 : i32
    %c0_i32_1 = arith.constant 0 : i32
    return %c0_i32, %c0_i32_0 : i32, i32
  }
  func.func @transform_6(%arg0: i32) -> (i32, i32) {
    %c0_i32 = arith.constant 0 : i32
    %c0_i32_0 = arith.constant 0 : i32
    %c0_i32_1 = arith.constant 0 : i32
    return %c0_i32, %c0_i32_0 : i32, i32
  }
  func.func @transform_7(%arg0: i32) -> (i32, i32) {
    %c0_i32 = arith.constant 0 : i32
    %c0_i32_0 = arith.constant 0 : i32
    %c0_i32_1 = arith.constant 0 : i32
    return %c0_i32, %c0_i32_0 : i32, i32
  }
  func.func @transform_8(%arg0: i32) -> (i32, i32) {
    %c0_i32 = arith.constant 0 : i32
    %c0_i32_0 = arith.constant 0 : i32
    %c0_i32_1 = arith.constant 0 : i32
    return %c0_i32, %c0_i32_0 : i32, i32
  }
  func.func @transform_9(%arg0: i32) -> (i32, i32, i32) {
    %c0_i32 = arith.constant 0 : i32
    %c0_i32_0 = arith.constant 0 : i32
    %c0_i32_1 = arith.constant 0 : i32
    return %arg0, %c0_i32, %c0_i32_0 : i32, i32, i32
  }
}

module attributes {stable_mosaic.version = 11 : i64} {
  func.func @_enc_layer_kernel(%arg0: i32, %arg1: memref<1x8x128xf32, #tpu.memory_space<vmem>>, %arg2: memref<128x384xf32, #tpu.memory_space<vmem>>, %arg3: memref<1x384xf32, #tpu.memory_space<vmem>>, %arg4: memref<128x128xf32, #tpu.memory_space<vmem>>, %arg5: memref<128x128xf32, #tpu.memory_space<vmem>>, %arg6: memref<1x128xf32, #tpu.memory_space<vmem>>, %arg7: memref<128x128xf32, #tpu.memory_space<vmem>>, %arg8: memref<6x128xf32, #tpu.memory_space<vmem>>, %arg9: memref<2x128xf32, #tpu.memory_space<vmem>>, %arg10: memref<1x8x128xf32, #tpu.memory_space<vmem>>) attributes {dimension_semantics = [#tpu.dimension_semantics<parallel>], iteration_bounds = array<i64: 2>, scalar_prefetch = 0 : i64, scratch_operands = 0 : i64, tpu.core_type = #tpu.core_type<tc>, window_params = [{transform_indices = @transform_0, window_bounds = array<i64: 1, 8, 128>}, {pipeline_mode = #tpu.pipeline_mode<synchronous>, transform_indices = @transform_1, window_bounds = array<i64: 128, 384>}, {pipeline_mode = #tpu.pipeline_mode<synchronous>, transform_indices = @transform_2, window_bounds = array<i64: 1, 384>}, {pipeline_mode = #tpu.pipeline_mode<synchronous>, transform_indices = @transform_3, window_bounds = array<i64: 128, 128>}, {pipeline_mode = #tpu.pipeline_mode<synchronous>, transform_indices = @transform_4, window_bounds = array<i64: 128, 128>}, {pipeline_mode = #tpu.pipeline_mode<synchronous>, transform_indices = @transform_5, window_bounds = array<i64: 1, 128>}, {pipeline_mode = #tpu.pipeline_mode<synchronous>, transform_indices = @transform_6, window_bounds = array<i64: 128, 128>}, {pipeline_mode = #tpu.pipeline_mode<synchronous>, transform_indices = @transform_7, window_bounds = array<i64: 6, 128>}, {pipeline_mode = #tpu.pipeline_mode<synchronous>, transform_indices = @transform_8, window_bounds = array<i64: 2, 128>}, {transform_indices = @transform_9, window_bounds = array<i64: 1, 8, 128>}]} {
    %c0 = arith.constant 0 : index
    %c0_0 = arith.constant 0 : index
    %c0_1 = arith.constant 0 : index
    %0 = vector.load %arg1[%c0, %c0_0, %c0_1] : memref<1x8x128xf32, #tpu.memory_space<vmem>>, vector<1x8x128xf32>
    %1 = vector.shape_cast %0 : vector<1x8x128xf32> to vector<8x128xf32>
    %c0_2 = arith.constant 0 : index
    %c0_3 = arith.constant 0 : index
    %2 = vector.load %arg8[%c0_2, %c0_3] : memref<6x128xf32, #tpu.memory_space<vmem>>, vector<6x128xf32>
    %c0_4 = arith.constant 0 : index
    %c0_5 = arith.constant 0 : index
    %3 = vector.load %arg2[%c0_4, %c0_5] : memref<128x384xf32, #tpu.memory_space<vmem>>, vector<128x384xf32>
    %c0_6 = arith.constant 0 : index
    %c0_7 = arith.constant 0 : index
    %4 = vector.load %arg3[%c0_6, %c0_7] : memref<1x384xf32, #tpu.memory_space<vmem>>, vector<1x384xf32>
    %c0_8 = arith.constant 0 : index
    %c0_9 = arith.constant 0 : index
    %5 = vector.load %arg4[%c0_8, %c0_9] : memref<128x128xf32, #tpu.memory_space<vmem>>, vector<128x128xf32>
    %6 = vector.extract_strided_slice %2 {offsets = [0, 0], sizes = [1, 128], strides = [1, 1]} : vector<6x128xf32> to vector<1x128xf32>
    %7 = arith.truncf %1 : vector<8x128xf32> to vector<8x128xbf16>
    %8 = arith.truncf %3 : vector<128x384xf32> to vector<128x384xbf16>
    %cst = arith.constant dense<0.000000e+00> : vector<8x384xf32>
    %9 = tpu.matmul %7, %8, %cst {dimension_numbers = #tpu.dot_dimension_numbers<[1], [0], [0], [1], [0, 0, 1, 1], [], []>} : vector<8x128xbf16>, vector<128x384xbf16>, vector<8x384xf32> -> vector<8x384xf32>
    %10 = vector.broadcast %4 : vector<1x384xf32> to vector<8x384xf32>
    %11 = arith.addf %9, %10 : vector<8x384xf32>
    %12 = vector.extract_strided_slice %11 {offsets = [0, 0], sizes = [8, 128], strides = [1, 1]} : vector<8x384xf32> to vector<8x128xf32>
    %13 = vector.extract_strided_slice %11 {offsets = [0, 128], sizes = [8, 128], strides = [1, 1]} : vector<8x384xf32> to vector<8x128xf32>
    %14 = vector.extract_strided_slice %11 {offsets = [0, 256], sizes = [8, 128], strides = [1, 1]} : vector<8x384xf32> to vector<8x128xf32>
    %15 = arith.truncf %12 : vector<8x128xf32> to vector<8x128xbf16>
    %16 = arith.truncf %13 : vector<8x128xf32> to vector<8x128xbf16>
    %17 = arith.truncf %14 : vector<8x128xf32> to vector<8x128xbf16>
    %18 = vector.extract_strided_slice %15 {offsets = [0, 0], sizes = [8, 32], strides = [1, 1]} : vector<8x128xbf16> to vector<8x32xbf16>
    %19 = vector.extract_strided_slice %16 {offsets = [0, 0], sizes = [8, 32], strides = [1, 1]} : vector<8x128xbf16> to vector<8x32xbf16>
    %cst_10 = arith.constant dense<0.000000e+00> : vector<8x8xf32>
    %20 = tpu.matmul %18, %19, %cst_10 {dimension_numbers = #tpu.dot_dimension_numbers<[1], [1], [0], [0], [0, 0, 1, 0], [], []>} : vector<8x32xbf16>, vector<8x32xbf16>, vector<8x8xf32> -> vector<8x8xf32>
    %cst_11 = arith.constant 0.176776692 : f32
    %21 = vector.broadcast %cst_11 : f32 to vector<8x8xf32>
    %22 = arith.mulf %20, %21 : vector<8x8xf32>
    %cst_12 = arith.constant dense<0xFF800000> : vector<8xf32>
    %23 = vector.multi_reduction <maximumf>, %22, %cst_12 [1] : vector<8x8xf32> to vector<8xf32>
    %24 = vector.shape_cast %23 : vector<8xf32> to vector<8x1xf32>
    %25 = vector.broadcast %24 : vector<8x1xf32> to vector<8x8xf32>
    %26 = arith.subf %22, %25 : vector<8x8xf32>
    %27 = math.exp %26 : vector<8x8xf32>
    %cst_13 = arith.constant dense<0.000000e+00> : vector<8xf32>
    %28 = vector.multi_reduction <add>, %27, %cst_13 [1] : vector<8x8xf32> to vector<8xf32>
    %29 = vector.shape_cast %28 : vector<8xf32> to vector<8x1xf32>
    %30 = tpu.reciprocal %29 {approx = true} : vector<8x1xf32> -> vector<8x1xf32>
    %31 = vector.broadcast %30 : vector<8x1xf32> to vector<8x8xf32>
    %32 = arith.mulf %27, %31 : vector<8x8xf32>
    %33 = arith.truncf %32 : vector<8x8xf32> to vector<8x8xbf16>
    %34 = vector.extract_strided_slice %17 {offsets = [0, 0], sizes = [8, 32], strides = [1, 1]} : vector<8x128xbf16> to vector<8x32xbf16>
    %cst_14 = arith.constant dense<0.000000e+00> : vector<8x32xf32>
    %35 = tpu.matmul %33, %34, %cst_14 {dimension_numbers = #tpu.dot_dimension_numbers<[1], [0], [0], [1], [0, 0, 1, 1], [], []>} : vector<8x8xbf16>, vector<8x32xbf16>, vector<8x32xf32> -> vector<8x32xf32>
    %36 = vector.extract_strided_slice %15 {offsets = [0, 32], sizes = [8, 32], strides = [1, 1]} : vector<8x128xbf16> to vector<8x32xbf16>
    %37 = vector.extract_strided_slice %16 {offsets = [0, 32], sizes = [8, 32], strides = [1, 1]} : vector<8x128xbf16> to vector<8x32xbf16>
    %cst_15 = arith.constant dense<0.000000e+00> : vector<8x8xf32>
    %38 = tpu.matmul %36, %37, %cst_15 {dimension_numbers = #tpu.dot_dimension_numbers<[1], [1], [0], [0], [0, 0, 1, 0], [], []>} : vector<8x32xbf16>, vector<8x32xbf16>, vector<8x8xf32> -> vector<8x8xf32>
    %cst_16 = arith.constant 0.176776692 : f32
    %39 = vector.broadcast %cst_16 : f32 to vector<8x8xf32>
    %40 = arith.mulf %38, %39 : vector<8x8xf32>
    %cst_17 = arith.constant dense<0xFF800000> : vector<8xf32>
    %41 = vector.multi_reduction <maximumf>, %40, %cst_17 [1] : vector<8x8xf32> to vector<8xf32>
    %42 = vector.shape_cast %41 : vector<8xf32> to vector<8x1xf32>
    %43 = vector.broadcast %42 : vector<8x1xf32> to vector<8x8xf32>
    %44 = arith.subf %40, %43 : vector<8x8xf32>
    %45 = math.exp %44 : vector<8x8xf32>
    %cst_18 = arith.constant dense<0.000000e+00> : vector<8xf32>
    %46 = vector.multi_reduction <add>, %45, %cst_18 [1] : vector<8x8xf32> to vector<8xf32>
    %47 = vector.shape_cast %46 : vector<8xf32> to vector<8x1xf32>
    %48 = tpu.reciprocal %47 {approx = true} : vector<8x1xf32> -> vector<8x1xf32>
    %49 = vector.broadcast %48 : vector<8x1xf32> to vector<8x8xf32>
    %50 = arith.mulf %45, %49 : vector<8x8xf32>
    %51 = arith.truncf %50 : vector<8x8xf32> to vector<8x8xbf16>
    %52 = vector.extract_strided_slice %17 {offsets = [0, 32], sizes = [8, 32], strides = [1, 1]} : vector<8x128xbf16> to vector<8x32xbf16>
    %cst_19 = arith.constant dense<0.000000e+00> : vector<8x32xf32>
    %53 = tpu.matmul %51, %52, %cst_19 {dimension_numbers = #tpu.dot_dimension_numbers<[1], [0], [0], [1], [0, 0, 1, 1], [], []>} : vector<8x8xbf16>, vector<8x32xbf16>, vector<8x32xf32> -> vector<8x32xf32>
    %54 = vector.extract_strided_slice %15 {offsets = [0, 64], sizes = [8, 32], strides = [1, 1]} : vector<8x128xbf16> to vector<8x32xbf16>
    %55 = vector.extract_strided_slice %16 {offsets = [0, 64], sizes = [8, 32], strides = [1, 1]} : vector<8x128xbf16> to vector<8x32xbf16>
    %cst_20 = arith.constant dense<0.000000e+00> : vector<8x8xf32>
    %56 = tpu.matmul %54, %55, %cst_20 {dimension_numbers = #tpu.dot_dimension_numbers<[1], [1], [0], [0], [0, 0, 1, 0], [], []>} : vector<8x32xbf16>, vector<8x32xbf16>, vector<8x8xf32> -> vector<8x8xf32>
    %cst_21 = arith.constant 0.176776692 : f32
    %57 = vector.broadcast %cst_21 : f32 to vector<8x8xf32>
    %58 = arith.mulf %56, %57 : vector<8x8xf32>
    %cst_22 = arith.constant dense<0xFF800000> : vector<8xf32>
    %59 = vector.multi_reduction <maximumf>, %58, %cst_22 [1] : vector<8x8xf32> to vector<8xf32>
    %60 = vector.shape_cast %59 : vector<8xf32> to vector<8x1xf32>
    %61 = vector.broadcast %60 : vector<8x1xf32> to vector<8x8xf32>
    %62 = arith.subf %58, %61 : vector<8x8xf32>
    %63 = math.exp %62 : vector<8x8xf32>
    %cst_23 = arith.constant dense<0.000000e+00> : vector<8xf32>
    %64 = vector.multi_reduction <add>, %63, %cst_23 [1] : vector<8x8xf32> to vector<8xf32>
    %65 = vector.shape_cast %64 : vector<8xf32> to vector<8x1xf32>
    %66 = tpu.reciprocal %65 {approx = true} : vector<8x1xf32> -> vector<8x1xf32>
    %67 = vector.broadcast %66 : vector<8x1xf32> to vector<8x8xf32>
    %68 = arith.mulf %63, %67 : vector<8x8xf32>
    %69 = arith.truncf %68 : vector<8x8xf32> to vector<8x8xbf16>
    %70 = vector.extract_strided_slice %17 {offsets = [0, 64], sizes = [8, 32], strides = [1, 1]} : vector<8x128xbf16> to vector<8x32xbf16>
    %cst_24 = arith.constant dense<0.000000e+00> : vector<8x32xf32>
    %71 = tpu.matmul %69, %70, %cst_24 {dimension_numbers = #tpu.dot_dimension_numbers<[1], [0], [0], [1], [0, 0, 1, 1], [], []>} : vector<8x8xbf16>, vector<8x32xbf16>, vector<8x32xf32> -> vector<8x32xf32>
    %72 = vector.extract_strided_slice %15 {offsets = [0, 96], sizes = [8, 32], strides = [1, 1]} : vector<8x128xbf16> to vector<8x32xbf16>
    %73 = vector.extract_strided_slice %16 {offsets = [0, 96], sizes = [8, 32], strides = [1, 1]} : vector<8x128xbf16> to vector<8x32xbf16>
    %cst_25 = arith.constant dense<0.000000e+00> : vector<8x8xf32>
    %74 = tpu.matmul %72, %73, %cst_25 {dimension_numbers = #tpu.dot_dimension_numbers<[1], [1], [0], [0], [0, 0, 1, 0], [], []>} : vector<8x32xbf16>, vector<8x32xbf16>, vector<8x8xf32> -> vector<8x8xf32>
    %cst_26 = arith.constant 0.176776692 : f32
    %75 = vector.broadcast %cst_26 : f32 to vector<8x8xf32>
    %76 = arith.mulf %74, %75 : vector<8x8xf32>
    %cst_27 = arith.constant dense<0xFF800000> : vector<8xf32>
    %77 = vector.multi_reduction <maximumf>, %76, %cst_27 [1] : vector<8x8xf32> to vector<8xf32>
    %78 = vector.shape_cast %77 : vector<8xf32> to vector<8x1xf32>
    %79 = vector.broadcast %78 : vector<8x1xf32> to vector<8x8xf32>
    %80 = arith.subf %76, %79 : vector<8x8xf32>
    %81 = math.exp %80 : vector<8x8xf32>
    %cst_28 = arith.constant dense<0.000000e+00> : vector<8xf32>
    %82 = vector.multi_reduction <add>, %81, %cst_28 [1] : vector<8x8xf32> to vector<8xf32>
    %83 = vector.shape_cast %82 : vector<8xf32> to vector<8x1xf32>
    %84 = tpu.reciprocal %83 {approx = true} : vector<8x1xf32> -> vector<8x1xf32>
    %85 = vector.broadcast %84 : vector<8x1xf32> to vector<8x8xf32>
    %86 = arith.mulf %81, %85 : vector<8x8xf32>
    %87 = arith.truncf %86 : vector<8x8xf32> to vector<8x8xbf16>
    %88 = vector.extract_strided_slice %17 {offsets = [0, 96], sizes = [8, 32], strides = [1, 1]} : vector<8x128xbf16> to vector<8x32xbf16>
    %cst_29 = arith.constant dense<0.000000e+00> : vector<8x32xf32>
    %89 = tpu.matmul %87, %88, %cst_29 {dimension_numbers = #tpu.dot_dimension_numbers<[1], [0], [0], [1], [0, 0, 1, 1], [], []>} : vector<8x8xbf16>, vector<8x32xbf16>, vector<8x32xf32> -> vector<8x32xf32>
    %90 = tpu.concatenate %35, %53, %71, %89 in 1 : vector<8x32xf32>, vector<8x32xf32>, vector<8x32xf32>, vector<8x32xf32> -> vector<8x128xf32>
    %91 = arith.truncf %90 : vector<8x128xf32> to vector<8x128xbf16>
    %92 = arith.truncf %5 : vector<128x128xf32> to vector<128x128xbf16>
    %cst_30 = arith.constant dense<0.000000e+00> : vector<8x128xf32>
    %93 = tpu.matmul %91, %92, %cst_30 {dimension_numbers = #tpu.dot_dimension_numbers<[1], [0], [0], [1], [0, 0, 1, 1], [], []>} : vector<8x128xbf16>, vector<128x128xbf16>, vector<8x128xf32> -> vector<8x128xf32>
    %94 = vector.broadcast %6 : vector<1x128xf32> to vector<8x128xf32>
    %95 = arith.addf %93, %94 : vector<8x128xf32>
    %96 = arith.addf %1, %95 : vector<8x128xf32>
    %97 = vector.extract_strided_slice %2 {offsets = [2, 0], sizes = [1, 128], strides = [1, 1]} : vector<6x128xf32> to vector<1x128xf32>
    %98 = vector.extract_strided_slice %2 {offsets = [3, 0], sizes = [1, 128], strides = [1, 1]} : vector<6x128xf32> to vector<1x128xf32>
    %cst_31 = arith.constant dense<0.000000e+00> : vector<8xf32>
    %99 = vector.multi_reduction <add>, %96, %cst_31 [1] : vector<8x128xf32> to vector<8xf32>
    %100 = vector.shape_cast %99 : vector<8xf32> to vector<8x1xf32>
    %cst_32 = arith.constant 1.280000e+02 : f32
    %101 = vector.broadcast %cst_32 : f32 to vector<8x1xf32>
    %102 = arith.divf %100, %101 : vector<8x1xf32>
    %103 = vector.broadcast %102 : vector<8x1xf32> to vector<8x128xf32>
    %104 = arith.subf %96, %103 : vector<8x128xf32>
    %105 = arith.mulf %104, %104 : vector<8x128xf32>
    %cst_33 = arith.constant dense<0.000000e+00> : vector<8xf32>
    %106 = vector.multi_reduction <add>, %105, %cst_33 [1] : vector<8x128xf32> to vector<8xf32>
    %107 = vector.shape_cast %106 : vector<8xf32> to vector<8x1xf32>
    %cst_34 = arith.constant 1.280000e+02 : f32
    %108 = vector.broadcast %cst_34 : f32 to vector<8x1xf32>
    %109 = arith.divf %107, %108 : vector<8x1xf32>
    %cst_35 = arith.constant 9.99999974E-6 : f32
    %110 = vector.broadcast %cst_35 : f32 to vector<8x1xf32>
    %111 = arith.addf %109, %110 : vector<8x1xf32>
    %112 = math.rsqrt %111 : vector<8x1xf32>
    %113 = vector.broadcast %112 : vector<8x1xf32> to vector<8x128xf32>
    %114 = arith.mulf %104, %113 : vector<8x128xf32>
    %115 = vector.broadcast %97 : vector<1x128xf32> to vector<8x128xf32>
    %116 = arith.mulf %114, %115 : vector<8x128xf32>
    %117 = vector.broadcast %98 : vector<1x128xf32> to vector<8x128xf32>
    %118 = arith.addf %116, %117 : vector<8x128xf32>
    %c0_36 = arith.constant 0 : index
    %c0_37 = arith.constant 0 : index
    %119 = vector.load %arg5[%c0_36, %c0_37] : memref<128x128xf32, #tpu.memory_space<vmem>>, vector<128x128xf32>
    %c0_38 = arith.constant 0 : index
    %c0_39 = arith.constant 0 : index
    %120 = vector.load %arg6[%c0_38, %c0_39] : memref<1x128xf32, #tpu.memory_space<vmem>>, vector<1x128xf32>
    %c0_40 = arith.constant 0 : index
    %c0_41 = arith.constant 0 : index
    %121 = vector.load %arg7[%c0_40, %c0_41] : memref<128x128xf32, #tpu.memory_space<vmem>>, vector<128x128xf32>
    %122 = vector.extract_strided_slice %2 {offsets = [1, 0], sizes = [1, 128], strides = [1, 1]} : vector<6x128xf32> to vector<1x128xf32>
    %123 = arith.truncf %118 : vector<8x128xf32> to vector<8x128xbf16>
    %124 = arith.truncf %119 : vector<128x128xf32> to vector<128x128xbf16>
    %cst_42 = arith.constant dense<0.000000e+00> : vector<8x128xf32>
    %125 = tpu.matmul %123, %124, %cst_42 {dimension_numbers = #tpu.dot_dimension_numbers<[1], [0], [0], [1], [0, 0, 1, 1], [], []>} : vector<8x128xbf16>, vector<128x128xbf16>, vector<8x128xf32> -> vector<8x128xf32>
    %126 = vector.broadcast %120 : vector<1x128xf32> to vector<8x128xf32>
    %127 = arith.addf %125, %126 : vector<8x128xf32>
    %cst_43 = arith.constant 0.000000e+00 : f32
    %128 = vector.broadcast %cst_43 : f32 to vector<8x128xf32>
    %129 = arith.maximumf %127, %128 : vector<8x128xf32>
    %130 = arith.truncf %129 : vector<8x128xf32> to vector<8x128xbf16>
    %131 = arith.truncf %121 : vector<128x128xf32> to vector<128x128xbf16>
    %cst_44 = arith.constant dense<0.000000e+00> : vector<8x128xf32>
    %132 = tpu.matmul %130, %131, %cst_44 {dimension_numbers = #tpu.dot_dimension_numbers<[1], [0], [0], [1], [0, 0, 1, 1], [], []>} : vector<8x128xbf16>, vector<128x128xbf16>, vector<8x128xf32> -> vector<8x128xf32>
    %133 = vector.broadcast %122 : vector<1x128xf32> to vector<8x128xf32>
    %134 = arith.addf %132, %133 : vector<8x128xf32>
    %135 = arith.addf %118, %134 : vector<8x128xf32>
    %136 = vector.extract_strided_slice %2 {offsets = [4, 0], sizes = [1, 128], strides = [1, 1]} : vector<6x128xf32> to vector<1x128xf32>
    %137 = vector.extract_strided_slice %2 {offsets = [5, 0], sizes = [1, 128], strides = [1, 1]} : vector<6x128xf32> to vector<1x128xf32>
    %cst_45 = arith.constant dense<0.000000e+00> : vector<8xf32>
    %138 = vector.multi_reduction <add>, %135, %cst_45 [1] : vector<8x128xf32> to vector<8xf32>
    %139 = vector.shape_cast %138 : vector<8xf32> to vector<8x1xf32>
    %cst_46 = arith.constant 1.280000e+02 : f32
    %140 = vector.broadcast %cst_46 : f32 to vector<8x1xf32>
    %141 = arith.divf %139, %140 : vector<8x1xf32>
    %142 = vector.broadcast %141 : vector<8x1xf32> to vector<8x128xf32>
    %143 = arith.subf %135, %142 : vector<8x128xf32>
    %144 = arith.mulf %143, %143 : vector<8x128xf32>
    %cst_47 = arith.constant dense<0.000000e+00> : vector<8xf32>
    %145 = vector.multi_reduction <add>, %144, %cst_47 [1] : vector<8x128xf32> to vector<8xf32>
    %146 = vector.shape_cast %145 : vector<8xf32> to vector<8x1xf32>
    %cst_48 = arith.constant 1.280000e+02 : f32
    %147 = vector.broadcast %cst_48 : f32 to vector<8x1xf32>
    %148 = arith.divf %146, %147 : vector<8x1xf32>
    %cst_49 = arith.constant 9.99999974E-6 : f32
    %149 = vector.broadcast %cst_49 : f32 to vector<8x1xf32>
    %150 = arith.addf %148, %149 : vector<8x1xf32>
    %151 = math.rsqrt %150 : vector<8x1xf32>
    %152 = vector.broadcast %151 : vector<8x1xf32> to vector<8x128xf32>
    %153 = arith.mulf %143, %152 : vector<8x128xf32>
    %154 = vector.broadcast %136 : vector<1x128xf32> to vector<8x128xf32>
    %155 = arith.mulf %153, %154 : vector<8x128xf32>
    %156 = vector.broadcast %137 : vector<1x128xf32> to vector<8x128xf32>
    %157 = arith.addf %155, %156 : vector<8x128xf32>
    %c0_50 = arith.constant 0 : index
    %c0_51 = arith.constant 0 : index
    %158 = vector.load %arg9[%c0_50, %c0_51] : memref<2x128xf32, #tpu.memory_space<vmem>>, vector<2x128xf32>
    %159 = vector.extract_strided_slice %158 {offsets = [0, 0], sizes = [1, 128], strides = [1, 1]} : vector<2x128xf32> to vector<1x128xf32>
    %160 = vector.extract_strided_slice %158 {offsets = [1, 0], sizes = [1, 128], strides = [1, 1]} : vector<2x128xf32> to vector<1x128xf32>
    %cst_52 = arith.constant dense<0.000000e+00> : vector<8xf32>
    %161 = vector.multi_reduction <add>, %157, %cst_52 [1] : vector<8x128xf32> to vector<8xf32>
    %162 = vector.shape_cast %161 : vector<8xf32> to vector<8x1xf32>
    %cst_53 = arith.constant 1.280000e+02 : f32
    %163 = vector.broadcast %cst_53 : f32 to vector<8x1xf32>
    %164 = arith.divf %162, %163 : vector<8x1xf32>
    %165 = vector.broadcast %164 : vector<8x1xf32> to vector<8x128xf32>
    %166 = arith.subf %157, %165 : vector<8x128xf32>
    %167 = arith.mulf %166, %166 : vector<8x128xf32>
    %cst_54 = arith.constant dense<0.000000e+00> : vector<8xf32>
    %168 = vector.multi_reduction <add>, %167, %cst_54 [1] : vector<8x128xf32> to vector<8xf32>
    %169 = vector.shape_cast %168 : vector<8xf32> to vector<8x1xf32>
    %cst_55 = arith.constant 1.280000e+02 : f32
    %170 = vector.broadcast %cst_55 : f32 to vector<8x1xf32>
    %171 = arith.divf %169, %170 : vector<8x1xf32>
    %cst_56 = arith.constant 9.99999974E-6 : f32
    %172 = vector.broadcast %cst_56 : f32 to vector<8x1xf32>
    %173 = arith.addf %171, %172 : vector<8x1xf32>
    %174 = math.rsqrt %173 : vector<8x1xf32>
    %175 = vector.broadcast %174 : vector<8x1xf32> to vector<8x128xf32>
    %176 = arith.mulf %166, %175 : vector<8x128xf32>
    %177 = vector.broadcast %159 : vector<1x128xf32> to vector<8x128xf32>
    %178 = arith.mulf %176, %177 : vector<8x128xf32>
    %179 = vector.broadcast %160 : vector<1x128xf32> to vector<8x128xf32>
    %180 = arith.addf %178, %179 : vector<8x128xf32>
    %c0_57 = arith.constant 0 : index
    %c0_58 = arith.constant 0 : index
    %c0_59 = arith.constant 0 : index
    %181 = vector.load %arg10[%c0_57, %c0_58, %c0_59] : memref<1x8x128xf32, #tpu.memory_space<vmem>>, vector<1x8x128xf32>
    %182 = vector.shape_cast %181 : vector<1x8x128xf32> to vector<8x128xf32>
    %183 = vector.shape_cast %180 : vector<8x128xf32> to vector<1x8x128xf32>
    tpu.vector_store %arg10[%c0_57, %c0_58, %c0_59], %183 {strides = array<i32>} : memref<1x8x128xf32, #tpu.memory_space<vmem>>, vector<1x8x128xf32>,
    return
  }
  func.func @transform_0(%arg0: i32) -> (i32, i32, i32) {
    %c0_i32 = arith.constant 0 : i32
    %c0_i32_0 = arith.constant 0 : i32
    %c0_i32_1 = arith.constant 0 : i32
    return %arg0, %c0_i32, %c0_i32_0 : i32, i32, i32
  }
  func.func @transform_1(%arg0: i32) -> (i32, i32) {
    %c0_i32 = arith.constant 0 : i32
    %c0_i32_0 = arith.constant 0 : i32
    %c0_i32_1 = arith.constant 0 : i32
    return %c0_i32, %c0_i32_0 : i32, i32
  }
  func.func @transform_2(%arg0: i32) -> (i32, i32) {
    %c0_i32 = arith.constant 0 : i32
    %c0_i32_0 = arith.constant 0 : i32
    %c0_i32_1 = arith.constant 0 : i32
    return %c0_i32, %c0_i32_0 : i32, i32
  }
  func.func @transform_3(%arg0: i32) -> (i32, i32) {
    %c0_i32 = arith.constant 0 : i32
    %c0_i32_0 = arith.constant 0 : i32
    %c0_i32_1 = arith.constant 0 : i32
    return %c0_i32, %c0_i32_0 : i32, i32
  }
  func.func @transform_4(%arg0: i32) -> (i32, i32) {
    %c0_i32 = arith.constant 0 : i32
    %c0_i32_0 = arith.constant 0 : i32
    %c0_i32_1 = arith.constant 0 : i32
    return %c0_i32, %c0_i32_0 : i32, i32
  }
  func.func @transform_5(%arg0: i32) -> (i32, i32) {
    %c0_i32 = arith.constant 0 : i32
    %c0_i32_0 = arith.constant 0 : i32
    %c0_i32_1 = arith.constant 0 : i32
    return %c0_i32, %c0_i32_0 : i32, i32
  }
  func.func @transform_6(%arg0: i32) -> (i32, i32) {
    %c0_i32 = arith.constant 0 : i32
    %c0_i32_0 = arith.constant 0 : i32
    %c0_i32_1 = arith.constant 0 : i32
    return %c0_i32, %c0_i32_0 : i32, i32
  }
  func.func @transform_7(%arg0: i32) -> (i32, i32) {
    %c0_i32 = arith.constant 0 : i32
    %c0_i32_0 = arith.constant 0 : i32
    %c0_i32_1 = arith.constant 0 : i32
    return %c0_i32, %c0_i32_0 : i32, i32
  }
  func.func @transform_8(%arg0: i32) -> (i32, i32) {
    %c0_i32 = arith.constant 0 : i32
    %c0_i32_0 = arith.constant 0 : i32
    %c0_i32_1 = arith.constant 0 : i32
    return %c0_i32, %c0_i32_0 : i32, i32
  }
  func.func @transform_9(%arg0: i32) -> (i32, i32, i32) {
    %c0_i32 = arith.constant 0 : i32
    %c0_i32_0 = arith.constant 0 : i32
    %c0_i32_1 = arith.constant 0 : i32
    return %arg0, %c0_i32, %c0_i32_0 : i32, i32, i32
  }
}

module attributes {stable_mosaic.version = 11 : i64} {
  func.func @_dec_layer_kernel(%arg0: i32, %arg1: memref<1x8x128xf32, #tpu.memory_space<vmem>>, %arg2: memref<1x8x128xf32, #tpu.memory_space<vmem>>, %arg3: memref<128x384xf32, #tpu.memory_space<vmem>>, %arg4: memref<1x384xf32, #tpu.memory_space<vmem>>, %arg5: memref<128x128xf32, #tpu.memory_space<vmem>>, %arg6: memref<128x128xf32, #tpu.memory_space<vmem>>, %arg7: memref<128x256xf32, #tpu.memory_space<vmem>>, %arg8: memref<1x256xf32, #tpu.memory_space<vmem>>, %arg9: memref<128x128xf32, #tpu.memory_space<vmem>>, %arg10: memref<128x128xf32, #tpu.memory_space<vmem>>, %arg11: memref<1x128xf32, #tpu.memory_space<vmem>>, %arg12: memref<128x128xf32, #tpu.memory_space<vmem>>, %arg13: memref<10x128xf32, #tpu.memory_space<vmem>>, %arg14: memref<1x8x128xf32, #tpu.memory_space<vmem>>) attributes {dimension_semantics = [#tpu.dimension_semantics<parallel>], iteration_bounds = array<i64: 2>, scalar_prefetch = 0 : i64, scratch_operands = 0 : i64, tpu.core_type = #tpu.core_type<tc>, window_params = [{transform_indices = @transform_0, window_bounds = array<i64: 1, 8, 128>}, {transform_indices = @transform_1, window_bounds = array<i64: 1, 8, 128>}, {pipeline_mode = #tpu.pipeline_mode<synchronous>, transform_indices = @transform_2, window_bounds = array<i64: 128, 384>}, {pipeline_mode = #tpu.pipeline_mode<synchronous>, transform_indices = @transform_3, window_bounds = array<i64: 1, 384>}, {pipeline_mode = #tpu.pipeline_mode<synchronous>, transform_indices = @transform_4, window_bounds = array<i64: 128, 128>}, {pipeline_mode = #tpu.pipeline_mode<synchronous>, transform_indices = @transform_5, window_bounds = array<i64: 128, 128>}, {pipeline_mode = #tpu.pipeline_mode<synchronous>, transform_indices = @transform_6, window_bounds = array<i64: 128, 256>}, {pipeline_mode = #tpu.pipeline_mode<synchronous>, transform_indices = @transform_7, window_bounds = array<i64: 1, 256>}, {pipeline_mode = #tpu.pipeline_mode<synchronous>, transform_indices = @transform_8, window_bounds = array<i64: 128, 128>}, {pipeline_mode = #tpu.pipeline_mode<synchronous>, transform_indices = @transform_9, window_bounds = array<i64: 128, 128>}, {pipeline_mode = #tpu.pipeline_mode<synchronous>, transform_indices = @transform_10, window_bounds = array<i64: 1, 128>}, {pipeline_mode = #tpu.pipeline_mode<synchronous>, transform_indices = @transform_11, window_bounds = array<i64: 128, 128>}, {pipeline_mode = #tpu.pipeline_mode<synchronous>, transform_indices = @transform_12, window_bounds = array<i64: 10, 128>}, {transform_indices = @transform_13, window_bounds = array<i64: 1, 8, 128>}]} {
    %c0 = arith.constant 0 : index
    %c0_0 = arith.constant 0 : index
    %c0_1 = arith.constant 0 : index
    %0 = vector.load %arg1[%c0, %c0_0, %c0_1] : memref<1x8x128xf32, #tpu.memory_space<vmem>>, vector<1x8x128xf32>
    %1 = vector.shape_cast %0 : vector<1x8x128xf32> to vector<8x128xf32>
    %c0_2 = arith.constant 0 : index
    %c0_3 = arith.constant 0 : index
    %c0_4 = arith.constant 0 : index
    %2 = vector.load %arg2[%c0_2, %c0_3, %c0_4] : memref<1x8x128xf32, #tpu.memory_space<vmem>>, vector<1x8x128xf32>
    %3 = vector.shape_cast %2 : vector<1x8x128xf32> to vector<8x128xf32>
    %c0_5 = arith.constant 0 : index
    %c0_6 = arith.constant 0 : index
    %4 = vector.load %arg13[%c0_5, %c0_6] : memref<10x128xf32, #tpu.memory_space<vmem>>, vector<10x128xf32>
    %c0_7 = arith.constant 0 : index
    %c0_8 = arith.constant 0 : index
    %5 = vector.load %arg3[%c0_7, %c0_8] : memref<128x384xf32, #tpu.memory_space<vmem>>, vector<128x384xf32>
    %c0_9 = arith.constant 0 : index
    %c0_10 = arith.constant 0 : index
    %6 = vector.load %arg4[%c0_9, %c0_10] : memref<1x384xf32, #tpu.memory_space<vmem>>, vector<1x384xf32>
    %c0_11 = arith.constant 0 : index
    %c0_12 = arith.constant 0 : index
    %7 = vector.load %arg5[%c0_11, %c0_12] : memref<128x128xf32, #tpu.memory_space<vmem>>, vector<128x128xf32>
    %8 = vector.extract_strided_slice %4 {offsets = [0, 0], sizes = [1, 128], strides = [1, 1]} : vector<10x128xf32> to vector<1x128xf32>
    %9 = arith.truncf %1 : vector<8x128xf32> to vector<8x128xbf16>
    %10 = arith.truncf %5 : vector<128x384xf32> to vector<128x384xbf16>
    %cst = arith.constant dense<0.000000e+00> : vector<8x384xf32>
    %11 = tpu.matmul %9, %10, %cst {dimension_numbers = #tpu.dot_dimension_numbers<[1], [0], [0], [1], [0, 0, 1, 1], [], []>} : vector<8x128xbf16>, vector<128x384xbf16>, vector<8x384xf32> -> vector<8x384xf32>
    %12 = vector.broadcast %6 : vector<1x384xf32> to vector<8x384xf32>
    %13 = arith.addf %11, %12 : vector<8x384xf32>
    %14 = vector.extract_strided_slice %13 {offsets = [0, 0], sizes = [8, 128], strides = [1, 1]} : vector<8x384xf32> to vector<8x128xf32>
    %15 = vector.extract_strided_slice %13 {offsets = [0, 128], sizes = [8, 128], strides = [1, 1]} : vector<8x384xf32> to vector<8x128xf32>
    %16 = vector.extract_strided_slice %13 {offsets = [0, 256], sizes = [8, 128], strides = [1, 1]} : vector<8x384xf32> to vector<8x128xf32>
    %17 = tpu.iota {dimensions = array<i32: 0>} : vector<8x8xi32>
    %18 = tpu.iota {dimensions = array<i32: 1>} : vector<8x8xi32>
    %19 = arith.cmpi sle, %18, %17 : vector<8x8xi32>
    %20 = arith.truncf %14 : vector<8x128xf32> to vector<8x128xbf16>
    %21 = arith.truncf %15 : vector<8x128xf32> to vector<8x128xbf16>
    %22 = arith.truncf %16 : vector<8x128xf32> to vector<8x128xbf16>
    %23 = vector.extract_strided_slice %20 {offsets = [0, 0], sizes = [8, 32], strides = [1, 1]} : vector<8x128xbf16> to vector<8x32xbf16>
    %24 = vector.extract_strided_slice %21 {offsets = [0, 0], sizes = [8, 32], strides = [1, 1]} : vector<8x128xbf16> to vector<8x32xbf16>
    %cst_13 = arith.constant dense<0.000000e+00> : vector<8x8xf32>
    %25 = tpu.matmul %23, %24, %cst_13 {dimension_numbers = #tpu.dot_dimension_numbers<[1], [1], [0], [0], [0, 0, 1, 0], [], []>} : vector<8x32xbf16>, vector<8x32xbf16>, vector<8x8xf32> -> vector<8x8xf32>
    %cst_14 = arith.constant 0.176776692 : f32
    %26 = vector.broadcast %cst_14 : f32 to vector<8x8xf32>
    %27 = arith.mulf %25, %26 : vector<8x8xf32>
    %cst_15 = arith.constant -1.000000e+30 : f32
    %28 = vector.broadcast %cst_15 : f32 to vector<8x8xf32>
    %29 = arith.select %19, %27, %28 : vector<8x8xi1>, vector<8x8xf32>
    %cst_16 = arith.constant dense<0xFF800000> : vector<8xf32>
    %30 = vector.multi_reduction <maximumf>, %29, %cst_16 [1] : vector<8x8xf32> to vector<8xf32>
    %31 = vector.shape_cast %30 : vector<8xf32> to vector<8x1xf32>
    %32 = vector.broadcast %31 : vector<8x1xf32> to vector<8x8xf32>
    %33 = arith.subf %29, %32 : vector<8x8xf32>
    %34 = math.exp %33 : vector<8x8xf32>
    %cst_17 = arith.constant dense<0.000000e+00> : vector<8xf32>
    %35 = vector.multi_reduction <add>, %34, %cst_17 [1] : vector<8x8xf32> to vector<8xf32>
    %36 = vector.shape_cast %35 : vector<8xf32> to vector<8x1xf32>
    %37 = tpu.reciprocal %36 {approx = true} : vector<8x1xf32> -> vector<8x1xf32>
    %38 = vector.broadcast %37 : vector<8x1xf32> to vector<8x8xf32>
    %39 = arith.mulf %34, %38 : vector<8x8xf32>
    %40 = arith.truncf %39 : vector<8x8xf32> to vector<8x8xbf16>
    %41 = vector.extract_strided_slice %22 {offsets = [0, 0], sizes = [8, 32], strides = [1, 1]} : vector<8x128xbf16> to vector<8x32xbf16>
    %cst_18 = arith.constant dense<0.000000e+00> : vector<8x32xf32>
    %42 = tpu.matmul %40, %41, %cst_18 {dimension_numbers = #tpu.dot_dimension_numbers<[1], [0], [0], [1], [0, 0, 1, 1], [], []>} : vector<8x8xbf16>, vector<8x32xbf16>, vector<8x32xf32> -> vector<8x32xf32>
    %43 = vector.extract_strided_slice %20 {offsets = [0, 32], sizes = [8, 32], strides = [1, 1]} : vector<8x128xbf16> to vector<8x32xbf16>
    %44 = vector.extract_strided_slice %21 {offsets = [0, 32], sizes = [8, 32], strides = [1, 1]} : vector<8x128xbf16> to vector<8x32xbf16>
    %cst_19 = arith.constant dense<0.000000e+00> : vector<8x8xf32>
    %45 = tpu.matmul %43, %44, %cst_19 {dimension_numbers = #tpu.dot_dimension_numbers<[1], [1], [0], [0], [0, 0, 1, 0], [], []>} : vector<8x32xbf16>, vector<8x32xbf16>, vector<8x8xf32> -> vector<8x8xf32>
    %cst_20 = arith.constant 0.176776692 : f32
    %46 = vector.broadcast %cst_20 : f32 to vector<8x8xf32>
    %47 = arith.mulf %45, %46 : vector<8x8xf32>
    %cst_21 = arith.constant -1.000000e+30 : f32
    %48 = vector.broadcast %cst_21 : f32 to vector<8x8xf32>
    %49 = arith.select %19, %47, %48 : vector<8x8xi1>, vector<8x8xf32>
    %cst_22 = arith.constant dense<0xFF800000> : vector<8xf32>
    %50 = vector.multi_reduction <maximumf>, %49, %cst_22 [1] : vector<8x8xf32> to vector<8xf32>
    %51 = vector.shape_cast %50 : vector<8xf32> to vector<8x1xf32>
    %52 = vector.broadcast %51 : vector<8x1xf32> to vector<8x8xf32>
    %53 = arith.subf %49, %52 : vector<8x8xf32>
    %54 = math.exp %53 : vector<8x8xf32>
    %cst_23 = arith.constant dense<0.000000e+00> : vector<8xf32>
    %55 = vector.multi_reduction <add>, %54, %cst_23 [1] : vector<8x8xf32> to vector<8xf32>
    %56 = vector.shape_cast %55 : vector<8xf32> to vector<8x1xf32>
    %57 = tpu.reciprocal %56 {approx = true} : vector<8x1xf32> -> vector<8x1xf32>
    %58 = vector.broadcast %57 : vector<8x1xf32> to vector<8x8xf32>
    %59 = arith.mulf %54, %58 : vector<8x8xf32>
    %60 = arith.truncf %59 : vector<8x8xf32> to vector<8x8xbf16>
    %61 = vector.extract_strided_slice %22 {offsets = [0, 32], sizes = [8, 32], strides = [1, 1]} : vector<8x128xbf16> to vector<8x32xbf16>
    %cst_24 = arith.constant dense<0.000000e+00> : vector<8x32xf32>
    %62 = tpu.matmul %60, %61, %cst_24 {dimension_numbers = #tpu.dot_dimension_numbers<[1], [0], [0], [1], [0, 0, 1, 1], [], []>} : vector<8x8xbf16>, vector<8x32xbf16>, vector<8x32xf32> -> vector<8x32xf32>
    %63 = vector.extract_strided_slice %20 {offsets = [0, 64], sizes = [8, 32], strides = [1, 1]} : vector<8x128xbf16> to vector<8x32xbf16>
    %64 = vector.extract_strided_slice %21 {offsets = [0, 64], sizes = [8, 32], strides = [1, 1]} : vector<8x128xbf16> to vector<8x32xbf16>
    %cst_25 = arith.constant dense<0.000000e+00> : vector<8x8xf32>
    %65 = tpu.matmul %63, %64, %cst_25 {dimension_numbers = #tpu.dot_dimension_numbers<[1], [1], [0], [0], [0, 0, 1, 0], [], []>} : vector<8x32xbf16>, vector<8x32xbf16>, vector<8x8xf32> -> vector<8x8xf32>
    %cst_26 = arith.constant 0.176776692 : f32
    %66 = vector.broadcast %cst_26 : f32 to vector<8x8xf32>
    %67 = arith.mulf %65, %66 : vector<8x8xf32>
    %cst_27 = arith.constant -1.000000e+30 : f32
    %68 = vector.broadcast %cst_27 : f32 to vector<8x8xf32>
    %69 = arith.select %19, %67, %68 : vector<8x8xi1>, vector<8x8xf32>
    %cst_28 = arith.constant dense<0xFF800000> : vector<8xf32>
    %70 = vector.multi_reduction <maximumf>, %69, %cst_28 [1] : vector<8x8xf32> to vector<8xf32>
    %71 = vector.shape_cast %70 : vector<8xf32> to vector<8x1xf32>
    %72 = vector.broadcast %71 : vector<8x1xf32> to vector<8x8xf32>
    %73 = arith.subf %69, %72 : vector<8x8xf32>
    %74 = math.exp %73 : vector<8x8xf32>
    %cst_29 = arith.constant dense<0.000000e+00> : vector<8xf32>
    %75 = vector.multi_reduction <add>, %74, %cst_29 [1] : vector<8x8xf32> to vector<8xf32>
    %76 = vector.shape_cast %75 : vector<8xf32> to vector<8x1xf32>
    %77 = tpu.reciprocal %76 {approx = true} : vector<8x1xf32> -> vector<8x1xf32>
    %78 = vector.broadcast %77 : vector<8x1xf32> to vector<8x8xf32>
    %79 = arith.mulf %74, %78 : vector<8x8xf32>
    %80 = arith.truncf %79 : vector<8x8xf32> to vector<8x8xbf16>
    %81 = vector.extract_strided_slice %22 {offsets = [0, 64], sizes = [8, 32], strides = [1, 1]} : vector<8x128xbf16> to vector<8x32xbf16>
    %cst_30 = arith.constant dense<0.000000e+00> : vector<8x32xf32>
    %82 = tpu.matmul %80, %81, %cst_30 {dimension_numbers = #tpu.dot_dimension_numbers<[1], [0], [0], [1], [0, 0, 1, 1], [], []>} : vector<8x8xbf16>, vector<8x32xbf16>, vector<8x32xf32> -> vector<8x32xf32>
    %83 = vector.extract_strided_slice %20 {offsets = [0, 96], sizes = [8, 32], strides = [1, 1]} : vector<8x128xbf16> to vector<8x32xbf16>
    %84 = vector.extract_strided_slice %21 {offsets = [0, 96], sizes = [8, 32], strides = [1, 1]} : vector<8x128xbf16> to vector<8x32xbf16>
    %cst_31 = arith.constant dense<0.000000e+00> : vector<8x8xf32>
    %85 = tpu.matmul %83, %84, %cst_31 {dimension_numbers = #tpu.dot_dimension_numbers<[1], [1], [0], [0], [0, 0, 1, 0], [], []>} : vector<8x32xbf16>, vector<8x32xbf16>, vector<8x8xf32> -> vector<8x8xf32>
    %cst_32 = arith.constant 0.176776692 : f32
    %86 = vector.broadcast %cst_32 : f32 to vector<8x8xf32>
    %87 = arith.mulf %85, %86 : vector<8x8xf32>
    %cst_33 = arith.constant -1.000000e+30 : f32
    %88 = vector.broadcast %cst_33 : f32 to vector<8x8xf32>
    %89 = arith.select %19, %87, %88 : vector<8x8xi1>, vector<8x8xf32>
    %cst_34 = arith.constant dense<0xFF800000> : vector<8xf32>
    %90 = vector.multi_reduction <maximumf>, %89, %cst_34 [1] : vector<8x8xf32> to vector<8xf32>
    %91 = vector.shape_cast %90 : vector<8xf32> to vector<8x1xf32>
    %92 = vector.broadcast %91 : vector<8x1xf32> to vector<8x8xf32>
    %93 = arith.subf %89, %92 : vector<8x8xf32>
    %94 = math.exp %93 : vector<8x8xf32>
    %cst_35 = arith.constant dense<0.000000e+00> : vector<8xf32>
    %95 = vector.multi_reduction <add>, %94, %cst_35 [1] : vector<8x8xf32> to vector<8xf32>
    %96 = vector.shape_cast %95 : vector<8xf32> to vector<8x1xf32>
    %97 = tpu.reciprocal %96 {approx = true} : vector<8x1xf32> -> vector<8x1xf32>
    %98 = vector.broadcast %97 : vector<8x1xf32> to vector<8x8xf32>
    %99 = arith.mulf %94, %98 : vector<8x8xf32>
    %100 = arith.truncf %99 : vector<8x8xf32> to vector<8x8xbf16>
    %101 = vector.extract_strided_slice %22 {offsets = [0, 96], sizes = [8, 32], strides = [1, 1]} : vector<8x128xbf16> to vector<8x32xbf16>
    %cst_36 = arith.constant dense<0.000000e+00> : vector<8x32xf32>
    %102 = tpu.matmul %100, %101, %cst_36 {dimension_numbers = #tpu.dot_dimension_numbers<[1], [0], [0], [1], [0, 0, 1, 1], [], []>} : vector<8x8xbf16>, vector<8x32xbf16>, vector<8x32xf32> -> vector<8x32xf32>
    %103 = tpu.concatenate %42, %62, %82, %102 in 1 : vector<8x32xf32>, vector<8x32xf32>, vector<8x32xf32>, vector<8x32xf32> -> vector<8x128xf32>
    %104 = arith.truncf %103 : vector<8x128xf32> to vector<8x128xbf16>
    %105 = arith.truncf %7 : vector<128x128xf32> to vector<128x128xbf16>
    %cst_37 = arith.constant dense<0.000000e+00> : vector<8x128xf32>
    %106 = tpu.matmul %104, %105, %cst_37 {dimension_numbers = #tpu.dot_dimension_numbers<[1], [0], [0], [1], [0, 0, 1, 1], [], []>} : vector<8x128xbf16>, vector<128x128xbf16>, vector<8x128xf32> -> vector<8x128xf32>
    %107 = vector.broadcast %8 : vector<1x128xf32> to vector<8x128xf32>
    %108 = arith.addf %106, %107 : vector<8x128xf32>
    %109 = arith.addf %1, %108 : vector<8x128xf32>
    %110 = vector.extract_strided_slice %4 {offsets = [4, 0], sizes = [1, 128], strides = [1, 1]} : vector<10x128xf32> to vector<1x128xf32>
    %111 = vector.extract_strided_slice %4 {offsets = [5, 0], sizes = [1, 128], strides = [1, 1]} : vector<10x128xf32> to vector<1x128xf32>
    %cst_38 = arith.constant dense<0.000000e+00> : vector<8xf32>
    %112 = vector.multi_reduction <add>, %109, %cst_38 [1] : vector<8x128xf32> to vector<8xf32>
    %113 = vector.shape_cast %112 : vector<8xf32> to vector<8x1xf32>
    %cst_39 = arith.constant 1.280000e+02 : f32
    %114 = vector.broadcast %cst_39 : f32 to vector<8x1xf32>
    %115 = arith.divf %113, %114 : vector<8x1xf32>
    %116 = vector.broadcast %115 : vector<8x1xf32> to vector<8x128xf32>
    %117 = arith.subf %109, %116 : vector<8x128xf32>
    %118 = arith.mulf %117, %117 : vector<8x128xf32>
    %cst_40 = arith.constant dense<0.000000e+00> : vector<8xf32>
    %119 = vector.multi_reduction <add>, %118, %cst_40 [1] : vector<8x128xf32> to vector<8xf32>
    %120 = vector.shape_cast %119 : vector<8xf32> to vector<8x1xf32>
    %cst_41 = arith.constant 1.280000e+02 : f32
    %121 = vector.broadcast %cst_41 : f32 to vector<8x1xf32>
    %122 = arith.divf %120, %121 : vector<8x1xf32>
    %cst_42 = arith.constant 9.99999974E-6 : f32
    %123 = vector.broadcast %cst_42 : f32 to vector<8x1xf32>
    %124 = arith.addf %122, %123 : vector<8x1xf32>
    %125 = math.rsqrt %124 : vector<8x1xf32>
    %126 = vector.broadcast %125 : vector<8x1xf32> to vector<8x128xf32>
    %127 = arith.mulf %117, %126 : vector<8x128xf32>
    %128 = vector.broadcast %110 : vector<1x128xf32> to vector<8x128xf32>
    %129 = arith.mulf %127, %128 : vector<8x128xf32>
    %130 = vector.broadcast %111 : vector<1x128xf32> to vector<8x128xf32>
    %131 = arith.addf %129, %130 : vector<8x128xf32>
    %132 = arith.truncf %131 : vector<8x128xf32> to vector<8x128xbf16>
    %c0_43 = arith.constant 0 : index
    %c0_44 = arith.constant 0 : index
    %133 = vector.load %arg6[%c0_43, %c0_44] : memref<128x128xf32, #tpu.memory_space<vmem>>, vector<128x128xf32>
    %134 = arith.truncf %133 : vector<128x128xf32> to vector<128x128xbf16>
    %cst_45 = arith.constant dense<0.000000e+00> : vector<8x128xf32>
    %135 = tpu.matmul %132, %134, %cst_45 {dimension_numbers = #tpu.dot_dimension_numbers<[1], [0], [0], [1], [0, 0, 1, 1], [], []>} : vector<8x128xbf16>, vector<128x128xbf16>, vector<8x128xf32> -> vector<8x128xf32>
    %136 = vector.extract_strided_slice %4 {offsets = [1, 0], sizes = [1, 128], strides = [1, 1]} : vector<10x128xf32> to vector<1x128xf32>
    %137 = vector.broadcast %136 : vector<1x128xf32> to vector<8x128xf32>
    %138 = arith.addf %135, %137 : vector<8x128xf32>
    %139 = arith.truncf %3 : vector<8x128xf32> to vector<8x128xbf16>
    %c0_46 = arith.constant 0 : index
    %c0_47 = arith.constant 0 : index
    %140 = vector.load %arg7[%c0_46, %c0_47] : memref<128x256xf32, #tpu.memory_space<vmem>>, vector<128x256xf32>
    %141 = arith.truncf %140 : vector<128x256xf32> to vector<128x256xbf16>
    %cst_48 = arith.constant dense<0.000000e+00> : vector<8x256xf32>
    %142 = tpu.matmul %139, %141, %cst_48 {dimension_numbers = #tpu.dot_dimension_numbers<[1], [0], [0], [1], [0, 0, 1, 1], [], []>} : vector<8x128xbf16>, vector<128x256xbf16>, vector<8x256xf32> -> vector<8x256xf32>
    %c0_49 = arith.constant 0 : index
    %c0_50 = arith.constant 0 : index
    %143 = vector.load %arg8[%c0_49, %c0_50] : memref<1x256xf32, #tpu.memory_space<vmem>>, vector<1x256xf32>
    %144 = vector.broadcast %143 : vector<1x256xf32> to vector<8x256xf32>
    %145 = arith.addf %142, %144 : vector<8x256xf32>
    %146 = vector.extract_strided_slice %145 {offsets = [0, 0], sizes = [8, 128], strides = [1, 1]} : vector<8x256xf32> to vector<8x128xf32>
    %147 = vector.extract_strided_slice %145 {offsets = [0, 128], sizes = [8, 128], strides = [1, 1]} : vector<8x256xf32> to vector<8x128xf32>
    %c0_51 = arith.constant 0 : index
    %c0_52 = arith.constant 0 : index
    %148 = vector.load %arg9[%c0_51, %c0_52] : memref<128x128xf32, #tpu.memory_space<vmem>>, vector<128x128xf32>
    %149 = vector.extract_strided_slice %4 {offsets = [2, 0], sizes = [1, 128], strides = [1, 1]} : vector<10x128xf32> to vector<1x128xf32>
    %150 = arith.truncf %138 : vector<8x128xf32> to vector<8x128xbf16>
    %151 = arith.truncf %146 : vector<8x128xf32> to vector<8x128xbf16>
    %152 = arith.truncf %147 : vector<8x128xf32> to vector<8x128xbf16>
    %153 = vector.extract_strided_slice %150 {offsets = [0, 0], sizes = [8, 32], strides = [1, 1]} : vector<8x128xbf16> to vector<8x32xbf16>
    %154 = vector.extract_strided_slice %151 {offsets = [0, 0], sizes = [8, 32], strides = [1, 1]} : vector<8x128xbf16> to vector<8x32xbf16>
    %cst_53 = arith.constant dense<0.000000e+00> : vector<8x8xf32>
    %155 = tpu.matmul %153, %154, %cst_53 {dimension_numbers = #tpu.dot_dimension_numbers<[1], [1], [0], [0], [0, 0, 1, 0], [], []>} : vector<8x32xbf16>, vector<8x32xbf16>, vector<8x8xf32> -> vector<8x8xf32>
    %cst_54 = arith.constant 0.176776692 : f32
    %156 = vector.broadcast %cst_54 : f32 to vector<8x8xf32>
    %157 = arith.mulf %155, %156 : vector<8x8xf32>
    %cst_55 = arith.constant dense<0xFF800000> : vector<8xf32>
    %158 = vector.multi_reduction <maximumf>, %157, %cst_55 [1] : vector<8x8xf32> to vector<8xf32>
    %159 = vector.shape_cast %158 : vector<8xf32> to vector<8x1xf32>
    %160 = vector.broadcast %159 : vector<8x1xf32> to vector<8x8xf32>
    %161 = arith.subf %157, %160 : vector<8x8xf32>
    %162 = math.exp %161 : vector<8x8xf32>
    %cst_56 = arith.constant dense<0.000000e+00> : vector<8xf32>
    %163 = vector.multi_reduction <add>, %162, %cst_56 [1] : vector<8x8xf32> to vector<8xf32>
    %164 = vector.shape_cast %163 : vector<8xf32> to vector<8x1xf32>
    %165 = tpu.reciprocal %164 {approx = true} : vector<8x1xf32> -> vector<8x1xf32>
    %166 = vector.broadcast %165 : vector<8x1xf32> to vector<8x8xf32>
    %167 = arith.mulf %162, %166 : vector<8x8xf32>
    %168 = arith.truncf %167 : vector<8x8xf32> to vector<8x8xbf16>
    %169 = vector.extract_strided_slice %152 {offsets = [0, 0], sizes = [8, 32], strides = [1, 1]} : vector<8x128xbf16> to vector<8x32xbf16>
    %cst_57 = arith.constant dense<0.000000e+00> : vector<8x32xf32>
    %170 = tpu.matmul %168, %169, %cst_57 {dimension_numbers = #tpu.dot_dimension_numbers<[1], [0], [0], [1], [0, 0, 1, 1], [], []>} : vector<8x8xbf16>, vector<8x32xbf16>, vector<8x32xf32> -> vector<8x32xf32>
    %171 = vector.extract_strided_slice %150 {offsets = [0, 32], sizes = [8, 32], strides = [1, 1]} : vector<8x128xbf16> to vector<8x32xbf16>
    %172 = vector.extract_strided_slice %151 {offsets = [0, 32], sizes = [8, 32], strides = [1, 1]} : vector<8x128xbf16> to vector<8x32xbf16>
    %cst_58 = arith.constant dense<0.000000e+00> : vector<8x8xf32>
    %173 = tpu.matmul %171, %172, %cst_58 {dimension_numbers = #tpu.dot_dimension_numbers<[1], [1], [0], [0], [0, 0, 1, 0], [], []>} : vector<8x32xbf16>, vector<8x32xbf16>, vector<8x8xf32> -> vector<8x8xf32>
    %cst_59 = arith.constant 0.176776692 : f32
    %174 = vector.broadcast %cst_59 : f32 to vector<8x8xf32>
    %175 = arith.mulf %173, %174 : vector<8x8xf32>
    %cst_60 = arith.constant dense<0xFF800000> : vector<8xf32>
    %176 = vector.multi_reduction <maximumf>, %175, %cst_60 [1] : vector<8x8xf32> to vector<8xf32>
    %177 = vector.shape_cast %176 : vector<8xf32> to vector<8x1xf32>
    %178 = vector.broadcast %177 : vector<8x1xf32> to vector<8x8xf32>
    %179 = arith.subf %175, %178 : vector<8x8xf32>
    %180 = math.exp %179 : vector<8x8xf32>
    %cst_61 = arith.constant dense<0.000000e+00> : vector<8xf32>
    %181 = vector.multi_reduction <add>, %180, %cst_61 [1] : vector<8x8xf32> to vector<8xf32>
    %182 = vector.shape_cast %181 : vector<8xf32> to vector<8x1xf32>
    %183 = tpu.reciprocal %182 {approx = true} : vector<8x1xf32> -> vector<8x1xf32>
    %184 = vector.broadcast %183 : vector<8x1xf32> to vector<8x8xf32>
    %185 = arith.mulf %180, %184 : vector<8x8xf32>
    %186 = arith.truncf %185 : vector<8x8xf32> to vector<8x8xbf16>
    %187 = vector.extract_strided_slice %152 {offsets = [0, 32], sizes = [8, 32], strides = [1, 1]} : vector<8x128xbf16> to vector<8x32xbf16>
    %cst_62 = arith.constant dense<0.000000e+00> : vector<8x32xf32>
    %188 = tpu.matmul %186, %187, %cst_62 {dimension_numbers = #tpu.dot_dimension_numbers<[1], [0], [0], [1], [0, 0, 1, 1], [], []>} : vector<8x8xbf16>, vector<8x32xbf16>, vector<8x32xf32> -> vector<8x32xf32>
    %189 = vector.extract_strided_slice %150 {offsets = [0, 64], sizes = [8, 32], strides = [1, 1]} : vector<8x128xbf16> to vector<8x32xbf16>
    %190 = vector.extract_strided_slice %151 {offsets = [0, 64], sizes = [8, 32], strides = [1, 1]} : vector<8x128xbf16> to vector<8x32xbf16>
    %cst_63 = arith.constant dense<0.000000e+00> : vector<8x8xf32>
    %191 = tpu.matmul %189, %190, %cst_63 {dimension_numbers = #tpu.dot_dimension_numbers<[1], [1], [0], [0], [0, 0, 1, 0], [], []>} : vector<8x32xbf16>, vector<8x32xbf16>, vector<8x8xf32> -> vector<8x8xf32>
    %cst_64 = arith.constant 0.176776692 : f32
    %192 = vector.broadcast %cst_64 : f32 to vector<8x8xf32>
    %193 = arith.mulf %191, %192 : vector<8x8xf32>
    %cst_65 = arith.constant dense<0xFF800000> : vector<8xf32>
    %194 = vector.multi_reduction <maximumf>, %193, %cst_65 [1] : vector<8x8xf32> to vector<8xf32>
    %195 = vector.shape_cast %194 : vector<8xf32> to vector<8x1xf32>
    %196 = vector.broadcast %195 : vector<8x1xf32> to vector<8x8xf32>
    %197 = arith.subf %193, %196 : vector<8x8xf32>
    %198 = math.exp %197 : vector<8x8xf32>
    %cst_66 = arith.constant dense<0.000000e+00> : vector<8xf32>
    %199 = vector.multi_reduction <add>, %198, %cst_66 [1] : vector<8x8xf32> to vector<8xf32>
    %200 = vector.shape_cast %199 : vector<8xf32> to vector<8x1xf32>
    %201 = tpu.reciprocal %200 {approx = true} : vector<8x1xf32> -> vector<8x1xf32>
    %202 = vector.broadcast %201 : vector<8x1xf32> to vector<8x8xf32>
    %203 = arith.mulf %198, %202 : vector<8x8xf32>
    %204 = arith.truncf %203 : vector<8x8xf32> to vector<8x8xbf16>
    %205 = vector.extract_strided_slice %152 {offsets = [0, 64], sizes = [8, 32], strides = [1, 1]} : vector<8x128xbf16> to vector<8x32xbf16>
    %cst_67 = arith.constant dense<0.000000e+00> : vector<8x32xf32>
    %206 = tpu.matmul %204, %205, %cst_67 {dimension_numbers = #tpu.dot_dimension_numbers<[1], [0], [0], [1], [0, 0, 1, 1], [], []>} : vector<8x8xbf16>, vector<8x32xbf16>, vector<8x32xf32> -> vector<8x32xf32>
    %207 = vector.extract_strided_slice %150 {offsets = [0, 96], sizes = [8, 32], strides = [1, 1]} : vector<8x128xbf16> to vector<8x32xbf16>
    %208 = vector.extract_strided_slice %151 {offsets = [0, 96], sizes = [8, 32], strides = [1, 1]} : vector<8x128xbf16> to vector<8x32xbf16>
    %cst_68 = arith.constant dense<0.000000e+00> : vector<8x8xf32>
    %209 = tpu.matmul %207, %208, %cst_68 {dimension_numbers = #tpu.dot_dimension_numbers<[1], [1], [0], [0], [0, 0, 1, 0], [], []>} : vector<8x32xbf16>, vector<8x32xbf16>, vector<8x8xf32> -> vector<8x8xf32>
    %cst_69 = arith.constant 0.176776692 : f32
    %210 = vector.broadcast %cst_69 : f32 to vector<8x8xf32>
    %211 = arith.mulf %209, %210 : vector<8x8xf32>
    %cst_70 = arith.constant dense<0xFF800000> : vector<8xf32>
    %212 = vector.multi_reduction <maximumf>, %211, %cst_70 [1] : vector<8x8xf32> to vector<8xf32>
    %213 = vector.shape_cast %212 : vector<8xf32> to vector<8x1xf32>
    %214 = vector.broadcast %213 : vector<8x1xf32> to vector<8x8xf32>
    %215 = arith.subf %211, %214 : vector<8x8xf32>
    %216 = math.exp %215 : vector<8x8xf32>
    %cst_71 = arith.constant dense<0.000000e+00> : vector<8xf32>
    %217 = vector.multi_reduction <add>, %216, %cst_71 [1] : vector<8x8xf32> to vector<8xf32>
    %218 = vector.shape_cast %217 : vector<8xf32> to vector<8x1xf32>
    %219 = tpu.reciprocal %218 {approx = true} : vector<8x1xf32> -> vector<8x1xf32>
    %220 = vector.broadcast %219 : vector<8x1xf32> to vector<8x8xf32>
    %221 = arith.mulf %216, %220 : vector<8x8xf32>
    %222 = arith.truncf %221 : vector<8x8xf32> to vector<8x8xbf16>
    %223 = vector.extract_strided_slice %152 {offsets = [0, 96], sizes = [8, 32], strides = [1, 1]} : vector<8x128xbf16> to vector<8x32xbf16>
    %cst_72 = arith.constant dense<0.000000e+00> : vector<8x32xf32>
    %224 = tpu.matmul %222, %223, %cst_72 {dimension_numbers = #tpu.dot_dimension_numbers<[1], [0], [0], [1], [0, 0, 1, 1], [], []>} : vector<8x8xbf16>, vector<8x32xbf16>, vector<8x32xf32> -> vector<8x32xf32>
    %225 = tpu.concatenate %170, %188, %206, %224 in 1 : vector<8x32xf32>, vector<8x32xf32>, vector<8x32xf32>, vector<8x32xf32> -> vector<8x128xf32>
    %226 = arith.truncf %225 : vector<8x128xf32> to vector<8x128xbf16>
    %227 = arith.truncf %148 : vector<128x128xf32> to vector<128x128xbf16>
    %cst_73 = arith.constant dense<0.000000e+00> : vector<8x128xf32>
    %228 = tpu.matmul %226, %227, %cst_73 {dimension_numbers = #tpu.dot_dimension_numbers<[1], [0], [0], [1], [0, 0, 1, 1], [], []>} : vector<8x128xbf16>, vector<128x128xbf16>, vector<8x128xf32> -> vector<8x128xf32>
    %229 = vector.broadcast %149 : vector<1x128xf32> to vector<8x128xf32>
    %230 = arith.addf %228, %229 : vector<8x128xf32>
    %231 = arith.addf %131, %230 : vector<8x128xf32>
    %232 = vector.extract_strided_slice %4 {offsets = [6, 0], sizes = [1, 128], strides = [1, 1]} : vector<10x128xf32> to vector<1x128xf32>
    %233 = vector.extract_strided_slice %4 {offsets = [7, 0], sizes = [1, 128], strides = [1, 1]} : vector<10x128xf32> to vector<1x128xf32>
    %cst_74 = arith.constant dense<0.000000e+00> : vector<8xf32>
    %234 = vector.multi_reduction <add>, %231, %cst_74 [1] : vector<8x128xf32> to vector<8xf32>
    %235 = vector.shape_cast %234 : vector<8xf32> to vector<8x1xf32>
    %cst_75 = arith.constant 1.280000e+02 : f32
    %236 = vector.broadcast %cst_75 : f32 to vector<8x1xf32>
    %237 = arith.divf %235, %236 : vector<8x1xf32>
    %238 = vector.broadcast %237 : vector<8x1xf32> to vector<8x128xf32>
    %239 = arith.subf %231, %238 : vector<8x128xf32>
    %240 = arith.mulf %239, %239 : vector<8x128xf32>
    %cst_76 = arith.constant dense<0.000000e+00> : vector<8xf32>
    %241 = vector.multi_reduction <add>, %240, %cst_76 [1] : vector<8x128xf32> to vector<8xf32>
    %242 = vector.shape_cast %241 : vector<8xf32> to vector<8x1xf32>
    %cst_77 = arith.constant 1.280000e+02 : f32
    %243 = vector.broadcast %cst_77 : f32 to vector<8x1xf32>
    %244 = arith.divf %242, %243 : vector<8x1xf32>
    %cst_78 = arith.constant 9.99999974E-6 : f32
    %245 = vector.broadcast %cst_78 : f32 to vector<8x1xf32>
    %246 = arith.addf %244, %245 : vector<8x1xf32>
    %247 = math.rsqrt %246 : vector<8x1xf32>
    %248 = vector.broadcast %247 : vector<8x1xf32> to vector<8x128xf32>
    %249 = arith.mulf %239, %248 : vector<8x128xf32>
    %250 = vector.broadcast %232 : vector<1x128xf32> to vector<8x128xf32>
    %251 = arith.mulf %249, %250 : vector<8x128xf32>
    %252 = vector.broadcast %233 : vector<1x128xf32> to vector<8x128xf32>
    %253 = arith.addf %251, %252 : vector<8x128xf32>
    %c0_79 = arith.constant 0 : index
    %c0_80 = arith.constant 0 : index
    %254 = vector.load %arg10[%c0_79, %c0_80] : memref<128x128xf32, #tpu.memory_space<vmem>>, vector<128x128xf32>
    %c0_81 = arith.constant 0 : index
    %c0_82 = arith.constant 0 : index
    %255 = vector.load %arg11[%c0_81, %c0_82] : memref<1x128xf32, #tpu.memory_space<vmem>>, vector<1x128xf32>
    %c0_83 = arith.constant 0 : index
    %c0_84 = arith.constant 0 : index
    %256 = vector.load %arg12[%c0_83, %c0_84] : memref<128x128xf32, #tpu.memory_space<vmem>>, vector<128x128xf32>
    %257 = vector.extract_strided_slice %4 {offsets = [3, 0], sizes = [1, 128], strides = [1, 1]} : vector<10x128xf32> to vector<1x128xf32>
    %258 = arith.truncf %253 : vector<8x128xf32> to vector<8x128xbf16>
    %259 = arith.truncf %254 : vector<128x128xf32> to vector<128x128xbf16>
    %cst_85 = arith.constant dense<0.000000e+00> : vector<8x128xf32>
    %260 = tpu.matmul %258, %259, %cst_85 {dimension_numbers = #tpu.dot_dimension_numbers<[1], [0], [0], [1], [0, 0, 1, 1], [], []>} : vector<8x128xbf16>, vector<128x128xbf16>, vector<8x128xf32> -> vector<8x128xf32>
    %261 = vector.broadcast %255 : vector<1x128xf32> to vector<8x128xf32>
    %262 = arith.addf %260, %261 : vector<8x128xf32>
    %cst_86 = arith.constant 0.000000e+00 : f32
    %263 = vector.broadcast %cst_86 : f32 to vector<8x128xf32>
    %264 = arith.maximumf %262, %263 : vector<8x128xf32>
    %265 = arith.truncf %264 : vector<8x128xf32> to vector<8x128xbf16>
    %266 = arith.truncf %256 : vector<128x128xf32> to vector<128x128xbf16>
    %cst_87 = arith.constant dense<0.000000e+00> : vector<8x128xf32>
    %267 = tpu.matmul %265, %266, %cst_87 {dimension_numbers = #tpu.dot_dimension_numbers<[1], [0], [0], [1], [0, 0, 1, 1], [], []>} : vector<8x128xbf16>, vector<128x128xbf16>, vector<8x128xf32> -> vector<8x128xf32>
    %268 = vector.broadcast %257 : vector<1x128xf32> to vector<8x128xf32>
    %269 = arith.addf %267, %268 : vector<8x128xf32>
    %270 = arith.addf %253, %269 : vector<8x128xf32>
    %271 = vector.extract_strided_slice %4 {offsets = [8, 0], sizes = [1, 128], strides = [1, 1]} : vector<10x128xf32> to vector<1x128xf32>
    %272 = vector.extract_strided_slice %4 {offsets = [9, 0], sizes = [1, 128], strides = [1, 1]} : vector<10x128xf32> to vector<1x128xf32>
    %cst_88 = arith.constant dense<0.000000e+00> : vector<8xf32>
    %273 = vector.multi_reduction <add>, %270, %cst_88 [1] : vector<8x128xf32> to vector<8xf32>
    %274 = vector.shape_cast %273 : vector<8xf32> to vector<8x1xf32>
    %cst_89 = arith.constant 1.280000e+02 : f32
    %275 = vector.broadcast %cst_89 : f32 to vector<8x1xf32>
    %276 = arith.divf %274, %275 : vector<8x1xf32>
    %277 = vector.broadcast %276 : vector<8x1xf32> to vector<8x128xf32>
    %278 = arith.subf %270, %277 : vector<8x128xf32>
    %279 = arith.mulf %278, %278 : vector<8x128xf32>
    %cst_90 = arith.constant dense<0.000000e+00> : vector<8xf32>
    %280 = vector.multi_reduction <add>, %279, %cst_90 [1] : vector<8x128xf32> to vector<8xf32>
    %281 = vector.shape_cast %280 : vector<8xf32> to vector<8x1xf32>
    %cst_91 = arith.constant 1.280000e+02 : f32
    %282 = vector.broadcast %cst_91 : f32 to vector<8x1xf32>
    %283 = arith.divf %281, %282 : vector<8x1xf32>
    %cst_92 = arith.constant 9.99999974E-6 : f32
    %284 = vector.broadcast %cst_92 : f32 to vector<8x1xf32>
    %285 = arith.addf %283, %284 : vector<8x1xf32>
    %286 = math.rsqrt %285 : vector<8x1xf32>
    %287 = vector.broadcast %286 : vector<8x1xf32> to vector<8x128xf32>
    %288 = arith.mulf %278, %287 : vector<8x128xf32>
    %289 = vector.broadcast %271 : vector<1x128xf32> to vector<8x128xf32>
    %290 = arith.mulf %288, %289 : vector<8x128xf32>
    %291 = vector.broadcast %272 : vector<1x128xf32> to vector<8x128xf32>
    %292 = arith.addf %290, %291 : vector<8x128xf32>
    %c0_93 = arith.constant 0 : index
    %c0_94 = arith.constant 0 : index
    %c0_95 = arith.constant 0 : index
    %293 = vector.load %arg14[%c0_93, %c0_94, %c0_95] : memref<1x8x128xf32, #tpu.memory_space<vmem>>, vector<1x8x128xf32>
    %294 = vector.shape_cast %293 : vector<1x8x128xf32> to vector<8x128xf32>
    %295 = vector.shape_cast %292 : vector<8x128xf32> to vector<1x8x128xf32>
    tpu.vector_store %arg14[%c0_93, %c0_94, %c0_95], %295 {strides = array<i32>} : memref<1x8x128xf32, #tpu.memory_space<vmem>>, vector<1x8x128xf32>,
    return
  }
  func.func @transform_0(%arg0: i32) -> (i32, i32, i32) {
    %c0_i32 = arith.constant 0 : i32
    %c0_i32_0 = arith.constant 0 : i32
    %c0_i32_1 = arith.constant 0 : i32
    return %arg0, %c0_i32, %c0_i32_0 : i32, i32, i32
  }
  func.func @transform_1(%arg0: i32) -> (i32, i32, i32) {
    %c0_i32 = arith.constant 0 : i32
    %c0_i32_0 = arith.constant 0 : i32
    %c0_i32_1 = arith.constant 0 : i32
    return %arg0, %c0_i32, %c0_i32_0 : i32, i32, i32
  }
  func.func @transform_2(%arg0: i32) -> (i32, i32) {
    %c0_i32 = arith.constant 0 : i32
    %c0_i32_0 = arith.constant 0 : i32
    %c0_i32_1 = arith.constant 0 : i32
    return %c0_i32, %c0_i32_0 : i32, i32
  }
  func.func @transform_3(%arg0: i32) -> (i32, i32) {
    %c0_i32 = arith.constant 0 : i32
    %c0_i32_0 = arith.constant 0 : i32
    %c0_i32_1 = arith.constant 0 : i32
    return %c0_i32, %c0_i32_0 : i32, i32
  }
  func.func @transform_4(%arg0: i32) -> (i32, i32) {
    %c0_i32 = arith.constant 0 : i32
    %c0_i32_0 = arith.constant 0 : i32
    %c0_i32_1 = arith.constant 0 : i32
    return %c0_i32, %c0_i32_0 : i32, i32
  }
  func.func @transform_5(%arg0: i32) -> (i32, i32) {
    %c0_i32 = arith.constant 0 : i32
    %c0_i32_0 = arith.constant 0 : i32
    %c0_i32_1 = arith.constant 0 : i32
    return %c0_i32, %c0_i32_0 : i32, i32
  }
  func.func @transform_6(%arg0: i32) -> (i32, i32) {
    %c0_i32 = arith.constant 0 : i32
    %c0_i32_0 = arith.constant 0 : i32
    %c0_i32_1 = arith.constant 0 : i32
    return %c0_i32, %c0_i32_0 : i32, i32
  }
  func.func @transform_7(%arg0: i32) -> (i32, i32) {
    %c0_i32 = arith.constant 0 : i32
    %c0_i32_0 = arith.constant 0 : i32
    %c0_i32_1 = arith.constant 0 : i32
    return %c0_i32, %c0_i32_0 : i32, i32
  }
  func.func @transform_8(%arg0: i32) -> (i32, i32) {
    %c0_i32 = arith.constant 0 : i32
    %c0_i32_0 = arith.constant 0 : i32
    %c0_i32_1 = arith.constant 0 : i32
    return %c0_i32, %c0_i32_0 : i32, i32
  }
  func.func @transform_9(%arg0: i32) -> (i32, i32) {
    %c0_i32 = arith.constant 0 : i32
    %c0_i32_0 = arith.constant 0 : i32
    %c0_i32_1 = arith.constant 0 : i32
    return %c0_i32, %c0_i32_0 : i32, i32
  }
  func.func @transform_10(%arg0: i32) -> (i32, i32) {
    %c0_i32 = arith.constant 0 : i32
    %c0_i32_0 = arith.constant 0 : i32
    %c0_i32_1 = arith.constant 0 : i32
    return %c0_i32, %c0_i32_0 : i32, i32
  }
  func.func @transform_11(%arg0: i32) -> (i32, i32) {
    %c0_i32 = arith.constant 0 : i32
    %c0_i32_0 = arith.constant 0 : i32
    %c0_i32_1 = arith.constant 0 : i32
    return %c0_i32, %c0_i32_0 : i32, i32
  }
  func.func @transform_12(%arg0: i32) -> (i32, i32) {
    %c0_i32 = arith.constant 0 : i32
    %c0_i32_0 = arith.constant 0 : i32
    %c0_i32_1 = arith.constant 0 : i32
    return %c0_i32, %c0_i32_0 : i32, i32
  }
  func.func @transform_13(%arg0: i32) -> (i32, i32, i32) {
    %c0_i32 = arith.constant 0 : i32
    %c0_i32_0 = arith.constant 0 : i32
    %c0_i32_1 = arith.constant 0 : i32
    return %arg0, %c0_i32, %c0_i32_0 : i32, i32, i32
  }
}

module attributes {stable_mosaic.version = 11 : i64} {
  func.func @_dec_layer_kernel(%arg0: i32, %arg1: memref<1x8x128xf32, #tpu.memory_space<vmem>>, %arg2: memref<1x8x128xf32, #tpu.memory_space<vmem>>, %arg3: memref<128x384xf32, #tpu.memory_space<vmem>>, %arg4: memref<1x384xf32, #tpu.memory_space<vmem>>, %arg5: memref<128x128xf32, #tpu.memory_space<vmem>>, %arg6: memref<128x128xf32, #tpu.memory_space<vmem>>, %arg7: memref<128x256xf32, #tpu.memory_space<vmem>>, %arg8: memref<1x256xf32, #tpu.memory_space<vmem>>, %arg9: memref<128x128xf32, #tpu.memory_space<vmem>>, %arg10: memref<128x128xf32, #tpu.memory_space<vmem>>, %arg11: memref<1x128xf32, #tpu.memory_space<vmem>>, %arg12: memref<128x128xf32, #tpu.memory_space<vmem>>, %arg13: memref<10x128xf32, #tpu.memory_space<vmem>>, %arg14: memref<1x8x128xf32, #tpu.memory_space<vmem>>) attributes {dimension_semantics = [#tpu.dimension_semantics<parallel>], iteration_bounds = array<i64: 2>, scalar_prefetch = 0 : i64, scratch_operands = 0 : i64, tpu.core_type = #tpu.core_type<tc>, window_params = [{transform_indices = @transform_0, window_bounds = array<i64: 1, 8, 128>}, {transform_indices = @transform_1, window_bounds = array<i64: 1, 8, 128>}, {pipeline_mode = #tpu.pipeline_mode<synchronous>, transform_indices = @transform_2, window_bounds = array<i64: 128, 384>}, {pipeline_mode = #tpu.pipeline_mode<synchronous>, transform_indices = @transform_3, window_bounds = array<i64: 1, 384>}, {pipeline_mode = #tpu.pipeline_mode<synchronous>, transform_indices = @transform_4, window_bounds = array<i64: 128, 128>}, {pipeline_mode = #tpu.pipeline_mode<synchronous>, transform_indices = @transform_5, window_bounds = array<i64: 128, 128>}, {pipeline_mode = #tpu.pipeline_mode<synchronous>, transform_indices = @transform_6, window_bounds = array<i64: 128, 256>}, {pipeline_mode = #tpu.pipeline_mode<synchronous>, transform_indices = @transform_7, window_bounds = array<i64: 1, 256>}, {pipeline_mode = #tpu.pipeline_mode<synchronous>, transform_indices = @transform_8, window_bounds = array<i64: 128, 128>}, {pipeline_mode = #tpu.pipeline_mode<synchronous>, transform_indices = @transform_9, window_bounds = array<i64: 128, 128>}, {pipeline_mode = #tpu.pipeline_mode<synchronous>, transform_indices = @transform_10, window_bounds = array<i64: 1, 128>}, {pipeline_mode = #tpu.pipeline_mode<synchronous>, transform_indices = @transform_11, window_bounds = array<i64: 128, 128>}, {pipeline_mode = #tpu.pipeline_mode<synchronous>, transform_indices = @transform_12, window_bounds = array<i64: 10, 128>}, {transform_indices = @transform_13, window_bounds = array<i64: 1, 8, 128>}]} {
    %c0 = arith.constant 0 : index
    %c0_0 = arith.constant 0 : index
    %c0_1 = arith.constant 0 : index
    %0 = vector.load %arg1[%c0, %c0_0, %c0_1] : memref<1x8x128xf32, #tpu.memory_space<vmem>>, vector<1x8x128xf32>
    %1 = vector.shape_cast %0 : vector<1x8x128xf32> to vector<8x128xf32>
    %c0_2 = arith.constant 0 : index
    %c0_3 = arith.constant 0 : index
    %c0_4 = arith.constant 0 : index
    %2 = vector.load %arg2[%c0_2, %c0_3, %c0_4] : memref<1x8x128xf32, #tpu.memory_space<vmem>>, vector<1x8x128xf32>
    %3 = vector.shape_cast %2 : vector<1x8x128xf32> to vector<8x128xf32>
    %c0_5 = arith.constant 0 : index
    %c0_6 = arith.constant 0 : index
    %4 = vector.load %arg13[%c0_5, %c0_6] : memref<10x128xf32, #tpu.memory_space<vmem>>, vector<10x128xf32>
    %c0_7 = arith.constant 0 : index
    %c0_8 = arith.constant 0 : index
    %5 = vector.load %arg3[%c0_7, %c0_8] : memref<128x384xf32, #tpu.memory_space<vmem>>, vector<128x384xf32>
    %c0_9 = arith.constant 0 : index
    %c0_10 = arith.constant 0 : index
    %6 = vector.load %arg4[%c0_9, %c0_10] : memref<1x384xf32, #tpu.memory_space<vmem>>, vector<1x384xf32>
    %c0_11 = arith.constant 0 : index
    %c0_12 = arith.constant 0 : index
    %7 = vector.load %arg5[%c0_11, %c0_12] : memref<128x128xf32, #tpu.memory_space<vmem>>, vector<128x128xf32>
    %8 = vector.extract_strided_slice %4 {offsets = [0, 0], sizes = [1, 128], strides = [1, 1]} : vector<10x128xf32> to vector<1x128xf32>
    %9 = arith.truncf %1 : vector<8x128xf32> to vector<8x128xbf16>
    %10 = arith.truncf %5 : vector<128x384xf32> to vector<128x384xbf16>
    %cst = arith.constant dense<0.000000e+00> : vector<8x384xf32>
    %11 = tpu.matmul %9, %10, %cst {dimension_numbers = #tpu.dot_dimension_numbers<[1], [0], [0], [1], [0, 0, 1, 1], [], []>} : vector<8x128xbf16>, vector<128x384xbf16>, vector<8x384xf32> -> vector<8x384xf32>
    %12 = vector.broadcast %6 : vector<1x384xf32> to vector<8x384xf32>
    %13 = arith.addf %11, %12 : vector<8x384xf32>
    %14 = vector.extract_strided_slice %13 {offsets = [0, 0], sizes = [8, 128], strides = [1, 1]} : vector<8x384xf32> to vector<8x128xf32>
    %15 = vector.extract_strided_slice %13 {offsets = [0, 128], sizes = [8, 128], strides = [1, 1]} : vector<8x384xf32> to vector<8x128xf32>
    %16 = vector.extract_strided_slice %13 {offsets = [0, 256], sizes = [8, 128], strides = [1, 1]} : vector<8x384xf32> to vector<8x128xf32>
    %17 = tpu.iota {dimensions = array<i32: 0>} : vector<8x8xi32>
    %18 = tpu.iota {dimensions = array<i32: 1>} : vector<8x8xi32>
    %19 = arith.cmpi sle, %18, %17 : vector<8x8xi32>
    %20 = arith.truncf %14 : vector<8x128xf32> to vector<8x128xbf16>
    %21 = arith.truncf %15 : vector<8x128xf32> to vector<8x128xbf16>
    %22 = arith.truncf %16 : vector<8x128xf32> to vector<8x128xbf16>
    %23 = vector.extract_strided_slice %20 {offsets = [0, 0], sizes = [8, 32], strides = [1, 1]} : vector<8x128xbf16> to vector<8x32xbf16>
    %24 = vector.extract_strided_slice %21 {offsets = [0, 0], sizes = [8, 32], strides = [1, 1]} : vector<8x128xbf16> to vector<8x32xbf16>
    %cst_13 = arith.constant dense<0.000000e+00> : vector<8x8xf32>
    %25 = tpu.matmul %23, %24, %cst_13 {dimension_numbers = #tpu.dot_dimension_numbers<[1], [1], [0], [0], [0, 0, 1, 0], [], []>} : vector<8x32xbf16>, vector<8x32xbf16>, vector<8x8xf32> -> vector<8x8xf32>
    %cst_14 = arith.constant 0.176776692 : f32
    %26 = vector.broadcast %cst_14 : f32 to vector<8x8xf32>
    %27 = arith.mulf %25, %26 : vector<8x8xf32>
    %cst_15 = arith.constant -1.000000e+30 : f32
    %28 = vector.broadcast %cst_15 : f32 to vector<8x8xf32>
    %29 = arith.select %19, %27, %28 : vector<8x8xi1>, vector<8x8xf32>
    %cst_16 = arith.constant dense<0xFF800000> : vector<8xf32>
    %30 = vector.multi_reduction <maximumf>, %29, %cst_16 [1] : vector<8x8xf32> to vector<8xf32>
    %31 = vector.shape_cast %30 : vector<8xf32> to vector<8x1xf32>
    %32 = vector.broadcast %31 : vector<8x1xf32> to vector<8x8xf32>
    %33 = arith.subf %29, %32 : vector<8x8xf32>
    %34 = math.exp %33 : vector<8x8xf32>
    %cst_17 = arith.constant dense<0.000000e+00> : vector<8xf32>
    %35 = vector.multi_reduction <add>, %34, %cst_17 [1] : vector<8x8xf32> to vector<8xf32>
    %36 = vector.shape_cast %35 : vector<8xf32> to vector<8x1xf32>
    %37 = tpu.reciprocal %36 {approx = true} : vector<8x1xf32> -> vector<8x1xf32>
    %38 = vector.broadcast %37 : vector<8x1xf32> to vector<8x8xf32>
    %39 = arith.mulf %34, %38 : vector<8x8xf32>
    %40 = arith.truncf %39 : vector<8x8xf32> to vector<8x8xbf16>
    %41 = vector.extract_strided_slice %22 {offsets = [0, 0], sizes = [8, 32], strides = [1, 1]} : vector<8x128xbf16> to vector<8x32xbf16>
    %cst_18 = arith.constant dense<0.000000e+00> : vector<8x32xf32>
    %42 = tpu.matmul %40, %41, %cst_18 {dimension_numbers = #tpu.dot_dimension_numbers<[1], [0], [0], [1], [0, 0, 1, 1], [], []>} : vector<8x8xbf16>, vector<8x32xbf16>, vector<8x32xf32> -> vector<8x32xf32>
    %43 = vector.extract_strided_slice %20 {offsets = [0, 32], sizes = [8, 32], strides = [1, 1]} : vector<8x128xbf16> to vector<8x32xbf16>
    %44 = vector.extract_strided_slice %21 {offsets = [0, 32], sizes = [8, 32], strides = [1, 1]} : vector<8x128xbf16> to vector<8x32xbf16>
    %cst_19 = arith.constant dense<0.000000e+00> : vector<8x8xf32>
    %45 = tpu.matmul %43, %44, %cst_19 {dimension_numbers = #tpu.dot_dimension_numbers<[1], [1], [0], [0], [0, 0, 1, 0], [], []>} : vector<8x32xbf16>, vector<8x32xbf16>, vector<8x8xf32> -> vector<8x8xf32>
    %cst_20 = arith.constant 0.176776692 : f32
    %46 = vector.broadcast %cst_20 : f32 to vector<8x8xf32>
    %47 = arith.mulf %45, %46 : vector<8x8xf32>
    %cst_21 = arith.constant -1.000000e+30 : f32
    %48 = vector.broadcast %cst_21 : f32 to vector<8x8xf32>
    %49 = arith.select %19, %47, %48 : vector<8x8xi1>, vector<8x8xf32>
    %cst_22 = arith.constant dense<0xFF800000> : vector<8xf32>
    %50 = vector.multi_reduction <maximumf>, %49, %cst_22 [1] : vector<8x8xf32> to vector<8xf32>
    %51 = vector.shape_cast %50 : vector<8xf32> to vector<8x1xf32>
    %52 = vector.broadcast %51 : vector<8x1xf32> to vector<8x8xf32>
    %53 = arith.subf %49, %52 : vector<8x8xf32>
    %54 = math.exp %53 : vector<8x8xf32>
    %cst_23 = arith.constant dense<0.000000e+00> : vector<8xf32>
    %55 = vector.multi_reduction <add>, %54, %cst_23 [1] : vector<8x8xf32> to vector<8xf32>
    %56 = vector.shape_cast %55 : vector<8xf32> to vector<8x1xf32>
    %57 = tpu.reciprocal %56 {approx = true} : vector<8x1xf32> -> vector<8x1xf32>
    %58 = vector.broadcast %57 : vector<8x1xf32> to vector<8x8xf32>
    %59 = arith.mulf %54, %58 : vector<8x8xf32>
    %60 = arith.truncf %59 : vector<8x8xf32> to vector<8x8xbf16>
    %61 = vector.extract_strided_slice %22 {offsets = [0, 32], sizes = [8, 32], strides = [1, 1]} : vector<8x128xbf16> to vector<8x32xbf16>
    %cst_24 = arith.constant dense<0.000000e+00> : vector<8x32xf32>
    %62 = tpu.matmul %60, %61, %cst_24 {dimension_numbers = #tpu.dot_dimension_numbers<[1], [0], [0], [1], [0, 0, 1, 1], [], []>} : vector<8x8xbf16>, vector<8x32xbf16>, vector<8x32xf32> -> vector<8x32xf32>
    %63 = vector.extract_strided_slice %20 {offsets = [0, 64], sizes = [8, 32], strides = [1, 1]} : vector<8x128xbf16> to vector<8x32xbf16>
    %64 = vector.extract_strided_slice %21 {offsets = [0, 64], sizes = [8, 32], strides = [1, 1]} : vector<8x128xbf16> to vector<8x32xbf16>
    %cst_25 = arith.constant dense<0.000000e+00> : vector<8x8xf32>
    %65 = tpu.matmul %63, %64, %cst_25 {dimension_numbers = #tpu.dot_dimension_numbers<[1], [1], [0], [0], [0, 0, 1, 0], [], []>} : vector<8x32xbf16>, vector<8x32xbf16>, vector<8x8xf32> -> vector<8x8xf32>
    %cst_26 = arith.constant 0.176776692 : f32
    %66 = vector.broadcast %cst_26 : f32 to vector<8x8xf32>
    %67 = arith.mulf %65, %66 : vector<8x8xf32>
    %cst_27 = arith.constant -1.000000e+30 : f32
    %68 = vector.broadcast %cst_27 : f32 to vector<8x8xf32>
    %69 = arith.select %19, %67, %68 : vector<8x8xi1>, vector<8x8xf32>
    %cst_28 = arith.constant dense<0xFF800000> : vector<8xf32>
    %70 = vector.multi_reduction <maximumf>, %69, %cst_28 [1] : vector<8x8xf32> to vector<8xf32>
    %71 = vector.shape_cast %70 : vector<8xf32> to vector<8x1xf32>
    %72 = vector.broadcast %71 : vector<8x1xf32> to vector<8x8xf32>
    %73 = arith.subf %69, %72 : vector<8x8xf32>
    %74 = math.exp %73 : vector<8x8xf32>
    %cst_29 = arith.constant dense<0.000000e+00> : vector<8xf32>
    %75 = vector.multi_reduction <add>, %74, %cst_29 [1] : vector<8x8xf32> to vector<8xf32>
    %76 = vector.shape_cast %75 : vector<8xf32> to vector<8x1xf32>
    %77 = tpu.reciprocal %76 {approx = true} : vector<8x1xf32> -> vector<8x1xf32>
    %78 = vector.broadcast %77 : vector<8x1xf32> to vector<8x8xf32>
    %79 = arith.mulf %74, %78 : vector<8x8xf32>
    %80 = arith.truncf %79 : vector<8x8xf32> to vector<8x8xbf16>
    %81 = vector.extract_strided_slice %22 {offsets = [0, 64], sizes = [8, 32], strides = [1, 1]} : vector<8x128xbf16> to vector<8x32xbf16>
    %cst_30 = arith.constant dense<0.000000e+00> : vector<8x32xf32>
    %82 = tpu.matmul %80, %81, %cst_30 {dimension_numbers = #tpu.dot_dimension_numbers<[1], [0], [0], [1], [0, 0, 1, 1], [], []>} : vector<8x8xbf16>, vector<8x32xbf16>, vector<8x32xf32> -> vector<8x32xf32>
    %83 = vector.extract_strided_slice %20 {offsets = [0, 96], sizes = [8, 32], strides = [1, 1]} : vector<8x128xbf16> to vector<8x32xbf16>
    %84 = vector.extract_strided_slice %21 {offsets = [0, 96], sizes = [8, 32], strides = [1, 1]} : vector<8x128xbf16> to vector<8x32xbf16>
    %cst_31 = arith.constant dense<0.000000e+00> : vector<8x8xf32>
    %85 = tpu.matmul %83, %84, %cst_31 {dimension_numbers = #tpu.dot_dimension_numbers<[1], [1], [0], [0], [0, 0, 1, 0], [], []>} : vector<8x32xbf16>, vector<8x32xbf16>, vector<8x8xf32> -> vector<8x8xf32>
    %cst_32 = arith.constant 0.176776692 : f32
    %86 = vector.broadcast %cst_32 : f32 to vector<8x8xf32>
    %87 = arith.mulf %85, %86 : vector<8x8xf32>
    %cst_33 = arith.constant -1.000000e+30 : f32
    %88 = vector.broadcast %cst_33 : f32 to vector<8x8xf32>
    %89 = arith.select %19, %87, %88 : vector<8x8xi1>, vector<8x8xf32>
    %cst_34 = arith.constant dense<0xFF800000> : vector<8xf32>
    %90 = vector.multi_reduction <maximumf>, %89, %cst_34 [1] : vector<8x8xf32> to vector<8xf32>
    %91 = vector.shape_cast %90 : vector<8xf32> to vector<8x1xf32>
    %92 = vector.broadcast %91 : vector<8x1xf32> to vector<8x8xf32>
    %93 = arith.subf %89, %92 : vector<8x8xf32>
    %94 = math.exp %93 : vector<8x8xf32>
    %cst_35 = arith.constant dense<0.000000e+00> : vector<8xf32>
    %95 = vector.multi_reduction <add>, %94, %cst_35 [1] : vector<8x8xf32> to vector<8xf32>
    %96 = vector.shape_cast %95 : vector<8xf32> to vector<8x1xf32>
    %97 = tpu.reciprocal %96 {approx = true} : vector<8x1xf32> -> vector<8x1xf32>
    %98 = vector.broadcast %97 : vector<8x1xf32> to vector<8x8xf32>
    %99 = arith.mulf %94, %98 : vector<8x8xf32>
    %100 = arith.truncf %99 : vector<8x8xf32> to vector<8x8xbf16>
    %101 = vector.extract_strided_slice %22 {offsets = [0, 96], sizes = [8, 32], strides = [1, 1]} : vector<8x128xbf16> to vector<8x32xbf16>
    %cst_36 = arith.constant dense<0.000000e+00> : vector<8x32xf32>
    %102 = tpu.matmul %100, %101, %cst_36 {dimension_numbers = #tpu.dot_dimension_numbers<[1], [0], [0], [1], [0, 0, 1, 1], [], []>} : vector<8x8xbf16>, vector<8x32xbf16>, vector<8x32xf32> -> vector<8x32xf32>
    %103 = tpu.concatenate %42, %62, %82, %102 in 1 : vector<8x32xf32>, vector<8x32xf32>, vector<8x32xf32>, vector<8x32xf32> -> vector<8x128xf32>
    %104 = arith.truncf %103 : vector<8x128xf32> to vector<8x128xbf16>
    %105 = arith.truncf %7 : vector<128x128xf32> to vector<128x128xbf16>
    %cst_37 = arith.constant dense<0.000000e+00> : vector<8x128xf32>
    %106 = tpu.matmul %104, %105, %cst_37 {dimension_numbers = #tpu.dot_dimension_numbers<[1], [0], [0], [1], [0, 0, 1, 1], [], []>} : vector<8x128xbf16>, vector<128x128xbf16>, vector<8x128xf32> -> vector<8x128xf32>
    %107 = vector.broadcast %8 : vector<1x128xf32> to vector<8x128xf32>
    %108 = arith.addf %106, %107 : vector<8x128xf32>
    %109 = arith.addf %1, %108 : vector<8x128xf32>
    %110 = vector.extract_strided_slice %4 {offsets = [4, 0], sizes = [1, 128], strides = [1, 1]} : vector<10x128xf32> to vector<1x128xf32>
    %111 = vector.extract_strided_slice %4 {offsets = [5, 0], sizes = [1, 128], strides = [1, 1]} : vector<10x128xf32> to vector<1x128xf32>
    %cst_38 = arith.constant dense<0.000000e+00> : vector<8xf32>
    %112 = vector.multi_reduction <add>, %109, %cst_38 [1] : vector<8x128xf32> to vector<8xf32>
    %113 = vector.shape_cast %112 : vector<8xf32> to vector<8x1xf32>
    %cst_39 = arith.constant 1.280000e+02 : f32
    %114 = vector.broadcast %cst_39 : f32 to vector<8x1xf32>
    %115 = arith.divf %113, %114 : vector<8x1xf32>
    %116 = vector.broadcast %115 : vector<8x1xf32> to vector<8x128xf32>
    %117 = arith.subf %109, %116 : vector<8x128xf32>
    %118 = arith.mulf %117, %117 : vector<8x128xf32>
    %cst_40 = arith.constant dense<0.000000e+00> : vector<8xf32>
    %119 = vector.multi_reduction <add>, %118, %cst_40 [1] : vector<8x128xf32> to vector<8xf32>
    %120 = vector.shape_cast %119 : vector<8xf32> to vector<8x1xf32>
    %cst_41 = arith.constant 1.280000e+02 : f32
    %121 = vector.broadcast %cst_41 : f32 to vector<8x1xf32>
    %122 = arith.divf %120, %121 : vector<8x1xf32>
    %cst_42 = arith.constant 9.99999974E-6 : f32
    %123 = vector.broadcast %cst_42 : f32 to vector<8x1xf32>
    %124 = arith.addf %122, %123 : vector<8x1xf32>
    %125 = math.rsqrt %124 : vector<8x1xf32>
    %126 = vector.broadcast %125 : vector<8x1xf32> to vector<8x128xf32>
    %127 = arith.mulf %117, %126 : vector<8x128xf32>
    %128 = vector.broadcast %110 : vector<1x128xf32> to vector<8x128xf32>
    %129 = arith.mulf %127, %128 : vector<8x128xf32>
    %130 = vector.broadcast %111 : vector<1x128xf32> to vector<8x128xf32>
    %131 = arith.addf %129, %130 : vector<8x128xf32>
    %132 = arith.truncf %131 : vector<8x128xf32> to vector<8x128xbf16>
    %c0_43 = arith.constant 0 : index
    %c0_44 = arith.constant 0 : index
    %133 = vector.load %arg6[%c0_43, %c0_44] : memref<128x128xf32, #tpu.memory_space<vmem>>, vector<128x128xf32>
    %134 = arith.truncf %133 : vector<128x128xf32> to vector<128x128xbf16>
    %cst_45 = arith.constant dense<0.000000e+00> : vector<8x128xf32>
    %135 = tpu.matmul %132, %134, %cst_45 {dimension_numbers = #tpu.dot_dimension_numbers<[1], [0], [0], [1], [0, 0, 1, 1], [], []>} : vector<8x128xbf16>, vector<128x128xbf16>, vector<8x128xf32> -> vector<8x128xf32>
    %136 = vector.extract_strided_slice %4 {offsets = [1, 0], sizes = [1, 128], strides = [1, 1]} : vector<10x128xf32> to vector<1x128xf32>
    %137 = vector.broadcast %136 : vector<1x128xf32> to vector<8x128xf32>
    %138 = arith.addf %135, %137 : vector<8x128xf32>
    %139 = arith.truncf %3 : vector<8x128xf32> to vector<8x128xbf16>
    %c0_46 = arith.constant 0 : index
    %c0_47 = arith.constant 0 : index
    %140 = vector.load %arg7[%c0_46, %c0_47] : memref<128x256xf32, #tpu.memory_space<vmem>>, vector<128x256xf32>
    %141 = arith.truncf %140 : vector<128x256xf32> to vector<128x256xbf16>
    %cst_48 = arith.constant dense<0.000000e+00> : vector<8x256xf32>
    %142 = tpu.matmul %139, %141, %cst_48 {dimension_numbers = #tpu.dot_dimension_numbers<[1], [0], [0], [1], [0, 0, 1, 1], [], []>} : vector<8x128xbf16>, vector<128x256xbf16>, vector<8x256xf32> -> vector<8x256xf32>
    %c0_49 = arith.constant 0 : index
    %c0_50 = arith.constant 0 : index
    %143 = vector.load %arg8[%c0_49, %c0_50] : memref<1x256xf32, #tpu.memory_space<vmem>>, vector<1x256xf32>
    %144 = vector.broadcast %143 : vector<1x256xf32> to vector<8x256xf32>
    %145 = arith.addf %142, %144 : vector<8x256xf32>
    %146 = vector.extract_strided_slice %145 {offsets = [0, 0], sizes = [8, 128], strides = [1, 1]} : vector<8x256xf32> to vector<8x128xf32>
    %147 = vector.extract_strided_slice %145 {offsets = [0, 128], sizes = [8, 128], strides = [1, 1]} : vector<8x256xf32> to vector<8x128xf32>
    %c0_51 = arith.constant 0 : index
    %c0_52 = arith.constant 0 : index
    %148 = vector.load %arg9[%c0_51, %c0_52] : memref<128x128xf32, #tpu.memory_space<vmem>>, vector<128x128xf32>
    %149 = vector.extract_strided_slice %4 {offsets = [2, 0], sizes = [1, 128], strides = [1, 1]} : vector<10x128xf32> to vector<1x128xf32>
    %150 = arith.truncf %138 : vector<8x128xf32> to vector<8x128xbf16>
    %151 = arith.truncf %146 : vector<8x128xf32> to vector<8x128xbf16>
    %152 = arith.truncf %147 : vector<8x128xf32> to vector<8x128xbf16>
    %153 = vector.extract_strided_slice %150 {offsets = [0, 0], sizes = [8, 32], strides = [1, 1]} : vector<8x128xbf16> to vector<8x32xbf16>
    %154 = vector.extract_strided_slice %151 {offsets = [0, 0], sizes = [8, 32], strides = [1, 1]} : vector<8x128xbf16> to vector<8x32xbf16>
    %cst_53 = arith.constant dense<0.000000e+00> : vector<8x8xf32>
    %155 = tpu.matmul %153, %154, %cst_53 {dimension_numbers = #tpu.dot_dimension_numbers<[1], [1], [0], [0], [0, 0, 1, 0], [], []>} : vector<8x32xbf16>, vector<8x32xbf16>, vector<8x8xf32> -> vector<8x8xf32>
    %cst_54 = arith.constant 0.176776692 : f32
    %156 = vector.broadcast %cst_54 : f32 to vector<8x8xf32>
    %157 = arith.mulf %155, %156 : vector<8x8xf32>
    %cst_55 = arith.constant dense<0xFF800000> : vector<8xf32>
    %158 = vector.multi_reduction <maximumf>, %157, %cst_55 [1] : vector<8x8xf32> to vector<8xf32>
    %159 = vector.shape_cast %158 : vector<8xf32> to vector<8x1xf32>
    %160 = vector.broadcast %159 : vector<8x1xf32> to vector<8x8xf32>
    %161 = arith.subf %157, %160 : vector<8x8xf32>
    %162 = math.exp %161 : vector<8x8xf32>
    %cst_56 = arith.constant dense<0.000000e+00> : vector<8xf32>
    %163 = vector.multi_reduction <add>, %162, %cst_56 [1] : vector<8x8xf32> to vector<8xf32>
    %164 = vector.shape_cast %163 : vector<8xf32> to vector<8x1xf32>
    %165 = tpu.reciprocal %164 {approx = true} : vector<8x1xf32> -> vector<8x1xf32>
    %166 = vector.broadcast %165 : vector<8x1xf32> to vector<8x8xf32>
    %167 = arith.mulf %162, %166 : vector<8x8xf32>
    %168 = arith.truncf %167 : vector<8x8xf32> to vector<8x8xbf16>
    %169 = vector.extract_strided_slice %152 {offsets = [0, 0], sizes = [8, 32], strides = [1, 1]} : vector<8x128xbf16> to vector<8x32xbf16>
    %cst_57 = arith.constant dense<0.000000e+00> : vector<8x32xf32>
    %170 = tpu.matmul %168, %169, %cst_57 {dimension_numbers = #tpu.dot_dimension_numbers<[1], [0], [0], [1], [0, 0, 1, 1], [], []>} : vector<8x8xbf16>, vector<8x32xbf16>, vector<8x32xf32> -> vector<8x32xf32>
    %171 = vector.extract_strided_slice %150 {offsets = [0, 32], sizes = [8, 32], strides = [1, 1]} : vector<8x128xbf16> to vector<8x32xbf16>
    %172 = vector.extract_strided_slice %151 {offsets = [0, 32], sizes = [8, 32], strides = [1, 1]} : vector<8x128xbf16> to vector<8x32xbf16>
    %cst_58 = arith.constant dense<0.000000e+00> : vector<8x8xf32>
    %173 = tpu.matmul %171, %172, %cst_58 {dimension_numbers = #tpu.dot_dimension_numbers<[1], [1], [0], [0], [0, 0, 1, 0], [], []>} : vector<8x32xbf16>, vector<8x32xbf16>, vector<8x8xf32> -> vector<8x8xf32>
    %cst_59 = arith.constant 0.176776692 : f32
    %174 = vector.broadcast %cst_59 : f32 to vector<8x8xf32>
    %175 = arith.mulf %173, %174 : vector<8x8xf32>
    %cst_60 = arith.constant dense<0xFF800000> : vector<8xf32>
    %176 = vector.multi_reduction <maximumf>, %175, %cst_60 [1] : vector<8x8xf32> to vector<8xf32>
    %177 = vector.shape_cast %176 : vector<8xf32> to vector<8x1xf32>
    %178 = vector.broadcast %177 : vector<8x1xf32> to vector<8x8xf32>
    %179 = arith.subf %175, %178 : vector<8x8xf32>
    %180 = math.exp %179 : vector<8x8xf32>
    %cst_61 = arith.constant dense<0.000000e+00> : vector<8xf32>
    %181 = vector.multi_reduction <add>, %180, %cst_61 [1] : vector<8x8xf32> to vector<8xf32>
    %182 = vector.shape_cast %181 : vector<8xf32> to vector<8x1xf32>
    %183 = tpu.reciprocal %182 {approx = true} : vector<8x1xf32> -> vector<8x1xf32>
    %184 = vector.broadcast %183 : vector<8x1xf32> to vector<8x8xf32>
    %185 = arith.mulf %180, %184 : vector<8x8xf32>
    %186 = arith.truncf %185 : vector<8x8xf32> to vector<8x8xbf16>
    %187 = vector.extract_strided_slice %152 {offsets = [0, 32], sizes = [8, 32], strides = [1, 1]} : vector<8x128xbf16> to vector<8x32xbf16>
    %cst_62 = arith.constant dense<0.000000e+00> : vector<8x32xf32>
    %188 = tpu.matmul %186, %187, %cst_62 {dimension_numbers = #tpu.dot_dimension_numbers<[1], [0], [0], [1], [0, 0, 1, 1], [], []>} : vector<8x8xbf16>, vector<8x32xbf16>, vector<8x32xf32> -> vector<8x32xf32>
    %189 = vector.extract_strided_slice %150 {offsets = [0, 64], sizes = [8, 32], strides = [1, 1]} : vector<8x128xbf16> to vector<8x32xbf16>
    %190 = vector.extract_strided_slice %151 {offsets = [0, 64], sizes = [8, 32], strides = [1, 1]} : vector<8x128xbf16> to vector<8x32xbf16>
    %cst_63 = arith.constant dense<0.000000e+00> : vector<8x8xf32>
    %191 = tpu.matmul %189, %190, %cst_63 {dimension_numbers = #tpu.dot_dimension_numbers<[1], [1], [0], [0], [0, 0, 1, 0], [], []>} : vector<8x32xbf16>, vector<8x32xbf16>, vector<8x8xf32> -> vector<8x8xf32>
    %cst_64 = arith.constant 0.176776692 : f32
    %192 = vector.broadcast %cst_64 : f32 to vector<8x8xf32>
    %193 = arith.mulf %191, %192 : vector<8x8xf32>
    %cst_65 = arith.constant dense<0xFF800000> : vector<8xf32>
    %194 = vector.multi_reduction <maximumf>, %193, %cst_65 [1] : vector<8x8xf32> to vector<8xf32>
    %195 = vector.shape_cast %194 : vector<8xf32> to vector<8x1xf32>
    %196 = vector.broadcast %195 : vector<8x1xf32> to vector<8x8xf32>
    %197 = arith.subf %193, %196 : vector<8x8xf32>
    %198 = math.exp %197 : vector<8x8xf32>
    %cst_66 = arith.constant dense<0.000000e+00> : vector<8xf32>
    %199 = vector.multi_reduction <add>, %198, %cst_66 [1] : vector<8x8xf32> to vector<8xf32>
    %200 = vector.shape_cast %199 : vector<8xf32> to vector<8x1xf32>
    %201 = tpu.reciprocal %200 {approx = true} : vector<8x1xf32> -> vector<8x1xf32>
    %202 = vector.broadcast %201 : vector<8x1xf32> to vector<8x8xf32>
    %203 = arith.mulf %198, %202 : vector<8x8xf32>
    %204 = arith.truncf %203 : vector<8x8xf32> to vector<8x8xbf16>
    %205 = vector.extract_strided_slice %152 {offsets = [0, 64], sizes = [8, 32], strides = [1, 1]} : vector<8x128xbf16> to vector<8x32xbf16>
    %cst_67 = arith.constant dense<0.000000e+00> : vector<8x32xf32>
    %206 = tpu.matmul %204, %205, %cst_67 {dimension_numbers = #tpu.dot_dimension_numbers<[1], [0], [0], [1], [0, 0, 1, 1], [], []>} : vector<8x8xbf16>, vector<8x32xbf16>, vector<8x32xf32> -> vector<8x32xf32>
    %207 = vector.extract_strided_slice %150 {offsets = [0, 96], sizes = [8, 32], strides = [1, 1]} : vector<8x128xbf16> to vector<8x32xbf16>
    %208 = vector.extract_strided_slice %151 {offsets = [0, 96], sizes = [8, 32], strides = [1, 1]} : vector<8x128xbf16> to vector<8x32xbf16>
    %cst_68 = arith.constant dense<0.000000e+00> : vector<8x8xf32>
    %209 = tpu.matmul %207, %208, %cst_68 {dimension_numbers = #tpu.dot_dimension_numbers<[1], [1], [0], [0], [0, 0, 1, 0], [], []>} : vector<8x32xbf16>, vector<8x32xbf16>, vector<8x8xf32> -> vector<8x8xf32>
    %cst_69 = arith.constant 0.176776692 : f32
    %210 = vector.broadcast %cst_69 : f32 to vector<8x8xf32>
    %211 = arith.mulf %209, %210 : vector<8x8xf32>
    %cst_70 = arith.constant dense<0xFF800000> : vector<8xf32>
    %212 = vector.multi_reduction <maximumf>, %211, %cst_70 [1] : vector<8x8xf32> to vector<8xf32>
    %213 = vector.shape_cast %212 : vector<8xf32> to vector<8x1xf32>
    %214 = vector.broadcast %213 : vector<8x1xf32> to vector<8x8xf32>
    %215 = arith.subf %211, %214 : vector<8x8xf32>
    %216 = math.exp %215 : vector<8x8xf32>
    %cst_71 = arith.constant dense<0.000000e+00> : vector<8xf32>
    %217 = vector.multi_reduction <add>, %216, %cst_71 [1] : vector<8x8xf32> to vector<8xf32>
    %218 = vector.shape_cast %217 : vector<8xf32> to vector<8x1xf32>
    %219 = tpu.reciprocal %218 {approx = true} : vector<8x1xf32> -> vector<8x1xf32>
    %220 = vector.broadcast %219 : vector<8x1xf32> to vector<8x8xf32>
    %221 = arith.mulf %216, %220 : vector<8x8xf32>
    %222 = arith.truncf %221 : vector<8x8xf32> to vector<8x8xbf16>
    %223 = vector.extract_strided_slice %152 {offsets = [0, 96], sizes = [8, 32], strides = [1, 1]} : vector<8x128xbf16> to vector<8x32xbf16>
    %cst_72 = arith.constant dense<0.000000e+00> : vector<8x32xf32>
    %224 = tpu.matmul %222, %223, %cst_72 {dimension_numbers = #tpu.dot_dimension_numbers<[1], [0], [0], [1], [0, 0, 1, 1], [], []>} : vector<8x8xbf16>, vector<8x32xbf16>, vector<8x32xf32> -> vector<8x32xf32>
    %225 = tpu.concatenate %170, %188, %206, %224 in 1 : vector<8x32xf32>, vector<8x32xf32>, vector<8x32xf32>, vector<8x32xf32> -> vector<8x128xf32>
    %226 = arith.truncf %225 : vector<8x128xf32> to vector<8x128xbf16>
    %227 = arith.truncf %148 : vector<128x128xf32> to vector<128x128xbf16>
    %cst_73 = arith.constant dense<0.000000e+00> : vector<8x128xf32>
    %228 = tpu.matmul %226, %227, %cst_73 {dimension_numbers = #tpu.dot_dimension_numbers<[1], [0], [0], [1], [0, 0, 1, 1], [], []>} : vector<8x128xbf16>, vector<128x128xbf16>, vector<8x128xf32> -> vector<8x128xf32>
    %229 = vector.broadcast %149 : vector<1x128xf32> to vector<8x128xf32>
    %230 = arith.addf %228, %229 : vector<8x128xf32>
    %231 = arith.addf %131, %230 : vector<8x128xf32>
    %232 = vector.extract_strided_slice %4 {offsets = [6, 0], sizes = [1, 128], strides = [1, 1]} : vector<10x128xf32> to vector<1x128xf32>
    %233 = vector.extract_strided_slice %4 {offsets = [7, 0], sizes = [1, 128], strides = [1, 1]} : vector<10x128xf32> to vector<1x128xf32>
    %cst_74 = arith.constant dense<0.000000e+00> : vector<8xf32>
    %234 = vector.multi_reduction <add>, %231, %cst_74 [1] : vector<8x128xf32> to vector<8xf32>
    %235 = vector.shape_cast %234 : vector<8xf32> to vector<8x1xf32>
    %cst_75 = arith.constant 1.280000e+02 : f32
    %236 = vector.broadcast %cst_75 : f32 to vector<8x1xf32>
    %237 = arith.divf %235, %236 : vector<8x1xf32>
    %238 = vector.broadcast %237 : vector<8x1xf32> to vector<8x128xf32>
    %239 = arith.subf %231, %238 : vector<8x128xf32>
    %240 = arith.mulf %239, %239 : vector<8x128xf32>
    %cst_76 = arith.constant dense<0.000000e+00> : vector<8xf32>
    %241 = vector.multi_reduction <add>, %240, %cst_76 [1] : vector<8x128xf32> to vector<8xf32>
    %242 = vector.shape_cast %241 : vector<8xf32> to vector<8x1xf32>
    %cst_77 = arith.constant 1.280000e+02 : f32
    %243 = vector.broadcast %cst_77 : f32 to vector<8x1xf32>
    %244 = arith.divf %242, %243 : vector<8x1xf32>
    %cst_78 = arith.constant 9.99999974E-6 : f32
    %245 = vector.broadcast %cst_78 : f32 to vector<8x1xf32>
    %246 = arith.addf %244, %245 : vector<8x1xf32>
    %247 = math.rsqrt %246 : vector<8x1xf32>
    %248 = vector.broadcast %247 : vector<8x1xf32> to vector<8x128xf32>
    %249 = arith.mulf %239, %248 : vector<8x128xf32>
    %250 = vector.broadcast %232 : vector<1x128xf32> to vector<8x128xf32>
    %251 = arith.mulf %249, %250 : vector<8x128xf32>
    %252 = vector.broadcast %233 : vector<1x128xf32> to vector<8x128xf32>
    %253 = arith.addf %251, %252 : vector<8x128xf32>
    %c0_79 = arith.constant 0 : index
    %c0_80 = arith.constant 0 : index
    %254 = vector.load %arg10[%c0_79, %c0_80] : memref<128x128xf32, #tpu.memory_space<vmem>>, vector<128x128xf32>
    %c0_81 = arith.constant 0 : index
    %c0_82 = arith.constant 0 : index
    %255 = vector.load %arg11[%c0_81, %c0_82] : memref<1x128xf32, #tpu.memory_space<vmem>>, vector<1x128xf32>
    %c0_83 = arith.constant 0 : index
    %c0_84 = arith.constant 0 : index
    %256 = vector.load %arg12[%c0_83, %c0_84] : memref<128x128xf32, #tpu.memory_space<vmem>>, vector<128x128xf32>
    %257 = vector.extract_strided_slice %4 {offsets = [3, 0], sizes = [1, 128], strides = [1, 1]} : vector<10x128xf32> to vector<1x128xf32>
    %258 = arith.truncf %253 : vector<8x128xf32> to vector<8x128xbf16>
    %259 = arith.truncf %254 : vector<128x128xf32> to vector<128x128xbf16>
    %cst_85 = arith.constant dense<0.000000e+00> : vector<8x128xf32>
    %260 = tpu.matmul %258, %259, %cst_85 {dimension_numbers = #tpu.dot_dimension_numbers<[1], [0], [0], [1], [0, 0, 1, 1], [], []>} : vector<8x128xbf16>, vector<128x128xbf16>, vector<8x128xf32> -> vector<8x128xf32>
    %261 = vector.broadcast %255 : vector<1x128xf32> to vector<8x128xf32>
    %262 = arith.addf %260, %261 : vector<8x128xf32>
    %cst_86 = arith.constant 0.000000e+00 : f32
    %263 = vector.broadcast %cst_86 : f32 to vector<8x128xf32>
    %264 = arith.maximumf %262, %263 : vector<8x128xf32>
    %265 = arith.truncf %264 : vector<8x128xf32> to vector<8x128xbf16>
    %266 = arith.truncf %256 : vector<128x128xf32> to vector<128x128xbf16>
    %cst_87 = arith.constant dense<0.000000e+00> : vector<8x128xf32>
    %267 = tpu.matmul %265, %266, %cst_87 {dimension_numbers = #tpu.dot_dimension_numbers<[1], [0], [0], [1], [0, 0, 1, 1], [], []>} : vector<8x128xbf16>, vector<128x128xbf16>, vector<8x128xf32> -> vector<8x128xf32>
    %268 = vector.broadcast %257 : vector<1x128xf32> to vector<8x128xf32>
    %269 = arith.addf %267, %268 : vector<8x128xf32>
    %270 = arith.addf %253, %269 : vector<8x128xf32>
    %271 = vector.extract_strided_slice %4 {offsets = [8, 0], sizes = [1, 128], strides = [1, 1]} : vector<10x128xf32> to vector<1x128xf32>
    %272 = vector.extract_strided_slice %4 {offsets = [9, 0], sizes = [1, 128], strides = [1, 1]} : vector<10x128xf32> to vector<1x128xf32>
    %cst_88 = arith.constant dense<0.000000e+00> : vector<8xf32>
    %273 = vector.multi_reduction <add>, %270, %cst_88 [1] : vector<8x128xf32> to vector<8xf32>
    %274 = vector.shape_cast %273 : vector<8xf32> to vector<8x1xf32>
    %cst_89 = arith.constant 1.280000e+02 : f32
    %275 = vector.broadcast %cst_89 : f32 to vector<8x1xf32>
    %276 = arith.divf %274, %275 : vector<8x1xf32>
    %277 = vector.broadcast %276 : vector<8x1xf32> to vector<8x128xf32>
    %278 = arith.subf %270, %277 : vector<8x128xf32>
    %279 = arith.mulf %278, %278 : vector<8x128xf32>
    %cst_90 = arith.constant dense<0.000000e+00> : vector<8xf32>
    %280 = vector.multi_reduction <add>, %279, %cst_90 [1] : vector<8x128xf32> to vector<8xf32>
    %281 = vector.shape_cast %280 : vector<8xf32> to vector<8x1xf32>
    %cst_91 = arith.constant 1.280000e+02 : f32
    %282 = vector.broadcast %cst_91 : f32 to vector<8x1xf32>
    %283 = arith.divf %281, %282 : vector<8x1xf32>
    %cst_92 = arith.constant 9.99999974E-6 : f32
    %284 = vector.broadcast %cst_92 : f32 to vector<8x1xf32>
    %285 = arith.addf %283, %284 : vector<8x1xf32>
    %286 = math.rsqrt %285 : vector<8x1xf32>
    %287 = vector.broadcast %286 : vector<8x1xf32> to vector<8x128xf32>
    %288 = arith.mulf %278, %287 : vector<8x128xf32>
    %289 = vector.broadcast %271 : vector<1x128xf32> to vector<8x128xf32>
    %290 = arith.mulf %288, %289 : vector<8x128xf32>
    %291 = vector.broadcast %272 : vector<1x128xf32> to vector<8x128xf32>
    %292 = arith.addf %290, %291 : vector<8x128xf32>
    %c0_93 = arith.constant 0 : index
    %c0_94 = arith.constant 0 : index
    %c0_95 = arith.constant 0 : index
    %293 = vector.load %arg14[%c0_93, %c0_94, %c0_95] : memref<1x8x128xf32, #tpu.memory_space<vmem>>, vector<1x8x128xf32>
    %294 = vector.shape_cast %293 : vector<1x8x128xf32> to vector<8x128xf32>
    %295 = vector.shape_cast %292 : vector<8x128xf32> to vector<1x8x128xf32>
    tpu.vector_store %arg14[%c0_93, %c0_94, %c0_95], %295 {strides = array<i32>} : memref<1x8x128xf32, #tpu.memory_space<vmem>>, vector<1x8x128xf32>,
    return
  }
  func.func @transform_0(%arg0: i32) -> (i32, i32, i32) {
    %c0_i32 = arith.constant 0 : i32
    %c0_i32_0 = arith.constant 0 : i32
    %c0_i32_1 = arith.constant 0 : i32
    return %arg0, %c0_i32, %c0_i32_0 : i32, i32, i32
  }
  func.func @transform_1(%arg0: i32) -> (i32, i32, i32) {
    %c0_i32 = arith.constant 0 : i32
    %c0_i32_0 = arith.constant 0 : i32
    %c0_i32_1 = arith.constant 0 : i32
    return %arg0, %c0_i32, %c0_i32_0 : i32, i32, i32
  }
  func.func @transform_2(%arg0: i32) -> (i32, i32) {
    %c0_i32 = arith.constant 0 : i32
    %c0_i32_0 = arith.constant 0 : i32
    %c0_i32_1 = arith.constant 0 : i32
    return %c0_i32, %c0_i32_0 : i32, i32
  }
  func.func @transform_3(%arg0: i32) -> (i32, i32) {
    %c0_i32 = arith.constant 0 : i32
    %c0_i32_0 = arith.constant 0 : i32
    %c0_i32_1 = arith.constant 0 : i32
    return %c0_i32, %c0_i32_0 : i32, i32
  }
  func.func @transform_4(%arg0: i32) -> (i32, i32) {
    %c0_i32 = arith.constant 0 : i32
    %c0_i32_0 = arith.constant 0 : i32
    %c0_i32_1 = arith.constant 0 : i32
    return %c0_i32, %c0_i32_0 : i32, i32
  }
  func.func @transform_5(%arg0: i32) -> (i32, i32) {
    %c0_i32 = arith.constant 0 : i32
    %c0_i32_0 = arith.constant 0 : i32
    %c0_i32_1 = arith.constant 0 : i32
    return %c0_i32, %c0_i32_0 : i32, i32
  }
  func.func @transform_6(%arg0: i32) -> (i32, i32) {
    %c0_i32 = arith.constant 0 : i32
    %c0_i32_0 = arith.constant 0 : i32
    %c0_i32_1 = arith.constant 0 : i32
    return %c0_i32, %c0_i32_0 : i32, i32
  }
  func.func @transform_7(%arg0: i32) -> (i32, i32) {
    %c0_i32 = arith.constant 0 : i32
    %c0_i32_0 = arith.constant 0 : i32
    %c0_i32_1 = arith.constant 0 : i32
    return %c0_i32, %c0_i32_0 : i32, i32
  }
  func.func @transform_8(%arg0: i32) -> (i32, i32) {
    %c0_i32 = arith.constant 0 : i32
    %c0_i32_0 = arith.constant 0 : i32
    %c0_i32_1 = arith.constant 0 : i32
    return %c0_i32, %c0_i32_0 : i32, i32
  }
  func.func @transform_9(%arg0: i32) -> (i32, i32) {
    %c0_i32 = arith.constant 0 : i32
    %c0_i32_0 = arith.constant 0 : i32
    %c0_i32_1 = arith.constant 0 : i32
    return %c0_i32, %c0_i32_0 : i32, i32
  }
  func.func @transform_10(%arg0: i32) -> (i32, i32) {
    %c0_i32 = arith.constant 0 : i32
    %c0_i32_0 = arith.constant 0 : i32
    %c0_i32_1 = arith.constant 0 : i32
    return %c0_i32, %c0_i32_0 : i32, i32
  }
  func.func @transform_11(%arg0: i32) -> (i32, i32) {
    %c0_i32 = arith.constant 0 : i32
    %c0_i32_0 = arith.constant 0 : i32
    %c0_i32_1 = arith.constant 0 : i32
    return %c0_i32, %c0_i32_0 : i32, i32
  }
  func.func @transform_12(%arg0: i32) -> (i32, i32) {
    %c0_i32 = arith.constant 0 : i32
    %c0_i32_0 = arith.constant 0 : i32
    %c0_i32_1 = arith.constant 0 : i32
    return %c0_i32, %c0_i32_0 : i32, i32
  }
  func.func @transform_13(%arg0: i32) -> (i32, i32, i32) {
    %c0_i32 = arith.constant 0 : i32
    %c0_i32_0 = arith.constant 0 : i32
    %c0_i32_1 = arith.constant 0 : i32
    return %arg0, %c0_i32, %c0_i32_0 : i32, i32, i32
  }
}

module attributes {stable_mosaic.version = 11 : i64} {
  func.func @_final_kernel(%arg0: i32, %arg1: memref<16x128xf32, #tpu.memory_space<vmem>>, %arg2: memref<2x128xf32, #tpu.memory_space<vmem>>, %arg3: memref<128x128xf32, #tpu.memory_space<vmem>>, %arg4: memref<1x128xf32, #tpu.memory_space<vmem>>, %arg5: memref<16x128xf32, #tpu.memory_space<vmem>>) attributes {dimension_semantics = [#tpu.dimension_semantics<parallel>], iteration_bounds = array<i64: 1>, scalar_prefetch = 0 : i64, scratch_operands = 0 : i64, tpu.core_type = #tpu.core_type<tc>, window_params = [{transform_indices = @transform_0, window_bounds = array<i64: 16, 128>}, {pipeline_mode = #tpu.pipeline_mode<synchronous>, transform_indices = @transform_1, window_bounds = array<i64: 2, 128>}, {pipeline_mode = #tpu.pipeline_mode<synchronous>, transform_indices = @transform_2, window_bounds = array<i64: 128, 128>}, {pipeline_mode = #tpu.pipeline_mode<synchronous>, transform_indices = @transform_3, window_bounds = array<i64: 1, 128>}, {transform_indices = @transform_4, window_bounds = array<i64: 16, 128>}]} {
    %c0 = arith.constant 0 : index
    %c0_0 = arith.constant 0 : index
    %0 = vector.load %arg2[%c0, %c0_0] : memref<2x128xf32, #tpu.memory_space<vmem>>, vector<2x128xf32>
    %c0_1 = arith.constant 0 : index
    %c0_2 = arith.constant 0 : index
    %1 = vector.load %arg1[%c0_1, %c0_2] : memref<16x128xf32, #tpu.memory_space<vmem>>, vector<16x128xf32>
    %2 = vector.extract_strided_slice %0 {offsets = [0, 0], sizes = [1, 128], strides = [1, 1]} : vector<2x128xf32> to vector<1x128xf32>
    %3 = vector.extract_strided_slice %0 {offsets = [1, 0], sizes = [1, 128], strides = [1, 1]} : vector<2x128xf32> to vector<1x128xf32>
    %cst = arith.constant dense<0.000000e+00> : vector<16xf32>
    %4 = vector.multi_reduction <add>, %1, %cst [1] : vector<16x128xf32> to vector<16xf32>
    %5 = vector.shape_cast %4 : vector<16xf32> to vector<16x1xf32>
    %cst_3 = arith.constant 1.280000e+02 : f32
    %6 = vector.broadcast %cst_3 : f32 to vector<16x1xf32>
    %7 = arith.divf %5, %6 : vector<16x1xf32>
    %8 = vector.broadcast %7 : vector<16x1xf32> to vector<16x128xf32>
    %9 = arith.subf %1, %8 : vector<16x128xf32>
    %10 = arith.mulf %9, %9 : vector<16x128xf32>
    %cst_4 = arith.constant dense<0.000000e+00> : vector<16xf32>
    %11 = vector.multi_reduction <add>, %10, %cst_4 [1] : vector<16x128xf32> to vector<16xf32>
    %12 = vector.shape_cast %11 : vector<16xf32> to vector<16x1xf32>
    %cst_5 = arith.constant 1.280000e+02 : f32
    %13 = vector.broadcast %cst_5 : f32 to vector<16x1xf32>
    %14 = arith.divf %12, %13 : vector<16x1xf32>
    %cst_6 = arith.constant 9.99999974E-6 : f32
    %15 = vector.broadcast %cst_6 : f32 to vector<16x1xf32>
    %16 = arith.addf %14, %15 : vector<16x1xf32>
    %17 = math.rsqrt %16 : vector<16x1xf32>
    %18 = vector.broadcast %17 : vector<16x1xf32> to vector<16x128xf32>
    %19 = arith.mulf %9, %18 : vector<16x128xf32>
    %20 = vector.broadcast %2 : vector<1x128xf32> to vector<16x128xf32>
    %21 = arith.mulf %19, %20 : vector<16x128xf32>
    %22 = vector.broadcast %3 : vector<1x128xf32> to vector<16x128xf32>
    %23 = arith.addf %21, %22 : vector<16x128xf32>
    %24 = arith.truncf %23 : vector<16x128xf32> to vector<16x128xbf16>
    %c0_7 = arith.constant 0 : index
    %c0_8 = arith.constant 0 : index
    %25 = vector.load %arg3[%c0_7, %c0_8] : memref<128x128xf32, #tpu.memory_space<vmem>>, vector<128x128xf32>
    %26 = arith.truncf %25 : vector<128x128xf32> to vector<128x128xbf16>
    %cst_9 = arith.constant dense<0.000000e+00> : vector<16x128xf32>
    %27 = tpu.matmul %24, %26, %cst_9 {dimension_numbers = #tpu.dot_dimension_numbers<[1], [0], [0], [1], [0, 0, 1, 1], [], []>} : vector<16x128xbf16>, vector<128x128xbf16>, vector<16x128xf32> -> vector<16x128xf32>
    %c0_10 = arith.constant 0 : index
    %c0_11 = arith.constant 0 : index
    %28 = vector.load %arg4[%c0_10, %c0_11] : memref<1x128xf32, #tpu.memory_space<vmem>>, vector<1x128xf32>
    %29 = vector.broadcast %28 : vector<1x128xf32> to vector<16x128xf32>
    %30 = arith.addf %27, %29 : vector<16x128xf32>
    %cst_12 = arith.constant dense<0xFF800000> : vector<16xf32>
    %31 = vector.multi_reduction <maximumf>, %30, %cst_12 [1] : vector<16x128xf32> to vector<16xf32>
    %32 = vector.shape_cast %31 : vector<16xf32> to vector<16x1xf32>
    %33 = vector.broadcast %32 : vector<16x1xf32> to vector<16x128xf32>
    %34 = arith.subf %30, %33 : vector<16x128xf32>
    %35 = math.exp %34 : vector<16x128xf32>
    %cst_13 = arith.constant dense<0.000000e+00> : vector<16xf32>
    %36 = vector.multi_reduction <add>, %35, %cst_13 [1] : vector<16x128xf32> to vector<16xf32>
    %37 = vector.shape_cast %36 : vector<16xf32> to vector<16x1xf32>
    %38 = math.log %37 : vector<16x1xf32>
    %39 = vector.broadcast %38 : vector<16x1xf32> to vector<16x128xf32>
    %40 = arith.subf %34, %39 : vector<16x128xf32>
    %c0_14 = arith.constant 0 : index
    %c0_15 = arith.constant 0 : index
    %41 = vector.load %arg5[%c0_14, %c0_15] : memref<16x128xf32, #tpu.memory_space<vmem>>, vector<16x128xf32>
    tpu.vector_store %arg5[%c0_14, %c0_15], %40 {strides = array<i32>} : memref<16x128xf32, #tpu.memory_space<vmem>>, vector<16x128xf32>,
    return
  }
  func.func @transform_0(%arg0: i32) -> (i32, i32) {
    %c0_i32 = arith.constant 0 : i32
    %c0_i32_0 = arith.constant 0 : i32
    return %arg0, %c0_i32 : i32, i32
  }
  func.func @transform_1(%arg0: i32) -> (i32, i32) {
    %c0_i32 = arith.constant 0 : i32
    %c0_i32_0 = arith.constant 0 : i32
    %c0_i32_1 = arith.constant 0 : i32
    return %c0_i32, %c0_i32_0 : i32, i32
  }
  func.func @transform_2(%arg0: i32) -> (i32, i32) {
    %c0_i32 = arith.constant 0 : i32
    %c0_i32_0 = arith.constant 0 : i32
    %c0_i32_1 = arith.constant 0 : i32
    return %c0_i32, %c0_i32_0 : i32, i32
  }
  func.func @transform_3(%arg0: i32) -> (i32, i32) {
    %c0_i32 = arith.constant 0 : i32
    %c0_i32_0 = arith.constant 0 : i32
    %c0_i32_1 = arith.constant 0 : i32
    return %c0_i32, %c0_i32_0 : i32, i32
  }
  func.func @transform_4(%arg0: i32) -> (i32, i32) {
    %c0_i32 = arith.constant 0 : i32
    %c0_i32_0 = arith.constant 0 : i32
    return %arg0, %c0_i32 : i32, i32
  }
}

</mosaic_0001>

<llo_original>
// kernel: transformer_forward.5
$region0: #{transformer_forward.5}
  #allocation0 [shape = 'u32[]', space=smem, size = 0x4, offset = 0x4, fixed_abs, tag = 'smem constant byte address 0x4 - core index']
  #allocation1 [shape = 'u32[144,128]{1,0:T(1,128)}', space=vmem, size = 0x12000, scoped, tag = 'internal scratch']
  %s0 = inlined_call_operand.vmem [shape: f32[2,8,128], index: 0, kind: input, shape index: {}]
  %s1 = inlined_call_operand.vmem [shape: f32[128,384], index: 1, kind: input, shape index: {}]
  %s2 = inlined_call_operand.vmem [shape: f32[1,384], index: 2, kind: input, shape index: {}]
  %s3 = inlined_call_operand.vmem [shape: f32[128,128], index: 3, kind: input, shape index: {}]
  %s4 = inlined_call_operand.vmem [shape: f32[128,128], index: 4, kind: input, shape index: {}]
  %s5 = inlined_call_operand.vmem [shape: f32[1,128], index: 5, kind: input, shape index: {}]
  %s6 = inlined_call_operand.hbm [shape: f32[128,128], index: 6, kind: input, shape index: {}]
  %s7 = inlined_call_operand.vmem [shape: f32[6,128], index: 7, kind: input, shape index: {}]
  %s8 = inlined_call_operand.vmem [shape: f32[2,128], index: 8, kind: input, shape index: {}]
  %s9 = inlined_call_operand.vmem [shape: f32[2,8,128], index: 9, kind: output, shape index: {}]
  %s10 = sld [smem:[#allocation0]]
  $region73: #{transformer_forward.5} parent=0
    _
  %s12 = ssub.s32 1, %s10
  %s13 = scalar_select 0, %s12, %s10
  $region1: #{transformer_forward.5} parent=0
    #allocation2 [shape = 'u8[65536]{0}', space=vmem, size = 0x10000, scoped, tag = 'input window, operand 6, single buffered']
    #allocation3 [shape = 's32[2]{0}', space=sflag, size = 0x8, scoped, tag = 'scoped memory for transformer_forward.5']
    %14 = vsyncpa [#allocation3], 0
    loop: start=0, step=1, limit=4
    $region2: #{transformer_forward.5} parent=1 // loop_pre_header
      _
    $region3: #{transformer_forward.5} parent=1 // loop_header
      %s16 = sphi 0, %s20
      %p17 = scmp.ge.s32.totalorder %s16, 4
      %s26 = sphi 0, %s28
      %s29 = sphi 0, %s26
      %s30 = sphi 0, %s29
      %s46 = sphi 0, %s30
      %s50 = sphi 0, %s50
      %s52 = sphi 0, %s50
      %s53 = sphi 0, %s52
      %s67 = sphi 0, %s53
      %s71 = sphi 0, %s71
      %s73 = sphi 0, %s71
      %s74 = sphi 0, %s73
      %s88 = sphi 0, %s74
      %s92 = sphi 0, %s92
      %s94 = sphi 0, %s92
      %s95 = sphi 0, %s94
      %s109 = sphi 0, %s95
      %s113 = sphi 0, %s113
      %s115 = sphi 0, %s113
      %s116 = sphi 0, %s115
      %s130 = sphi 0, %s116
      %s134 = sphi 0, %s134
      %s136 = sphi 0, %s134
      %s137 = sphi 0, %s136
      %s151 = sphi 0, %s137
      %s155 = sphi 0, %s155
      %s157 = sphi 0, %s155
      %s158 = sphi 0, %s157
      %s172 = sphi 0, %s158
      %s176 = sphi 0, %s176
      %s178 = sphi 0, %s176
      %s179 = sphi 0, %s178
      %s193 = sphi 0, %s179
      %s197 = sphi 0, %s197
      %s199 = sphi 0, %s197
      %s200 = sphi 0, %s199
      %s214 = sphi 0, %s200
      %s220 = sphi 0, %s222
      %s223 = sphi 0, %s220
      %s224 = sphi 0, %s223
      %s240 = sphi 0, %s224
    $region4: #{transformer_forward.5} parent=1 // loop_header_branch
      %19 = sbr.rel (%p17) target = $region8
    $region5: #{transformer_forward.5} parent=1 // loop_body
      %s21 = ssub.s32 %s16, 1
      %s22 = ssub.s32 %s16, 2
      %s23 = sadd.s32 %s16, 1
      %s24 = ssub.s32 %s16, %s23
      %p25 = scmp.eq.s32.totalorder %s24, 0
      %s27 = sadd.s32 %s26, 1
      %s28 = scalar_select %p25, %s26, %s27
      %p31 = pneg %p25
      %p32 = scmp.eq.s32.totalorder %s16, 1
      %p33 = por %p31, %p32
      %p34 = scmp.ne.s32.totalorder %s26, %s29
      %p35 = scmp.eq.s32.totalorder %s16, 0
      %p36 = por %p34, %p35
      %p37 = scmp.ne.s32.totalorder %s26, %s29
      %p38 = scmp.eq.s32.totalorder %s21, 1
      %p39 = por %p37, %p38
      %p40 = scmp.ne.s32.totalorder %s29, %s30
      %p41 = scmp.eq.s32.totalorder %s21, 0
      %p42 = por %p40, %p41
      %p43 = scmp.ne.s32.totalorder %s29, %s30
      %p44 = scmp.eq.s32.totalorder %s22, 1
      %p45 = por %p43, %p44
      %p47 = scmp.ne.s32.totalorder %s30, %s46
      %p48 = scmp.eq.s32.totalorder %s22, 0
      %p49 = por %p47, %p48
      %s51 = sadd.s32 %s50, 1
      %p54 = scmp.eq.s32.totalorder %s16, 1
      %p55 = scmp.ne.s32.totalorder %s50, %s52
      %p56 = scmp.eq.s32.totalorder %s16, 0
      %p57 = por %p55, %p56
      %p58 = scmp.ne.s32.totalorder %s50, %s52
      %p59 = scmp.eq.s32.totalorder %s21, 1
      %p60 = por %p58, %p59
      %p61 = scmp.ne.s32.totalorder %s52, %s53
      %p62 = scmp.eq.s32.totalorder %s21, 0
      %p63 = por %p61, %p62
      %p64 = scmp.ne.s32.totalorder %s52, %s53
      %p65 = scmp.eq.s32.totalorder %s22, 1
      %p66 = por %p64, %p65
      %p68 = scmp.ne.s32.totalorder %s53, %s67
      %p69 = scmp.eq.s32.totalorder %s22, 0
      %p70 = por %p68, %p69
      %s72 = sadd.s32 %s71, 1
      %p75 = scmp.eq.s32.totalorder %s16, 1
      %p76 = scmp.ne.s32.totalorder %s71, %s73
      %p77 = scmp.eq.s32.totalorder %s16, 0
      %p78 = por %p76, %p77
      %p79 = scmp.ne.s32.totalorder %s71, %s73
      %p80 = scmp.eq.s32.totalorder %s21, 1
      %p81 = por %p79, %p80
      %p82 = scmp.ne.s32.totalorder %s73, %s74
      %p83 = scmp.eq.s32.totalorder %s21, 0
      %p84 = por %p82, %p83
      %p85 = scmp.ne.s32.totalorder %s73, %s74
      %p86 = scmp.eq.s32.totalorder %s22, 1
      %p87 = por %p85, %p86
      %p89 = scmp.ne.s32.totalorder %s74, %s88
      %p90 = scmp.eq.s32.totalorder %s22, 0
      %p91 = por %p89, %p90
      %s93 = sadd.s32 %s92, 1
      %p96 = scmp.eq.s32.totalorder %s16, 1
      %p97 = scmp.ne.s32.totalorder %s92, %s94
      %p98 = scmp.eq.s32.totalorder %s16, 0
      %p99 = por %p97, %p98
      %p100 = scmp.ne.s32.totalorder %s92, %s94
      %p101 = scmp.eq.s32.totalorder %s21, 1
      %p102 = por %p100, %p101
      %p103 = scmp.ne.s32.totalorder %s94, %s95
      %p104 = scmp.eq.s32.totalorder %s21, 0
      %p105 = por %p103, %p104
      %p106 = scmp.ne.s32.totalorder %s94, %s95
      %p107 = scmp.eq.s32.totalorder %s22, 1
      %p108 = por %p106, %p107
      %p110 = scmp.ne.s32.totalorder %s95, %s109
      %p111 = scmp.eq.s32.totalorder %s22, 0
      %p112 = por %p110, %p111
      %s114 = sadd.s32 %s113, 1
      %p117 = scmp.eq.s32.totalorder %s16, 1
      %p118 = scmp.ne.s32.totalorder %s113, %s115
      %p119 = scmp.eq.s32.totalorder %s16, 0
      %p120 = por %p118, %p119
      %p121 = scmp.ne.s32.totalorder %s113, %s115
      %p122 = scmp.eq.s32.totalorder %s21, 1
      %p123 = por %p121, %p122
      %p124 = scmp.ne.s32.totalorder %s115, %s116
      %p125 = scmp.eq.s32.totalorder %s21, 0
      %p126 = por %p124, %p125
      %p127 = scmp.ne.s32.totalorder %s115, %s116
      %p128 = scmp.eq.s32.totalorder %s22, 1
      %p129 = por %p127, %p128
      %p131 = scmp.ne.s32.totalorder %s116, %s130
      %p132 = scmp.eq.s32.totalorder %s22, 0
      %p133 = por %p131, %p132
      %s135 = sadd.s32 %s134, 1
      %p138 = scmp.eq.s32.totalorder %s16, 1
      %p139 = scmp.ne.s32.totalorder %s134, %s136
      %p140 = scmp.eq.s32.totalorder %s16, 0
      %p141 = por %p139, %p140
      %p142 = scmp.ne.s32.totalorder %s134, %s136
      %p143 = scmp.eq.s32.totalorder %s21, 1
      %p144 = por %p142, %p143
      %p145 = scmp.ne.s32.totalorder %s136, %s137
      %p146 = scmp.eq.s32.totalorder %s21, 0
      %p147 = por %p145, %p146
      %p148 = scmp.ne.s32.totalorder %s136, %s137
      %p149 = scmp.eq.s32.totalorder %s22, 1
      %p150 = por %p148, %p149
      %p152 = scmp.ne.s32.totalorder %s137, %s151
      %p153 = scmp.eq.s32.totalorder %s22, 0
      %p154 = por %p152, %p153
      %s156 = sadd.s32 %s155, 1
      %p159 = scmp.eq.s32.totalorder %s16, 1
      %p160 = scmp.ne.s32.totalorder %s155, %s157
      %p161 = scmp.eq.s32.totalorder %s16, 0
      %p162 = por %p160, %p161
      %p163 = scmp.ne.s32.totalorder %s155, %s157
      %p164 = scmp.eq.s32.totalorder %s21, 1
      %p165 = por %p163, %p164
      %p166 = scmp.ne.s32.totalorder %s157, %s158
      %p167 = scmp.eq.s32.totalorder %s21, 0
      %p168 = por %p166, %p167
      %p169 = scmp.ne.s32.totalorder %s157, %s158
      %p170 = scmp.eq.s32.totalorder %s22, 1
      %p171 = por %p169, %p170
      %p173 = scmp.ne.s32.totalorder %s158, %s172
      %p174 = scmp.eq.s32.totalorder %s22, 0
      %p175 = por %p173, %p174
      %s177 = sadd.s32 %s176, 1
      %p180 = scmp.eq.s32.totalorder %s16, 1
      %p181 = scmp.ne.s32.totalorder %s176, %s178
      %p182 = scmp.eq.s32.totalorder %s16, 0
      %p183 = por %p181, %p182
      %p184 = scmp.ne.s32.totalorder %s176, %s178
      %p185 = scmp.eq.s32.totalorder %s21, 1
      %p186 = por %p184, %p185
      %p187 = scmp.ne.s32.totalorder %s178, %s179
      %p188 = scmp.eq.s32.totalorder %s21, 0
      %p189 = por %p187, %p188
      %p190 = scmp.ne.s32.totalorder %s178, %s179
      %p191 = scmp.eq.s32.totalorder %s22, 1
      %p192 = por %p190, %p191
      %p194 = scmp.ne.s32.totalorder %s179, %s193
      %p195 = scmp.eq.s32.totalorder %s22, 0
      %p196 = por %p194, %p195
      %s198 = sadd.s32 %s197, 1
      %p201 = scmp.eq.s32.totalorder %s16, 1
      %p202 = scmp.ne.s32.totalorder %s197, %s199
      %p203 = scmp.eq.s32.totalorder %s16, 0
      %p204 = por %p202, %p203
      %p205 = scmp.ne.s32.totalorder %s197, %s199
      %p206 = scmp.eq.s32.totalorder %s21, 1
      %p207 = por %p205, %p206
      %p208 = scmp.ne.s32.totalorder %s199, %s200
      %p209 = scmp.eq.s32.totalorder %s21, 0
      %p210 = por %p208, %p209
      %p211 = scmp.ne.s32.totalorder %s199, %s200
      %p212 = scmp.eq.s32.totalorder %s22, 1
      %p213 = por %p211, %p212
      %p215 = scmp.ne.s32.totalorder %s200, %s214
      %p216 = scmp.eq.s32.totalorder %s22, 0
      %p217 = por %p215, %p216
      %s218 = ssub.s32 %s16, %s23
      %p219 = scmp.eq.s32.totalorder %s218, 0
      %s221 = sadd.s32 %s220, 1
      %s222 = scalar_select %p219, %s220, %s221
      %p225 = pneg %p219
      %p226 = scmp.eq.s32.totalorder %s16, 1
      %p227 = por %p225, %p226
      %p228 = scmp.ne.s32.totalorder %s220, %s223
      %p229 = scmp.eq.s32.totalorder %s16, 0
      %p230 = por %p228, %p229
      %p231 = scmp.ne.s32.totalorder %s220, %s223
      %p232 = scmp.eq.s32.totalorder %s21, 1
      %p233 = por %p231, %p232
      %p234 = scmp.ne.s32.totalorder %s223, %s224
      %p235 = scmp.eq.s32.totalorder %s21, 0
      %p236 = por %p234, %p235
      %p237 = scmp.ne.s32.totalorder %s223, %s224
      %p238 = scmp.eq.s32.totalorder %s22, 1
      %p239 = por %p237, %p238
      %p241 = scmp.ne.s32.totalorder %s224, %s240
      %p242 = scmp.eq.s32.totalorder %s22, 0
      %p243 = por %p241, %p242
      %p244 = scmp.le.s32.totalorder 1, %s16
      %p245 = scmp.lt.s32.totalorder %s16, 3
      %p246 = pnand %p244, %p245
      %p247 = pneg %p246
      // Predicated region
      $region9: #{transformer_forward.5} parent=5 // pred_check
        _
      $region10: #{transformer_forward.5} parent=5 // pred_check_branch
        %249 = sbr.rel (%p246) target = $region12
      $region11: #{transformer_forward.5} parent=5 // pred_region
        %s250 = ssub.s32 %s16, 1
        // Predicated region
        $region13: #{transformer_forward.5} parent=11 // pred_check
          %p251 = pneg %p63
        $region14: #{transformer_forward.5} parent=11 // pred_check_branch
          %253 = sbr.rel (%p251) target = $region16
        $region15: #{transformer_forward.5} parent=11 // pred_region
          _
        $region16: #{transformer_forward.5} parent=11 // pred_fallthru
          _
        // Predicated region
        $region17: #{transformer_forward.5} parent=11 // pred_check
          %p254 = pneg %p84
        $region18: #{transformer_forward.5} parent=11 // pred_check_branch
          %256 = sbr.rel (%p254) target = $region20
        $region19: #{transformer_forward.5} parent=11 // pred_region
          _
        $region20: #{transformer_forward.5} parent=11 // pred_fallthru
          _
        // Predicated region
        $region21: #{transformer_forward.5} parent=11 // pred_check
          %p257 = pneg %p105
        $region22: #{transformer_forward.5} parent=11 // pred_check_branch
          %259 = sbr.rel (%p257) target = $region24
        $region23: #{transformer_forward.5} parent=11 // pred_region
          _
        $region24: #{transformer_forward.5} parent=11 // pred_fallthru
          _
        // Predicated region
        $region25: #{transformer_forward.5} parent=11 // pred_check
          %p260 = pneg %p126
        $region26: #{transformer_forward.5} parent=11 // pred_check_branch
          %262 = sbr.rel (%p260) target = $region28
        $region27: #{transformer_forward.5} parent=11 // pred_region
          _
        $region28: #{transformer_forward.5} parent=11 // pred_fallthru
          _
        // Predicated region
        $region29: #{transformer_forward.5} parent=11 // pred_check
          %p263 = pneg %p147
        $region30: #{transformer_forward.5} parent=11 // pred_check_branch
          %265 = sbr.rel (%p263) target = $region32
        $region31: #{transformer_forward.5} parent=11 // pred_region
          _
        $region32: #{transformer_forward.5} parent=11 // pred_fallthru
          _
        // Predicated region
        $region33: #{transformer_forward.5} parent=11 // pred_check
          %p266 = pneg %p168
        $region34: #{transformer_forward.5} parent=11 // pred_check_branch
          %268 = sbr.rel (%p266) target = $region36
        $region35: #{transformer_forward.5} parent=11 // pred_region
          %s270 = ssub.s32 2048, 2048
          %271 = vsyncadd [#allocation3], %s270
          %s272 = sshll.u32 [#allocation2], 4
          %s273 = int_to_ptr.vmem [resolvable:$true] %s272
          %278 = dma.hbm_to_vmem [thread:$0]  %s6, 2048, %s273, [#allocation3], 128, 128, 8
        $region36: #{transformer_forward.5} parent=11 // pred_fallthru
          _
        // Predicated region
        $region37: #{transformer_forward.5} parent=11 // pred_check
          %p279 = pneg %p189
        $region38: #{transformer_forward.5} parent=11 // pred_check_branch
          %281 = sbr.rel (%p279) target = $region40
        $region39: #{transformer_forward.5} parent=11 // pred_region
          _
        $region40: #{transformer_forward.5} parent=11 // pred_fallthru
          _
        // Predicated region
        $region41: #{transformer_forward.5} parent=11 // pred_check
          %p282 = pneg %p210
        $region42: #{transformer_forward.5} parent=11 // pred_check_branch
          %284 = sbr.rel (%p282) target = $region44
        $region43: #{transformer_forward.5} parent=11 // pred_region
          _
        $region44: #{transformer_forward.5} parent=11 // pred_fallthru
          _
      $region12: #{transformer_forward.5} parent=5 // pred_fallthru
        _
      %p285 = scmp.lt.s32.totalorder %s16, 2
      // Predicated region
      $region45: #{transformer_forward.5} parent=5 // pred_check
        %p286 = pneg %p285
      $region46: #{transformer_forward.5} parent=5 // pred_check_branch
        %288 = sbr.rel (%p286) target = $region48
      $region47: #{transformer_forward.5} parent=5 // pred_region
        // Predicated region
        $region49: #{transformer_forward.5} parent=47 // pred_check
          %p289 = pneg %p36
        $region50: #{transformer_forward.5} parent=47 // pred_check_branch
          %291 = sbr.rel (%p289) target = $region52
        $region51: #{transformer_forward.5} parent=47 // pred_region
          %p292 = scmp.lt.s32.totalorder %s16, 1
          %s293 = scalar_select %p292, %s16, 1
          %s294 = smul.addr %s293, 8
          %s295 = scalar_lea.vmem %s0, %s294
        $region52: #{transformer_forward.5} parent=47 // pred_fallthru
          _
      $region48: #{transformer_forward.5} parent=5 // pred_fallthru
        _
      %p296 = scmp.le.s32.totalorder 1, %s16
      %p297 = scmp.lt.s32.totalorder %s16, 3
      %p298 = pnand %p296, %p297
      %p299 = pneg %p298
      // Predicated region
      $region53: #{transformer_forward.5} parent=5 // pred_check
        _
      $region54: #{transformer_forward.5} parent=5 // pred_check_branch
        %301 = sbr.rel (%p298) target = $region56
      $region55: #{transformer_forward.5} parent=5 // pred_region
        %s302 = ssub.s32 %s16, 1
        // Predicated region
        $region57: #{transformer_forward.5} parent=55 // pred_check
          %p303 = pneg %p168
        $region58: #{transformer_forward.5} parent=55 // pred_check_branch
          %305 = sbr.rel (%p303) target = $region60
        $region59: #{transformer_forward.5} parent=55 // pred_region
          %306 = dma.done [#allocation3], 2048
        $region60: #{transformer_forward.5} parent=55 // pred_fallthru
          _
        %p307 = scmp.lt.s32.totalorder %s21, 1
        %s308 = scalar_select %p307, %s21, 1
        %s309 = smul.addr %s308, 8
        %s310 = scalar_lea.vmem %s0, %s309
        %p311 = pneg %p42
        %p312 = pneg %p39
        %p313 = pneg %p63
        %p314 = pneg %p60
        %p315 = pneg %p84
        %p316 = pneg %p81
        %p317 = pneg %p105
        %p318 = pneg %p102
        %p319 = pneg %p126
        %p320 = pneg %p123
        %p321 = pneg %p147
        %p322 = pneg %p144
        %p323 = pneg %p168
        %p324 = pneg %p165
        %p325 = pneg %p189
        %p326 = pneg %p186
        %p327 = pneg %p210
        %p328 = pneg %p207
        %p329 = pneg %p236
        %p330 = pneg %p233
        %p331 = scmp.lt.s32.totalorder %s21, 1
        %s332 = scalar_select %p331, %s21, 1
        %s333 = smul.addr %s332, 8
        %s334 = scalar_lea.vmem %s9, %s333
        %p335 = scmp.lt.s32.totalorder %s21, 1
        %s336 = scalar_select %p335, %s21, 1
        %s337 = smul.addr %s336, 8
        %s338 = scalar_lea.vmem %s0, %s337
        %p339 = scmp.lt.s32.totalorder %s21, 1
        %s340 = scalar_select %p339, %s21, 1
        %s341 = smul.addr %s340, 8
        %s342 = scalar_lea.vmem %s9, %s341
        %v344 = vld [vmem:[%s338] sm:$0xff]
        %v345 = vld [vmem:[%s7] sm:$0x3f]
        %v346 = vld [vmem:[%s1] sm:$0xff]
        %v347 = vld [vmem:[%s1 + $0x8] sm:$0xff]
        %v348 = vld [vmem:[%s1 + $0x10] sm:$0xff]
        %v349 = vld [vmem:[%s1 + $0x18] sm:$0xff]
        %v350 = vld [vmem:[%s1 + $0x20] sm:$0xff]
        %v351 = vld [vmem:[%s1 + $0x28] sm:$0xff]
        %v352 = vld [vmem:[%s1 + $0x30] sm:$0xff]
        %v353 = vld [vmem:[%s1 + $0x38] sm:$0xff]
        %v354 = vld [vmem:[%s1 + $0x40] sm:$0xff]
        %v355 = vld [vmem:[%s1 + $0x48] sm:$0xff]
        %v356 = vld [vmem:[%s1 + $0x50] sm:$0xff]
        %v357 = vld [vmem:[%s1 + $0x58] sm:$0xff]
        %v358 = vld [vmem:[%s1 + $0x60] sm:$0xff]
        %v359 = vld [vmem:[%s1 + $0x68] sm:$0xff]
        %v360 = vld [vmem:[%s1 + $0x70] sm:$0xff]
        %v361 = vld [vmem:[%s1 + $0x78] sm:$0xff]
        %v362 = vld [vmem:[%s1 + $0x80] sm:$0xff]
        %v363 = vld [vmem:[%s1 + $0x88] sm:$0xff]
        %v364 = vld [vmem:[%s1 + $0x90] sm:$0xff]
        %v365 = vld [vmem:[%s1 + $0x98] sm:$0xff]
        %v366 = vld [vmem:[%s1 + $0xa0] sm:$0xff]
        %v367 = vld [vmem:[%s1 + $0xa8] sm:$0xff]
        %v368 = vld [vmem:[%s1 + $0xb0] sm:$0xff]
        %v369 = vld [vmem:[%s1 + $0xb8] sm:$0xff]
        %v370 = vld [vmem:[%s1 + $0xc0] sm:$0xff]
        %v371 = vld [vmem:[%s1 + $0xc8] sm:$0xff]
        %v372 = vld [vmem:[%s1 + $0xd0] sm:$0xff]
        %v373 = vld [vmem:[%s1 + $0xd8] sm:$0xff]
        %v374 = vld [vmem:[%s1 + $0xe0] sm:$0xff]
        %v375 = vld [vmem:[%s1 + $0xe8] sm:$0xff]
        %v376 = vld [vmem:[%s1 + $0xf0] sm:$0xff]
        %v377 = vld [vmem:[%s1 + $0xf8] sm:$0xff]
        %v378 = vld [vmem:[%s1 + $0x100] sm:$0xff]
        %v379 = vld [vmem:[%s1 + $0x108] sm:$0xff]
        %v380 = vld [vmem:[%s1 + $0x110] sm:$0xff]
        %v381 = vld [vmem:[%s1 + $0x118] sm:$0xff]
        %v382 = vld [vmem:[%s1 + $0x120] sm:$0xff]
        %v383 = vld [vmem:[%s1 + $0x128] sm:$0xff]
        %v384 = vld [vmem:[%s1 + $0x130] sm:$0xff]
        %v385 = vld [vmem:[%s1 + $0x138] sm:$0xff]
        %v386 = vld [vmem:[%s1 + $0x140] sm:$0xff]
        %v387 = vld [vmem:[%s1 + $0x148] sm:$0xff]
        %v388 = vld [vmem:[%s1 + $0x150] sm:$0xff]
        %v389 = vld [vmem:[%s1 + $0x158] sm:$0xff]
        %v390 = vld [vmem:[%s1 + $0x160] sm:$0xff]
        %v391 = vld [vmem:[%s1 + $0x168] sm:$0xff]
        %v392 = vld [vmem:[%s1 + $0x170] sm:$0xff]
        %v393 = vld [vmem:[%s1 + $0x178] sm:$0xff]
        %v394 = vld [vmem:[%s2] sm:$0x7]
        %v395 = vld [vmem:[%s3] sm:$0xff]
        %v396 = vld [vmem:[%s3 + $0x8] sm:$0xff]
        %v397 = vld [vmem:[%s3 + $0x10] sm:$0xff]
        %v398 = vld [vmem:[%s3 + $0x18] sm:$0xff]
        %v399 = vld [vmem:[%s3 + $0x20] sm:$0xff]
        %v400 = vld [vmem:[%s3 + $0x28] sm:$0xff]
        %v401 = vld [vmem:[%s3 + $0x30] sm:$0xff]
        %v402 = vld [vmem:[%s3 + $0x38] sm:$0xff]
        %v403 = vld [vmem:[%s3 + $0x40] sm:$0xff]
        %v404 = vld [vmem:[%s3 + $0x48] sm:$0xff]
        %v405 = vld [vmem:[%s3 + $0x50] sm:$0xff]
        %v406 = vld [vmem:[%s3 + $0x58] sm:$0xff]
        %v407 = vld [vmem:[%s3 + $0x60] sm:$0xff]
        %v408 = vld [vmem:[%s3 + $0x68] sm:$0xff]
        %v409 = vld [vmem:[%s3 + $0x70] sm:$0xff]
        %v410 = vld [vmem:[%s3 + $0x78] sm:$0xff]
        %v411 = vpack.c.bf16 %v344, %v344
        %v412 = vpack.c.bf16 %v349, %v346
        %v413 = vpack.c.bf16 %v350, %v347
        %v414 = vpack.c.bf16 %v351, %v348
        %v415 = vpack.c.bf16 %v355, %v352
        %v416 = vpack.c.bf16 %v356, %v353
        %v417 = vpack.c.bf16 %v357, %v354
        %v418 = vpack.c.bf16 %v361, %v358
        %v419 = vpack.c.bf16 %v362, %v359
        %v420 = vpack.c.bf16 %v363, %v360
        %v421 = vpack.c.bf16 %v367, %v364
        %v422 = vpack.c.bf16 %v368, %v365
        %v423 = vpack.c.bf16 %v369, %v366
        %v424 = vpack.c.bf16 %v373, %v370
        %v425 = vpack.c.bf16 %v374, %v371
        %v426 = vpack.c.bf16 %v375, %v372
        %v427 = vpack.c.bf16 %v379, %v376
        %v428 = vpack.c.bf16 %v380, %v377
        %v429 = vpack.c.bf16 %v381, %v378
        %v430 = vpack.c.bf16 %v385, %v382
        %v431 = vpack.c.bf16 %v386, %v383
        %v432 = vpack.c.bf16 %v387, %v384
        %v433 = vpack.c.bf16 %v391, %v388
        %v434 = vpack.c.bf16 %v392, %v389
        %v435 = vpack.c.bf16 %v393, %v390
        %v437 = vlaneseq
        %v438 = vshrl.u32 %v437, 7
        %v439 = vsub.s32 0, %v438
        %v440 = vrot.slane %v394, %v439
        %v441 = vlaneseq
        %v442 = vshrl.u32 %v441, 7
        %v443 = vsub.s32 1, %v442
        %v444 = vrot.slane %v394, %v443
        %v445 = vlaneseq
        %v446 = vshrl.u32 %v445, 7
        %v447 = vsub.s32 2, %v446
        %v448 = vrot.slane %v394, %v447
        %452 = vmatprep.subr.bf16.mxu0 %v434
        %453 = vmatpush1.bf16.msra.mxu0 %v433
        %454 = vmatprep.subr.bf16.mxu0 %v431
        %455 = vmatpush1.bf16.msra.mxu0 %v430
        %456 = vmatprep.subr.bf16.mxu0 %v428
        %457 = vmatpush1.bf16.msra.mxu0 %v427
        %458 = vmatprep.subr.bf16.mxu0 %v425
        %459 = vmatpush1.bf16.msra.mxu0 %v424
        %460 = vmatprep.subr.bf16.mxu0 %v422
        %461 = vmatpush1.bf16.msra.mxu0 %v421
        %462 = vmatprep.subr.bf16.mxu0 %v419
        %463 = vmatpush1.bf16.msra.mxu0 %v418
        %464 = vmatprep.subr.bf16.mxu0 %v416
        %465 = vmatpush1.bf16.msra.mxu0 %v415
        %466 = vmatprep.subr.bf16.mxu0 %v413
        %467 = vmatpush1.bf16.msra.mxu0 %v412
        %468 = vmatprep.subr.bf16.mxu0 0
        %469 = vmatpush2.bf16.msra.mxu0 0
        %470 = vmatprep.subr.bf16.mxu0 0
        %471 = vmatpush2.bf16.msra.mxu0 0
        %472 = vmatprep.subr.bf16.mxu0 0
        %473 = vmatpush2.bf16.msra.mxu0 0
        %474 = vmatprep.subr.bf16.mxu0 0
        %475 = vmatpush2.bf16.msra.mxu0 0
        %476 = vmatprep.subr.bf16.mxu0 0
        %477 = vmatpush2.bf16.msra.mxu0 0
        %478 = vmatprep.subr.bf16.mxu0 0
        %479 = vmatpush2.bf16.msra.mxu0 0
        %480 = vmatprep.subr.bf16.mxu0 0
        %481 = vmatpush2.bf16.msra.mxu0 0
        %482 = vmatprep.subr.bf16.mxu0 0
        %483 = vmatpush2.bf16.msra.mxu0 0
        %484 = vmatprep.mubr.bf16.mxu0 0
        %485 = vmatmul.mubr.bf16.gmra.mxu0 %v411
        %v486 = vpop.f32.mrf.mxu0
        %v487 = vadd.f32 %v440, %v486
        %v488 = vpop.f32.mrf.mxu0
        %v489 = vadd.f32 %v444, %v488
        %v490 = vpop.f32.mrf.mxu0
        %v491 = vpop.f32.mrf.mxu0
        %492 = vdwg.mxu0
        %493 = vmatprep.subr.bf16.mxu0 0
        %494 = vmatpush1.bf16.msra.mxu0 %v435
        %495 = vmatprep.subr.bf16.mxu0 0
        %496 = vmatpush1.bf16.msra.mxu0 %v432
        %497 = vmatprep.subr.bf16.mxu0 0
        %498 = vmatpush1.bf16.msra.mxu0 %v429
        %499 = vmatprep.subr.bf16.mxu0 0
        %500 = vmatpush1.bf16.msra.mxu0 %v426
        %501 = vmatprep.subr.bf16.mxu0 0
        %502 = vmatpush1.bf16.msra.mxu0 %v423
        %503 = vmatprep.subr.bf16.mxu0 0
        %504 = vmatpush1.bf16.msra.mxu0 %v420
        %505 = vmatprep.subr.bf16.mxu0 0
        %506 = vmatpush1.bf16.msra.mxu0 %v417
        %507 = vmatprep.subr.bf16.mxu0 0
        %508 = vmatpush1.bf16.msra.mxu0 %v414
        %509 = vmatprep.subr.bf16.mxu0 0
        %510 = vmatpush2.bf16.msra.mxu0 0
        %511 = vmatprep.subr.bf16.mxu0 0
        %512 = vmatpush2.bf16.msra.mxu0 0
        %513 = vmatprep.subr.bf16.mxu0 0
        %514 = vmatpush2.bf16.msra.mxu0 0
        %515 = vmatprep.subr.bf16.mxu0 0
        %516 = vmatpush2.bf16.msra.mxu0 0
        %517 = vmatprep.subr.bf16.mxu0 0
        %518 = vmatpush2.bf16.msra.mxu0 0
        %519 = vmatprep.subr.bf16.mxu0 0
        %520 = vmatpush2.bf16.msra.mxu0 0
        %521 = vmatprep.subr.bf16.mxu0 0
        %522 = vmatpush2.bf16.msra.mxu0 0
        %523 = vmatprep.subr.bf16.mxu0 0
        %524 = vmatpush2.bf16.msra.mxu0 0
        %525 = vmatprep.mubr.bf16.mxu0 0
        %526 = vmatmul.mubr.bf16.gmra.mxu0 %v411
        %v527 = vpop.f32.mrf.mxu0
        %v528 = vadd.f32 %v448, %v527
        %v529 = vpop.f32.mrf.mxu0
        %v530 = vpop.f32.mrf.mxu0
        %v531 = vpop.f32.mrf.mxu0
        %532 = vdwg.mxu0
        %v533 = vpack.c.bf16 %v487, %v487
        %v534 = vpack.c.bf16 %v489, %v489
        %v535 = vpack.c.bf16 %v528, %v528
        %vm536 = vcmask 261120
        %v538 = vsel %vm536, %v533, 0
        %v541 = vsel %vm536, %v534, 0
        %543 = vmatprep.subr.bf16.mxu0 0
        %544 = vmatpush1.bf16.xpose.msra.mxu0 0
        %545 = vmatprep.subr.bf16.mxu0 0
        %546 = vmatpush1.bf16.xpose.msra.mxu0 0
        %547 = vmatprep.subr.bf16.mxu0 0
        %548 = vmatpush1.bf16.xpose.msra.mxu0 0
        %549 = vmatprep.subr.bf16.mxu0 0
        %550 = vmatpush1.bf16.xpose.msra.mxu0 0
        %551 = vmatprep.subr.bf16.mxu0 0
        %552 = vmatpush1.bf16.xpose.msra.mxu0 0
        %553 = vmatprep.subr.bf16.mxu0 0
        %554 = vmatpush1.bf16.xpose.msra.mxu0 0
        %555 = vmatprep.subr.bf16.mxu0 0
        %556 = vmatpush1.bf16.xpose.msra.mxu0 0
        %557 = vmatprep.subr.bf16.mxu0 0
        %558 = vmatpush1.bf16.xpose.msra.mxu0 %v541
        %559 = vmatprep.subr.bf16.mxu0 0
        %560 = vmatpush2.bf16.xpose.msra.mxu0 0
        %561 = vmatprep.subr.bf16.mxu0 0
        %562 = vmatpush2.bf16.xpose.msra.mxu0 0
        %563 = vmatprep.subr.bf16.mxu0 0
        %564 = vmatpush2.bf16.xpose.msra.mxu0 0
        %565 = vmatprep.subr.bf16.mxu0 0
        %566 = vmatpush2.bf16.xpose.msra.mxu0 0
        %567 = vmatprep.subr.bf16.mxu0 0
        %568 = vmatpush2.bf16.xpose.msra.mxu0 0
        %569 = vmatprep.subr.bf16.mxu0 0
        %570 = vmatpush2.bf16.xpose.msra.mxu0 0
        %571 = vmatprep.subr.bf16.mxu0 0
        %572 = vmatpush2.bf16.xpose.msra.mxu0 0
        %573 = vmatprep.subr.bf16.mxu0 0
        %574 = vmatpush2.bf16.xpose.msra.mxu0 0
        %575 = vmatprep.mubr.bf16.mxu0 0
        %576 = vmatmul.mubr.bf16.gmra.mxu0 %v538
        %v577 = vpop.f32.mrf.mxu0
        %v578 = vadd.f32 0.0, %v577
        %v579 = vpop.f32.mrf.mxu0
        %v580 = vpop.f32.mrf.mxu0
        %v581 = vpop.f32.mrf.mxu0
        %582 = vdwg.mxu0
        %v583 = vmul.f32 %v578, 0.17677669
        %vm584 = vcmask 64512
        %v585 = vsel %vm584, %v583, -inf
        %586 = vmax.xlane.f32.xlu0 %v585
        %v587 = vpop.xlane.xlu0 %586
        %v588 = vsub.f32 %v583, %v587
        %v589 = vmul.f32 %v588, 1.442695
        %v590 = vpow.pop %v589
        %v591 = vsel %vm584, %v590, 0.0
        %592 = vadd.xlane.f32.xlu0 %v591
        %v593 = vpop.xlane.xlu0 %592
        %v594 = vrcp.pop %v593
        %v595 = vmul.f32 %v590, %v594
        %v596 = vpack.c.bf16 %v595, %v595
        %v598 = vsel %vm584, %v596, 0
        %vm600 = vcmask 1043456
        %v602 = vsel %vm600, %v535, 0
        %604 = vmatprep.subr.bf16.mxu0 0
        %605 = vmatpush1.bf16.msra.mxu0 0
        %606 = vmatprep.subr.bf16.mxu0 0
        %607 = vmatpush1.bf16.msra.mxu0 0
        %608 = vmatprep.subr.bf16.mxu0 0
        %609 = vmatpush1.bf16.msra.mxu0 0
        %610 = vmatprep.subr.bf16.mxu0 0
        %611 = vmatpush1.bf16.msra.mxu0 0
        %612 = vmatprep.subr.bf16.mxu0 0
        %613 = vmatpush1.bf16.msra.mxu0 0
        %614 = vmatprep.subr.bf16.mxu0 0
        %615 = vmatpush1.bf16.msra.mxu0 0
        %616 = vmatprep.subr.bf16.mxu0 0
        %617 = vmatpush1.bf16.msra.mxu0 0
        %618 = vmatprep.subr.bf16.mxu0 0
        %619 = vmatpush1.bf16.msra.mxu0 %v602
        %620 = vmatprep.subr.bf16.mxu0 0
        %621 = vmatpush2.bf16.msra.mxu0 0
        %622 = vmatprep.subr.bf16.mxu0 0
        %623 = vmatpush2.bf16.msra.mxu0 0
        %624 = vmatprep.subr.bf16.mxu0 0
        %625 = vmatpush2.bf16.msra.mxu0 0
        %626 = vmatprep.subr.bf16.mxu0 0
        %627 = vmatpush2.bf16.msra.mxu0 0
        %628 = vmatprep.subr.bf16.mxu0 0
        %629 = vmatpush2.bf16.msra.mxu0 0
        %630 = vmatprep.subr.bf16.mxu0 0
        %631 = vmatpush2.bf16.msra.mxu0 0
        %632 = vmatprep.subr.bf16.mxu0 0
        %633 = vmatpush2.bf16.msra.mxu0 0
        %634 = vmatprep.subr.bf16.mxu0 0
        %635 = vmatpush2.bf16.msra.mxu0 0
        %636 = vmatprep.mubr.bf16.mxu0 0
        %637 = vmatmul.mubr.bf16.gmra.mxu0 %v598
        %v638 = vpop.f32.mrf.mxu0
        %v639 = vadd.f32 0.0, %v638
        %v640 = vpop.f32.mrf.mxu0
        %v641 = vpop.f32.mrf.mxu0
        %v642 = vpop.f32.mrf.mxu0
        %643 = vdwg.mxu0
        %645 = vrot.lane.b32.xlu0 %v533, 96
        %v646 = vpop.permute.xlu0 %645
        %648 = vrot.lane.b32.xlu0 %v534, 96
        %v649 = vpop.permute.xlu0 %648
        %v651 = vsel %vm536, %v646, 0
        %v654 = vsel %vm536, %v649, 0
        %656 = vmatprep.subr.bf16.mxu0 0
        %657 = vmatpush1.bf16.xpose.msra.mxu0 0
        %658 = vmatprep.subr.bf16.mxu0 0
        %659 = vmatpush1.bf16.xpose.msra.mxu0 0
        %660 = vmatprep.subr.bf16.mxu0 0
        %661 = vmatpush1.bf16.xpose.msra.mxu0 0
        %662 = vmatprep.subr.bf16.mxu0 0
        %663 = vmatpush1.bf16.xpose.msra.mxu0 0
        %664 = vmatprep.subr.bf16.mxu0 0
        %665 = vmatpush1.bf16.xpose.msra.mxu0 0
        %666 = vmatprep.subr.bf16.mxu0 0
        %667 = vmatpush1.bf16.xpose.msra.mxu0 0
        %668 = vmatprep.subr.bf16.mxu0 0
        %669 = vmatpush1.bf16.xpose.msra.mxu0 0
        %670 = vmatprep.subr.bf16.mxu0 0
        %671 = vmatpush1.bf16.xpose.msra.mxu0 %v654
        %672 = vmatprep.subr.bf16.mxu0 0
        %673 = vmatpush2.bf16.xpose.msra.mxu0 0
        %674 = vmatprep.subr.bf16.mxu0 0
        %675 = vmatpush2.bf16.xpose.msra.mxu0 0
        %676 = vmatprep.subr.bf16.mxu0 0
        %677 = vmatpush2.bf16.xpose.msra.mxu0 0
        %678 = vmatprep.subr.bf16.mxu0 0
        %679 = vmatpush2.bf16.xpose.msra.mxu0 0
        %680 = vmatprep.subr.bf16.mxu0 0
        %681 = vmatpush2.bf16.xpose.msra.mxu0 0
        %682 = vmatprep.subr.bf16.mxu0 0
        %683 = vmatpush2.bf16.xpose.msra.mxu0 0
        %684 = vmatprep.subr.bf16.mxu0 0
        %685 = vmatpush2.bf16.xpose.msra.mxu0 0
        %686 = vmatprep.subr.bf16.mxu0 0
        %687 = vmatpush2.bf16.xpose.msra.mxu0 0
        %688 = vmatprep.mubr.bf16.mxu0 0
        %689 = vmatmul.mubr.bf16.gmra.mxu0 %v651
        %v690 = vpop.f32.mrf.mxu0
        %v691 = vadd.f32 0.0, %v690
        %v692 = vpop.f32.mrf.mxu0
        %v693 = vpop.f32.mrf.mxu0
        %v694 = vpop.f32.mrf.mxu0
        %695 = vdwg.mxu0
        %v696 = vmul.f32 %v691, 0.17677669
        %v697 = vsel %vm584, %v696, -inf
        %698 = vmax.xlane.f32.xlu0 %v697
        %v699 = vpop.xlane.xlu0 %698
        %v700 = vsub.f32 %v696, %v699
        %v701 = vmul.f32 %v700, 1.442695
        %v702 = vpow.pop %v701
        %v703 = vsel %vm584, %v702, 0.0
        %704 = vadd.xlane.f32.xlu0 %v703
        %v705 = vpop.xlane.xlu0 %704
        %v706 = vrcp.pop %v705
        %v707 = vmul.f32 %v702, %v706
        %v708 = vpack.c.bf16 %v707, %v707
        %710 = vrot.lane.b32.xlu0 %v535, 96
        %v711 = vpop.permute.xlu0 %710
        %v713 = vsel %vm584, %v708, 0
        %v716 = vsel %vm600, %v711, 0
        %718 = vmatprep.subr.bf16.mxu0 0
        %719 = vmatpush1.bf16.msra.mxu0 0
        %720 = vmatprep.subr.bf16.mxu0 0
        %721 = vmatpush1.bf16.msra.mxu0 0
        %722 = vmatprep.subr.bf16.mxu0 0
        %723 = vmatpush1.bf16.msra.mxu0 0
        %724 = vmatprep.subr.bf16.mxu0 0
        %725 = vmatpush1.bf16.msra.mxu0 0
        %726 = vmatprep.subr.bf16.mxu0 0
        %727 = vmatpush1.bf16.msra.mxu0 0
        %728 = vmatprep.subr.bf16.mxu0 0
        %729 = vmatpush1.bf16.msra.mxu0 0
        %730 = vmatprep.subr.bf16.mxu0 0
        %731 = vmatpush1.bf16.msra.mxu0 0
        %732 = vmatprep.subr.bf16.mxu0 0
        %733 = vmatpush1.bf16.msra.mxu0 %v716
        %734 = vmatprep.subr.bf16.mxu0 0
        %735 = vmatpush2.bf16.msra.mxu0 0
        %736 = vmatprep.subr.bf16.mxu0 0
        %737 = vmatpush2.bf16.msra.mxu0 0
        %738 = vmatprep.subr.bf16.mxu0 0
        %739 = vmatpush2.bf16.msra.mxu0 0
        %740 = vmatprep.subr.bf16.mxu0 0
        %741 = vmatpush2.bf16.msra.mxu0 0
        %742 = vmatprep.subr.bf16.mxu0 0
        %743 = vmatpush2.bf16.msra.mxu0 0
        %744 = vmatprep.subr.bf16.mxu0 0
        %745 = vmatpush2.bf16.msra.mxu0 0
        %746 = vmatprep.subr.bf16.mxu0 0
        %747 = vmatpush2.bf16.msra.mxu0 0
        %748 = vmatprep.subr.bf16.mxu0 0
        %749 = vmatpush2.bf16.msra.mxu0 0
        %750 = vmatprep.mubr.bf16.mxu0 0
        %751 = vmatmul.mubr.bf16.gmra.mxu0 %v713
        %v752 = vpop.f32.mrf.mxu0
        %v753 = vadd.f32 0.0, %v752
        %v754 = vpop.f32.mrf.mxu0
        %v755 = vpop.f32.mrf.mxu0
        %v756 = vpop.f32.mrf.mxu0
        %757 = vdwg.mxu0
        %758 = vrot.lane.b32.xlu0 %v533, 64
        %v759 = vpop.permute.xlu0 %758
        %760 = vrot.lane.b32.xlu0 %v534, 64
        %v761 = vpop.permute.xlu0 %760
        %v763 = vsel %vm536, %v759, 0
        %v766 = vsel %vm536, %v761, 0
        %768 = vmatprep.subr.bf16.mxu0 0
        %769 = vmatpush1.bf16.xpose.msra.mxu0 0
        %770 = vmatprep.subr.bf16.mxu0 0
        %771 = vmatpush1.bf16.xpose.msra.mxu0 0
        %772 = vmatprep.subr.bf16.mxu0 0
        %773 = vmatpush1.bf16.xpose.msra.mxu0 0
        %774 = vmatprep.subr.bf16.mxu0 0
        %775 = vmatpush1.bf16.xpose.msra.mxu0 0
        %776 = vmatprep.subr.bf16.mxu0 0
        %777 = vmatpush1.bf16.xpose.msra.mxu0 0
        %778 = vmatprep.subr.bf16.mxu0 0
        %779 = vmatpush1.bf16.xpose.msra.mxu0 0
        %780 = vmatprep.subr.bf16.mxu0 0
        %781 = vmatpush1.bf16.xpose.msra.mxu0 0
        %782 = vmatprep.subr.bf16.mxu0 0
        %783 = vmatpush1.bf16.xpose.msra.mxu0 %v766
        %784 = vmatprep.subr.bf16.mxu0 0
        %785 = vmatpush2.bf16.xpose.msra.mxu0 0
        %786 = vmatprep.subr.bf16.mxu0 0
        %787 = vmatpush2.bf16.xpose.msra.mxu0 0
        %788 = vmatprep.subr.bf16.mxu0 0
        %789 = vmatpush2.bf16.xpose.msra.mxu0 0
        %790 = vmatprep.subr.bf16.mxu0 0
        %791 = vmatpush2.bf16.xpose.msra.mxu0 0
        %792 = vmatprep.subr.bf16.mxu0 0
        %793 = vmatpush2.bf16.xpose.msra.mxu0 0
        %794 = vmatprep.subr.bf16.mxu0 0
        %795 = vmatpush2.bf16.xpose.msra.mxu0 0
        %796 = vmatprep.subr.bf16.mxu0 0
        %797 = vmatpush2.bf16.xpose.msra.mxu0 0
        %798 = vmatprep.subr.bf16.mxu0 0
        %799 = vmatpush2.bf16.xpose.msra.mxu0 0
        %800 = vmatprep.mubr.bf16.mxu0 0
        %801 = vmatmul.mubr.bf16.gmra.mxu0 %v763
        %v802 = vpop.f32.mrf.mxu0
        %v803 = vadd.f32 0.0, %v802
        %v804 = vpop.f32.mrf.mxu0
        %v805 = vpop.f32.mrf.mxu0
        %v806 = vpop.f32.mrf.mxu0
        %807 = vdwg.mxu0
        %v808 = vmul.f32 %v803, 0.17677669
        %v809 = vsel %vm584, %v808, -inf
        %810 = vmax.xlane.f32.xlu0 %v809
        %v811 = vpop.xlane.xlu0 %810
        %v812 = vsub.f32 %v808, %v811
        %v813 = vmul.f32 %v812, 1.442695
        %v814 = vpow.pop %v813
        %v815 = vsel %vm584, %v814, 0.0
        %816 = vadd.xlane.f32.xlu0 %v815
        %v817 = vpop.xlane.xlu0 %816
        %v818 = vrcp.pop %v817
        %v819 = vmul.f32 %v814, %v818
        %v820 = vpack.c.bf16 %v819, %v819
        %821 = vrot.lane.b32.xlu0 %v535, 64
        %v822 = vpop.permute.xlu0 %821
        %v824 = vsel %vm584, %v820, 0
        %v827 = vsel %vm600, %v822, 0
        %829 = vmatprep.subr.bf16.mxu0 0
        %830 = vmatpush1.bf16.msra.mxu0 0
        %831 = vmatprep.subr.bf16.mxu0 0
        %832 = vmatpush1.bf16.msra.mxu0 0
        %833 = vmatprep.subr.bf16.mxu0 0
        %834 = vmatpush1.bf16.msra.mxu0 0
        %835 = vmatprep.subr.bf16.mxu0 0
        %836 = vmatpush1.bf16.msra.mxu0 0
        %837 = vmatprep.subr.bf16.mxu0 0
        %838 = vmatpush1.bf16.msra.mxu0 0
        %839 = vmatprep.subr.bf16.mxu0 0
        %840 = vmatpush1.bf16.msra.mxu0 0
        %841 = vmatprep.subr.bf16.mxu0 0
        %842 = vmatpush1.bf16.msra.mxu0 0
        %843 = vmatprep.subr.bf16.mxu0 0
        %844 = vmatpush1.bf16.msra.mxu0 %v827
        %845 = vmatprep.subr.bf16.mxu0 0
        %846 = vmatpush2.bf16.msra.mxu0 0
        %847 = vmatprep.subr.bf16.mxu0 0
        %848 = vmatpush2.bf16.msra.mxu0 0
        %849 = vmatprep.subr.bf16.mxu0 0
        %850 = vmatpush2.bf16.msra.mxu0 0
        %851 = vmatprep.subr.bf16.mxu0 0
        %852 = vmatpush2.bf16.msra.mxu0 0
        %853 = vmatprep.subr.bf16.mxu0 0
        %854 = vmatpush2.bf16.msra.mxu0 0
        %855 = vmatprep.subr.bf16.mxu0 0
        %856 = vmatpush2.bf16.msra.mxu0 0
        %857 = vmatprep.subr.bf16.mxu0 0
        %858 = vmatpush2.bf16.msra.mxu0 0
        %859 = vmatprep.subr.bf16.mxu0 0
        %860 = vmatpush2.bf16.msra.mxu0 0
        %861 = vmatprep.mubr.bf16.mxu0 0
        %862 = vmatmul.mubr.bf16.gmra.mxu0 %v824
        %v863 = vpop.f32.mrf.mxu0
        %v864 = vadd.f32 0.0, %v863
        %v865 = vpop.f32.mrf.mxu0
        %v866 = vpop.f32.mrf.mxu0
        %v867 = vpop.f32.mrf.mxu0
        %868 = vdwg.mxu0
        %869 = vrot.lane.b32.xlu0 %v533, 32
        %v870 = vpop.permute.xlu0 %869
        %871 = vrot.lane.b32.xlu0 %v534, 32
        %v872 = vpop.permute.xlu0 %871
        %v874 = vsel %vm536, %v870, 0
        %v877 = vsel %vm536, %v872, 0
        %879 = vmatprep.subr.bf16.mxu0 0
        %880 = vmatpush1.bf16.xpose.msra.mxu0 0
        %881 = vmatprep.subr.bf16.mxu0 0
        %882 = vmatpush1.bf16.xpose.msra.mxu0 0
        %883 = vmatprep.subr.bf16.mxu0 0
        %884 = vmatpush1.bf16.xpose.msra.mxu0 0
        %885 = vmatprep.subr.bf16.mxu0 0
        %886 = vmatpush1.bf16.xpose.msra.mxu0 0
        %887 = vmatprep.subr.bf16.mxu0 0
        %888 = vmatpush1.bf16.xpose.msra.mxu0 0
        %889 = vmatprep.subr.bf16.mxu0 0
        %890 = vmatpush1.bf16.xpose.msra.mxu0 0
        %891 = vmatprep.subr.bf16.mxu0 0
        %892 = vmatpush1.bf16.xpose.msra.mxu0 0
        %893 = vmatprep.subr.bf16.mxu0 0
        %894 = vmatpush1.bf16.xpose.msra.mxu0 %v877
        %895 = vmatprep.subr.bf16.mxu0 0
        %896 = vmatpush2.bf16.xpose.msra.mxu0 0
        %897 = vmatprep.subr.bf16.mxu0 0
        %898 = vmatpush2.bf16.xpose.msra.mxu0 0
        %899 = vmatprep.subr.bf16.mxu0 0
        %900 = vmatpush2.bf16.xpose.msra.mxu0 0
        %901 = vmatprep.subr.bf16.mxu0 0
        %902 = vmatpush2.bf16.xpose.msra.mxu0 0
        %903 = vmatprep.subr.bf16.mxu0 0
        %904 = vmatpush2.bf16.xpose.msra.mxu0 0
        %905 = vmatprep.subr.bf16.mxu0 0
        %906 = vmatpush2.bf16.xpose.msra.mxu0 0
        %907 = vmatprep.subr.bf16.mxu0 0
        %908 = vmatpush2.bf16.xpose.msra.mxu0 0
        %909 = vmatprep.subr.bf16.mxu0 0
        %910 = vmatpush2.bf16.xpose.msra.mxu0 0
        %911 = vmatprep.mubr.bf16.mxu0 0
        %912 = vmatmul.mubr.bf16.gmra.mxu0 %v874
        %v913 = vpop.f32.mrf.mxu0
        %v914 = vadd.f32 0.0, %v913
        %v915 = vpop.f32.mrf.mxu0
        %v916 = vpop.f32.mrf.mxu0
        %v917 = vpop.f32.mrf.mxu0
        %918 = vdwg.mxu0
        %v919 = vmul.f32 %v914, 0.17677669
        %v920 = vsel %vm584, %v919, -inf
        %921 = vmax.xlane.f32.xlu0 %v920
        %v922 = vpop.xlane.xlu0 %921
        %v923 = vsub.f32 %v919, %v922
        %v924 = vmul.f32 %v923, 1.442695
        %v925 = vpow.pop %v924
        %v926 = vsel %vm584, %v925, 0.0
        %927 = vadd.xlane.f32.xlu0 %v926
        %v928 = vpop.xlane.xlu0 %927
        %v929 = vrcp.pop %v928
        %v930 = vmul.f32 %v925, %v929
        %v931 = vpack.c.bf16 %v930, %v930
        %932 = vrot.lane.b32.xlu0 %v535, 32
        %v933 = vpop.permute.xlu0 %932
        %v935 = vsel %vm584, %v931, 0
        %v938 = vsel %vm600, %v933, 0
        %940 = vmatprep.subr.bf16.mxu0 0
        %941 = vmatpush1.bf16.msra.mxu0 0
        %942 = vmatprep.subr.bf16.mxu0 0
        %943 = vmatpush1.bf16.msra.mxu0 0
        %944 = vmatprep.subr.bf16.mxu0 0
        %945 = vmatpush1.bf16.msra.mxu0 0
        %946 = vmatprep.subr.bf16.mxu0 0
        %947 = vmatpush1.bf16.msra.mxu0 0
        %948 = vmatprep.subr.bf16.mxu0 0
        %949 = vmatpush1.bf16.msra.mxu0 0
        %950 = vmatprep.subr.bf16.mxu0 0
        %951 = vmatpush1.bf16.msra.mxu0 0
        %952 = vmatprep.subr.bf16.mxu0 0
        %953 = vmatpush1.bf16.msra.mxu0 0
        %954 = vmatprep.subr.bf16.mxu0 0
        %955 = vmatpush1.bf16.msra.mxu0 %v938
        %956 = vmatprep.subr.bf16.mxu0 0
        %957 = vmatpush2.bf16.msra.mxu0 0
        %958 = vmatprep.subr.bf16.mxu0 0
        %959 = vmatpush2.bf16.msra.mxu0 0
        %960 = vmatprep.subr.bf16.mxu0 0
        %961 = vmatpush2.bf16.msra.mxu0 0
        %962 = vmatprep.subr.bf16.mxu0 0
        %963 = vmatpush2.bf16.msra.mxu0 0
        %964 = vmatprep.subr.bf16.mxu0 0
        %965 = vmatpush2.bf16.msra.mxu0 0
        %966 = vmatprep.subr.bf16.mxu0 0
        %967 = vmatpush2.bf16.msra.mxu0 0
        %968 = vmatprep.subr.bf16.mxu0 0
        %969 = vmatpush2.bf16.msra.mxu0 0
        %970 = vmatprep.subr.bf16.mxu0 0
        %971 = vmatpush2.bf16.msra.mxu0 0
        %972 = vmatprep.mubr.bf16.mxu0 0
        %973 = vmatmul.mubr.bf16.gmra.mxu0 %v935
        %v974 = vpop.f32.mrf.mxu0
        %v975 = vadd.f32 0.0, %v974
        %v976 = vpop.f32.mrf.mxu0
        %v977 = vpop.f32.mrf.mxu0
        %v978 = vpop.f32.mrf.mxu0
        %979 = vdwg.mxu0
        %981 = vrot.lane.b32.xlu0 %v753, 32
        %v982 = vpop.permute.xlu0 %981
        %985 = vrot.lane.b32.xlu0 %v864, 64
        %v986 = vpop.permute.xlu0 %985
        %989 = vrot.lane.b32.xlu0 %v975, 96
        %v990 = vpop.permute.xlu0 %989
        %v992 = vsel %vm536, %v639, %v982
        %vm993 = vcmask 523264
        %v994 = vsel %vm993, %v992, %v986
        %vm995 = vcmask 785408
        %v996 = vsel %vm995, %v994, %v990
        %v997 = vpack.c.bf16 %v996, %v996
        %v998 = vpack.c.bf16 %v396, %v395
        %v999 = vpack.c.bf16 %v398, %v397
        %v1000 = vpack.c.bf16 %v400, %v399
        %v1001 = vpack.c.bf16 %v402, %v401
        %v1002 = vpack.c.bf16 %v404, %v403
        %v1003 = vpack.c.bf16 %v406, %v405
        %v1004 = vpack.c.bf16 %v408, %v407
        %v1005 = vpack.c.bf16 %v410, %v409
        %v1006 = vlaneseq
        %v1007 = vshrl.u32 %v1006, 7
        %v1008 = vsub.s32 0, %v1007
        %v1009 = vrot.slane %v345, %v1008
        %1010 = vmatprep.subr.bf16.mxu0 0
        %1011 = vmatpush1.bf16.msra.mxu0 %v1005
        %1012 = vmatprep.subr.bf16.mxu0 0
        %1013 = vmatpush1.bf16.msra.mxu0 %v1004
        %1014 = vmatprep.subr.bf16.mxu0 0
        %1015 = vmatpush1.bf16.msra.mxu0 %v1003
        %1016 = vmatprep.subr.bf16.mxu0 0
        %1017 = vmatpush1.bf16.msra.mxu0 %v1002
        %1018 = vmatprep.subr.bf16.mxu0 0
        %1019 = vmatpush1.bf16.msra.mxu0 %v1001
        %1020 = vmatprep.subr.bf16.mxu0 0
        %1021 = vmatpush1.bf16.msra.mxu0 %v1000
        %1022 = vmatprep.subr.bf16.mxu0 0
        %1023 = vmatpush1.bf16.msra.mxu0 %v999
        %1024 = vmatprep.subr.bf16.mxu0 0
        %1025 = vmatpush1.bf16.msra.mxu0 %v998
        %1026 = vmatprep.subr.bf16.mxu0 0
        %1027 = vmatpush2.bf16.msra.mxu0 0
        %1028 = vmatprep.subr.bf16.mxu0 0
        %1029 = vmatpush2.bf16.msra.mxu0 0
        %1030 = vmatprep.subr.bf16.mxu0 0
        %1031 = vmatpush2.bf16.msra.mxu0 0
        %1032 = vmatprep.subr.bf16.mxu0 0
        %1033 = vmatpush2.bf16.msra.mxu0 0
        %1034 = vmatprep.subr.bf16.mxu0 0
        %1035 = vmatpush2.bf16.msra.mxu0 0
        %1036 = vmatprep.subr.bf16.mxu0 0
        %1037 = vmatpush2.bf16.msra.mxu0 0
        %1038 = vmatprep.subr.bf16.mxu0 0
        %1039 = vmatpush2.bf16.msra.mxu0 0
        %1040 = vmatprep.subr.bf16.mxu0 0
        %1041 = vmatpush2.bf16.msra.mxu0 0
        %1042 = vmatprep.mubr.bf16.mxu0 0
        %1043 = vmatmul.mubr.bf16.gmra.mxu0 %v997
        %v1044 = vpop.f32.mrf.mxu0
        %v1045 = vadd.f32 %v1009, %v1044
        %v1046 = vpop.f32.mrf.mxu0
        %v1047 = vpop.f32.mrf.mxu0
        %v1048 = vpop.f32.mrf.mxu0
        %1049 = vdwg.mxu0
        %v1050 = vadd.f32 %v344, %v1045
        %1051 = vadd.xlane.f32.xlu0 %v1050
        %v1052 = vpop.xlane.xlu0 %1051
        %v1053 = vrcp.pop 128.0
        %v1054 = vmul.f32 %v1052, %v1053
        %v1055 = vsub.f32 %v1050, %v1054
        %v1056 = vmul.f32 %v1055, %v1055
        %1057 = vadd.xlane.f32.xlu0 %v1056
        %v1058 = vpop.xlane.xlu0 %1057
        %v1059 = vmul.f32 %v1058, %v1053
        %v1060 = vadd.f32 %v1059, 1e-05
        %v1061 = vrsqrt.pop %v1060
        %v1062 = vmul.f32 %v1055, %v1061
        %v1063 = vlaneseq
        %v1064 = vshrl.u32 %v1063, 7
        %v1065 = vsub.s32 2, %v1064
        %v1066 = vrot.slane %v345, %v1065
        %v1067 = vmul.f32 %v1062, %v1066
        %v1068 = vlaneseq
        %v1069 = vshrl.u32 %v1068, 7
        %v1070 = vsub.s32 3, %v1069
        %v1071 = vrot.slane %v345, %v1070
        %v1072 = vadd.f32 %v1067, %v1071
        %v1073 = vld [vmem:[%s4] sm:$0xff]
        %v1074 = vld [vmem:[%s4 + $0x8] sm:$0xff]
        %v1075 = vld [vmem:[%s4 + $0x10] sm:$0xff]
        %v1076 = vld [vmem:[%s4 + $0x18] sm:$0xff]
        %v1077 = vld [vmem:[%s4 + $0x20] sm:$0xff]
        %v1078 = vld [vmem:[%s4 + $0x28] sm:$0xff]
        %v1079 = vld [vmem:[%s4 + $0x30] sm:$0xff]
        %v1080 = vld [vmem:[%s4 + $0x38] sm:$0xff]
        %v1081 = vld [vmem:[%s4 + $0x40] sm:$0xff]
        %v1082 = vld [vmem:[%s4 + $0x48] sm:$0xff]
        %v1083 = vld [vmem:[%s4 + $0x50] sm:$0xff]
        %v1084 = vld [vmem:[%s4 + $0x58] sm:$0xff]
        %v1085 = vld [vmem:[%s4 + $0x60] sm:$0xff]
        %v1086 = vld [vmem:[%s4 + $0x68] sm:$0xff]
        %v1087 = vld [vmem:[%s4 + $0x70] sm:$0xff]
        %v1088 = vld [vmem:[%s4 + $0x78] sm:$0xff]
        %v1089 = vld [vmem:[%s5] sm:$0x1]
        %v1090 = vld [vmem:[#allocation2] sm:$0xff]
        %v1091 = vld [vmem:[#allocation2 + $0x8] sm:$0xff]
        %v1092 = vld [vmem:[#allocation2 + $0x10] sm:$0xff]
        %v1093 = vld [vmem:[#allocation2 + $0x18] sm:$0xff]
        %v1094 = vld [vmem:[#allocation2 + $0x20] sm:$0xff]
        %v1095 = vld [vmem:[#allocation2 + $0x28] sm:$0xff]
        %v1096 = vld [vmem:[#allocation2 + $0x30] sm:$0xff]
        %v1097 = vld [vmem:[#allocation2 + $0x38] sm:$0xff]
        %v1098 = vld [vmem:[#allocation2 + $0x40] sm:$0xff]
        %v1099 = vld [vmem:[#allocation2 + $0x48] sm:$0xff]
        %v1100 = vld [vmem:[#allocation2 + $0x50] sm:$0xff]
        %v1101 = vld [vmem:[#allocation2 + $0x58] sm:$0xff]
        %v1102 = vld [vmem:[#allocation2 + $0x60] sm:$0xff]
        %v1103 = vld [vmem:[#allocation2 + $0x68] sm:$0xff]
        %v1104 = vld [vmem:[#allocation2 + $0x70] sm:$0xff]
        %v1105 = vld [vmem:[#allocation2 + $0x78] sm:$0xff]
        %v1106 = vpack.c.bf16 %v1072, %v1072
        %v1107 = vpack.c.bf16 %v1074, %v1073
        %v1108 = vpack.c.bf16 %v1076, %v1075
        %v1109 = vpack.c.bf16 %v1078, %v1077
        %v1110 = vpack.c.bf16 %v1080, %v1079
        %v1111 = vpack.c.bf16 %v1082, %v1081
        %v1112 = vpack.c.bf16 %v1084, %v1083
        %v1113 = vpack.c.bf16 %v1086, %v1085
        %v1114 = vpack.c.bf16 %v1088, %v1087
        %v1116 = vlaneseq
        %v1117 = vshrl.u32 %v1116, 7
        %v1118 = vsub.s32 0, %v1117
        %v1119 = vrot.slane %v1089, %v1118
        %1121 = vmatprep.subr.bf16.mxu0 0
        %1122 = vmatpush1.bf16.msra.mxu0 %v1114
        %1123 = vmatprep.subr.bf16.mxu0 0
        %1124 = vmatpush1.bf16.msra.mxu0 %v1113
        %1125 = vmatprep.subr.bf16.mxu0 0
        %1126 = vmatpush1.bf16.msra.mxu0 %v1112
        %1127 = vmatprep.subr.bf16.mxu0 0
        %1128 = vmatpush1.bf16.msra.mxu0 %v1111
        %1129 = vmatprep.subr.bf16.mxu0 0
        %1130 = vmatpush1.bf16.msra.mxu0 %v1110
        %1131 = vmatprep.subr.bf16.mxu0 0
        %1132 = vmatpush1.bf16.msra.mxu0 %v1109
        %1133 = vmatprep.subr.bf16.mxu0 0
        %1134 = vmatpush1.bf16.msra.mxu0 %v1108
        %1135 = vmatprep.subr.bf16.mxu0 0
        %1136 = vmatpush1.bf16.msra.mxu0 %v1107
        %1137 = vmatprep.subr.bf16.mxu0 0
        %1138 = vmatpush2.bf16.msra.mxu0 0
        %1139 = vmatprep.subr.bf16.mxu0 0
        %1140 = vmatpush2.bf16.msra.mxu0 0
        %1141 = vmatprep.subr.bf16.mxu0 0
        %1142 = vmatpush2.bf16.msra.mxu0 0
        %1143 = vmatprep.subr.bf16.mxu0 0
        %1144 = vmatpush2.bf16.msra.mxu0 0
        %1145 = vmatprep.subr.bf16.mxu0 0
        %1146 = vmatpush2.bf16.msra.mxu0 0
        %1147 = vmatprep.subr.bf16.mxu0 0
        %1148 = vmatpush2.bf16.msra.mxu0 0
        %1149 = vmatprep.subr.bf16.mxu0 0
        %1150 = vmatpush2.bf16.msra.mxu0 0
        %1151 = vmatprep.subr.bf16.mxu0 0
        %1152 = vmatpush2.bf16.msra.mxu0 0
        %1153 = vmatprep.mubr.bf16.mxu0 0
        %1154 = vmatmul.mubr.bf16.gmra.mxu0 %v1106
        %v1155 = vpop.f32.mrf.mxu0
        %v1156 = vadd.f32 %v1119, %v1155
        %v1157 = vpop.f32.mrf.mxu0
        %v1158 = vpop.f32.mrf.mxu0
        %v1159 = vpop.f32.mrf.mxu0
        %1160 = vdwg.mxu0
        %v1161 = vmax.f32 %v1156, 0.0
        %v1162 = vpack.c.bf16 %v1161, %v1161
        %v1163 = vpack.c.bf16 %v1091, %v1090
        %v1164 = vpack.c.bf16 %v1093, %v1092
        %v1165 = vpack.c.bf16 %v1095, %v1094
        %v1166 = vpack.c.bf16 %v1097, %v1096
        %v1167 = vpack.c.bf16 %v1099, %v1098
        %v1168 = vpack.c.bf16 %v1101, %v1100
        %v1169 = vpack.c.bf16 %v1103, %v1102
        %v1170 = vpack.c.bf16 %v1105, %v1104
        %v1171 = vlaneseq
        %v1172 = vshrl.u32 %v1171, 7
        %v1173 = vsub.s32 1, %v1172
        %v1174 = vrot.slane %v345, %v1173
        %1175 = vmatprep.subr.bf16.mxu0 0
        %1176 = vmatpush1.bf16.msra.mxu0 %v1170
        %1177 = vmatprep.subr.bf16.mxu0 0
        %1178 = vmatpush1.bf16.msra.mxu0 %v1169
        %1179 = vmatprep.subr.bf16.mxu0 0
        %1180 = vmatpush1.bf16.msra.mxu0 %v1168
        %1181 = vmatprep.subr.bf16.mxu0 0
        %1182 = vmatpush1.bf16.msra.mxu0 %v1167
        %1183 = vmatprep.subr.bf16.mxu0 0
        %1184 = vmatpush1.bf16.msra.mxu0 %v1166
        %1185 = vmatprep.subr.bf16.mxu0 0
        %1186 = vmatpush1.bf16.msra.mxu0 %v1165
        %1187 = vmatprep.subr.bf16.mxu0 0
        %1188 = vmatpush1.bf16.msra.mxu0 %v1164
        %1189 = vmatprep.subr.bf16.mxu0 0
        %1190 = vmatpush1.bf16.msra.mxu0 %v1163
        %1191 = vmatprep.subr.bf16.mxu0 0
        %1192 = vmatpush2.bf16.msra.mxu0 0
        %1193 = vmatprep.subr.bf16.mxu0 0
        %1194 = vmatpush2.bf16.msra.mxu0 0
        %1195 = vmatprep.subr.bf16.mxu0 0
        %1196 = vmatpush2.bf16.msra.mxu0 0
        %1197 = vmatprep.subr.bf16.mxu0 0
        %1198 = vmatpush2.bf16.msra.mxu0 0
        %1199 = vmatprep.subr.bf16.mxu0 0
        %1200 = vmatpush2.bf16.msra.mxu0 0
        %1201 = vmatprep.subr.bf16.mxu0 0
        %1202 = vmatpush2.bf16.msra.mxu0 0
        %1203 = vmatprep.subr.bf16.mxu0 0
        %1204 = vmatpush2.bf16.msra.mxu0 0
        %1205 = vmatprep.subr.bf16.mxu0 0
        %1206 = vmatpush2.bf16.msra.mxu0 0
        %1207 = vmatprep.mubr.bf16.mxu0 0
        %1208 = vmatmul.mubr.bf16.gmra.mxu0 %v1162
        %v1209 = vpop.f32.mrf.mxu0
        %v1210 = vadd.f32 %v1174, %v1209
        %v1211 = vpop.f32.mrf.mxu0
        %v1212 = vpop.f32.mrf.mxu0
        %v1213 = vpop.f32.mrf.mxu0
        %1214 = vdwg.mxu0
        %v1215 = vadd.f32 %v1072, %v1210
        %1216 = vadd.xlane.f32.xlu0 %v1215
        %v1217 = vpop.xlane.xlu0 %1216
        %v1218 = vmul.f32 %v1217, %v1053
        %v1219 = vsub.f32 %v1215, %v1218
        %v1220 = vmul.f32 %v1219, %v1219
        %1221 = vadd.xlane.f32.xlu0 %v1220
        %v1222 = vpop.xlane.xlu0 %1221
        %v1223 = vmul.f32 %v1222, %v1053
        %v1224 = vadd.f32 %v1223, 1e-05
        %v1225 = vrsqrt.pop %v1224
        %v1226 = vmul.f32 %v1219, %v1225
        %v1227 = vlaneseq
        %v1228 = vshrl.u32 %v1227, 7
        %v1229 = vsub.s32 4, %v1228
        %v1230 = vrot.slane %v345, %v1229
        %v1231 = vmul.f32 %v1226, %v1230
        %v1232 = vlaneseq
        %v1233 = vshrl.u32 %v1232, 7
        %v1234 = vsub.s32 5, %v1233
        %v1235 = vrot.slane %v345, %v1234
        %v1236 = vadd.f32 %v1231, %v1235
        %1237 = vst [vmem:[%s342] sm:$0xff] %v1236
        %p1238 = scmp.lt.s32.totalorder %s21, 1
        %s1239 = scalar_select %p1238, %s21, 1
        %s1240 = smul.addr %s1239, 8
        %s1241 = scalar_lea.vmem %s9, %s1240
        // Predicated region
        $region61: #{transformer_forward.5} parent=55 // pred_check
          %p1242 = pneg %p233
        $region62: #{transformer_forward.5} parent=55 // pred_check_branch
          %1244 = sbr.rel (%p1242) target = $region64
        $region63: #{transformer_forward.5} parent=55 // pred_region
          _
        $region64: #{transformer_forward.5} parent=55 // pred_fallthru
          _
      $region56: #{transformer_forward.5} parent=5 // pred_fallthru
        _
      %p1245 = scmp.le.s32.totalorder 2, %s16
      // Predicated region
      $region65: #{transformer_forward.5} parent=5 // pred_check
        %p1246 = pneg %p1245
      $region66: #{transformer_forward.5} parent=5 // pred_check_branch
        %1248 = sbr.rel (%p1246) target = $region68
      $region67: #{transformer_forward.5} parent=5 // pred_region
        %s1249 = ssub.s32 %s16, 2
        // Predicated region
        $region69: #{transformer_forward.5} parent=67 // pred_check
          %p1250 = pneg %p239
        $region70: #{transformer_forward.5} parent=67 // pred_check_branch
          %1252 = sbr.rel (%p1250) target = $region72
        $region71: #{transformer_forward.5} parent=67 // pred_region
          %p1253 = scmp.lt.s32.totalorder %s22, 1
          %s1254 = scalar_select %p1253, %s22, 1
          %s1255 = smul.addr %s1254, 8
          %s1256 = scalar_lea.vmem %s9, %s1255
        $region72: #{transformer_forward.5} parent=67 // pred_fallthru
          _
      $region68: #{transformer_forward.5} parent=5 // pred_fallthru
        _
    $region6: #{transformer_forward.5} parent=1 // loop_footer
      %s20 = sadd.s32 1, %s16
    $region7: #{transformer_forward.5} parent=1 // loop_footer_branch
      %15 = sbr.rel target = $region3
    $region8: #{transformer_forward.5} parent=1 // loop_exit
      _
    %1257 = vsyncpa [#allocation3], 1
    %s1258 = scalar_lea.sflag [#allocation3], 1
    %1259 = vsyncpa %s1258, 1

// kernel: transformer_forward.6
$region0: #{transformer_forward.6}
  #allocation0 [shape = 'u32[]', space=smem, size = 0x4, offset = 0x4, fixed_abs, tag = 'smem constant byte address 0x4 - core index']
  #allocation1 [shape = 'u32[144,128]{1,0:T(1,128)}', space=vmem, size = 0x12000, scoped, tag = 'internal scratch']
  %s0 = inlined_call_operand.vmem [shape: f32[2,8,128], index: 0, kind: input, shape index: {}]
  %s1 = inlined_call_operand.vmem [shape: f32[128,384], index: 1, kind: input, shape index: {}]
  %s2 = inlined_call_operand.vmem [shape: f32[1,384], index: 2, kind: input, shape index: {}]
  %s3 = inlined_call_operand.hbm [shape: f32[128,128], index: 3, kind: input, shape index: {}]
  %s4 = inlined_call_operand.hbm [shape: f32[128,128], index: 4, kind: input, shape index: {}]
  %s5 = inlined_call_operand.vmem [shape: f32[1,128], index: 5, kind: input, shape index: {}]
  %s6 = inlined_call_operand.hbm [shape: f32[128,128], index: 6, kind: input, shape index: {}]
  %s7 = inlined_call_operand.vmem [shape: f32[6,128], index: 7, kind: input, shape index: {}]
  %s8 = inlined_call_operand.vmem [shape: f32[2,128], index: 8, kind: input, shape index: {}]
  %s9 = inlined_call_operand.vmem [shape: f32[2,8,128], index: 9, kind: output, shape index: {}]
  %s10 = sld [smem:[#allocation0]]
  $region81: #{transformer_forward.6} parent=0
    _
  %s12 = ssub.s32 1, %s10
  %s13 = scalar_select 0, %s12, %s10
  $region1: #{transformer_forward.6} parent=0
    #allocation2 [shape = 'u8[65536]{0}', space=vmem, size = 0x10000, scoped, tag = 'input window, operand 3, single buffered']
    #allocation3 [shape = 's32[2]{0}', space=sflag, size = 0x8, scoped, tag = 'scoped memory for transformer_forward.6']
    #allocation4 [shape = 'u8[65536]{0}', space=vmem, size = 0x10000, scoped, tag = 'input window, operand 4, single buffered']
    #allocation5 [shape = 's32[1]{0}', space=sflag, size = 0x4, scoped, tag = 'scoped memory for transformer_forward.6']
    #allocation6 [shape = 'u8[65536]{0}', space=vmem, size = 0x10000, scoped, tag = 'input window, operand 6, single buffered']
    %14 = vsyncpa [#allocation3], 0
    %15 = vsyncpa [#allocation5], 0
    loop: start=0, step=1, limit=4
    $region2: #{transformer_forward.6} parent=1 // loop_pre_header
      _
    $region3: #{transformer_forward.6} parent=1 // loop_header
      %s17 = sphi 0, %s21
      %p18 = scmp.ge.s32.totalorder %s17, 4
      %s27 = sphi 0, %s29
      %s30 = sphi 0, %s27
      %s31 = sphi 0, %s30
      %s47 = sphi 0, %s31
      %s51 = sphi 0, %s51
      %s53 = sphi 0, %s51
      %s54 = sphi 0, %s53
      %s68 = sphi 0, %s54
      %s72 = sphi 0, %s72
      %s74 = sphi 0, %s72
      %s75 = sphi 0, %s74
      %s89 = sphi 0, %s75
      %s93 = sphi 0, %s93
      %s95 = sphi 0, %s93
      %s96 = sphi 0, %s95
      %s110 = sphi 0, %s96
      %s114 = sphi 0, %s114
      %s116 = sphi 0, %s114
      %s117 = sphi 0, %s116
      %s131 = sphi 0, %s117
      %s135 = sphi 0, %s135
      %s137 = sphi 0, %s135
      %s138 = sphi 0, %s137
      %s152 = sphi 0, %s138
      %s156 = sphi 0, %s156
      %s158 = sphi 0, %s156
      %s159 = sphi 0, %s158
      %s173 = sphi 0, %s159
      %s177 = sphi 0, %s177
      %s179 = sphi 0, %s177
      %s180 = sphi 0, %s179
      %s194 = sphi 0, %s180
      %s198 = sphi 0, %s198
      %s200 = sphi 0, %s198
      %s201 = sphi 0, %s200
      %s215 = sphi 0, %s201
      %s221 = sphi 0, %s223
      %s224 = sphi 0, %s221
      %s225 = sphi 0, %s224
      %s241 = sphi 0, %s225
    $region4: #{transformer_forward.6} parent=1 // loop_header_branch
      %20 = sbr.rel (%p18) target = $region8
    $region5: #{transformer_forward.6} parent=1 // loop_body
      %s22 = ssub.s32 %s17, 1
      %s23 = ssub.s32 %s17, 2
      %s24 = sadd.s32 %s17, 1
      %s25 = ssub.s32 %s17, %s24
      %p26 = scmp.eq.s32.totalorder %s25, 0
      %s28 = sadd.s32 %s27, 1
      %s29 = scalar_select %p26, %s27, %s28
      %p32 = pneg %p26
      %p33 = scmp.eq.s32.totalorder %s17, 1
      %p34 = por %p32, %p33
      %p35 = scmp.ne.s32.totalorder %s27, %s30
      %p36 = scmp.eq.s32.totalorder %s17, 0
      %p37 = por %p35, %p36
      %p38 = scmp.ne.s32.totalorder %s27, %s30
      %p39 = scmp.eq.s32.totalorder %s22, 1
      %p40 = por %p38, %p39
      %p41 = scmp.ne.s32.totalorder %s30, %s31
      %p42 = scmp.eq.s32.totalorder %s22, 0
      %p43 = por %p41, %p42
      %p44 = scmp.ne.s32.totalorder %s30, %s31
      %p45 = scmp.eq.s32.totalorder %s23, 1
      %p46 = por %p44, %p45
      %p48 = scmp.ne.s32.totalorder %s31, %s47
      %p49 = scmp.eq.s32.totalorder %s23, 0
      %p50 = por %p48, %p49
      %s52 = sadd.s32 %s51, 1
      %p55 = scmp.eq.s32.totalorder %s17, 1
      %p56 = scmp.ne.s32.totalorder %s51, %s53
      %p57 = scmp.eq.s32.totalorder %s17, 0
      %p58 = por %p56, %p57
      %p59 = scmp.ne.s32.totalorder %s51, %s53
      %p60 = scmp.eq.s32.totalorder %s22, 1
      %p61 = por %p59, %p60
      %p62 = scmp.ne.s32.totalorder %s53, %s54
      %p63 = scmp.eq.s32.totalorder %s22, 0
      %p64 = por %p62, %p63
      %p65 = scmp.ne.s32.totalorder %s53, %s54
      %p66 = scmp.eq.s32.totalorder %s23, 1
      %p67 = por %p65, %p66
      %p69 = scmp.ne.s32.totalorder %s54, %s68
      %p70 = scmp.eq.s32.totalorder %s23, 0
      %p71 = por %p69, %p70
      %s73 = sadd.s32 %s72, 1
      %p76 = scmp.eq.s32.totalorder %s17, 1
      %p77 = scmp.ne.s32.totalorder %s72, %s74
      %p78 = scmp.eq.s32.totalorder %s17, 0
      %p79 = por %p77, %p78
      %p80 = scmp.ne.s32.totalorder %s72, %s74
      %p81 = scmp.eq.s32.totalorder %s22, 1
      %p82 = por %p80, %p81
      %p83 = scmp.ne.s32.totalorder %s74, %s75
      %p84 = scmp.eq.s32.totalorder %s22, 0
      %p85 = por %p83, %p84
      %p86 = scmp.ne.s32.totalorder %s74, %s75
      %p87 = scmp.eq.s32.totalorder %s23, 1
      %p88 = por %p86, %p87
      %p90 = scmp.ne.s32.totalorder %s75, %s89
      %p91 = scmp.eq.s32.totalorder %s23, 0
      %p92 = por %p90, %p91
      %s94 = sadd.s32 %s93, 1
      %p97 = scmp.eq.s32.totalorder %s17, 1
      %p98 = scmp.ne.s32.totalorder %s93, %s95
      %p99 = scmp.eq.s32.totalorder %s17, 0
      %p100 = por %p98, %p99
      %p101 = scmp.ne.s32.totalorder %s93, %s95
      %p102 = scmp.eq.s32.totalorder %s22, 1
      %p103 = por %p101, %p102
      %p104 = scmp.ne.s32.totalorder %s95, %s96
      %p105 = scmp.eq.s32.totalorder %s22, 0
      %p106 = por %p104, %p105
      %p107 = scmp.ne.s32.totalorder %s95, %s96
      %p108 = scmp.eq.s32.totalorder %s23, 1
      %p109 = por %p107, %p108
      %p111 = scmp.ne.s32.totalorder %s96, %s110
      %p112 = scmp.eq.s32.totalorder %s23, 0
      %p113 = por %p111, %p112
      %s115 = sadd.s32 %s114, 1
      %p118 = scmp.eq.s32.totalorder %s17, 1
      %p119 = scmp.ne.s32.totalorder %s114, %s116
      %p120 = scmp.eq.s32.totalorder %s17, 0
      %p121 = por %p119, %p120
      %p122 = scmp.ne.s32.totalorder %s114, %s116
      %p123 = scmp.eq.s32.totalorder %s22, 1
      %p124 = por %p122, %p123
      %p125 = scmp.ne.s32.totalorder %s116, %s117
      %p126 = scmp.eq.s32.totalorder %s22, 0
      %p127 = por %p125, %p126
      %p128 = scmp.ne.s32.totalorder %s116, %s117
      %p129 = scmp.eq.s32.totalorder %s23, 1
      %p130 = por %p128, %p129
      %p132 = scmp.ne.s32.totalorder %s117, %s131
      %p133 = scmp.eq.s32.totalorder %s23, 0
      %p134 = por %p132, %p133
      %s136 = sadd.s32 %s135, 1
      %p139 = scmp.eq.s32.totalorder %s17, 1
      %p140 = scmp.ne.s32.totalorder %s135, %s137
      %p141 = scmp.eq.s32.totalorder %s17, 0
      %p142 = por %p140, %p141
      %p143 = scmp.ne.s32.totalorder %s135, %s137
      %p144 = scmp.eq.s32.totalorder %s22, 1
      %p145 = por %p143, %p144
      %p146 = scmp.ne.s32.totalorder %s137, %s138
      %p147 = scmp.eq.s32.totalorder %s22, 0
      %p148 = por %p146, %p147
      %p149 = scmp.ne.s32.totalorder %s137, %s138
      %p150 = scmp.eq.s32.totalorder %s23, 1
      %p151 = por %p149, %p150
      %p153 = scmp.ne.s32.totalorder %s138, %s152
      %p154 = scmp.eq.s32.totalorder %s23, 0
      %p155 = por %p153, %p154
      %s157 = sadd.s32 %s156, 1
      %p160 = scmp.eq.s32.totalorder %s17, 1
      %p161 = scmp.ne.s32.totalorder %s156, %s158
      %p162 = scmp.eq.s32.totalorder %s17, 0
      %p163 = por %p161, %p162
      %p164 = scmp.ne.s32.totalorder %s156, %s158
      %p165 = scmp.eq.s32.totalorder %s22, 1
      %p166 = por %p164, %p165
      %p167 = scmp.ne.s32.totalorder %s158, %s159
      %p168 = scmp.eq.s32.totalorder %s22, 0
      %p169 = por %p167, %p168
      %p170 = scmp.ne.s32.totalorder %s158, %s159
      %p171 = scmp.eq.s32.totalorder %s23, 1
      %p172 = por %p170, %p171
      %p174 = scmp.ne.s32.totalorder %s159, %s173
      %p175 = scmp.eq.s32.totalorder %s23, 0
      %p176 = por %p174, %p175
      %s178 = sadd.s32 %s177, 1
      %p181 = scmp.eq.s32.totalorder %s17, 1
      %p182 = scmp.ne.s32.totalorder %s177, %s179
      %p183 = scmp.eq.s32.totalorder %s17, 0
      %p184 = por %p182, %p183
      %p185 = scmp.ne.s32.totalorder %s177, %s179
      %p186 = scmp.eq.s32.totalorder %s22, 1
      %p187 = por %p185, %p186
      %p188 = scmp.ne.s32.totalorder %s179, %s180
      %p189 = scmp.eq.s32.totalorder %s22, 0
      %p190 = por %p188, %p189
      %p191 = scmp.ne.s32.totalorder %s179, %s180
      %p192 = scmp.eq.s32.totalorder %s23, 1
      %p193 = por %p191, %p192
      %p195 = scmp.ne.s32.totalorder %s180, %s194
      %p196 = scmp.eq.s32.totalorder %s23, 0
      %p197 = por %p195, %p196
      %s199 = sadd.s32 %s198, 1
      %p202 = scmp.eq.s32.totalorder %s17, 1
      %p203 = scmp.ne.s32.totalorder %s198, %s200
      %p204 = scmp.eq.s32.totalorder %s17, 0
      %p205 = por %p203, %p204
      %p206 = scmp.ne.s32.totalorder %s198, %s200
      %p207 = scmp.eq.s32.totalorder %s22, 1
      %p208 = por %p206, %p207
      %p209 = scmp.ne.s32.totalorder %s200, %s201
      %p210 = scmp.eq.s32.totalorder %s22, 0
      %p211 = por %p209, %p210
      %p212 = scmp.ne.s32.totalorder %s200, %s201
      %p213 = scmp.eq.s32.totalorder %s23, 1
      %p214 = por %p212, %p213
      %p216 = scmp.ne.s32.totalorder %s201, %s215
      %p217 = scmp.eq.s32.totalorder %s23, 0
      %p218 = por %p216, %p217
      %s219 = ssub.s32 %s17, %s24
      %p220 = scmp.eq.s32.totalorder %s219, 0
      %s222 = sadd.s32 %s221, 1
      %s223 = scalar_select %p220, %s221, %s222
      %p226 = pneg %p220
      %p227 = scmp.eq.s32.totalorder %s17, 1
      %p228 = por %p226, %p227
      %p229 = scmp.ne.s32.totalorder %s221, %s224
      %p230 = scmp.eq.s32.totalorder %s17, 0
      %p231 = por %p229, %p230
      %p232 = scmp.ne.s32.totalorder %s221, %s224
      %p233 = scmp.eq.s32.totalorder %s22, 1
      %p234 = por %p232, %p233
      %p235 = scmp.ne.s32.totalorder %s224, %s225
      %p236 = scmp.eq.s32.totalorder %s22, 0
      %p237 = por %p235, %p236
      %p238 = scmp.ne.s32.totalorder %s224, %s225
      %p239 = scmp.eq.s32.totalorder %s23, 1
      %p240 = por %p238, %p239
      %p242 = scmp.ne.s32.totalorder %s225, %s241
      %p243 = scmp.eq.s32.totalorder %s23, 0
      %p244 = por %p242, %p243
      %p245 = scmp.le.s32.totalorder 1, %s17
      %p246 = scmp.lt.s32.totalorder %s17, 3
      %p247 = pnand %p245, %p246
      %p248 = pneg %p247
      // Predicated region
      $region9: #{transformer_forward.6} parent=5 // pred_check
        _
      $region10: #{transformer_forward.6} parent=5 // pred_check_branch
        %250 = sbr.rel (%p247) target = $region12
      $region11: #{transformer_forward.6} parent=5 // pred_region
        %s251 = ssub.s32 %s17, 1
        // Predicated region
        $region13: #{transformer_forward.6} parent=11 // pred_check
          %p252 = pneg %p64
        $region14: #{transformer_forward.6} parent=11 // pred_check_branch
          %254 = sbr.rel (%p252) target = $region16
        $region15: #{transformer_forward.6} parent=11 // pred_region
          _
        $region16: #{transformer_forward.6} parent=11 // pred_fallthru
          _
        // Predicated region
        $region17: #{transformer_forward.6} parent=11 // pred_check
          %p255 = pneg %p85
        $region18: #{transformer_forward.6} parent=11 // pred_check_branch
          %257 = sbr.rel (%p255) target = $region20
        $region19: #{transformer_forward.6} parent=11 // pred_region
          _
        $region20: #{transformer_forward.6} parent=11 // pred_fallthru
          _
        // Predicated region
        $region21: #{transformer_forward.6} parent=11 // pred_check
          %p258 = pneg %p106
        $region22: #{transformer_forward.6} parent=11 // pred_check_branch
          %260 = sbr.rel (%p258) target = $region24
        $region23: #{transformer_forward.6} parent=11 // pred_region
          %s262 = ssub.s32 2048, 2048
          %263 = vsyncadd [#allocation3], %s262
          %s264 = sshll.u32 [#allocation2], 4
          %s265 = int_to_ptr.vmem [resolvable:$true] %s264
          %270 = dma.hbm_to_vmem [thread:$0]  %s3, 2048, %s265, [#allocation3], 128, 128, 8
        $region24: #{transformer_forward.6} parent=11 // pred_fallthru
          _
        // Predicated region
        $region25: #{transformer_forward.6} parent=11 // pred_check
          %p271 = pneg %p127
        $region26: #{transformer_forward.6} parent=11 // pred_check_branch
          %273 = sbr.rel (%p271) target = $region28
        $region27: #{transformer_forward.6} parent=11 // pred_region
          %s275 = ssub.s32 2048, 2048
          %276 = vsyncadd [#allocation5], %s275
          %s277 = sshll.u32 [#allocation4], 4
          %s278 = int_to_ptr.vmem [resolvable:$true] %s277
          %283 = dma.hbm_to_vmem [thread:$0]  %s4, 2048, %s278, [#allocation5], 128, 128, 8
        $region28: #{transformer_forward.6} parent=11 // pred_fallthru
          _
        // Predicated region
        $region29: #{transformer_forward.6} parent=11 // pred_check
          %p284 = pneg %p148
        $region30: #{transformer_forward.6} parent=11 // pred_check_branch
          %286 = sbr.rel (%p284) target = $region32
        $region31: #{transformer_forward.6} parent=11 // pred_region
          _
        $region32: #{transformer_forward.6} parent=11 // pred_fallthru
          _
        // Predicated region
        $region33: #{transformer_forward.6} parent=11 // pred_check
          %p287 = pneg %p169
        $region34: #{transformer_forward.6} parent=11 // pred_check_branch
          %289 = sbr.rel (%p287) target = $region36
        $region35: #{transformer_forward.6} parent=11 // pred_region
          %s291 = ssub.s32 2048, 2048
          %292 = vsyncadd [#allocation5], %s291
          %s293 = sshll.u32 [#allocation6], 4
          %s294 = int_to_ptr.vmem [resolvable:$true] %s293
          %299 = dma.hbm_to_vmem [thread:$0]  %s6, 2048, %s294, [#allocation5], 128, 128, 8
        $region36: #{transformer_forward.6} parent=11 // pred_fallthru
          _
        // Predicated region
        $region37: #{transformer_forward.6} parent=11 // pred_check
          %p300 = pneg %p190
        $region38: #{transformer_forward.6} parent=11 // pred_check_branch
          %302 = sbr.rel (%p300) target = $region40
        $region39: #{transformer_forward.6} parent=11 // pred_region
          _
        $region40: #{transformer_forward.6} parent=11 // pred_fallthru
          _
        // Predicated region
        $region41: #{transformer_forward.6} parent=11 // pred_check
          %p303 = pneg %p211
        $region42: #{transformer_forward.6} parent=11 // pred_check_branch
          %305 = sbr.rel (%p303) target = $region44
        $region43: #{transformer_forward.6} parent=11 // pred_region
          _
        $region44: #{transformer_forward.6} parent=11 // pred_fallthru
          _
      $region12: #{transformer_forward.6} parent=5 // pred_fallthru
        _
      %p306 = scmp.lt.s32.totalorder %s17, 2
      // Predicated region
      $region45: #{transformer_forward.6} parent=5 // pred_check
        %p307 = pneg %p306
      $region46: #{transformer_forward.6} parent=5 // pred_check_branch
        %309 = sbr.rel (%p307) target = $region48
      $region47: #{transformer_forward.6} parent=5 // pred_region
        // Predicated region
        $region49: #{transformer_forward.6} parent=47 // pred_check
          %p310 = pneg %p37
        $region50: #{transformer_forward.6} parent=47 // pred_check_branch
          %312 = sbr.rel (%p310) target = $region52
        $region51: #{transformer_forward.6} parent=47 // pred_region
          %p313 = scmp.lt.s32.totalorder %s17, 1
          %s314 = scalar_select %p313, %s17, 1
          %s315 = smul.addr %s314, 8
          %s316 = scalar_lea.vmem %s0, %s315
        $region52: #{transformer_forward.6} parent=47 // pred_fallthru
          _
      $region48: #{transformer_forward.6} parent=5 // pred_fallthru
        _
      %p317 = scmp.le.s32.totalorder 1, %s17
      %p318 = scmp.lt.s32.totalorder %s17, 3
      %p319 = pnand %p317, %p318
      %p320 = pneg %p319
      // Predicated region
      $region53: #{transformer_forward.6} parent=5 // pred_check
        _
      $region54: #{transformer_forward.6} parent=5 // pred_check_branch
        %322 = sbr.rel (%p319) target = $region56
      $region55: #{transformer_forward.6} parent=5 // pred_region
        %s323 = ssub.s32 %s17, 1
        // Predicated region
        $region57: #{transformer_forward.6} parent=55 // pred_check
          %p324 = pneg %p106
        $region58: #{transformer_forward.6} parent=55 // pred_check_branch
          %326 = sbr.rel (%p324) target = $region60
        $region59: #{transformer_forward.6} parent=55 // pred_region
          %327 = dma.done [#allocation3], 2048
        $region60: #{transformer_forward.6} parent=55 // pred_fallthru
          _
        // Predicated region
        $region61: #{transformer_forward.6} parent=55 // pred_check
          %p328 = pneg %p127
        $region62: #{transformer_forward.6} parent=55 // pred_check_branch
          %330 = sbr.rel (%p328) target = $region64
        $region63: #{transformer_forward.6} parent=55 // pred_region
          %331 = dma.done [#allocation5], 2048
        $region64: #{transformer_forward.6} parent=55 // pred_fallthru
          _
        // Predicated region
        $region65: #{transformer_forward.6} parent=55 // pred_check
          %p332 = pneg %p169
        $region66: #{transformer_forward.6} parent=55 // pred_check_branch
          %334 = sbr.rel (%p332) target = $region68
        $region67: #{transformer_forward.6} parent=55 // pred_region
          %335 = dma.done [#allocation5], 2048
        $region68: #{transformer_forward.6} parent=55 // pred_fallthru
          _
        %p336 = scmp.lt.s32.totalorder %s22, 1
        %s337 = scalar_select %p336, %s22, 1
        %s338 = smul.addr %s337, 8
        %s339 = scalar_lea.vmem %s0, %s338
        %p340 = pneg %p43
        %p341 = pneg %p40
        %p342 = pneg %p64
        %p343 = pneg %p61
        %p344 = pneg %p85
        %p345 = pneg %p82
        %p346 = pneg %p106
        %p347 = pneg %p103
        %p348 = pneg %p127
        %p349 = pneg %p124
        %p350 = pneg %p148
        %p351 = pneg %p145
        %p352 = pneg %p169
        %p353 = pneg %p166
        %p354 = pneg %p190
        %p355 = pneg %p187
        %p356 = pneg %p211
        %p357 = pneg %p208
        %p358 = pneg %p237
        %p359 = pneg %p234
        %p360 = scmp.lt.s32.totalorder %s22, 1
        %s361 = scalar_select %p360, %s22, 1
        %s362 = smul.addr %s361, 8
        %s363 = scalar_lea.vmem %s9, %s362
        %p364 = scmp.lt.s32.totalorder %s22, 1
        %s365 = scalar_select %p364, %s22, 1
        %s366 = smul.addr %s365, 8
        %s367 = scalar_lea.vmem %s0, %s366
        %p368 = scmp.lt.s32.totalorder %s22, 1
        %s369 = scalar_select %p368, %s22, 1
        %s370 = smul.addr %s369, 8
        %s371 = scalar_lea.vmem %s9, %s370
        %v373 = vld [vmem:[%s367] sm:$0xff]
        %v374 = vld [vmem:[%s7] sm:$0x3f]
        %v375 = vld [vmem:[%s1] sm:$0xff]
        %v376 = vld [vmem:[%s1 + $0x8] sm:$0xff]
        %v377 = vld [vmem:[%s1 + $0x10] sm:$0xff]
        %v378 = vld [vmem:[%s1 + $0x18] sm:$0xff]
        %v379 = vld [vmem:[%s1 + $0x20] sm:$0xff]
        %v380 = vld [vmem:[%s1 + $0x28] sm:$0xff]
        %v381 = vld [vmem:[%s1 + $0x30] sm:$0xff]
        %v382 = vld [vmem:[%s1 + $0x38] sm:$0xff]
        %v383 = vld [vmem:[%s1 + $0x40] sm:$0xff]
        %v384 = vld [vmem:[%s1 + $0x48] sm:$0xff]
        %v385 = vld [vmem:[%s1 + $0x50] sm:$0xff]
        %v386 = vld [vmem:[%s1 + $0x58] sm:$0xff]
        %v387 = vld [vmem:[%s1 + $0x60] sm:$0xff]
        %v388 = vld [vmem:[%s1 + $0x68] sm:$0xff]
        %v389 = vld [vmem:[%s1 + $0x70] sm:$0xff]
        %v390 = vld [vmem:[%s1 + $0x78] sm:$0xff]
        %v391 = vld [vmem:[%s1 + $0x80] sm:$0xff]
        %v392 = vld [vmem:[%s1 + $0x88] sm:$0xff]
        %v393 = vld [vmem:[%s1 + $0x90] sm:$0xff]
        %v394 = vld [vmem:[%s1 + $0x98] sm:$0xff]
        %v395 = vld [vmem:[%s1 + $0xa0] sm:$0xff]
        %v396 = vld [vmem:[%s1 + $0xa8] sm:$0xff]
        %v397 = vld [vmem:[%s1 + $0xb0] sm:$0xff]
        %v398 = vld [vmem:[%s1 + $0xb8] sm:$0xff]
        %v399 = vld [vmem:[%s1 + $0xc0] sm:$0xff]
        %v400 = vld [vmem:[%s1 + $0xc8] sm:$0xff]
        %v401 = vld [vmem:[%s1 + $0xd0] sm:$0xff]
        %v402 = vld [vmem:[%s1 + $0xd8] sm:$0xff]
        %v403 = vld [vmem:[%s1 + $0xe0] sm:$0xff]
        %v404 = vld [vmem:[%s1 + $0xe8] sm:$0xff]
        %v405 = vld [vmem:[%s1 + $0xf0] sm:$0xff]
        %v406 = vld [vmem:[%s1 + $0xf8] sm:$0xff]
        %v407 = vld [vmem:[%s1 + $0x100] sm:$0xff]
        %v408 = vld [vmem:[%s1 + $0x108] sm:$0xff]
        %v409 = vld [vmem:[%s1 + $0x110] sm:$0xff]
        %v410 = vld [vmem:[%s1 + $0x118] sm:$0xff]
        %v411 = vld [vmem:[%s1 + $0x120] sm:$0xff]
        %v412 = vld [vmem:[%s1 + $0x128] sm:$0xff]
        %v413 = vld [vmem:[%s1 + $0x130] sm:$0xff]
        %v414 = vld [vmem:[%s1 + $0x138] sm:$0xff]
        %v415 = vld [vmem:[%s1 + $0x140] sm:$0xff]
        %v416 = vld [vmem:[%s1 + $0x148] sm:$0xff]
        %v417 = vld [vmem:[%s1 + $0x150] sm:$0xff]
        %v418 = vld [vmem:[%s1 + $0x158] sm:$0xff]
        %v419 = vld [vmem:[%s1 + $0x160] sm:$0xff]
        %v420 = vld [vmem:[%s1 + $0x168] sm:$0xff]
        %v421 = vld [vmem:[%s1 + $0x170] sm:$0xff]
        %v422 = vld [vmem:[%s1 + $0x178] sm:$0xff]
        %v423 = vld [vmem:[%s2] sm:$0x7]
        %v424 = vld [vmem:[#allocation2] sm:$0xff]
        %v425 = vld [vmem:[#allocation2 + $0x8] sm:$0xff]
        %v426 = vld [vmem:[#allocation2 + $0x10] sm:$0xff]
        %v427 = vld [vmem:[#allocation2 + $0x18] sm:$0xff]
        %v428 = vld [vmem:[#allocation2 + $0x20] sm:$0xff]
        %v429 = vld [vmem:[#allocation2 + $0x28] sm:$0xff]
        %v430 = vld [vmem:[#allocation2 + $0x30] sm:$0xff]
        %v431 = vld [vmem:[#allocation2 + $0x38] sm:$0xff]
        %v432 = vld [vmem:[#allocation2 + $0x40] sm:$0xff]
        %v433 = vld [vmem:[#allocation2 + $0x48] sm:$0xff]
        %v434 = vld [vmem:[#allocation2 + $0x50] sm:$0xff]
        %v435 = vld [vmem:[#allocation2 + $0x58] sm:$0xff]
        %v436 = vld [vmem:[#allocation2 + $0x60] sm:$0xff]
        %v437 = vld [vmem:[#allocation2 + $0x68] sm:$0xff]
        %v438 = vld [vmem:[#allocation2 + $0x70] sm:$0xff]
        %v439 = vld [vmem:[#allocation2 + $0x78] sm:$0xff]
        %v440 = vpack.c.bf16 %v373, %v373
        %v441 = vpack.c.bf16 %v378, %v375
        %v442 = vpack.c.bf16 %v379, %v376
        %v443 = vpack.c.bf16 %v380, %v377
        %v444 = vpack.c.bf16 %v384, %v381
        %v445 = vpack.c.bf16 %v385, %v382
        %v446 = vpack.c.bf16 %v386, %v383
        %v447 = vpack.c.bf16 %v390, %v387
        %v448 = vpack.c.bf16 %v391, %v388
        %v449 = vpack.c.bf16 %v392, %v389
        %v450 = vpack.c.bf16 %v396, %v393
        %v451 = vpack.c.bf16 %v397, %v394
        %v452 = vpack.c.bf16 %v398, %v395
        %v453 = vpack.c.bf16 %v402, %v399
        %v454 = vpack.c.bf16 %v403, %v400
        %v455 = vpack.c.bf16 %v404, %v401
        %v456 = vpack.c.bf16 %v408, %v405
        %v457 = vpack.c.bf16 %v409, %v406
        %v458 = vpack.c.bf16 %v410, %v407
        %v459 = vpack.c.bf16 %v414, %v411
        %v460 = vpack.c.bf16 %v415, %v412
        %v461 = vpack.c.bf16 %v416, %v413
        %v462 = vpack.c.bf16 %v420, %v417
        %v463 = vpack.c.bf16 %v421, %v418
        %v464 = vpack.c.bf16 %v422, %v419
        %v466 = vlaneseq
        %v467 = vshrl.u32 %v466, 7
        %v468 = vsub.s32 0, %v467
        %v469 = vrot.slane %v423, %v468
        %v470 = vlaneseq
        %v471 = vshrl.u32 %v470, 7
        %v472 = vsub.s32 1, %v471
        %v473 = vrot.slane %v423, %v472
        %v474 = vlaneseq
        %v475 = vshrl.u32 %v474, 7
        %v476 = vsub.s32 2, %v475
        %v477 = vrot.slane %v423, %v476
        %481 = vmatprep.subr.bf16.mxu0 %v463
        %482 = vmatpush1.bf16.msra.mxu0 %v462
        %483 = vmatprep.subr.bf16.mxu0 %v460
        %484 = vmatpush1.bf16.msra.mxu0 %v459
        %485 = vmatprep.subr.bf16.mxu0 %v457
        %486 = vmatpush1.bf16.msra.mxu0 %v456
        %487 = vmatprep.subr.bf16.mxu0 %v454
        %488 = vmatpush1.bf16.msra.mxu0 %v453
        %489 = vmatprep.subr.bf16.mxu0 %v451
        %490 = vmatpush1.bf16.msra.mxu0 %v450
        %491 = vmatprep.subr.bf16.mxu0 %v448
        %492 = vmatpush1.bf16.msra.mxu0 %v447
        %493 = vmatprep.subr.bf16.mxu0 %v445
        %494 = vmatpush1.bf16.msra.mxu0 %v444
        %495 = vmatprep.subr.bf16.mxu0 %v442
        %496 = vmatpush1.bf16.msra.mxu0 %v441
        %497 = vmatprep.subr.bf16.mxu0 0
        %498 = vmatpush2.bf16.msra.mxu0 0
        %499 = vmatprep.subr.bf16.mxu0 0
        %500 = vmatpush2.bf16.msra.mxu0 0
        %501 = vmatprep.subr.bf16.mxu0 0
        %502 = vmatpush2.bf16.msra.mxu0 0
        %503 = vmatprep.subr.bf16.mxu0 0
        %504 = vmatpush2.bf16.msra.mxu0 0
        %505 = vmatprep.subr.bf16.mxu0 0
        %506 = vmatpush2.bf16.msra.mxu0 0
        %507 = vmatprep.subr.bf16.mxu0 0
        %508 = vmatpush2.bf16.msra.mxu0 0
        %509 = vmatprep.subr.bf16.mxu0 0
        %510 = vmatpush2.bf16.msra.mxu0 0
        %511 = vmatprep.subr.bf16.mxu0 0
        %512 = vmatpush2.bf16.msra.mxu0 0
        %513 = vmatprep.mubr.bf16.mxu0 0
        %514 = vmatmul.mubr.bf16.gmra.mxu0 %v440
        %v515 = vpop.f32.mrf.mxu0
        %v516 = vadd.f32 %v469, %v515
        %v517 = vpop.f32.mrf.mxu0
        %v518 = vadd.f32 %v473, %v517
        %v519 = vpop.f32.mrf.mxu0
        %v520 = vpop.f32.mrf.mxu0
        %521 = vdwg.mxu0
        %522 = vmatprep.subr.bf16.mxu0 0
        %523 = vmatpush1.bf16.msra.mxu0 %v464
        %524 = vmatprep.subr.bf16.mxu0 0
        %525 = vmatpush1.bf16.msra.mxu0 %v461
        %526 = vmatprep.subr.bf16.mxu0 0
        %527 = vmatpush1.bf16.msra.mxu0 %v458
        %528 = vmatprep.subr.bf16.mxu0 0
        %529 = vmatpush1.bf16.msra.mxu0 %v455
        %530 = vmatprep.subr.bf16.mxu0 0
        %531 = vmatpush1.bf16.msra.mxu0 %v452
        %532 = vmatprep.subr.bf16.mxu0 0
        %533 = vmatpush1.bf16.msra.mxu0 %v449
        %534 = vmatprep.subr.bf16.mxu0 0
        %535 = vmatpush1.bf16.msra.mxu0 %v446
        %536 = vmatprep.subr.bf16.mxu0 0
        %537 = vmatpush1.bf16.msra.mxu0 %v443
        %538 = vmatprep.subr.bf16.mxu0 0
        %539 = vmatpush2.bf16.msra.mxu0 0
        %540 = vmatprep.subr.bf16.mxu0 0
        %541 = vmatpush2.bf16.msra.mxu0 0
        %542 = vmatprep.subr.bf16.mxu0 0
        %543 = vmatpush2.bf16.msra.mxu0 0
        %544 = vmatprep.subr.bf16.mxu0 0
        %545 = vmatpush2.bf16.msra.mxu0 0
        %546 = vmatprep.subr.bf16.mxu0 0
        %547 = vmatpush2.bf16.msra.mxu0 0
        %548 = vmatprep.subr.bf16.mxu0 0
        %549 = vmatpush2.bf16.msra.mxu0 0
        %550 = vmatprep.subr.bf16.mxu0 0
        %551 = vmatpush2.bf16.msra.mxu0 0
        %552 = vmatprep.subr.bf16.mxu0 0
        %553 = vmatpush2.bf16.msra.mxu0 0
        %554 = vmatprep.mubr.bf16.mxu0 0
        %555 = vmatmul.mubr.bf16.gmra.mxu0 %v440
        %v556 = vpop.f32.mrf.mxu0
        %v557 = vadd.f32 %v477, %v556
        %v558 = vpop.f32.mrf.mxu0
        %v559 = vpop.f32.mrf.mxu0
        %v560 = vpop.f32.mrf.mxu0
        %561 = vdwg.mxu0
        %v562 = vpack.c.bf16 %v516, %v516
        %v563 = vpack.c.bf16 %v518, %v518
        %v564 = vpack.c.bf16 %v557, %v557
        %vm565 = vcmask 261120
        %v567 = vsel %vm565, %v562, 0
        %v570 = vsel %vm565, %v563, 0
        %572 = vmatprep.subr.bf16.mxu0 0
        %573 = vmatpush1.bf16.xpose.msra.mxu0 0
        %574 = vmatprep.subr.bf16.mxu0 0
        %575 = vmatpush1.bf16.xpose.msra.mxu0 0
        %576 = vmatprep.subr.bf16.mxu0 0
        %577 = vmatpush1.bf16.xpose.msra.mxu0 0
        %578 = vmatprep.subr.bf16.mxu0 0
        %579 = vmatpush1.bf16.xpose.msra.mxu0 0
        %580 = vmatprep.subr.bf16.mxu0 0
        %581 = vmatpush1.bf16.xpose.msra.mxu0 0
        %582 = vmatprep.subr.bf16.mxu0 0
        %583 = vmatpush1.bf16.xpose.msra.mxu0 0
        %584 = vmatprep.subr.bf16.mxu0 0
        %585 = vmatpush1.bf16.xpose.msra.mxu0 0
        %586 = vmatprep.subr.bf16.mxu0 0
        %587 = vmatpush1.bf16.xpose.msra.mxu0 %v570
        %588 = vmatprep.subr.bf16.mxu0 0
        %589 = vmatpush2.bf16.xpose.msra.mxu0 0
        %590 = vmatprep.subr.bf16.mxu0 0
        %591 = vmatpush2.bf16.xpose.msra.mxu0 0
        %592 = vmatprep.subr.bf16.mxu0 0
        %593 = vmatpush2.bf16.xpose.msra.mxu0 0
        %594 = vmatprep.subr.bf16.mxu0 0
        %595 = vmatpush2.bf16.xpose.msra.mxu0 0
        %596 = vmatprep.subr.bf16.mxu0 0
        %597 = vmatpush2.bf16.xpose.msra.mxu0 0
        %598 = vmatprep.subr.bf16.mxu0 0
        %599 = vmatpush2.bf16.xpose.msra.mxu0 0
        %600 = vmatprep.subr.bf16.mxu0 0
        %601 = vmatpush2.bf16.xpose.msra.mxu0 0
        %602 = vmatprep.subr.bf16.mxu0 0
        %603 = vmatpush2.bf16.xpose.msra.mxu0 0
        %604 = vmatprep.mubr.bf16.mxu0 0
        %605 = vmatmul.mubr.bf16.gmra.mxu0 %v567
        %v606 = vpop.f32.mrf.mxu0
        %v607 = vadd.f32 0.0, %v606
        %v608 = vpop.f32.mrf.mxu0
        %v609 = vpop.f32.mrf.mxu0
        %v610 = vpop.f32.mrf.mxu0
        %611 = vdwg.mxu0
        %v612 = vmul.f32 %v607, 0.17677669
        %vm613 = vcmask 64512
        %v614 = vsel %vm613, %v612, -inf
        %615 = vmax.xlane.f32.xlu0 %v614
        %v616 = vpop.xlane.xlu0 %615
        %v617 = vsub.f32 %v612, %v616
        %v618 = vmul.f32 %v617, 1.442695
        %v619 = vpow.pop %v618
        %v620 = vsel %vm613, %v619, 0.0
        %621 = vadd.xlane.f32.xlu0 %v620
        %v622 = vpop.xlane.xlu0 %621
        %v623 = vrcp.pop %v622
        %v624 = vmul.f32 %v619, %v623
        %v625 = vpack.c.bf16 %v624, %v624
        %v627 = vsel %vm613, %v625, 0
        %vm629 = vcmask 1043456
        %v631 = vsel %vm629, %v564, 0
        %633 = vmatprep.subr.bf16.mxu0 0
        %634 = vmatpush1.bf16.msra.mxu0 0
        %635 = vmatprep.subr.bf16.mxu0 0
        %636 = vmatpush1.bf16.msra.mxu0 0
        %637 = vmatprep.subr.bf16.mxu0 0
        %638 = vmatpush1.bf16.msra.mxu0 0
        %639 = vmatprep.subr.bf16.mxu0 0
        %640 = vmatpush1.bf16.msra.mxu0 0
        %641 = vmatprep.subr.bf16.mxu0 0
        %642 = vmatpush1.bf16.msra.mxu0 0
        %643 = vmatprep.subr.bf16.mxu0 0
        %644 = vmatpush1.bf16.msra.mxu0 0
        %645 = vmatprep.subr.bf16.mxu0 0
        %646 = vmatpush1.bf16.msra.mxu0 0
        %647 = vmatprep.subr.bf16.mxu0 0
        %648 = vmatpush1.bf16.msra.mxu0 %v631
        %649 = vmatprep.subr.bf16.mxu0 0
        %650 = vmatpush2.bf16.msra.mxu0 0
        %651 = vmatprep.subr.bf16.mxu0 0
        %652 = vmatpush2.bf16.msra.mxu0 0
        %653 = vmatprep.subr.bf16.mxu0 0
        %654 = vmatpush2.bf16.msra.mxu0 0
        %655 = vmatprep.subr.bf16.mxu0 0
        %656 = vmatpush2.bf16.msra.mxu0 0
        %657 = vmatprep.subr.bf16.mxu0 0
        %658 = vmatpush2.bf16.msra.mxu0 0
        %659 = vmatprep.subr.bf16.mxu0 0
        %660 = vmatpush2.bf16.msra.mxu0 0
        %661 = vmatprep.subr.bf16.mxu0 0
        %662 = vmatpush2.bf16.msra.mxu0 0
        %663 = vmatprep.subr.bf16.mxu0 0
        %664 = vmatpush2.bf16.msra.mxu0 0
        %665 = vmatprep.mubr.bf16.mxu0 0
        %666 = vmatmul.mubr.bf16.gmra.mxu0 %v627
        %v667 = vpop.f32.mrf.mxu0
        %v668 = vadd.f32 0.0, %v667
        %v669 = vpop.f32.mrf.mxu0
        %v670 = vpop.f32.mrf.mxu0
        %v671 = vpop.f32.mrf.mxu0
        %672 = vdwg.mxu0
        %674 = vrot.lane.b32.xlu0 %v562, 96
        %v675 = vpop.permute.xlu0 %674
        %677 = vrot.lane.b32.xlu0 %v563, 96
        %v678 = vpop.permute.xlu0 %677
        %v680 = vsel %vm565, %v675, 0
        %v683 = vsel %vm565, %v678, 0
        %685 = vmatprep.subr.bf16.mxu0 0
        %686 = vmatpush1.bf16.xpose.msra.mxu0 0
        %687 = vmatprep.subr.bf16.mxu0 0
        %688 = vmatpush1.bf16.xpose.msra.mxu0 0
        %689 = vmatprep.subr.bf16.mxu0 0
        %690 = vmatpush1.bf16.xpose.msra.mxu0 0
        %691 = vmatprep.subr.bf16.mxu0 0
        %692 = vmatpush1.bf16.xpose.msra.mxu0 0
        %693 = vmatprep.subr.bf16.mxu0 0
        %694 = vmatpush1.bf16.xpose.msra.mxu0 0
        %695 = vmatprep.subr.bf16.mxu0 0
        %696 = vmatpush1.bf16.xpose.msra.mxu0 0
        %697 = vmatprep.subr.bf16.mxu0 0
        %698 = vmatpush1.bf16.xpose.msra.mxu0 0
        %699 = vmatprep.subr.bf16.mxu0 0
        %700 = vmatpush1.bf16.xpose.msra.mxu0 %v683
        %701 = vmatprep.subr.bf16.mxu0 0
        %702 = vmatpush2.bf16.xpose.msra.mxu0 0
        %703 = vmatprep.subr.bf16.mxu0 0
        %704 = vmatpush2.bf16.xpose.msra.mxu0 0
        %705 = vmatprep.subr.bf16.mxu0 0
        %706 = vmatpush2.bf16.xpose.msra.mxu0 0
        %707 = vmatprep.subr.bf16.mxu0 0
        %708 = vmatpush2.bf16.xpose.msra.mxu0 0
        %709 = vmatprep.subr.bf16.mxu0 0
        %710 = vmatpush2.bf16.xpose.msra.mxu0 0
        %711 = vmatprep.subr.bf16.mxu0 0
        %712 = vmatpush2.bf16.xpose.msra.mxu0 0
        %713 = vmatprep.subr.bf16.mxu0 0
        %714 = vmatpush2.bf16.xpose.msra.mxu0 0
        %715 = vmatprep.subr.bf16.mxu0 0
        %716 = vmatpush2.bf16.xpose.msra.mxu0 0
        %717 = vmatprep.mubr.bf16.mxu0 0
        %718 = vmatmul.mubr.bf16.gmra.mxu0 %v680
        %v719 = vpop.f32.mrf.mxu0
        %v720 = vadd.f32 0.0, %v719
        %v721 = vpop.f32.mrf.mxu0
        %v722 = vpop.f32.mrf.mxu0
        %v723 = vpop.f32.mrf.mxu0
        %724 = vdwg.mxu0
        %v725 = vmul.f32 %v720, 0.17677669
        %v726 = vsel %vm613, %v725, -inf
        %727 = vmax.xlane.f32.xlu0 %v726
        %v728 = vpop.xlane.xlu0 %727
        %v729 = vsub.f32 %v725, %v728
        %v730 = vmul.f32 %v729, 1.442695
        %v731 = vpow.pop %v730
        %v732 = vsel %vm613, %v731, 0.0
        %733 = vadd.xlane.f32.xlu0 %v732
        %v734 = vpop.xlane.xlu0 %733
        %v735 = vrcp.pop %v734
        %v736 = vmul.f32 %v731, %v735
        %v737 = vpack.c.bf16 %v736, %v736
        %739 = vrot.lane.b32.xlu0 %v564, 96
        %v740 = vpop.permute.xlu0 %739
        %v742 = vsel %vm613, %v737, 0
        %v745 = vsel %vm629, %v740, 0
        %747 = vmatprep.subr.bf16.mxu0 0
        %748 = vmatpush1.bf16.msra.mxu0 0
        %749 = vmatprep.subr.bf16.mxu0 0
        %750 = vmatpush1.bf16.msra.mxu0 0
        %751 = vmatprep.subr.bf16.mxu0 0
        %752 = vmatpush1.bf16.msra.mxu0 0
        %753 = vmatprep.subr.bf16.mxu0 0
        %754 = vmatpush1.bf16.msra.mxu0 0
        %755 = vmatprep.subr.bf16.mxu0 0
        %756 = vmatpush1.bf16.msra.mxu0 0
        %757 = vmatprep.subr.bf16.mxu0 0
        %758 = vmatpush1.bf16.msra.mxu0 0
        %759 = vmatprep.subr.bf16.mxu0 0
        %760 = vmatpush1.bf16.msra.mxu0 0
        %761 = vmatprep.subr.bf16.mxu0 0
        %762 = vmatpush1.bf16.msra.mxu0 %v745
        %763 = vmatprep.subr.bf16.mxu0 0
        %764 = vmatpush2.bf16.msra.mxu0 0
        %765 = vmatprep.subr.bf16.mxu0 0
        %766 = vmatpush2.bf16.msra.mxu0 0
        %767 = vmatprep.subr.bf16.mxu0 0
        %768 = vmatpush2.bf16.msra.mxu0 0
        %769 = vmatprep.subr.bf16.mxu0 0
        %770 = vmatpush2.bf16.msra.mxu0 0
        %771 = vmatprep.subr.bf16.mxu0 0
        %772 = vmatpush2.bf16.msra.mxu0 0
        %773 = vmatprep.subr.bf16.mxu0 0
        %774 = vmatpush2.bf16.msra.mxu0 0
        %775 = vmatprep.subr.bf16.mxu0 0
        %776 = vmatpush2.bf16.msra.mxu0 0
        %777 = vmatprep.subr.bf16.mxu0 0
        %778 = vmatpush2.bf16.msra.mxu0 0
        %779 = vmatprep.mubr.bf16.mxu0 0
        %780 = vmatmul.mubr.bf16.gmra.mxu0 %v742
        %v781 = vpop.f32.mrf.mxu0
        %v782 = vadd.f32 0.0, %v781
        %v783 = vpop.f32.mrf.mxu0
        %v784 = vpop.f32.mrf.mxu0
        %v785 = vpop.f32.mrf.mxu0
        %786 = vdwg.mxu0
        %787 = vrot.lane.b32.xlu0 %v562, 64
        %v788 = vpop.permute.xlu0 %787
        %789 = vrot.lane.b32.xlu0 %v563, 64
        %v790 = vpop.permute.xlu0 %789
        %v792 = vsel %vm565, %v788, 0
        %v795 = vsel %vm565, %v790, 0
        %797 = vmatprep.subr.bf16.mxu0 0
        %798 = vmatpush1.bf16.xpose.msra.mxu0 0
        %799 = vmatprep.subr.bf16.mxu0 0
        %800 = vmatpush1.bf16.xpose.msra.mxu0 0
        %801 = vmatprep.subr.bf16.mxu0 0
        %802 = vmatpush1.bf16.xpose.msra.mxu0 0
        %803 = vmatprep.subr.bf16.mxu0 0
        %804 = vmatpush1.bf16.xpose.msra.mxu0 0
        %805 = vmatprep.subr.bf16.mxu0 0
        %806 = vmatpush1.bf16.xpose.msra.mxu0 0
        %807 = vmatprep.subr.bf16.mxu0 0
        %808 = vmatpush1.bf16.xpose.msra.mxu0 0
        %809 = vmatprep.subr.bf16.mxu0 0
        %810 = vmatpush1.bf16.xpose.msra.mxu0 0
        %811 = vmatprep.subr.bf16.mxu0 0
        %812 = vmatpush1.bf16.xpose.msra.mxu0 %v795
        %813 = vmatprep.subr.bf16.mxu0 0
        %814 = vmatpush2.bf16.xpose.msra.mxu0 0
        %815 = vmatprep.subr.bf16.mxu0 0
        %816 = vmatpush2.bf16.xpose.msra.mxu0 0
        %817 = vmatprep.subr.bf16.mxu0 0
        %818 = vmatpush2.bf16.xpose.msra.mxu0 0
        %819 = vmatprep.subr.bf16.mxu0 0
        %820 = vmatpush2.bf16.xpose.msra.mxu0 0
        %821 = vmatprep.subr.bf16.mxu0 0
        %822 = vmatpush2.bf16.xpose.msra.mxu0 0
        %823 = vmatprep.subr.bf16.mxu0 0
        %824 = vmatpush2.bf16.xpose.msra.mxu0 0
        %825 = vmatprep.subr.bf16.mxu0 0
        %826 = vmatpush2.bf16.xpose.msra.mxu0 0
        %827 = vmatprep.subr.bf16.mxu0 0
        %828 = vmatpush2.bf16.xpose.msra.mxu0 0
        %829 = vmatprep.mubr.bf16.mxu0 0
        %830 = vmatmul.mubr.bf16.gmra.mxu0 %v792
        %v831 = vpop.f32.mrf.mxu0
        %v832 = vadd.f32 0.0, %v831
        %v833 = vpop.f32.mrf.mxu0
        %v834 = vpop.f32.mrf.mxu0
        %v835 = vpop.f32.mrf.mxu0
        %836 = vdwg.mxu0
        %v837 = vmul.f32 %v832, 0.17677669
        %v838 = vsel %vm613, %v837, -inf
        %839 = vmax.xlane.f32.xlu0 %v838
        %v840 = vpop.xlane.xlu0 %839
        %v841 = vsub.f32 %v837, %v840
        %v842 = vmul.f32 %v841, 1.442695
        %v843 = vpow.pop %v842
        %v844 = vsel %vm613, %v843, 0.0
        %845 = vadd.xlane.f32.xlu0 %v844
        %v846 = vpop.xlane.xlu0 %845
        %v847 = vrcp.pop %v846
        %v848 = vmul.f32 %v843, %v847
        %v849 = vpack.c.bf16 %v848, %v848
        %850 = vrot.lane.b32.xlu0 %v564, 64
        %v851 = vpop.permute.xlu0 %850
        %v853 = vsel %vm613, %v849, 0
        %v856 = vsel %vm629, %v851, 0
        %858 = vmatprep.subr.bf16.mxu0 0
        %859 = vmatpush1.bf16.msra.mxu0 0
        %860 = vmatprep.subr.bf16.mxu0 0
        %861 = vmatpush1.bf16.msra.mxu0 0
        %862 = vmatprep.subr.bf16.mxu0 0
        %863 = vmatpush1.bf16.msra.mxu0 0
        %864 = vmatprep.subr.bf16.mxu0 0
        %865 = vmatpush1.bf16.msra.mxu0 0
        %866 = vmatprep.subr.bf16.mxu0 0
        %867 = vmatpush1.bf16.msra.mxu0 0
        %868 = vmatprep.subr.bf16.mxu0 0
        %869 = vmatpush1.bf16.msra.mxu0 0
        %870 = vmatprep.subr.bf16.mxu0 0
        %871 = vmatpush1.bf16.msra.mxu0 0
        %872 = vmatprep.subr.bf16.mxu0 0
        %873 = vmatpush1.bf16.msra.mxu0 %v856
        %874 = vmatprep.subr.bf16.mxu0 0
        %875 = vmatpush2.bf16.msra.mxu0 0
        %876 = vmatprep.subr.bf16.mxu0 0
        %877 = vmatpush2.bf16.msra.mxu0 0
        %878 = vmatprep.subr.bf16.mxu0 0
        %879 = vmatpush2.bf16.msra.mxu0 0
        %880 = vmatprep.subr.bf16.mxu0 0
        %881 = vmatpush2.bf16.msra.mxu0 0
        %882 = vmatprep.subr.bf16.mxu0 0
        %883 = vmatpush2.bf16.msra.mxu0 0
        %884 = vmatprep.subr.bf16.mxu0 0
        %885 = vmatpush2.bf16.msra.mxu0 0
        %886 = vmatprep.subr.bf16.mxu0 0
        %887 = vmatpush2.bf16.msra.mxu0 0
        %888 = vmatprep.subr.bf16.mxu0 0
        %889 = vmatpush2.bf16.msra.mxu0 0
        %890 = vmatprep.mubr.bf16.mxu0 0
        %891 = vmatmul.mubr.bf16.gmra.mxu0 %v853
        %v892 = vpop.f32.mrf.mxu0
        %v893 = vadd.f32 0.0, %v892
        %v894 = vpop.f32.mrf.mxu0
        %v895 = vpop.f32.mrf.mxu0
        %v896 = vpop.f32.mrf.mxu0
        %897 = vdwg.mxu0
        %898 = vrot.lane.b32.xlu0 %v562, 32
        %v899 = vpop.permute.xlu0 %898
        %900 = vrot.lane.b32.xlu0 %v563, 32
        %v901 = vpop.permute.xlu0 %900
        %v903 = vsel %vm565, %v899, 0
        %v906 = vsel %vm565, %v901, 0
        %908 = vmatprep.subr.bf16.mxu0 0
        %909 = vmatpush1.bf16.xpose.msra.mxu0 0
        %910 = vmatprep.subr.bf16.mxu0 0
        %911 = vmatpush1.bf16.xpose.msra.mxu0 0
        %912 = vmatprep.subr.bf16.mxu0 0
        %913 = vmatpush1.bf16.xpose.msra.mxu0 0
        %914 = vmatprep.subr.bf16.mxu0 0
        %915 = vmatpush1.bf16.xpose.msra.mxu0 0
        %916 = vmatprep.subr.bf16.mxu0 0
        %917 = vmatpush1.bf16.xpose.msra.mxu0 0
        %918 = vmatprep.subr.bf16.mxu0 0
        %919 = vmatpush1.bf16.xpose.msra.mxu0 0
        %920 = vmatprep.subr.bf16.mxu0 0
        %921 = vmatpush1.bf16.xpose.msra.mxu0 0
        %922 = vmatprep.subr.bf16.mxu0 0
        %923 = vmatpush1.bf16.xpose.msra.mxu0 %v906
        %924 = vmatprep.subr.bf16.mxu0 0
        %925 = vmatpush2.bf16.xpose.msra.mxu0 0
        %926 = vmatprep.subr.bf16.mxu0 0
        %927 = vmatpush2.bf16.xpose.msra.mxu0 0
        %928 = vmatprep.subr.bf16.mxu0 0
        %929 = vmatpush2.bf16.xpose.msra.mxu0 0
        %930 = vmatprep.subr.bf16.mxu0 0
        %931 = vmatpush2.bf16.xpose.msra.mxu0 0
        %932 = vmatprep.subr.bf16.mxu0 0
        %933 = vmatpush2.bf16.xpose.msra.mxu0 0
        %934 = vmatprep.subr.bf16.mxu0 0
        %935 = vmatpush2.bf16.xpose.msra.mxu0 0
        %936 = vmatprep.subr.bf16.mxu0 0
        %937 = vmatpush2.bf16.xpose.msra.mxu0 0
        %938 = vmatprep.subr.bf16.mxu0 0
        %939 = vmatpush2.bf16.xpose.msra.mxu0 0
        %940 = vmatprep.mubr.bf16.mxu0 0
        %941 = vmatmul.mubr.bf16.gmra.mxu0 %v903
        %v942 = vpop.f32.mrf.mxu0
        %v943 = vadd.f32 0.0, %v942
        %v944 = vpop.f32.mrf.mxu0
        %v945 = vpop.f32.mrf.mxu0
        %v946 = vpop.f32.mrf.mxu0
        %947 = vdwg.mxu0
        %v948 = vmul.f32 %v943, 0.17677669
        %v949 = vsel %vm613, %v948, -inf
        %950 = vmax.xlane.f32.xlu0 %v949
        %v951 = vpop.xlane.xlu0 %950
        %v952 = vsub.f32 %v948, %v951
        %v953 = vmul.f32 %v952, 1.442695
        %v954 = vpow.pop %v953
        %v955 = vsel %vm613, %v954, 0.0
        %956 = vadd.xlane.f32.xlu0 %v955
        %v957 = vpop.xlane.xlu0 %956
        %v958 = vrcp.pop %v957
        %v959 = vmul.f32 %v954, %v958
        %v960 = vpack.c.bf16 %v959, %v959
        %961 = vrot.lane.b32.xlu0 %v564, 32
        %v962 = vpop.permute.xlu0 %961
        %v964 = vsel %vm613, %v960, 0
        %v967 = vsel %vm629, %v962, 0
        %969 = vmatprep.subr.bf16.mxu0 0
        %970 = vmatpush1.bf16.msra.mxu0 0
        %971 = vmatprep.subr.bf16.mxu0 0
        %972 = vmatpush1.bf16.msra.mxu0 0
        %973 = vmatprep.subr.bf16.mxu0 0
        %974 = vmatpush1.bf16.msra.mxu0 0
        %975 = vmatprep.subr.bf16.mxu0 0
        %976 = vmatpush1.bf16.msra.mxu0 0
        %977 = vmatprep.subr.bf16.mxu0 0
        %978 = vmatpush1.bf16.msra.mxu0 0
        %979 = vmatprep.subr.bf16.mxu0 0
        %980 = vmatpush1.bf16.msra.mxu0 0
        %981 = vmatprep.subr.bf16.mxu0 0
        %982 = vmatpush1.bf16.msra.mxu0 0
        %983 = vmatprep.subr.bf16.mxu0 0
        %984 = vmatpush1.bf16.msra.mxu0 %v967
        %985 = vmatprep.subr.bf16.mxu0 0
        %986 = vmatpush2.bf16.msra.mxu0 0
        %987 = vmatprep.subr.bf16.mxu0 0
        %988 = vmatpush2.bf16.msra.mxu0 0
        %989 = vmatprep.subr.bf16.mxu0 0
        %990 = vmatpush2.bf16.msra.mxu0 0
        %991 = vmatprep.subr.bf16.mxu0 0
        %992 = vmatpush2.bf16.msra.mxu0 0
        %993 = vmatprep.subr.bf16.mxu0 0
        %994 = vmatpush2.bf16.msra.mxu0 0
        %995 = vmatprep.subr.bf16.mxu0 0
        %996 = vmatpush2.bf16.msra.mxu0 0
        %997 = vmatprep.subr.bf16.mxu0 0
        %998 = vmatpush2.bf16.msra.mxu0 0
        %999 = vmatprep.subr.bf16.mxu0 0
        %1000 = vmatpush2.bf16.msra.mxu0 0
        %1001 = vmatprep.mubr.bf16.mxu0 0
        %1002 = vmatmul.mubr.bf16.gmra.mxu0 %v964
        %v1003 = vpop.f32.mrf.mxu0
        %v1004 = vadd.f32 0.0, %v1003
        %v1005 = vpop.f32.mrf.mxu0
        %v1006 = vpop.f32.mrf.mxu0
        %v1007 = vpop.f32.mrf.mxu0
        %1008 = vdwg.mxu0
        %1010 = vrot.lane.b32.xlu0 %v782, 32
        %v1011 = vpop.permute.xlu0 %1010
        %1014 = vrot.lane.b32.xlu0 %v893, 64
        %v1015 = vpop.permute.xlu0 %1014
        %1018 = vrot.lane.b32.xlu0 %v1004, 96
        %v1019 = vpop.permute.xlu0 %1018
        %v1021 = vsel %vm565, %v668, %v1011
        %vm1022 = vcmask 523264
        %v1023 = vsel %vm1022, %v1021, %v1015
        %vm1024 = vcmask 785408
        %v1025 = vsel %vm1024, %v1023, %v1019
        %v1026 = vpack.c.bf16 %v1025, %v1025
        %v1027 = vpack.c.bf16 %v425, %v424
        %v1028 = vpack.c.bf16 %v427, %v426
        %v1029 = vpack.c.bf16 %v429, %v428
        %v1030 = vpack.c.bf16 %v431, %v430
        %v1031 = vpack.c.bf16 %v433, %v432
        %v1032 = vpack.c.bf16 %v435, %v434
        %v1033 = vpack.c.bf16 %v437, %v436
        %v1034 = vpack.c.bf16 %v439, %v438
        %v1035 = vlaneseq
        %v1036 = vshrl.u32 %v1035, 7
        %v1037 = vsub.s32 0, %v1036
        %v1038 = vrot.slane %v374, %v1037
        %1039 = vmatprep.subr.bf16.mxu0 0
        %1040 = vmatpush1.bf16.msra.mxu0 %v1034
        %1041 = vmatprep.subr.bf16.mxu0 0
        %1042 = vmatpush1.bf16.msra.mxu0 %v1033
        %1043 = vmatprep.subr.bf16.mxu0 0
        %1044 = vmatpush1.bf16.msra.mxu0 %v1032
        %1045 = vmatprep.subr.bf16.mxu0 0
        %1046 = vmatpush1.bf16.msra.mxu0 %v1031
        %1047 = vmatprep.subr.bf16.mxu0 0
        %1048 = vmatpush1.bf16.msra.mxu0 %v1030
        %1049 = vmatprep.subr.bf16.mxu0 0
        %1050 = vmatpush1.bf16.msra.mxu0 %v1029
        %1051 = vmatprep.subr.bf16.mxu0 0
        %1052 = vmatpush1.bf16.msra.mxu0 %v1028
        %1053 = vmatprep.subr.bf16.mxu0 0
        %1054 = vmatpush1.bf16.msra.mxu0 %v1027
        %1055 = vmatprep.subr.bf16.mxu0 0
        %1056 = vmatpush2.bf16.msra.mxu0 0
        %1057 = vmatprep.subr.bf16.mxu0 0
        %1058 = vmatpush2.bf16.msra.mxu0 0
        %1059 = vmatprep.subr.bf16.mxu0 0
        %1060 = vmatpush2.bf16.msra.mxu0 0
        %1061 = vmatprep.subr.bf16.mxu0 0
        %1062 = vmatpush2.bf16.msra.mxu0 0
        %1063 = vmatprep.subr.bf16.mxu0 0
        %1064 = vmatpush2.bf16.msra.mxu0 0
        %1065 = vmatprep.subr.bf16.mxu0 0
        %1066 = vmatpush2.bf16.msra.mxu0 0
        %1067 = vmatprep.subr.bf16.mxu0 0
        %1068 = vmatpush2.bf16.msra.mxu0 0
        %1069 = vmatprep.subr.bf16.mxu0 0
        %1070 = vmatpush2.bf16.msra.mxu0 0
        %1071 = vmatprep.mubr.bf16.mxu0 0
        %1072 = vmatmul.mubr.bf16.gmra.mxu0 %v1026
        %v1073 = vpop.f32.mrf.mxu0
        %v1074 = vadd.f32 %v1038, %v1073
        %v1075 = vpop.f32.mrf.mxu0
        %v1076 = vpop.f32.mrf.mxu0
        %v1077 = vpop.f32.mrf.mxu0
        %1078 = vdwg.mxu0
        %v1079 = vadd.f32 %v373, %v1074
        %1080 = vadd.xlane.f32.xlu0 %v1079
        %v1081 = vpop.xlane.xlu0 %1080
        %v1082 = vrcp.pop 128.0
        %v1083 = vmul.f32 %v1081, %v1082
        %v1084 = vsub.f32 %v1079, %v1083
        %v1085 = vmul.f32 %v1084, %v1084
        %1086 = vadd.xlane.f32.xlu0 %v1085
        %v1087 = vpop.xlane.xlu0 %1086
        %v1088 = vmul.f32 %v1087, %v1082
        %v1089 = vadd.f32 %v1088, 1e-05
        %v1090 = vrsqrt.pop %v1089
        %v1091 = vmul.f32 %v1084, %v1090
        %v1092 = vlaneseq
        %v1093 = vshrl.u32 %v1092, 7
        %v1094 = vsub.s32 2, %v1093
        %v1095 = vrot.slane %v374, %v1094
        %v1096 = vmul.f32 %v1091, %v1095
        %v1097 = vlaneseq
        %v1098 = vshrl.u32 %v1097, 7
        %v1099 = vsub.s32 3, %v1098
        %v1100 = vrot.slane %v374, %v1099
        %v1101 = vadd.f32 %v1096, %v1100
        %v1102 = vld [vmem:[#allocation4] sm:$0xff]
        %v1103 = vld [vmem:[#allocation4 + $0x8] sm:$0xff]
        %v1104 = vld [vmem:[#allocation4 + $0x10] sm:$0xff]
        %v1105 = vld [vmem:[#allocation4 + $0x18] sm:$0xff]
        %v1106 = vld [vmem:[#allocation4 + $0x20] sm:$0xff]
        %v1107 = vld [vmem:[#allocation4 + $0x28] sm:$0xff]
        %v1108 = vld [vmem:[#allocation4 + $0x30] sm:$0xff]
        %v1109 = vld [vmem:[#allocation4 + $0x38] sm:$0xff]
        %v1110 = vld [vmem:[#allocation4 + $0x40] sm:$0xff]
        %v1111 = vld [vmem:[#allocation4 + $0x48] sm:$0xff]
        %v1112 = vld [vmem:[#allocation4 + $0x50] sm:$0xff]
        %v1113 = vld [vmem:[#allocation4 + $0x58] sm:$0xff]
        %v1114 = vld [vmem:[#allocation4 + $0x60] sm:$0xff]
        %v1115 = vld [vmem:[#allocation4 + $0x68] sm:$0xff]
        %v1116 = vld [vmem:[#allocation4 + $0x70] sm:$0xff]
        %v1117 = vld [vmem:[#allocation4 + $0x78] sm:$0xff]
        %v1118 = vld [vmem:[%s5] sm:$0x1]
        %v1119 = vld [vmem:[#allocation6] sm:$0xff]
        %v1120 = vld [vmem:[#allocation6 + $0x8] sm:$0xff]
        %v1121 = vld [vmem:[#allocation6 + $0x10] sm:$0xff]
        %v1122 = vld [vmem:[#allocation6 + $0x18] sm:$0xff]
        %v1123 = vld [vmem:[#allocation6 + $0x20] sm:$0xff]
        %v1124 = vld [vmem:[#allocation6 + $0x28] sm:$0xff]
        %v1125 = vld [vmem:[#allocation6 + $0x30] sm:$0xff]
        %v1126 = vld [vmem:[#allocation6 + $0x38] sm:$0xff]
        %v1127 = vld [vmem:[#allocation6 + $0x40] sm:$0xff]
        %v1128 = vld [vmem:[#allocation6 + $0x48] sm:$0xff]
        %v1129 = vld [vmem:[#allocation6 + $0x50] sm:$0xff]
        %v1130 = vld [vmem:[#allocation6 + $0x58] sm:$0xff]
        %v1131 = vld [vmem:[#allocation6 + $0x60] sm:$0xff]
        %v1132 = vld [vmem:[#allocation6 + $0x68] sm:$0xff]
        %v1133 = vld [vmem:[#allocation6 + $0x70] sm:$0xff]
        %v1134 = vld [vmem:[#allocation6 + $0x78] sm:$0xff]
        %v1135 = vpack.c.bf16 %v1101, %v1101
        %v1136 = vpack.c.bf16 %v1103, %v1102
        %v1137 = vpack.c.bf16 %v1105, %v1104
        %v1138 = vpack.c.bf16 %v1107, %v1106
        %v1139 = vpack.c.bf16 %v1109, %v1108
        %v1140 = vpack.c.bf16 %v1111, %v1110
        %v1141 = vpack.c.bf16 %v1113, %v1112
        %v1142 = vpack.c.bf16 %v1115, %v1114
        %v1143 = vpack.c.bf16 %v1117, %v1116
        %v1145 = vlaneseq
        %v1146 = vshrl.u32 %v1145, 7
        %v1147 = vsub.s32 0, %v1146
        %v1148 = vrot.slane %v1118, %v1147
        %1150 = vmatprep.subr.bf16.mxu0 0
        %1151 = vmatpush1.bf16.msra.mxu0 %v1143
        %1152 = vmatprep.subr.bf16.mxu0 0
        %1153 = vmatpush1.bf16.msra.mxu0 %v1142
        %1154 = vmatprep.subr.bf16.mxu0 0
        %1155 = vmatpush1.bf16.msra.mxu0 %v1141
        %1156 = vmatprep.subr.bf16.mxu0 0
        %1157 = vmatpush1.bf16.msra.mxu0 %v1140
        %1158 = vmatprep.subr.bf16.mxu0 0
        %1159 = vmatpush1.bf16.msra.mxu0 %v1139
        %1160 = vmatprep.subr.bf16.mxu0 0
        %1161 = vmatpush1.bf16.msra.mxu0 %v1138
        %1162 = vmatprep.subr.bf16.mxu0 0
        %1163 = vmatpush1.bf16.msra.mxu0 %v1137
        %1164 = vmatprep.subr.bf16.mxu0 0
        %1165 = vmatpush1.bf16.msra.mxu0 %v1136
        %1166 = vmatprep.subr.bf16.mxu0 0
        %1167 = vmatpush2.bf16.msra.mxu0 0
        %1168 = vmatprep.subr.bf16.mxu0 0
        %1169 = vmatpush2.bf16.msra.mxu0 0
        %1170 = vmatprep.subr.bf16.mxu0 0
        %1171 = vmatpush2.bf16.msra.mxu0 0
        %1172 = vmatprep.subr.bf16.mxu0 0
        %1173 = vmatpush2.bf16.msra.mxu0 0
        %1174 = vmatprep.subr.bf16.mxu0 0
        %1175 = vmatpush2.bf16.msra.mxu0 0
        %1176 = vmatprep.subr.bf16.mxu0 0
        %1177 = vmatpush2.bf16.msra.mxu0 0
        %1178 = vmatprep.subr.bf16.mxu0 0
        %1179 = vmatpush2.bf16.msra.mxu0 0
        %1180 = vmatprep.subr.bf16.mxu0 0
        %1181 = vmatpush2.bf16.msra.mxu0 0
        %1182 = vmatprep.mubr.bf16.mxu0 0
        %1183 = vmatmul.mubr.bf16.gmra.mxu0 %v1135
        %v1184 = vpop.f32.mrf.mxu0
        %v1185 = vadd.f32 %v1148, %v1184
        %v1186 = vpop.f32.mrf.mxu0
        %v1187 = vpop.f32.mrf.mxu0
        %v1188 = vpop.f32.mrf.mxu0
        %1189 = vdwg.mxu0
        %v1190 = vmax.f32 %v1185, 0.0
        %v1191 = vpack.c.bf16 %v1190, %v1190
        %v1192 = vpack.c.bf16 %v1120, %v1119
        %v1193 = vpack.c.bf16 %v1122, %v1121
        %v1194 = vpack.c.bf16 %v1124, %v1123
        %v1195 = vpack.c.bf16 %v1126, %v1125
        %v1196 = vpack.c.bf16 %v1128, %v1127
        %v1197 = vpack.c.bf16 %v1130, %v1129
        %v1198 = vpack.c.bf16 %v1132, %v1131
        %v1199 = vpack.c.bf16 %v1134, %v1133
        %v1200 = vlaneseq
        %v1201 = vshrl.u32 %v1200, 7
        %v1202 = vsub.s32 1, %v1201
        %v1203 = vrot.slane %v374, %v1202
        %1204 = vmatprep.subr.bf16.mxu0 0
        %1205 = vmatpush1.bf16.msra.mxu0 %v1199
        %1206 = vmatprep.subr.bf16.mxu0 0
        %1207 = vmatpush1.bf16.msra.mxu0 %v1198
        %1208 = vmatprep.subr.bf16.mxu0 0
        %1209 = vmatpush1.bf16.msra.mxu0 %v1197
        %1210 = vmatprep.subr.bf16.mxu0 0
        %1211 = vmatpush1.bf16.msra.mxu0 %v1196
        %1212 = vmatprep.subr.bf16.mxu0 0
        %1213 = vmatpush1.bf16.msra.mxu0 %v1195
        %1214 = vmatprep.subr.bf16.mxu0 0
        %1215 = vmatpush1.bf16.msra.mxu0 %v1194
        %1216 = vmatprep.subr.bf16.mxu0 0
        %1217 = vmatpush1.bf16.msra.mxu0 %v1193
        %1218 = vmatprep.subr.bf16.mxu0 0
        %1219 = vmatpush1.bf16.msra.mxu0 %v1192
        %1220 = vmatprep.subr.bf16.mxu0 0
        %1221 = vmatpush2.bf16.msra.mxu0 0
        %1222 = vmatprep.subr.bf16.mxu0 0
        %1223 = vmatpush2.bf16.msra.mxu0 0
        %1224 = vmatprep.subr.bf16.mxu0 0
        %1225 = vmatpush2.bf16.msra.mxu0 0
        %1226 = vmatprep.subr.bf16.mxu0 0
        %1227 = vmatpush2.bf16.msra.mxu0 0
        %1228 = vmatprep.subr.bf16.mxu0 0
        %1229 = vmatpush2.bf16.msra.mxu0 0
        %1230 = vmatprep.subr.bf16.mxu0 0
        %1231 = vmatpush2.bf16.msra.mxu0 0
        %1232 = vmatprep.subr.bf16.mxu0 0
        %1233 = vmatpush2.bf16.msra.mxu0 0
        %1234 = vmatprep.subr.bf16.mxu0 0
        %1235 = vmatpush2.bf16.msra.mxu0 0
        %1236 = vmatprep.mubr.bf16.mxu0 0
        %1237 = vmatmul.mubr.bf16.gmra.mxu0 %v1191
        %v1238 = vpop.f32.mrf.mxu0
        %v1239 = vadd.f32 %v1203, %v1238
        %v1240 = vpop.f32.mrf.mxu0
        %v1241 = vpop.f32.mrf.mxu0
        %v1242 = vpop.f32.mrf.mxu0
        %1243 = vdwg.mxu0
        %v1244 = vadd.f32 %v1101, %v1239
        %1245 = vadd.xlane.f32.xlu0 %v1244
        %v1246 = vpop.xlane.xlu0 %1245
        %v1247 = vmul.f32 %v1246, %v1082
        %v1248 = vsub.f32 %v1244, %v1247
        %v1249 = vmul.f32 %v1248, %v1248
        %1250 = vadd.xlane.f32.xlu0 %v1249
        %v1251 = vpop.xlane.xlu0 %1250
        %v1252 = vmul.f32 %v1251, %v1082
        %v1253 = vadd.f32 %v1252, 1e-05
        %v1254 = vrsqrt.pop %v1253
        %v1255 = vmul.f32 %v1248, %v1254
        %v1256 = vlaneseq
        %v1257 = vshrl.u32 %v1256, 7
        %v1258 = vsub.s32 4, %v1257
        %v1259 = vrot.slane %v374, %v1258
        %v1260 = vmul.f32 %v1255, %v1259
        %v1261 = vlaneseq
        %v1262 = vshrl.u32 %v1261, 7
        %v1263 = vsub.s32 5, %v1262
        %v1264 = vrot.slane %v374, %v1263
        %v1265 = vadd.f32 %v1260, %v1264
        %v1266 = vld [vmem:[%s8] sm:$0x3]
        %1267 = vadd.xlane.f32.xlu0 %v1265
        %v1268 = vpop.xlane.xlu0 %1267
        %v1269 = vmul.f32 %v1268, %v1082
        %v1270 = vsub.f32 %v1265, %v1269
        %v1271 = vmul.f32 %v1270, %v1270
        %1272 = vadd.xlane.f32.xlu0 %v1271
        %v1273 = vpop.xlane.xlu0 %1272
        %v1274 = vmul.f32 %v1273, %v1082
        %v1275 = vadd.f32 %v1274, 1e-05
        %v1276 = vrsqrt.pop %v1275
        %v1277 = vmul.f32 %v1270, %v1276
        %v1278 = vlaneseq
        %v1279 = vshrl.u32 %v1278, 7
        %v1280 = vsub.s32 0, %v1279
        %v1281 = vrot.slane %v1266, %v1280
        %v1282 = vmul.f32 %v1277, %v1281
        %v1283 = vlaneseq
        %v1284 = vshrl.u32 %v1283, 7
        %v1285 = vsub.s32 1, %v1284
        %v1286 = vrot.slane %v1266, %v1285
        %v1287 = vadd.f32 %v1282, %v1286
        %1288 = vst [vmem:[%s371] sm:$0xff] %v1287
        %p1289 = scmp.lt.s32.totalorder %s22, 1
        %s1290 = scalar_select %p1289, %s22, 1
        %s1291 = smul.addr %s1290, 8
        %s1292 = scalar_lea.vmem %s9, %s1291
        // Predicated region
        $region69: #{transformer_forward.6} parent=55 // pred_check
          %p1293 = pneg %p234
        $region70: #{transformer_forward.6} parent=55 // pred_check_branch
          %1295 = sbr.rel (%p1293) target = $region72
        $region71: #{transformer_forward.6} parent=55 // pred_region
          _
        $region72: #{transformer_forward.6} parent=55 // pred_fallthru
          _
      $region56: #{transformer_forward.6} parent=5 // pred_fallthru
        _
      %p1296 = scmp.le.s32.totalorder 2, %s17
      // Predicated region
      $region73: #{transformer_forward.6} parent=5 // pred_check
        %p1297 = pneg %p1296
      $region74: #{transformer_forward.6} parent=5 // pred_check_branch
        %1299 = sbr.rel (%p1297) target = $region76
      $region75: #{transformer_forward.6} parent=5 // pred_region
        %s1300 = ssub.s32 %s17, 2
        // Predicated region
        $region77: #{transformer_forward.6} parent=75 // pred_check
          %p1301 = pneg %p240
        $region78: #{transformer_forward.6} parent=75 // pred_check_branch
          %1303 = sbr.rel (%p1301) target = $region80
        $region79: #{transformer_forward.6} parent=75 // pred_region
          %p1304 = scmp.lt.s32.totalorder %s23, 1
          %s1305 = scalar_select %p1304, %s23, 1
          %s1306 = smul.addr %s1305, 8
          %s1307 = scalar_lea.vmem %s9, %s1306
        $region80: #{transformer_forward.6} parent=75 // pred_fallthru
          _
      $region76: #{transformer_forward.6} parent=5 // pred_fallthru
        _
    $region6: #{transformer_forward.6} parent=1 // loop_footer
      %s21 = sadd.s32 1, %s17
    $region7: #{transformer_forward.6} parent=1 // loop_footer_branch
      %16 = sbr.rel target = $region3
    $region8: #{transformer_forward.6} parent=1 // loop_exit
      _
    %1308 = vsyncpa [#allocation3], 1
    %s1309 = scalar_lea.sflag [#allocation3], 1
    %1310 = vsyncpa %s1309, 1
    %1311 = vsyncpa [#allocation5], 1

// kernel: transformer_forward.7
$region0: #{transformer_forward.7}
  #allocation0 [shape = 'u32[]', space=smem, size = 0x4, offset = 0x4, fixed_abs, tag = 'smem constant byte address 0x4 - core index']
  #allocation1 [shape = 'u32[144,128]{1,0:T(1,128)}', space=vmem, size = 0x12000, scoped, tag = 'internal scratch']
  %s0 = inlined_call_operand.vmem [shape: f32[2,8,128], index: 0, kind: input, shape index: {}]
  %s1 = inlined_call_operand.vmem [shape: f32[2,8,128], index: 1, kind: input, shape index: {}]
  %s2 = inlined_call_operand.vmem [shape: f32[128,384], index: 2, kind: input, shape index: {}]
  %s3 = inlined_call_operand.hbm [shape: f32[1,384], index: 3, kind: input, shape index: {}]
  %s4 = inlined_call_operand.vmem [shape: f32[128,128], index: 4, kind: input, shape index: {}]
  %s5 = inlined_call_operand.vmem [shape: f32[128,128], index: 5, kind: input, shape index: {}]
  %s6 = inlined_call_operand.vmem [shape: f32[128,256], index: 6, kind: input, shape index: {}]
  %s7 = inlined_call_operand.hbm [shape: f32[1,256], index: 7, kind: input, shape index: {}]
  %s8 = inlined_call_operand.vmem [shape: f32[128,128], index: 8, kind: input, shape index: {}]
  %s9 = inlined_call_operand.vmem [shape: f32[128,128], index: 9, kind: input, shape index: {}]
  %s10 = inlined_call_operand.hbm [shape: f32[1,128], index: 10, kind: input, shape index: {}]
  %s11 = inlined_call_operand.vmem [shape: f32[128,128], index: 11, kind: input, shape index: {}]
  %s12 = inlined_call_operand.vmem [shape: f32[10,128], index: 12, kind: input, shape index: {}]
  %s13 = inlined_call_operand.vmem [shape: f32[2,8,128], index: 13, kind: output, shape index: {}]
  %s14 = sld [smem:[#allocation0]]
  $region97: #{transformer_forward.7} parent=0
    _
  %s16 = ssub.s32 1, %s14
  %s17 = scalar_select 0, %s16, %s14
  $region1: #{transformer_forward.7} parent=0
    #allocation2 [shape = 'u8[1536]{0}', space=vmem, size = 0x800, scoped, tag = 'input window, operand 3, single buffered']
    #allocation3 [shape = 's32[2]{0}', space=sflag, size = 0x8, scoped, tag = 'scoped memory for transformer_forward.7']
    #allocation4 [shape = 'u8[1024]{0}', space=vmem, size = 0x400, scoped, tag = 'input window, operand 7, single buffered']
    #allocation5 [shape = 's32[1]{0}', space=sflag, size = 0x4, scoped, tag = 'scoped memory for transformer_forward.7']
    #allocation6 [shape = 'u8[512]{0}', space=vmem, size = 0x400, scoped, tag = 'input window, operand 10, single buffered']
    %18 = vsyncpa [#allocation3], 0
    %19 = vsyncpa [#allocation5], 0
    loop: start=0, step=1, limit=4
    $region2: #{transformer_forward.7} parent=1 // loop_pre_header
      _
    $region3: #{transformer_forward.7} parent=1 // loop_header
      %s21 = sphi 0, %s25
      %p22 = scmp.ge.s32.totalorder %s21, 4
      %s31 = sphi 0, %s33
      %s34 = sphi 0, %s31
      %s35 = sphi 0, %s34
      %s51 = sphi 0, %s35
      %s57 = sphi 0, %s59
      %s60 = sphi 0, %s57
      %s61 = sphi 0, %s60
      %s77 = sphi 0, %s61
      %s81 = sphi 0, %s81
      %s83 = sphi 0, %s81
      %s84 = sphi 0, %s83
      %s98 = sphi 0, %s84
      %s102 = sphi 0, %s102
      %s104 = sphi 0, %s102
      %s105 = sphi 0, %s104
      %s119 = sphi 0, %s105
      %s123 = sphi 0, %s123
      %s125 = sphi 0, %s123
      %s126 = sphi 0, %s125
      %s140 = sphi 0, %s126
      %s144 = sphi 0, %s144
      %s146 = sphi 0, %s144
      %s147 = sphi 0, %s146
      %s161 = sphi 0, %s147
      %s165 = sphi 0, %s165
      %s167 = sphi 0, %s165
      %s168 = sphi 0, %s167
      %s182 = sphi 0, %s168
      %s186 = sphi 0, %s186
      %s188 = sphi 0, %s186
      %s189 = sphi 0, %s188
      %s203 = sphi 0, %s189
      %s207 = sphi 0, %s207
      %s209 = sphi 0, %s207
      %s210 = sphi 0, %s209
      %s224 = sphi 0, %s210
      %s228 = sphi 0, %s228
      %s230 = sphi 0, %s228
      %s231 = sphi 0, %s230
      %s245 = sphi 0, %s231
      %s249 = sphi 0, %s249
      %s251 = sphi 0, %s249
      %s252 = sphi 0, %s251
      %s266 = sphi 0, %s252
      %s270 = sphi 0, %s270
      %s272 = sphi 0, %s270
      %s273 = sphi 0, %s272
      %s287 = sphi 0, %s273
      %s291 = sphi 0, %s291
      %s293 = sphi 0, %s291
      %s294 = sphi 0, %s293
      %s308 = sphi 0, %s294
      %s314 = sphi 0, %s316
      %s317 = sphi 0, %s314
      %s318 = sphi 0, %s317
      %s334 = sphi 0, %s318
    $region4: #{transformer_forward.7} parent=1 // loop_header_branch
      %24 = sbr.rel (%p22) target = $region8
    $region5: #{transformer_forward.7} parent=1 // loop_body
      %s26 = ssub.s32 %s21, 1
      %s27 = ssub.s32 %s21, 2
      %s28 = sadd.s32 %s21, 1
      %s29 = ssub.s32 %s21, %s28
      %p30 = scmp.eq.s32.totalorder %s29, 0
      %s32 = sadd.s32 %s31, 1
      %s33 = scalar_select %p30, %s31, %s32
      %p36 = pneg %p30
      %p37 = scmp.eq.s32.totalorder %s21, 1
      %p38 = por %p36, %p37
      %p39 = scmp.ne.s32.totalorder %s31, %s34
      %p40 = scmp.eq.s32.totalorder %s21, 0
      %p41 = por %p39, %p40
      %p42 = scmp.ne.s32.totalorder %s31, %s34
      %p43 = scmp.eq.s32.totalorder %s26, 1
      %p44 = por %p42, %p43
      %p45 = scmp.ne.s32.totalorder %s34, %s35
      %p46 = scmp.eq.s32.totalorder %s26, 0
      %p47 = por %p45, %p46
      %p48 = scmp.ne.s32.totalorder %s34, %s35
      %p49 = scmp.eq.s32.totalorder %s27, 1
      %p50 = por %p48, %p49
      %p52 = scmp.ne.s32.totalorder %s35, %s51
      %p53 = scmp.eq.s32.totalorder %s27, 0
      %p54 = por %p52, %p53
      %s55 = ssub.s32 %s21, %s28
      %p56 = scmp.eq.s32.totalorder %s55, 0
      %s58 = sadd.s32 %s57, 1
      %s59 = scalar_select %p56, %s57, %s58
      %p62 = pneg %p56
      %p63 = scmp.eq.s32.totalorder %s21, 1
      %p64 = por %p62, %p63
      %p65 = scmp.ne.s32.totalorder %s57, %s60
      %p66 = scmp.eq.s32.totalorder %s21, 0
      %p67 = por %p65, %p66
      %p68 = scmp.ne.s32.totalorder %s57, %s60
      %p69 = scmp.eq.s32.totalorder %s26, 1
      %p70 = por %p68, %p69
      %p71 = scmp.ne.s32.totalorder %s60, %s61
      %p72 = scmp.eq.s32.totalorder %s26, 0
      %p73 = por %p71, %p72
      %p74 = scmp.ne.s32.totalorder %s60, %s61
      %p75 = scmp.eq.s32.totalorder %s27, 1
      %p76 = por %p74, %p75
      %p78 = scmp.ne.s32.totalorder %s61, %s77
      %p79 = scmp.eq.s32.totalorder %s27, 0
      %p80 = por %p78, %p79
      %s82 = sadd.s32 %s81, 1
      %p85 = scmp.eq.s32.totalorder %s21, 1
      %p86 = scmp.ne.s32.totalorder %s81, %s83
      %p87 = scmp.eq.s32.totalorder %s21, 0
      %p88 = por %p86, %p87
      %p89 = scmp.ne.s32.totalorder %s81, %s83
      %p90 = scmp.eq.s32.totalorder %s26, 1
      %p91 = por %p89, %p90
      %p92 = scmp.ne.s32.totalorder %s83, %s84
      %p93 = scmp.eq.s32.totalorder %s26, 0
      %p94 = por %p92, %p93
      %p95 = scmp.ne.s32.totalorder %s83, %s84
      %p96 = scmp.eq.s32.totalorder %s27, 1
      %p97 = por %p95, %p96
      %p99 = scmp.ne.s32.totalorder %s84, %s98
      %p100 = scmp.eq.s32.totalorder %s27, 0
      %p101 = por %p99, %p100
      %s103 = sadd.s32 %s102, 1
      %p106 = scmp.eq.s32.totalorder %s21, 1
      %p107 = scmp.ne.s32.totalorder %s102, %s104
      %p108 = scmp.eq.s32.totalorder %s21, 0
      %p109 = por %p107, %p108
      %p110 = scmp.ne.s32.totalorder %s102, %s104
      %p111 = scmp.eq.s32.totalorder %s26, 1
      %p112 = por %p110, %p111
      %p113 = scmp.ne.s32.totalorder %s104, %s105
      %p114 = scmp.eq.s32.totalorder %s26, 0
      %p115 = por %p113, %p114
      %p116 = scmp.ne.s32.totalorder %s104, %s105
      %p117 = scmp.eq.s32.totalorder %s27, 1
      %p118 = por %p116, %p117
      %p120 = scmp.ne.s32.totalorder %s105, %s119
      %p121 = scmp.eq.s32.totalorder %s27, 0
      %p122 = por %p120, %p121
      %s124 = sadd.s32 %s123, 1
      %p127 = scmp.eq.s32.totalorder %s21, 1
      %p128 = scmp.ne.s32.totalorder %s123, %s125
      %p129 = scmp.eq.s32.totalorder %s21, 0
      %p130 = por %p128, %p129
      %p131 = scmp.ne.s32.totalorder %s123, %s125
      %p132 = scmp.eq.s32.totalorder %s26, 1
      %p133 = por %p131, %p132
      %p134 = scmp.ne.s32.totalorder %s125, %s126
      %p135 = scmp.eq.s32.totalorder %s26, 0
      %p136 = por %p134, %p135
      %p137 = scmp.ne.s32.totalorder %s125, %s126
      %p138 = scmp.eq.s32.totalorder %s27, 1
      %p139 = por %p137, %p138
      %p141 = scmp.ne.s32.totalorder %s126, %s140
      %p142 = scmp.eq.s32.totalorder %s27, 0
      %p143 = por %p141, %p142
      %s145 = sadd.s32 %s144, 1
      %p148 = scmp.eq.s32.totalorder %s21, 1
      %p149 = scmp.ne.s32.totalorder %s144, %s146
      %p150 = scmp.eq.s32.totalorder %s21, 0
      %p151 = por %p149, %p150
      %p152 = scmp.ne.s32.totalorder %s144, %s146
      %p153 = scmp.eq.s32.totalorder %s26, 1
      %p154 = por %p152, %p153
      %p155 = scmp.ne.s32.totalorder %s146, %s147
      %p156 = scmp.eq.s32.totalorder %s26, 0
      %p157 = por %p155, %p156
      %p158 = scmp.ne.s32.totalorder %s146, %s147
      %p159 = scmp.eq.s32.totalorder %s27, 1
      %p160 = por %p158, %p159
      %p162 = scmp.ne.s32.totalorder %s147, %s161
      %p163 = scmp.eq.s32.totalorder %s27, 0
      %p164 = por %p162, %p163
      %s166 = sadd.s32 %s165, 1
      %p169 = scmp.eq.s32.totalorder %s21, 1
      %p170 = scmp.ne.s32.totalorder %s165, %s167
      %p171 = scmp.eq.s32.totalorder %s21, 0
      %p172 = por %p170, %p171
      %p173 = scmp.ne.s32.totalorder %s165, %s167
      %p174 = scmp.eq.s32.totalorder %s26, 1
      %p175 = por %p173, %p174
      %p176 = scmp.ne.s32.totalorder %s167, %s168
      %p177 = scmp.eq.s32.totalorder %s26, 0
      %p178 = por %p176, %p177
      %p179 = scmp.ne.s32.totalorder %s167, %s168
      %p180 = scmp.eq.s32.totalorder %s27, 1
      %p181 = por %p179, %p180
      %p183 = scmp.ne.s32.totalorder %s168, %s182
      %p184 = scmp.eq.s32.totalorder %s27, 0
      %p185 = por %p183, %p184
      %s187 = sadd.s32 %s186, 1
      %p190 = scmp.eq.s32.totalorder %s21, 1
      %p191 = scmp.ne.s32.totalorder %s186, %s188
      %p192 = scmp.eq.s32.totalorder %s21, 0
      %p193 = por %p191, %p192
      %p194 = scmp.ne.s32.totalorder %s186, %s188
      %p195 = scmp.eq.s32.totalorder %s26, 1
      %p196 = por %p194, %p195
      %p197 = scmp.ne.s32.totalorder %s188, %s189
      %p198 = scmp.eq.s32.totalorder %s26, 0
      %p199 = por %p197, %p198
      %p200 = scmp.ne.s32.totalorder %s188, %s189
      %p201 = scmp.eq.s32.totalorder %s27, 1
      %p202 = por %p200, %p201
      %p204 = scmp.ne.s32.totalorder %s189, %s203
      %p205 = scmp.eq.s32.totalorder %s27, 0
      %p206 = por %p204, %p205
      %s208 = sadd.s32 %s207, 1
      %p211 = scmp.eq.s32.totalorder %s21, 1
      %p212 = scmp.ne.s32.totalorder %s207, %s209
      %p213 = scmp.eq.s32.totalorder %s21, 0
      %p214 = por %p212, %p213
      %p215 = scmp.ne.s32.totalorder %s207, %s209
      %p216 = scmp.eq.s32.totalorder %s26, 1
      %p217 = por %p215, %p216
      %p218 = scmp.ne.s32.totalorder %s209, %s210
      %p219 = scmp.eq.s32.totalorder %s26, 0
      %p220 = por %p218, %p219
      %p221 = scmp.ne.s32.totalorder %s209, %s210
      %p222 = scmp.eq.s32.totalorder %s27, 1
      %p223 = por %p221, %p222
      %p225 = scmp.ne.s32.totalorder %s210, %s224
      %p226 = scmp.eq.s32.totalorder %s27, 0
      %p227 = por %p225, %p226
      %s229 = sadd.s32 %s228, 1
      %p232 = scmp.eq.s32.totalorder %s21, 1
      %p233 = scmp.ne.s32.totalorder %s228, %s230
      %p234 = scmp.eq.s32.totalorder %s21, 0
      %p235 = por %p233, %p234
      %p236 = scmp.ne.s32.totalorder %s228, %s230
      %p237 = scmp.eq.s32.totalorder %s26, 1
      %p238 = por %p236, %p237
      %p239 = scmp.ne.s32.totalorder %s230, %s231
      %p240 = scmp.eq.s32.totalorder %s26, 0
      %p241 = por %p239, %p240
      %p242 = scmp.ne.s32.totalorder %s230, %s231
      %p243 = scmp.eq.s32.totalorder %s27, 1
      %p244 = por %p242, %p243
      %p246 = scmp.ne.s32.totalorder %s231, %s245
      %p247 = scmp.eq.s32.totalorder %s27, 0
      %p248 = por %p246, %p247
      %s250 = sadd.s32 %s249, 1
      %p253 = scmp.eq.s32.totalorder %s21, 1
      %p254 = scmp.ne.s32.totalorder %s249, %s251
      %p255 = scmp.eq.s32.totalorder %s21, 0
      %p256 = por %p254, %p255
      %p257 = scmp.ne.s32.totalorder %s249, %s251
      %p258 = scmp.eq.s32.totalorder %s26, 1
      %p259 = por %p257, %p258
      %p260 = scmp.ne.s32.totalorder %s251, %s252
      %p261 = scmp.eq.s32.totalorder %s26, 0
      %p262 = por %p260, %p261
      %p263 = scmp.ne.s32.totalorder %s251, %s252
      %p264 = scmp.eq.s32.totalorder %s27, 1
      %p265 = por %p263, %p264
      %p267 = scmp.ne.s32.totalorder %s252, %s266
      %p268 = scmp.eq.s32.totalorder %s27, 0
      %p269 = por %p267, %p268
      %s271 = sadd.s32 %s270, 1
      %p274 = scmp.eq.s32.totalorder %s21, 1
      %p275 = scmp.ne.s32.totalorder %s270, %s272
      %p276 = scmp.eq.s32.totalorder %s21, 0
      %p277 = por %p275, %p276
      %p278 = scmp.ne.s32.totalorder %s270, %s272
      %p279 = scmp.eq.s32.totalorder %s26, 1
      %p280 = por %p278, %p279
      %p281 = scmp.ne.s32.totalorder %s272, %s273
      %p282 = scmp.eq.s32.totalorder %s26, 0
      %p283 = por %p281, %p282
      %p284 = scmp.ne.s32.totalorder %s272, %s273
      %p285 = scmp.eq.s32.totalorder %s27, 1
      %p286 = por %p284, %p285
      %p288 = scmp.ne.s32.totalorder %s273, %s287
      %p289 = scmp.eq.s32.totalorder %s27, 0
      %p290 = por %p288, %p289
      %s292 = sadd.s32 %s291, 1
      %p295 = scmp.eq.s32.totalorder %s21, 1
      %p296 = scmp.ne.s32.totalorder %s291, %s293
      %p297 = scmp.eq.s32.totalorder %s21, 0
      %p298 = por %p296, %p297
      %p299 = scmp.ne.s32.totalorder %s291, %s293
      %p300 = scmp.eq.s32.totalorder %s26, 1
      %p301 = por %p299, %p300
      %p302 = scmp.ne.s32.totalorder %s293, %s294
      %p303 = scmp.eq.s32.totalorder %s26, 0
      %p304 = por %p302, %p303
      %p305 = scmp.ne.s32.totalorder %s293, %s294
      %p306 = scmp.eq.s32.totalorder %s27, 1
      %p307 = por %p305, %p306
      %p309 = scmp.ne.s32.totalorder %s294, %s308
      %p310 = scmp.eq.s32.totalorder %s27, 0
      %p311 = por %p309, %p310
      %s312 = ssub.s32 %s21, %s28
      %p313 = scmp.eq.s32.totalorder %s312, 0
      %s315 = sadd.s32 %s314, 1
      %s316 = scalar_select %p313, %s314, %s315
      %p319 = pneg %p313
      %p320 = scmp.eq.s32.totalorder %s21, 1
      %p321 = por %p319, %p320
      %p322 = scmp.ne.s32.totalorder %s314, %s317
      %p323 = scmp.eq.s32.totalorder %s21, 0
      %p324 = por %p322, %p323
      %p325 = scmp.ne.s32.totalorder %s314, %s317
      %p326 = scmp.eq.s32.totalorder %s26, 1
      %p327 = por %p325, %p326
      %p328 = scmp.ne.s32.totalorder %s317, %s318
      %p329 = scmp.eq.s32.totalorder %s26, 0
      %p330 = por %p328, %p329
      %p331 = scmp.ne.s32.totalorder %s317, %s318
      %p332 = scmp.eq.s32.totalorder %s27, 1
      %p333 = por %p331, %p332
      %p335 = scmp.ne.s32.totalorder %s318, %s334
      %p336 = scmp.eq.s32.totalorder %s27, 0
      %p337 = por %p335, %p336
      %p338 = scmp.le.s32.totalorder 1, %s21
      %p339 = scmp.lt.s32.totalorder %s21, 3
      %p340 = pnand %p338, %p339
      %p341 = pneg %p340
      // Predicated region
      $region9: #{transformer_forward.7} parent=5 // pred_check
        _
      $region10: #{transformer_forward.7} parent=5 // pred_check_branch
        %343 = sbr.rel (%p340) target = $region12
      $region11: #{transformer_forward.7} parent=5 // pred_region
        %s344 = ssub.s32 %s21, 1
        // Predicated region
        $region13: #{transformer_forward.7} parent=11 // pred_check
          %p345 = pneg %p94
        $region14: #{transformer_forward.7} parent=11 // pred_check_branch
          %347 = sbr.rel (%p345) target = $region16
        $region15: #{transformer_forward.7} parent=11 // pred_region
          _
        $region16: #{transformer_forward.7} parent=11 // pred_fallthru
          _
        // Predicated region
        $region17: #{transformer_forward.7} parent=11 // pred_check
          %p348 = pneg %p115
        $region18: #{transformer_forward.7} parent=11 // pred_check_branch
          %350 = sbr.rel (%p348) target = $region20
        $region19: #{transformer_forward.7} parent=11 // pred_region
          %s352 = ssub.s32 48, 48
          %353 = vsyncadd [#allocation3], %s352
          %s355 = sshll.u32 [#allocation2], 4
          %s356 = int_to_ptr.vmem [resolvable:$true] %s355
          %358 = dma.hbm_to_vmem [thread:$0]  %s3, 48, %s356, [#allocation3]
        $region20: #{transformer_forward.7} parent=11 // pred_fallthru
          _
        // Predicated region
        $region21: #{transformer_forward.7} parent=11 // pred_check
          %p359 = pneg %p136
        $region22: #{transformer_forward.7} parent=11 // pred_check_branch
          %361 = sbr.rel (%p359) target = $region24
        $region23: #{transformer_forward.7} parent=11 // pred_region
          _
        $region24: #{transformer_forward.7} parent=11 // pred_fallthru
          _
        // Predicated region
        $region25: #{transformer_forward.7} parent=11 // pred_check
          %p362 = pneg %p157
        $region26: #{transformer_forward.7} parent=11 // pred_check_branch
          %364 = sbr.rel (%p362) target = $region28
        $region27: #{transformer_forward.7} parent=11 // pred_region
          _
        $region28: #{transformer_forward.7} parent=11 // pred_fallthru
          _
        // Predicated region
        $region29: #{transformer_forward.7} parent=11 // pred_check
          %p365 = pneg %p178
        $region30: #{transformer_forward.7} parent=11 // pred_check_branch
          %367 = sbr.rel (%p365) target = $region32
        $region31: #{transformer_forward.7} parent=11 // pred_region
          _
        $region32: #{transformer_forward.7} parent=11 // pred_fallthru
          _
        // Predicated region
        $region33: #{transformer_forward.7} parent=11 // pred_check
          %p368 = pneg %p199
        $region34: #{transformer_forward.7} parent=11 // pred_check_branch
          %370 = sbr.rel (%p368) target = $region36
        $region35: #{transformer_forward.7} parent=11 // pred_region
          %s372 = ssub.s32 32, 32
          %373 = vsyncadd [#allocation5], %s372
          %s375 = sshll.u32 [#allocation4], 4
          %s376 = int_to_ptr.vmem [resolvable:$true] %s375
          %378 = dma.hbm_to_vmem [thread:$0]  %s7, 32, %s376, [#allocation5]
        $region36: #{transformer_forward.7} parent=11 // pred_fallthru
          _
        // Predicated region
        $region37: #{transformer_forward.7} parent=11 // pred_check
          %p379 = pneg %p220
        $region38: #{transformer_forward.7} parent=11 // pred_check_branch
          %381 = sbr.rel (%p379) target = $region40
        $region39: #{transformer_forward.7} parent=11 // pred_region
          _
        $region40: #{transformer_forward.7} parent=11 // pred_fallthru
          _
        // Predicated region
        $region41: #{transformer_forward.7} parent=11 // pred_check
          %p382 = pneg %p241
        $region42: #{transformer_forward.7} parent=11 // pred_check_branch
          %384 = sbr.rel (%p382) target = $region44
        $region43: #{transformer_forward.7} parent=11 // pred_region
          _
        $region44: #{transformer_forward.7} parent=11 // pred_fallthru
          _
        // Predicated region
        $region45: #{transformer_forward.7} parent=11 // pred_check
          %p385 = pneg %p262
        $region46: #{transformer_forward.7} parent=11 // pred_check_branch
          %387 = sbr.rel (%p385) target = $region48
        $region47: #{transformer_forward.7} parent=11 // pred_region
          %s389 = ssub.s32 16, 16
          %390 = vsyncadd [#allocation5], %s389
          %s392 = sshll.u32 [#allocation6], 4
          %s393 = int_to_ptr.vmem [resolvable:$true] %s392
          %395 = dma.hbm_to_vmem [thread:$0]  %s10, 16, %s393, [#allocation5]
        $region48: #{transformer_forward.7} parent=11 // pred_fallthru
          _
        // Predicated region
        $region49: #{transformer_forward.7} parent=11 // pred_check
          %p396 = pneg %p283
        $region50: #{transformer_forward.7} parent=11 // pred_check_branch
          %398 = sbr.rel (%p396) target = $region52
        $region51: #{transformer_forward.7} parent=11 // pred_region
          _
        $region52: #{transformer_forward.7} parent=11 // pred_fallthru
          _
        // Predicated region
        $region53: #{transformer_forward.7} parent=11 // pred_check
          %p399 = pneg %p304
        $region54: #{transformer_forward.7} parent=11 // pred_check_branch
          %401 = sbr.rel (%p399) target = $region56
        $region55: #{transformer_forward.7} parent=11 // pred_region
          _
        $region56: #{transformer_forward.7} parent=11 // pred_fallthru
          _
      $region12: #{transformer_forward.7} parent=5 // pred_fallthru
        _
      %p402 = scmp.lt.s32.totalorder %s21, 2
      // Predicated region
      $region57: #{transformer_forward.7} parent=5 // pred_check
        %p403 = pneg %p402
      $region58: #{transformer_forward.7} parent=5 // pred_check_branch
        %405 = sbr.rel (%p403) target = $region60
      $region59: #{transformer_forward.7} parent=5 // pred_region
        // Predicated region
        $region61: #{transformer_forward.7} parent=59 // pred_check
          %p406 = pneg %p41
        $region62: #{transformer_forward.7} parent=59 // pred_check_branch
          %408 = sbr.rel (%p406) target = $region64
        $region63: #{transformer_forward.7} parent=59 // pred_region
          %p409 = scmp.lt.s32.totalorder %s21, 1
          %s410 = scalar_select %p409, %s21, 1
          %s411 = smul.addr %s410, 8
          %s412 = scalar_lea.vmem %s0, %s411
        $region64: #{transformer_forward.7} parent=59 // pred_fallthru
          _
        // Predicated region
        $region65: #{transformer_forward.7} parent=59 // pred_check
          %p413 = pneg %p67
        $region66: #{transformer_forward.7} parent=59 // pred_check_branch
          %415 = sbr.rel (%p413) target = $region68
        $region67: #{transformer_forward.7} parent=59 // pred_region
          %p416 = scmp.lt.s32.totalorder %s21, 1
          %s417 = scalar_select %p416, %s21, 1
          %s418 = smul.addr %s417, 8
          %s419 = scalar_lea.vmem %s1, %s418
        $region68: #{transformer_forward.7} parent=59 // pred_fallthru
          _
      $region60: #{transformer_forward.7} parent=5 // pred_fallthru
        _
      %p420 = scmp.le.s32.totalorder 1, %s21
      %p421 = scmp.lt.s32.totalorder %s21, 3
      %p422 = pnand %p420, %p421
      %p423 = pneg %p422
      // Predicated region
      $region69: #{transformer_forward.7} parent=5 // pred_check
        _
      $region70: #{transformer_forward.7} parent=5 // pred_check_branch
        %425 = sbr.rel (%p422) target = $region72
      $region71: #{transformer_forward.7} parent=5 // pred_region
        %s426 = ssub.s32 %s21, 1
        // Predicated region
        $region73: #{transformer_forward.7} parent=71 // pred_check
          %p427 = pneg %p115
        $region74: #{transformer_forward.7} parent=71 // pred_check_branch
          %429 = sbr.rel (%p427) target = $region76
        $region75: #{transformer_forward.7} parent=71 // pred_region
          %430 = dma.done [#allocation3], 48
        $region76: #{transformer_forward.7} parent=71 // pred_fallthru
          _
        // Predicated region
        $region77: #{transformer_forward.7} parent=71 // pred_check
          %p431 = pneg %p199
        $region78: #{transformer_forward.7} parent=71 // pred_check_branch
          %433 = sbr.rel (%p431) target = $region80
        $region79: #{transformer_forward.7} parent=71 // pred_region
          %434 = dma.done [#allocation5], 32
        $region80: #{transformer_forward.7} parent=71 // pred_fallthru
          _
        // Predicated region
        $region81: #{transformer_forward.7} parent=71 // pred_check
          %p435 = pneg %p262
        $region82: #{transformer_forward.7} parent=71 // pred_check_branch
          %437 = sbr.rel (%p435) target = $region84
        $region83: #{transformer_forward.7} parent=71 // pred_region
          %438 = dma.done [#allocation5], 16
        $region84: #{transformer_forward.7} parent=71 // pred_fallthru
          _
        %p439 = scmp.lt.s32.totalorder %s26, 1
        %s440 = scalar_select %p439, %s26, 1
        %s441 = smul.addr %s440, 8
        %s442 = scalar_lea.vmem %s0, %s441
        %p443 = pneg %p47
        %p444 = pneg %p44
        %p445 = scmp.lt.s32.totalorder %s26, 1
        %s446 = scalar_select %p445, %s26, 1
        %s447 = smul.addr %s446, 8
        %s448 = scalar_lea.vmem %s1, %s447
        %p449 = pneg %p73
        %p450 = pneg %p70
        %p451 = pneg %p94
        %p452 = pneg %p91
        %p453 = pneg %p115
        %p454 = pneg %p112
        %p455 = pneg %p136
        %p456 = pneg %p133
        %p457 = pneg %p157
        %p458 = pneg %p154
        %p459 = pneg %p178
        %p460 = pneg %p175
        %p461 = pneg %p199
        %p462 = pneg %p196
        %p463 = pneg %p220
        %p464 = pneg %p217
        %p465 = pneg %p241
        %p466 = pneg %p238
        %p467 = pneg %p262
        %p468 = pneg %p259
        %p469 = pneg %p283
        %p470 = pneg %p280
        %p471 = pneg %p304
        %p472 = pneg %p301
        %p473 = pneg %p330
        %p474 = pneg %p327
        %p475 = scmp.lt.s32.totalorder %s26, 1
        %s476 = scalar_select %p475, %s26, 1
        %s477 = smul.addr %s476, 8
        %s478 = scalar_lea.vmem %s13, %s477
        %p479 = scmp.lt.s32.totalorder %s26, 1
        %s480 = scalar_select %p479, %s26, 1
        %s481 = smul.addr %s480, 8
        %s482 = scalar_lea.vmem %s0, %s481
        %p483 = scmp.lt.s32.totalorder %s26, 1
        %s484 = scalar_select %p483, %s26, 1
        %s485 = smul.addr %s484, 8
        %s486 = scalar_lea.vmem %s1, %s485
        %p487 = scmp.lt.s32.totalorder %s26, 1
        %s488 = scalar_select %p487, %s26, 1
        %s489 = smul.addr %s488, 8
        %s490 = scalar_lea.vmem %s13, %s489
        %v492 = vld [vmem:[%s482] sm:$0xff]
        %v493 = vld [vmem:[%s486] sm:$0xff]
        %v494 = vld [vmem:[%s12] sm:$0xff]
        %v495 = vld [vmem:[%s12 + $0x8] sm:$0x3]
        %v496 = vld [vmem:[%s2] sm:$0xff]
        %v497 = vld [vmem:[%s2 + $0x8] sm:$0xff]
        %v498 = vld [vmem:[%s2 + $0x10] sm:$0xff]
        %v499 = vld [vmem:[%s2 + $0x18] sm:$0xff]
        %v500 = vld [vmem:[%s2 + $0x20] sm:$0xff]
        %v501 = vld [vmem:[%s2 + $0x28] sm:$0xff]
        %v502 = vld [vmem:[%s2 + $0x30] sm:$0xff]
        %v503 = vld [vmem:[%s2 + $0x38] sm:$0xff]
        %v504 = vld [vmem:[%s2 + $0x40] sm:$0xff]
        %v505 = vld [vmem:[%s2 + $0x48] sm:$0xff]
        %v506 = vld [vmem:[%s2 + $0x50] sm:$0xff]
        %v507 = vld [vmem:[%s2 + $0x58] sm:$0xff]
        %v508 = vld [vmem:[%s2 + $0x60] sm:$0xff]
        %v509 = vld [vmem:[%s2 + $0x68] sm:$0xff]
        %v510 = vld [vmem:[%s2 + $0x70] sm:$0xff]
        %v511 = vld [vmem:[%s2 + $0x78] sm:$0xff]
        %v512 = vld [vmem:[%s2 + $0x80] sm:$0xff]
        %v513 = vld [vmem:[%s2 + $0x88] sm:$0xff]
        %v514 = vld [vmem:[%s2 + $0x90] sm:$0xff]
        %v515 = vld [vmem:[%s2 + $0x98] sm:$0xff]
        %v516 = vld [vmem:[%s2 + $0xa0] sm:$0xff]
        %v517 = vld [vmem:[%s2 + $0xa8] sm:$0xff]
        %v518 = vld [vmem:[%s2 + $0xb0] sm:$0xff]
        %v519 = vld [vmem:[%s2 + $0xb8] sm:$0xff]
        %v520 = vld [vmem:[%s2 + $0xc0] sm:$0xff]
        %v521 = vld [vmem:[%s2 + $0xc8] sm:$0xff]
        %v522 = vld [vmem:[%s2 + $0xd0] sm:$0xff]
        %v523 = vld [vmem:[%s2 + $0xd8] sm:$0xff]
        %v524 = vld [vmem:[%s2 + $0xe0] sm:$0xff]
        %v525 = vld [vmem:[%s2 + $0xe8] sm:$0xff]
        %v526 = vld [vmem:[%s2 + $0xf0] sm:$0xff]
        %v527 = vld [vmem:[%s2 + $0xf8] sm:$0xff]
        %v528 = vld [vmem:[%s2 + $0x100] sm:$0xff]
        %v529 = vld [vmem:[%s2 + $0x108] sm:$0xff]
        %v530 = vld [vmem:[%s2 + $0x110] sm:$0xff]
        %v531 = vld [vmem:[%s2 + $0x118] sm:$0xff]
        %v532 = vld [vmem:[%s2 + $0x120] sm:$0xff]
        %v533 = vld [vmem:[%s2 + $0x128] sm:$0xff]
        %v534 = vld [vmem:[%s2 + $0x130] sm:$0xff]
        %v535 = vld [vmem:[%s2 + $0x138] sm:$0xff]
        %v536 = vld [vmem:[%s2 + $0x140] sm:$0xff]
        %v537 = vld [vmem:[%s2 + $0x148] sm:$0xff]
        %v538 = vld [vmem:[%s2 + $0x150] sm:$0xff]
        %v539 = vld [vmem:[%s2 + $0x158] sm:$0xff]
        %v540 = vld [vmem:[%s2 + $0x160] sm:$0xff]
        %v541 = vld [vmem:[%s2 + $0x168] sm:$0xff]
        %v542 = vld [vmem:[%s2 + $0x170] sm:$0xff]
        %v543 = vld [vmem:[%s2 + $0x178] sm:$0xff]
        %v544 = vld [vmem:[#allocation2] sm:$0x7]
        %v545 = vld [vmem:[%s4] sm:$0xff]
        %v546 = vld [vmem:[%s4 + $0x8] sm:$0xff]
        %v547 = vld [vmem:[%s4 + $0x10] sm:$0xff]
        %v548 = vld [vmem:[%s4 + $0x18] sm:$0xff]
        %v549 = vld [vmem:[%s4 + $0x20] sm:$0xff]
        %v550 = vld [vmem:[%s4 + $0x28] sm:$0xff]
        %v551 = vld [vmem:[%s4 + $0x30] sm:$0xff]
        %v552 = vld [vmem:[%s4 + $0x38] sm:$0xff]
        %v553 = vld [vmem:[%s4 + $0x40] sm:$0xff]
        %v554 = vld [vmem:[%s4 + $0x48] sm:$0xff]
        %v555 = vld [vmem:[%s4 + $0x50] sm:$0xff]
        %v556 = vld [vmem:[%s4 + $0x58] sm:$0xff]
        %v557 = vld [vmem:[%s4 + $0x60] sm:$0xff]
        %v558 = vld [vmem:[%s4 + $0x68] sm:$0xff]
        %v559 = vld [vmem:[%s4 + $0x70] sm:$0xff]
        %v560 = vld [vmem:[%s4 + $0x78] sm:$0xff]
        %v561 = vpack.c.bf16 %v492, %v492
        %v562 = vpack.c.bf16 %v499, %v496
        %v563 = vpack.c.bf16 %v500, %v497
        %v564 = vpack.c.bf16 %v501, %v498
        %v565 = vpack.c.bf16 %v505, %v502
        %v566 = vpack.c.bf16 %v506, %v503
        %v567 = vpack.c.bf16 %v507, %v504
        %v568 = vpack.c.bf16 %v511, %v508
        %v569 = vpack.c.bf16 %v512, %v509
        %v570 = vpack.c.bf16 %v513, %v510
        %v571 = vpack.c.bf16 %v517, %v514
        %v572 = vpack.c.bf16 %v518, %v515
        %v573 = vpack.c.bf16 %v519, %v516
        %v574 = vpack.c.bf16 %v523, %v520
        %v575 = vpack.c.bf16 %v524, %v521
        %v576 = vpack.c.bf16 %v525, %v522
        %v577 = vpack.c.bf16 %v529, %v526
        %v578 = vpack.c.bf16 %v530, %v527
        %v579 = vpack.c.bf16 %v531, %v528
        %v580 = vpack.c.bf16 %v535, %v532
        %v581 = vpack.c.bf16 %v536, %v533
        %v582 = vpack.c.bf16 %v537, %v534
        %v583 = vpack.c.bf16 %v541, %v538
        %v584 = vpack.c.bf16 %v542, %v539
        %v585 = vpack.c.bf16 %v543, %v540
        %v587 = vlaneseq
        %v588 = vshrl.u32 %v587, 7
        %v589 = vsub.s32 0, %v588
        %v590 = vrot.slane %v544, %v589
        %v591 = vlaneseq
        %v592 = vshrl.u32 %v591, 7
        %v593 = vsub.s32 1, %v592
        %v594 = vrot.slane %v544, %v593
        %v595 = vlaneseq
        %v596 = vshrl.u32 %v595, 7
        %v597 = vsub.s32 2, %v596
        %v598 = vrot.slane %v544, %v597
        %602 = vmatprep.subr.bf16.mxu0 %v584
        %603 = vmatpush1.bf16.msra.mxu0 %v583
        %604 = vmatprep.subr.bf16.mxu0 %v581
        %605 = vmatpush1.bf16.msra.mxu0 %v580
        %606 = vmatprep.subr.bf16.mxu0 %v578
        %607 = vmatpush1.bf16.msra.mxu0 %v577
        %608 = vmatprep.subr.bf16.mxu0 %v575
        %609 = vmatpush1.bf16.msra.mxu0 %v574
        %610 = vmatprep.subr.bf16.mxu0 %v572
        %611 = vmatpush1.bf16.msra.mxu0 %v571
        %612 = vmatprep.subr.bf16.mxu0 %v569
        %613 = vmatpush1.bf16.msra.mxu0 %v568
        %614 = vmatprep.subr.bf16.mxu0 %v566
        %615 = vmatpush1.bf16.msra.mxu0 %v565
        %616 = vmatprep.subr.bf16.mxu0 %v563
        %617 = vmatpush1.bf16.msra.mxu0 %v562
        %618 = vmatprep.subr.bf16.mxu0 0
        %619 = vmatpush2.bf16.msra.mxu0 0
        %620 = vmatprep.subr.bf16.mxu0 0
        %621 = vmatpush2.bf16.msra.mxu0 0
        %622 = vmatprep.subr.bf16.mxu0 0
        %623 = vmatpush2.bf16.msra.mxu0 0
        %624 = vmatprep.subr.bf16.mxu0 0
        %625 = vmatpush2.bf16.msra.mxu0 0
        %626 = vmatprep.subr.bf16.mxu0 0
        %627 = vmatpush2.bf16.msra.mxu0 0
        %628 = vmatprep.subr.bf16.mxu0 0
        %629 = vmatpush2.bf16.msra.mxu0 0
        %630 = vmatprep.subr.bf16.mxu0 0
        %631 = vmatpush2.bf16.msra.mxu0 0
        %632 = vmatprep.subr.bf16.mxu0 0
        %633 = vmatpush2.bf16.msra.mxu0 0
        %634 = vmatprep.mubr.bf16.mxu0 0
        %635 = vmatmul.mubr.bf16.gmra.mxu0 %v561
        %v636 = vpop.f32.mrf.mxu0
        %v637 = vadd.f32 %v590, %v636
        %v638 = vpop.f32.mrf.mxu0
        %v639 = vadd.f32 %v594, %v638
        %v640 = vpop.f32.mrf.mxu0
        %v641 = vpop.f32.mrf.mxu0
        %642 = vdwg.mxu0
        %643 = vmatprep.subr.bf16.mxu0 0
        %644 = vmatpush1.bf16.msra.mxu0 %v585
        %645 = vmatprep.subr.bf16.mxu0 0
        %646 = vmatpush1.bf16.msra.mxu0 %v582
        %647 = vmatprep.subr.bf16.mxu0 0
        %648 = vmatpush1.bf16.msra.mxu0 %v579
        %649 = vmatprep.subr.bf16.mxu0 0
        %650 = vmatpush1.bf16.msra.mxu0 %v576
        %651 = vmatprep.subr.bf16.mxu0 0
        %652 = vmatpush1.bf16.msra.mxu0 %v573
        %653 = vmatprep.subr.bf16.mxu0 0
        %654 = vmatpush1.bf16.msra.mxu0 %v570
        %655 = vmatprep.subr.bf16.mxu0 0
        %656 = vmatpush1.bf16.msra.mxu0 %v567
        %657 = vmatprep.subr.bf16.mxu0 0
        %658 = vmatpush1.bf16.msra.mxu0 %v564
        %659 = vmatprep.subr.bf16.mxu0 0
        %660 = vmatpush2.bf16.msra.mxu0 0
        %661 = vmatprep.subr.bf16.mxu0 0
        %662 = vmatpush2.bf16.msra.mxu0 0
        %663 = vmatprep.subr.bf16.mxu0 0
        %664 = vmatpush2.bf16.msra.mxu0 0
        %665 = vmatprep.subr.bf16.mxu0 0
        %666 = vmatpush2.bf16.msra.mxu0 0
        %667 = vmatprep.subr.bf16.mxu0 0
        %668 = vmatpush2.bf16.msra.mxu0 0
        %669 = vmatprep.subr.bf16.mxu0 0
        %670 = vmatpush2.bf16.msra.mxu0 0
        %671 = vmatprep.subr.bf16.mxu0 0
        %672 = vmatpush2.bf16.msra.mxu0 0
        %673 = vmatprep.subr.bf16.mxu0 0
        %674 = vmatpush2.bf16.msra.mxu0 0
        %675 = vmatprep.mubr.bf16.mxu0 0
        %676 = vmatmul.mubr.bf16.gmra.mxu0 %v561
        %v677 = vpop.f32.mrf.mxu0
        %v678 = vadd.f32 %v598, %v677
        %v679 = vpop.f32.mrf.mxu0
        %v680 = vpop.f32.mrf.mxu0
        %v681 = vpop.f32.mrf.mxu0
        %682 = vdwg.mxu0
        %v683 = vlaneseq
        %v684 = vshrl.u32 %v683, 7
        %v685 = vlaneseq
        %v686 = vand.u32 %v685, 127
        %vm687 = vcmp.le.s32.totalorder %v686, %v684
        %v688 = vpack.c.bf16 %v637, %v637
        %v689 = vpack.c.bf16 %v639, %v639
        %v690 = vpack.c.bf16 %v678, %v678
        %vm691 = vcmask 261120
        %v693 = vsel %vm691, %v688, 0
        %v696 = vsel %vm691, %v689, 0
        %698 = vmatprep.subr.bf16.mxu0 0
        %699 = vmatpush1.bf16.xpose.msra.mxu0 0
        %700 = vmatprep.subr.bf16.mxu0 0
        %701 = vmatpush1.bf16.xpose.msra.mxu0 0
        %702 = vmatprep.subr.bf16.mxu0 0
        %703 = vmatpush1.bf16.xpose.msra.mxu0 0
        %704 = vmatprep.subr.bf16.mxu0 0
        %705 = vmatpush1.bf16.xpose.msra.mxu0 0
        %706 = vmatprep.subr.bf16.mxu0 0
        %707 = vmatpush1.bf16.xpose.msra.mxu0 0
        %708 = vmatprep.subr.bf16.mxu0 0
        %709 = vmatpush1.bf16.xpose.msra.mxu0 0
        %710 = vmatprep.subr.bf16.mxu0 0
        %711 = vmatpush1.bf16.xpose.msra.mxu0 0
        %712 = vmatprep.subr.bf16.mxu0 0
        %713 = vmatpush1.bf16.xpose.msra.mxu0 %v696
        %714 = vmatprep.subr.bf16.mxu0 0
        %715 = vmatpush2.bf16.xpose.msra.mxu0 0
        %716 = vmatprep.subr.bf16.mxu0 0
        %717 = vmatpush2.bf16.xpose.msra.mxu0 0
        %718 = vmatprep.subr.bf16.mxu0 0
        %719 = vmatpush2.bf16.xpose.msra.mxu0 0
        %720 = vmatprep.subr.bf16.mxu0 0
        %721 = vmatpush2.bf16.xpose.msra.mxu0 0
        %722 = vmatprep.subr.bf16.mxu0 0
        %723 = vmatpush2.bf16.xpose.msra.mxu0 0
        %724 = vmatprep.subr.bf16.mxu0 0
        %725 = vmatpush2.bf16.xpose.msra.mxu0 0
        %726 = vmatprep.subr.bf16.mxu0 0
        %727 = vmatpush2.bf16.xpose.msra.mxu0 0
        %728 = vmatprep.subr.bf16.mxu0 0
        %729 = vmatpush2.bf16.xpose.msra.mxu0 0
        %730 = vmatprep.mubr.bf16.mxu0 0
        %731 = vmatmul.mubr.bf16.gmra.mxu0 %v693
        %v732 = vpop.f32.mrf.mxu0
        %v733 = vadd.f32 0.0, %v732
        %v734 = vpop.f32.mrf.mxu0
        %v735 = vpop.f32.mrf.mxu0
        %v736 = vpop.f32.mrf.mxu0
        %737 = vdwg.mxu0
        %v738 = vmul.f32 %v733, 0.17677669
        %v739 = vsel %vm687, %v738, -1e+30
        %vm740 = vcmask 64512
        %v741 = vsel %vm740, %v739, -inf
        %742 = vmax.xlane.f32.xlu0 %v741
        %v743 = vpop.xlane.xlu0 %742
        %v744 = vsub.f32 %v739, %v743
        %v745 = vmul.f32 %v744, 1.442695
        %v746 = vpow.pop %v745
        %v747 = vsel %vm740, %v746, 0.0
        %748 = vadd.xlane.f32.xlu0 %v747
        %v749 = vpop.xlane.xlu0 %748
        %v750 = vrcp.pop %v749
        %v751 = vmul.f32 %v746, %v750
        %v752 = vpack.c.bf16 %v751, %v751
        %v754 = vsel %vm740, %v752, 0
        %vm756 = vcmask 1043456
        %v758 = vsel %vm756, %v690, 0
        %760 = vmatprep.subr.bf16.mxu0 0
        %761 = vmatpush1.bf16.msra.mxu0 0
        %762 = vmatprep.subr.bf16.mxu0 0
        %763 = vmatpush1.bf16.msra.mxu0 0
        %764 = vmatprep.subr.bf16.mxu0 0
        %765 = vmatpush1.bf16.msra.mxu0 0
        %766 = vmatprep.subr.bf16.mxu0 0
        %767 = vmatpush1.bf16.msra.mxu0 0
        %768 = vmatprep.subr.bf16.mxu0 0
        %769 = vmatpush1.bf16.msra.mxu0 0
        %770 = vmatprep.subr.bf16.mxu0 0
        %771 = vmatpush1.bf16.msra.mxu0 0
        %772 = vmatprep.subr.bf16.mxu0 0
        %773 = vmatpush1.bf16.msra.mxu0 0
        %774 = vmatprep.subr.bf16.mxu0 0
        %775 = vmatpush1.bf16.msra.mxu0 %v758
        %776 = vmatprep.subr.bf16.mxu0 0
        %777 = vmatpush2.bf16.msra.mxu0 0
        %778 = vmatprep.subr.bf16.mxu0 0
        %779 = vmatpush2.bf16.msra.mxu0 0
        %780 = vmatprep.subr.bf16.mxu0 0
        %781 = vmatpush2.bf16.msra.mxu0 0
        %782 = vmatprep.subr.bf16.mxu0 0
        %783 = vmatpush2.bf16.msra.mxu0 0
        %784 = vmatprep.subr.bf16.mxu0 0
        %785 = vmatpush2.bf16.msra.mxu0 0
        %786 = vmatprep.subr.bf16.mxu0 0
        %787 = vmatpush2.bf16.msra.mxu0 0
        %788 = vmatprep.subr.bf16.mxu0 0
        %789 = vmatpush2.bf16.msra.mxu0 0
        %790 = vmatprep.subr.bf16.mxu0 0
        %791 = vmatpush2.bf16.msra.mxu0 0
        %792 = vmatprep.mubr.bf16.mxu0 0
        %793 = vmatmul.mubr.bf16.gmra.mxu0 %v754
        %v794 = vpop.f32.mrf.mxu0
        %v795 = vadd.f32 0.0, %v794
        %v796 = vpop.f32.mrf.mxu0
        %v797 = vpop.f32.mrf.mxu0
        %v798 = vpop.f32.mrf.mxu0
        %799 = vdwg.mxu0
        %801 = vrot.lane.b32.xlu0 %v688, 96
        %v802 = vpop.permute.xlu0 %801
        %804 = vrot.lane.b32.xlu0 %v689, 96
        %v805 = vpop.permute.xlu0 %804
        %v807 = vsel %vm691, %v802, 0
        %v810 = vsel %vm691, %v805, 0
        %812 = vmatprep.subr.bf16.mxu0 0
        %813 = vmatpush1.bf16.xpose.msra.mxu0 0
        %814 = vmatprep.subr.bf16.mxu0 0
        %815 = vmatpush1.bf16.xpose.msra.mxu0 0
        %816 = vmatprep.subr.bf16.mxu0 0
        %817 = vmatpush1.bf16.xpose.msra.mxu0 0
        %818 = vmatprep.subr.bf16.mxu0 0
        %819 = vmatpush1.bf16.xpose.msra.mxu0 0
        %820 = vmatprep.subr.bf16.mxu0 0
        %821 = vmatpush1.bf16.xpose.msra.mxu0 0
        %822 = vmatprep.subr.bf16.mxu0 0
        %823 = vmatpush1.bf16.xpose.msra.mxu0 0
        %824 = vmatprep.subr.bf16.mxu0 0
        %825 = vmatpush1.bf16.xpose.msra.mxu0 0
        %826 = vmatprep.subr.bf16.mxu0 0
        %827 = vmatpush1.bf16.xpose.msra.mxu0 %v810
        %828 = vmatprep.subr.bf16.mxu0 0
        %829 = vmatpush2.bf16.xpose.msra.mxu0 0
        %830 = vmatprep.subr.bf16.mxu0 0
        %831 = vmatpush2.bf16.xpose.msra.mxu0 0
        %832 = vmatprep.subr.bf16.mxu0 0
        %833 = vmatpush2.bf16.xpose.msra.mxu0 0
        %834 = vmatprep.subr.bf16.mxu0 0
        %835 = vmatpush2.bf16.xpose.msra.mxu0 0
        %836 = vmatprep.subr.bf16.mxu0 0
        %837 = vmatpush2.bf16.xpose.msra.mxu0 0
        %838 = vmatprep.subr.bf16.mxu0 0
        %839 = vmatpush2.bf16.xpose.msra.mxu0 0
        %840 = vmatprep.subr.bf16.mxu0 0
        %841 = vmatpush2.bf16.xpose.msra.mxu0 0
        %842 = vmatprep.subr.bf16.mxu0 0
        %843 = vmatpush2.bf16.xpose.msra.mxu0 0
        %844 = vmatprep.mubr.bf16.mxu0 0
        %845 = vmatmul.mubr.bf16.gmra.mxu0 %v807
        %v846 = vpop.f32.mrf.mxu0
        %v847 = vadd.f32 0.0, %v846
        %v848 = vpop.f32.mrf.mxu0
        %v849 = vpop.f32.mrf.mxu0
        %v850 = vpop.f32.mrf.mxu0
        %851 = vdwg.mxu0
        %v852 = vmul.f32 %v847, 0.17677669
        %v853 = vsel %vm687, %v852, -1e+30
        %v854 = vsel %vm740, %v853, -inf
        %855 = vmax.xlane.f32.xlu0 %v854
        %v856 = vpop.xlane.xlu0 %855
        %v857 = vsub.f32 %v853, %v856
        %v858 = vmul.f32 %v857, 1.442695
        %v859 = vpow.pop %v858
        %v860 = vsel %vm740, %v859, 0.0
        %861 = vadd.xlane.f32.xlu0 %v860
        %v862 = vpop.xlane.xlu0 %861
        %v863 = vrcp.pop %v862
        %v864 = vmul.f32 %v859, %v863
        %v865 = vpack.c.bf16 %v864, %v864
        %867 = vrot.lane.b32.xlu0 %v690, 96
        %v868 = vpop.permute.xlu0 %867
        %v870 = vsel %vm740, %v865, 0
        %v873 = vsel %vm756, %v868, 0
        %875 = vmatprep.subr.bf16.mxu0 0
        %876 = vmatpush1.bf16.msra.mxu0 0
        %877 = vmatprep.subr.bf16.mxu0 0
        %878 = vmatpush1.bf16.msra.mxu0 0
        %879 = vmatprep.subr.bf16.mxu0 0
        %880 = vmatpush1.bf16.msra.mxu0 0
        %881 = vmatprep.subr.bf16.mxu0 0
        %882 = vmatpush1.bf16.msra.mxu0 0
        %883 = vmatprep.subr.bf16.mxu0 0
        %884 = vmatpush1.bf16.msra.mxu0 0
        %885 = vmatprep.subr.bf16.mxu0 0
        %886 = vmatpush1.bf16.msra.mxu0 0
        %887 = vmatprep.subr.bf16.mxu0 0
        %888 = vmatpush1.bf16.msra.mxu0 0
        %889 = vmatprep.subr.bf16.mxu0 0
        %890 = vmatpush1.bf16.msra.mxu0 %v873
        %891 = vmatprep.subr.bf16.mxu0 0
        %892 = vmatpush2.bf16.msra.mxu0 0
        %893 = vmatprep.subr.bf16.mxu0 0
        %894 = vmatpush2.bf16.msra.mxu0 0
        %895 = vmatprep.subr.bf16.mxu0 0
        %896 = vmatpush2.bf16.msra.mxu0 0
        %897 = vmatprep.subr.bf16.mxu0 0
        %898 = vmatpush2.bf16.msra.mxu0 0
        %899 = vmatprep.subr.bf16.mxu0 0
        %900 = vmatpush2.bf16.msra.mxu0 0
        %901 = vmatprep.subr.bf16.mxu0 0
        %902 = vmatpush2.bf16.msra.mxu0 0
        %903 = vmatprep.subr.bf16.mxu0 0
        %904 = vmatpush2.bf16.msra.mxu0 0
        %905 = vmatprep.subr.bf16.mxu0 0
        %906 = vmatpush2.bf16.msra.mxu0 0
        %907 = vmatprep.mubr.bf16.mxu0 0
        %908 = vmatmul.mubr.bf16.gmra.mxu0 %v870
        %v909 = vpop.f32.mrf.mxu0
        %v910 = vadd.f32 0.0, %v909
        %v911 = vpop.f32.mrf.mxu0
        %v912 = vpop.f32.mrf.mxu0
        %v913 = vpop.f32.mrf.mxu0
        %914 = vdwg.mxu0
        %915 = vrot.lane.b32.xlu0 %v688, 64
        %v916 = vpop.permute.xlu0 %915
        %917 = vrot.lane.b32.xlu0 %v689, 64
        %v918 = vpop.permute.xlu0 %917
        %v920 = vsel %vm691, %v916, 0
        %v923 = vsel %vm691, %v918, 0
        %925 = vmatprep.subr.bf16.mxu0 0
        %926 = vmatpush1.bf16.xpose.msra.mxu0 0
        %927 = vmatprep.subr.bf16.mxu0 0
        %928 = vmatpush1.bf16.xpose.msra.mxu0 0
        %929 = vmatprep.subr.bf16.mxu0 0
        %930 = vmatpush1.bf16.xpose.msra.mxu0 0
        %931 = vmatprep.subr.bf16.mxu0 0
        %932 = vmatpush1.bf16.xpose.msra.mxu0 0
        %933 = vmatprep.subr.bf16.mxu0 0
        %934 = vmatpush1.bf16.xpose.msra.mxu0 0
        %935 = vmatprep.subr.bf16.mxu0 0
        %936 = vmatpush1.bf16.xpose.msra.mxu0 0
        %937 = vmatprep.subr.bf16.mxu0 0
        %938 = vmatpush1.bf16.xpose.msra.mxu0 0
        %939 = vmatprep.subr.bf16.mxu0 0
        %940 = vmatpush1.bf16.xpose.msra.mxu0 %v923
        %941 = vmatprep.subr.bf16.mxu0 0
        %942 = vmatpush2.bf16.xpose.msra.mxu0 0
        %943 = vmatprep.subr.bf16.mxu0 0
        %944 = vmatpush2.bf16.xpose.msra.mxu0 0
        %945 = vmatprep.subr.bf16.mxu0 0
        %946 = vmatpush2.bf16.xpose.msra.mxu0 0
        %947 = vmatprep.subr.bf16.mxu0 0
        %948 = vmatpush2.bf16.xpose.msra.mxu0 0
        %949 = vmatprep.subr.bf16.mxu0 0
        %950 = vmatpush2.bf16.xpose.msra.mxu0 0
        %951 = vmatprep.subr.bf16.mxu0 0
        %952 = vmatpush2.bf16.xpose.msra.mxu0 0
        %953 = vmatprep.subr.bf16.mxu0 0
        %954 = vmatpush2.bf16.xpose.msra.mxu0 0
        %955 = vmatprep.subr.bf16.mxu0 0
        %956 = vmatpush2.bf16.xpose.msra.mxu0 0
        %957 = vmatprep.mubr.bf16.mxu0 0
        %958 = vmatmul.mubr.bf16.gmra.mxu0 %v920
        %v959 = vpop.f32.mrf.mxu0
        %v960 = vadd.f32 0.0, %v959
        %v961 = vpop.f32.mrf.mxu0
        %v962 = vpop.f32.mrf.mxu0
        %v963 = vpop.f32.mrf.mxu0
        %964 = vdwg.mxu0
        %v965 = vmul.f32 %v960, 0.17677669
        %v966 = vsel %vm687, %v965, -1e+30
        %v967 = vsel %vm740, %v966, -inf
        %968 = vmax.xlane.f32.xlu0 %v967
        %v969 = vpop.xlane.xlu0 %968
        %v970 = vsub.f32 %v966, %v969
        %v971 = vmul.f32 %v970, 1.442695
        %v972 = vpow.pop %v971
        %v973 = vsel %vm740, %v972, 0.0
        %974 = vadd.xlane.f32.xlu0 %v973
        %v975 = vpop.xlane.xlu0 %974
        %v976 = vrcp.pop %v975
        %v977 = vmul.f32 %v972, %v976
        %v978 = vpack.c.bf16 %v977, %v977
        %979 = vrot.lane.b32.xlu0 %v690, 64
        %v980 = vpop.permute.xlu0 %979
        %v982 = vsel %vm740, %v978, 0
        %v985 = vsel %vm756, %v980, 0
        %987 = vmatprep.subr.bf16.mxu0 0
        %988 = vmatpush1.bf16.msra.mxu0 0
        %989 = vmatprep.subr.bf16.mxu0 0
        %990 = vmatpush1.bf16.msra.mxu0 0
        %991 = vmatprep.subr.bf16.mxu0 0
        %992 = vmatpush1.bf16.msra.mxu0 0
        %993 = vmatprep.subr.bf16.mxu0 0
        %994 = vmatpush1.bf16.msra.mxu0 0
        %995 = vmatprep.subr.bf16.mxu0 0
        %996 = vmatpush1.bf16.msra.mxu0 0
        %997 = vmatprep.subr.bf16.mxu0 0
        %998 = vmatpush1.bf16.msra.mxu0 0
        %999 = vmatprep.subr.bf16.mxu0 0
        %1000 = vmatpush1.bf16.msra.mxu0 0
        %1001 = vmatprep.subr.bf16.mxu0 0
        %1002 = vmatpush1.bf16.msra.mxu0 %v985
        %1003 = vmatprep.subr.bf16.mxu0 0
        %1004 = vmatpush2.bf16.msra.mxu0 0
        %1005 = vmatprep.subr.bf16.mxu0 0
        %1006 = vmatpush2.bf16.msra.mxu0 0
        %1007 = vmatprep.subr.bf16.mxu0 0
        %1008 = vmatpush2.bf16.msra.mxu0 0
        %1009 = vmatprep.subr.bf16.mxu0 0
        %1010 = vmatpush2.bf16.msra.mxu0 0
        %1011 = vmatprep.subr.bf16.mxu0 0
        %1012 = vmatpush2.bf16.msra.mxu0 0
        %1013 = vmatprep.subr.bf16.mxu0 0
        %1014 = vmatpush2.bf16.msra.mxu0 0
        %1015 = vmatprep.subr.bf16.mxu0 0
        %1016 = vmatpush2.bf16.msra.mxu0 0
        %1017 = vmatprep.subr.bf16.mxu0 0
        %1018 = vmatpush2.bf16.msra.mxu0 0
        %1019 = vmatprep.mubr.bf16.mxu0 0
        %1020 = vmatmul.mubr.bf16.gmra.mxu0 %v982
        %v1021 = vpop.f32.mrf.mxu0
        %v1022 = vadd.f32 0.0, %v1021
        %v1023 = vpop.f32.mrf.mxu0
        %v1024 = vpop.f32.mrf.mxu0
        %v1025 = vpop.f32.mrf.mxu0
        %1026 = vdwg.mxu0
        %1027 = vrot.lane.b32.xlu0 %v688, 32
        %v1028 = vpop.permute.xlu0 %1027
        %1029 = vrot.lane.b32.xlu0 %v689, 32
        %v1030 = vpop.permute.xlu0 %1029
        %v1032 = vsel %vm691, %v1028, 0
        %v1035 = vsel %vm691, %v1030, 0
        %1037 = vmatprep.subr.bf16.mxu0 0
        %1038 = vmatpush1.bf16.xpose.msra.mxu0 0
        %1039 = vmatprep.subr.bf16.mxu0 0
        %1040 = vmatpush1.bf16.xpose.msra.mxu0 0
        %1041 = vmatprep.subr.bf16.mxu0 0
        %1042 = vmatpush1.bf16.xpose.msra.mxu0 0
        %1043 = vmatprep.subr.bf16.mxu0 0
        %1044 = vmatpush1.bf16.xpose.msra.mxu0 0
        %1045 = vmatprep.subr.bf16.mxu0 0
        %1046 = vmatpush1.bf16.xpose.msra.mxu0 0
        %1047 = vmatprep.subr.bf16.mxu0 0
        %1048 = vmatpush1.bf16.xpose.msra.mxu0 0
        %1049 = vmatprep.subr.bf16.mxu0 0
        %1050 = vmatpush1.bf16.xpose.msra.mxu0 0
        %1051 = vmatprep.subr.bf16.mxu0 0
        %1052 = vmatpush1.bf16.xpose.msra.mxu0 %v1035
        %1053 = vmatprep.subr.bf16.mxu0 0
        %1054 = vmatpush2.bf16.xpose.msra.mxu0 0
        %1055 = vmatprep.subr.bf16.mxu0 0
        %1056 = vmatpush2.bf16.xpose.msra.mxu0 0
        %1057 = vmatprep.subr.bf16.mxu0 0
        %1058 = vmatpush2.bf16.xpose.msra.mxu0 0
        %1059 = vmatprep.subr.bf16.mxu0 0
        %1060 = vmatpush2.bf16.xpose.msra.mxu0 0
        %1061 = vmatprep.subr.bf16.mxu0 0
        %1062 = vmatpush2.bf16.xpose.msra.mxu0 0
        %1063 = vmatprep.subr.bf16.mxu0 0
        %1064 = vmatpush2.bf16.xpose.msra.mxu0 0
        %1065 = vmatprep.subr.bf16.mxu0 0
        %1066 = vmatpush2.bf16.xpose.msra.mxu0 0
        %1067 = vmatprep.subr.bf16.mxu0 0
        %1068 = vmatpush2.bf16.xpose.msra.mxu0 0
        %1069 = vmatprep.mubr.bf16.mxu0 0
        %1070 = vmatmul.mubr.bf16.gmra.mxu0 %v1032
        %v1071 = vpop.f32.mrf.mxu0
        %v1072 = vadd.f32 0.0, %v1071
        %v1073 = vpop.f32.mrf.mxu0
        %v1074 = vpop.f32.mrf.mxu0
        %v1075 = vpop.f32.mrf.mxu0
        %1076 = vdwg.mxu0
        %v1077 = vmul.f32 %v1072, 0.17677669
        %v1078 = vsel %vm687, %v1077, -1e+30
        %v1079 = vsel %vm740, %v1078, -inf
        %1080 = vmax.xlane.f32.xlu0 %v1079
        %v1081 = vpop.xlane.xlu0 %1080
        %v1082 = vsub.f32 %v1078, %v1081
        %v1083 = vmul.f32 %v1082, 1.442695
        %v1084 = vpow.pop %v1083
        %v1085 = vsel %vm740, %v1084, 0.0
        %1086 = vadd.xlane.f32.xlu0 %v1085
        %v1087 = vpop.xlane.xlu0 %1086
        %v1088 = vrcp.pop %v1087
        %v1089 = vmul.f32 %v1084, %v1088
        %v1090 = vpack.c.bf16 %v1089, %v1089
        %1091 = vrot.lane.b32.xlu0 %v690, 32
        %v1092 = vpop.permute.xlu0 %1091
        %v1094 = vsel %vm740, %v1090, 0
        %v1097 = vsel %vm756, %v1092, 0
        %1099 = vmatprep.subr.bf16.mxu0 0
        %1100 = vmatpush1.bf16.msra.mxu0 0
        %1101 = vmatprep.subr.bf16.mxu0 0
        %1102 = vmatpush1.bf16.msra.mxu0 0
        %1103 = vmatprep.subr.bf16.mxu0 0
        %1104 = vmatpush1.bf16.msra.mxu0 0
        %1105 = vmatprep.subr.bf16.mxu0 0
        %1106 = vmatpush1.bf16.msra.mxu0 0
        %1107 = vmatprep.subr.bf16.mxu0 0
        %1108 = vmatpush1.bf16.msra.mxu0 0
        %1109 = vmatprep.subr.bf16.mxu0 0
        %1110 = vmatpush1.bf16.msra.mxu0 0
        %1111 = vmatprep.subr.bf16.mxu0 0
        %1112 = vmatpush1.bf16.msra.mxu0 0
        %1113 = vmatprep.subr.bf16.mxu0 0
        %1114 = vmatpush1.bf16.msra.mxu0 %v1097
        %1115 = vmatprep.subr.bf16.mxu0 0
        %1116 = vmatpush2.bf16.msra.mxu0 0
        %1117 = vmatprep.subr.bf16.mxu0 0
        %1118 = vmatpush2.bf16.msra.mxu0 0
        %1119 = vmatprep.subr.bf16.mxu0 0
        %1120 = vmatpush2.bf16.msra.mxu0 0
        %1121 = vmatprep.subr.bf16.mxu0 0
        %1122 = vmatpush2.bf16.msra.mxu0 0
        %1123 = vmatprep.subr.bf16.mxu0 0
        %1124 = vmatpush2.bf16.msra.mxu0 0
        %1125 = vmatprep.subr.bf16.mxu0 0
        %1126 = vmatpush2.bf16.msra.mxu0 0
        %1127 = vmatprep.subr.bf16.mxu0 0
        %1128 = vmatpush2.bf16.msra.mxu0 0
        %1129 = vmatprep.subr.bf16.mxu0 0
        %1130 = vmatpush2.bf16.msra.mxu0 0
        %1131 = vmatprep.mubr.bf16.mxu0 0
        %1132 = vmatmul.mubr.bf16.gmra.mxu0 %v1094
        %v1133 = vpop.f32.mrf.mxu0
        %v1134 = vadd.f32 0.0, %v1133
        %v1135 = vpop.f32.mrf.mxu0
        %v1136 = vpop.f32.mrf.mxu0
        %v1137 = vpop.f32.mrf.mxu0
        %1138 = vdwg.mxu0
        %1140 = vrot.lane.b32.xlu0 %v910, 32
        %v1141 = vpop.permute.xlu0 %1140
        %1144 = vrot.lane.b32.xlu0 %v1022, 64
        %v1145 = vpop.permute.xlu0 %1144
        %1148 = vrot.lane.b32.xlu0 %v1134, 96
        %v1149 = vpop.permute.xlu0 %1148
        %v1151 = vsel %vm691, %v795, %v1141
        %vm1152 = vcmask 523264
        %v1153 = vsel %vm1152, %v1151, %v1145
        %vm1154 = vcmask 785408
        %v1155 = vsel %vm1154, %v1153, %v1149
        %v1156 = vpack.c.bf16 %v1155, %v1155
        %v1157 = vpack.c.bf16 %v546, %v545
        %v1158 = vpack.c.bf16 %v548, %v547
        %v1159 = vpack.c.bf16 %v550, %v549
        %v1160 = vpack.c.bf16 %v552, %v551
        %v1161 = vpack.c.bf16 %v554, %v553
        %v1162 = vpack.c.bf16 %v556, %v555
        %v1163 = vpack.c.bf16 %v558, %v557
        %v1164 = vpack.c.bf16 %v560, %v559
        %v1165 = vlaneseq
        %v1166 = vshrl.u32 %v1165, 7
        %v1167 = vsub.s32 0, %v1166
        %v1168 = vrot.slane %v494, %v1167
        %1169 = vmatprep.subr.bf16.mxu0 0
        %1170 = vmatpush1.bf16.msra.mxu0 %v1164
        %1171 = vmatprep.subr.bf16.mxu0 0
        %1172 = vmatpush1.bf16.msra.mxu0 %v1163
        %1173 = vmatprep.subr.bf16.mxu0 0
        %1174 = vmatpush1.bf16.msra.mxu0 %v1162
        %1175 = vmatprep.subr.bf16.mxu0 0
        %1176 = vmatpush1.bf16.msra.mxu0 %v1161
        %1177 = vmatprep.subr.bf16.mxu0 0
        %1178 = vmatpush1.bf16.msra.mxu0 %v1160
        %1179 = vmatprep.subr.bf16.mxu0 0
        %1180 = vmatpush1.bf16.msra.mxu0 %v1159
        %1181 = vmatprep.subr.bf16.mxu0 0
        %1182 = vmatpush1.bf16.msra.mxu0 %v1158
        %1183 = vmatprep.subr.bf16.mxu0 0
        %1184 = vmatpush1.bf16.msra.mxu0 %v1157
        %1185 = vmatprep.subr.bf16.mxu0 0
        %1186 = vmatpush2.bf16.msra.mxu0 0
        %1187 = vmatprep.subr.bf16.mxu0 0
        %1188 = vmatpush2.bf16.msra.mxu0 0
        %1189 = vmatprep.subr.bf16.mxu0 0
        %1190 = vmatpush2.bf16.msra.mxu0 0
        %1191 = vmatprep.subr.bf16.mxu0 0
        %1192 = vmatpush2.bf16.msra.mxu0 0
        %1193 = vmatprep.subr.bf16.mxu0 0
        %1194 = vmatpush2.bf16.msra.mxu0 0
        %1195 = vmatprep.subr.bf16.mxu0 0
        %1196 = vmatpush2.bf16.msra.mxu0 0
        %1197 = vmatprep.subr.bf16.mxu0 0
        %1198 = vmatpush2.bf16.msra.mxu0 0
        %1199 = vmatprep.subr.bf16.mxu0 0
        %1200 = vmatpush2.bf16.msra.mxu0 0
        %1201 = vmatprep.mubr.bf16.mxu0 0
        %1202 = vmatmul.mubr.bf16.gmra.mxu0 %v1156
        %v1203 = vpop.f32.mrf.mxu0
        %v1204 = vadd.f32 %v1168, %v1203
        %v1205 = vpop.f32.mrf.mxu0
        %v1206 = vpop.f32.mrf.mxu0
        %v1207 = vpop.f32.mrf.mxu0
        %1208 = vdwg.mxu0
        %v1209 = vadd.f32 %v492, %v1204
        %1210 = vadd.xlane.f32.xlu0 %v1209
        %v1211 = vpop.xlane.xlu0 %1210
        %v1212 = vrcp.pop 128.0
        %v1213 = vmul.f32 %v1211, %v1212
        %v1214 = vsub.f32 %v1209, %v1213
        %v1215 = vmul.f32 %v1214, %v1214
        %1216 = vadd.xlane.f32.xlu0 %v1215
        %v1217 = vpop.xlane.xlu0 %1216
        %v1218 = vmul.f32 %v1217, %v1212
        %v1219 = vadd.f32 %v1218, 1e-05
        %v1220 = vrsqrt.pop %v1219
        %v1221 = vmul.f32 %v1214, %v1220
        %v1222 = vlaneseq
        %v1223 = vshrl.u32 %v1222, 7
        %v1224 = vsub.s32 4, %v1223
        %v1225 = vrot.slane %v494, %v1224
        %v1226 = vmul.f32 %v1221, %v1225
        %v1227 = vlaneseq
        %v1228 = vshrl.u32 %v1227, 7
        %v1229 = vsub.s32 5, %v1228
        %v1230 = vrot.slane %v494, %v1229
        %v1231 = vadd.f32 %v1226, %v1230
        %v1232 = vpack.c.bf16 %v1231, %v1231
        %v1233 = vld [vmem:[%s5] sm:$0xff]
        %v1234 = vld [vmem:[%s5 + $0x8] sm:$0xff]
        %v1235 = vld [vmem:[%s5 + $0x10] sm:$0xff]
        %v1236 = vld [vmem:[%s5 + $0x18] sm:$0xff]
        %v1237 = vld [vmem:[%s5 + $0x20] sm:$0xff]
        %v1238 = vld [vmem:[%s5 + $0x28] sm:$0xff]
        %v1239 = vld [vmem:[%s5 + $0x30] sm:$0xff]
        %v1240 = vld [vmem:[%s5 + $0x38] sm:$0xff]
        %v1241 = vld [vmem:[%s5 + $0x40] sm:$0xff]
        %v1242 = vld [vmem:[%s5 + $0x48] sm:$0xff]
        %v1243 = vld [vmem:[%s5 + $0x50] sm:$0xff]
        %v1244 = vld [vmem:[%s5 + $0x58] sm:$0xff]
        %v1245 = vld [vmem:[%s5 + $0x60] sm:$0xff]
        %v1246 = vld [vmem:[%s5 + $0x68] sm:$0xff]
        %v1247 = vld [vmem:[%s5 + $0x70] sm:$0xff]
        %v1248 = vld [vmem:[%s5 + $0x78] sm:$0xff]
        %v1249 = vpack.c.bf16 %v1234, %v1233
        %v1250 = vpack.c.bf16 %v1236, %v1235
        %v1251 = vpack.c.bf16 %v1238, %v1237
        %v1252 = vpack.c.bf16 %v1240, %v1239
        %v1253 = vpack.c.bf16 %v1242, %v1241
        %v1254 = vpack.c.bf16 %v1244, %v1243
        %v1255 = vpack.c.bf16 %v1246, %v1245
        %v1256 = vpack.c.bf16 %v1248, %v1247
        %v1257 = vlaneseq
        %v1258 = vshrl.u32 %v1257, 7
        %v1259 = vsub.s32 1, %v1258
        %v1260 = vrot.slane %v494, %v1259
        %1261 = vmatprep.subr.bf16.mxu0 0
        %1262 = vmatpush1.bf16.msra.mxu0 %v1256
        %1263 = vmatprep.subr.bf16.mxu0 0
        %1264 = vmatpush1.bf16.msra.mxu0 %v1255
        %1265 = vmatprep.subr.bf16.mxu0 0
        %1266 = vmatpush1.bf16.msra.mxu0 %v1254
        %1267 = vmatprep.subr.bf16.mxu0 0
        %1268 = vmatpush1.bf16.msra.mxu0 %v1253
        %1269 = vmatprep.subr.bf16.mxu0 0
        %1270 = vmatpush1.bf16.msra.mxu0 %v1252
        %1271 = vmatprep.subr.bf16.mxu0 0
        %1272 = vmatpush1.bf16.msra.mxu0 %v1251
        %1273 = vmatprep.subr.bf16.mxu0 0
        %1274 = vmatpush1.bf16.msra.mxu0 %v1250
        %1275 = vmatprep.subr.bf16.mxu0 0
        %1276 = vmatpush1.bf16.msra.mxu0 %v1249
        %1277 = vmatprep.subr.bf16.mxu0 0
        %1278 = vmatpush2.bf16.msra.mxu0 0
        %1279 = vmatprep.subr.bf16.mxu0 0
        %1280 = vmatpush2.bf16.msra.mxu0 0
        %1281 = vmatprep.subr.bf16.mxu0 0
        %1282 = vmatpush2.bf16.msra.mxu0 0
        %1283 = vmatprep.subr.bf16.mxu0 0
        %1284 = vmatpush2.bf16.msra.mxu0 0
        %1285 = vmatprep.subr.bf16.mxu0 0
        %1286 = vmatpush2.bf16.msra.mxu0 0
        %1287 = vmatprep.subr.bf16.mxu0 0
        %1288 = vmatpush2.bf16.msra.mxu0 0
        %1289 = vmatprep.subr.bf16.mxu0 0
        %1290 = vmatpush2.bf16.msra.mxu0 0
        %1291 = vmatprep.subr.bf16.mxu0 0
        %1292 = vmatpush2.bf16.msra.mxu0 0
        %1293 = vmatprep.mubr.bf16.mxu0 0
        %1294 = vmatmul.mubr.bf16.gmra.mxu0 %v1232
        %v1295 = vpop.f32.mrf.mxu0
        %v1296 = vadd.f32 %v1260, %v1295
        %v1297 = vpop.f32.mrf.mxu0
        %v1298 = vpop.f32.mrf.mxu0
        %v1299 = vpop.f32.mrf.mxu0
        %1300 = vdwg.mxu0
        %v1301 = vpack.c.bf16 %v493, %v493
        %v1302 = vld [vmem:[%s6] sm:$0xff]
        %v1303 = vld [vmem:[%s6 + $0x8] sm:$0xff]
        %v1304 = vld [vmem:[%s6 + $0x10] sm:$0xff]
        %v1305 = vld [vmem:[%s6 + $0x18] sm:$0xff]
        %v1306 = vld [vmem:[%s6 + $0x20] sm:$0xff]
        %v1307 = vld [vmem:[%s6 + $0x28] sm:$0xff]
        %v1308 = vld [vmem:[%s6 + $0x30] sm:$0xff]
        %v1309 = vld [vmem:[%s6 + $0x38] sm:$0xff]
        %v1310 = vld [vmem:[%s6 + $0x40] sm:$0xff]
        %v1311 = vld [vmem:[%s6 + $0x48] sm:$0xff]
        %v1312 = vld [vmem:[%s6 + $0x50] sm:$0xff]
        %v1313 = vld [vmem:[%s6 + $0x58] sm:$0xff]
        %v1314 = vld [vmem:[%s6 + $0x60] sm:$0xff]
        %v1315 = vld [vmem:[%s6 + $0x68] sm:$0xff]
        %v1316 = vld [vmem:[%s6 + $0x70] sm:$0xff]
        %v1317 = vld [vmem:[%s6 + $0x78] sm:$0xff]
        %v1318 = vld [vmem:[%s6 + $0x80] sm:$0xff]
        %v1319 = vld [vmem:[%s6 + $0x88] sm:$0xff]
        %v1320 = vld [vmem:[%s6 + $0x90] sm:$0xff]
        %v1321 = vld [vmem:[%s6 + $0x98] sm:$0xff]
        %v1322 = vld [vmem:[%s6 + $0xa0] sm:$0xff]
        %v1323 = vld [vmem:[%s6 + $0xa8] sm:$0xff]
        %v1324 = vld [vmem:[%s6 + $0xb0] sm:$0xff]
        %v1325 = vld [vmem:[%s6 + $0xb8] sm:$0xff]
        %v1326 = vld [vmem:[%s6 + $0xc0] sm:$0xff]
        %v1327 = vld [vmem:[%s6 + $0xc8] sm:$0xff]
        %v1328 = vld [vmem:[%s6 + $0xd0] sm:$0xff]
        %v1329 = vld [vmem:[%s6 + $0xd8] sm:$0xff]
        %v1330 = vld [vmem:[%s6 + $0xe0] sm:$0xff]
        %v1331 = vld [vmem:[%s6 + $0xe8] sm:$0xff]
        %v1332 = vld [vmem:[%s6 + $0xf0] sm:$0xff]
        %v1333 = vld [vmem:[%s6 + $0xf8] sm:$0xff]
        %v1334 = vpack.c.bf16 %v1304, %v1302
        %v1335 = vpack.c.bf16 %v1305, %v1303
        %v1336 = vpack.c.bf16 %v1308, %v1306
        %v1337 = vpack.c.bf16 %v1309, %v1307
        %v1338 = vpack.c.bf16 %v1312, %v1310
        %v1339 = vpack.c.bf16 %v1313, %v1311
        %v1340 = vpack.c.bf16 %v1316, %v1314
        %v1341 = vpack.c.bf16 %v1317, %v1315
        %v1342 = vpack.c.bf16 %v1320, %v1318
        %v1343 = vpack.c.bf16 %v1321, %v1319
        %v1344 = vpack.c.bf16 %v1324, %v1322
        %v1345 = vpack.c.bf16 %v1325, %v1323
        %v1346 = vpack.c.bf16 %v1328, %v1326
        %v1347 = vpack.c.bf16 %v1329, %v1327
        %v1348 = vpack.c.bf16 %v1332, %v1330
        %v1349 = vpack.c.bf16 %v1333, %v1331
        %v1350 = vld [vmem:[#allocation4] sm:$0x3]
        %v1352 = vlaneseq
        %v1353 = vshrl.u32 %v1352, 7
        %v1354 = vsub.s32 0, %v1353
        %v1355 = vrot.slane %v1350, %v1354
        %v1356 = vlaneseq
        %v1357 = vshrl.u32 %v1356, 7
        %v1358 = vsub.s32 1, %v1357
        %v1359 = vrot.slane %v1350, %v1358
        %1362 = vmatprep.subr.bf16.mxu0 %v1349
        %1363 = vmatpush1.bf16.msra.mxu0 %v1348
        %1364 = vmatprep.subr.bf16.mxu0 %v1347
        %1365 = vmatpush1.bf16.msra.mxu0 %v1346
        %1366 = vmatprep.subr.bf16.mxu0 %v1345
        %1367 = vmatpush1.bf16.msra.mxu0 %v1344
        %1368 = vmatprep.subr.bf16.mxu0 %v1343
        %1369 = vmatpush1.bf16.msra.mxu0 %v1342
        %1370 = vmatprep.subr.bf16.mxu0 %v1341
        %1371 = vmatpush1.bf16.msra.mxu0 %v1340
        %1372 = vmatprep.subr.bf16.mxu0 %v1339
        %1373 = vmatpush1.bf16.msra.mxu0 %v1338
        %1374 = vmatprep.subr.bf16.mxu0 %v1337
        %1375 = vmatpush1.bf16.msra.mxu0 %v1336
        %1376 = vmatprep.subr.bf16.mxu0 %v1335
        %1377 = vmatpush1.bf16.msra.mxu0 %v1334
        %1378 = vmatprep.subr.bf16.mxu0 0
        %1379 = vmatpush2.bf16.msra.mxu0 0
        %1380 = vmatprep.subr.bf16.mxu0 0
        %1381 = vmatpush2.bf16.msra.mxu0 0
        %1382 = vmatprep.subr.bf16.mxu0 0
        %1383 = vmatpush2.bf16.msra.mxu0 0
        %1384 = vmatprep.subr.bf16.mxu0 0
        %1385 = vmatpush2.bf16.msra.mxu0 0
        %1386 = vmatprep.subr.bf16.mxu0 0
        %1387 = vmatpush2.bf16.msra.mxu0 0
        %1388 = vmatprep.subr.bf16.mxu0 0
        %1389 = vmatpush2.bf16.msra.mxu0 0
        %1390 = vmatprep.subr.bf16.mxu0 0
        %1391 = vmatpush2.bf16.msra.mxu0 0
        %1392 = vmatprep.subr.bf16.mxu0 0
        %1393 = vmatpush2.bf16.msra.mxu0 0
        %1394 = vmatprep.mubr.bf16.mxu0 0
        %1395 = vmatmul.mubr.bf16.gmra.mxu0 %v1301
        %v1396 = vpop.f32.mrf.mxu0
        %v1397 = vadd.f32 %v1355, %v1396
        %v1398 = vpop.f32.mrf.mxu0
        %v1399 = vadd.f32 %v1359, %v1398
        %v1400 = vpop.f32.mrf.mxu0
        %v1401 = vpop.f32.mrf.mxu0
        %1402 = vdwg.mxu0
        %v1403 = vld [vmem:[%s8] sm:$0xff]
        %v1404 = vld [vmem:[%s8 + $0x8] sm:$0xff]
        %v1405 = vld [vmem:[%s8 + $0x10] sm:$0xff]
        %v1406 = vld [vmem:[%s8 + $0x18] sm:$0xff]
        %v1407 = vld [vmem:[%s8 + $0x20] sm:$0xff]
        %v1408 = vld [vmem:[%s8 + $0x28] sm:$0xff]
        %v1409 = vld [vmem:[%s8 + $0x30] sm:$0xff]
        %v1410 = vld [vmem:[%s8 + $0x38] sm:$0xff]
        %v1411 = vld [vmem:[%s8 + $0x40] sm:$0xff]
        %v1412 = vld [vmem:[%s8 + $0x48] sm:$0xff]
        %v1413 = vld [vmem:[%s8 + $0x50] sm:$0xff]
        %v1414 = vld [vmem:[%s8 + $0x58] sm:$0xff]
        %v1415 = vld [vmem:[%s8 + $0x60] sm:$0xff]
        %v1416 = vld [vmem:[%s8 + $0x68] sm:$0xff]
        %v1417 = vld [vmem:[%s8 + $0x70] sm:$0xff]
        %v1418 = vld [vmem:[%s8 + $0x78] sm:$0xff]
        %v1419 = vpack.c.bf16 %v1296, %v1296
        %v1420 = vpack.c.bf16 %v1397, %v1397
        %v1421 = vpack.c.bf16 %v1399, %v1399
        %v1423 = vsel %vm691, %v1419, 0
        %v1426 = vsel %vm691, %v1420, 0
        %1428 = vmatprep.subr.bf16.mxu0 0
        %1429 = vmatpush1.bf16.xpose.msra.mxu0 0
        %1430 = vmatprep.subr.bf16.mxu0 0
        %1431 = vmatpush1.bf16.xpose.msra.mxu0 0
        %1432 = vmatprep.subr.bf16.mxu0 0
        %1433 = vmatpush1.bf16.xpose.msra.mxu0 0
        %1434 = vmatprep.subr.bf16.mxu0 0
        %1435 = vmatpush1.bf16.xpose.msra.mxu0 0
        %1436 = vmatprep.subr.bf16.mxu0 0
        %1437 = vmatpush1.bf16.xpose.msra.mxu0 0
        %1438 = vmatprep.subr.bf16.mxu0 0
        %1439 = vmatpush1.bf16.xpose.msra.mxu0 0
        %1440 = vmatprep.subr.bf16.mxu0 0
        %1441 = vmatpush1.bf16.xpose.msra.mxu0 0
        %1442 = vmatprep.subr.bf16.mxu0 0
        %1443 = vmatpush1.bf16.xpose.msra.mxu0 %v1426
        %1444 = vmatprep.subr.bf16.mxu0 0
        %1445 = vmatpush2.bf16.xpose.msra.mxu0 0
        %1446 = vmatprep.subr.bf16.mxu0 0
        %1447 = vmatpush2.bf16.xpose.msra.mxu0 0
        %1448 = vmatprep.subr.bf16.mxu0 0
        %1449 = vmatpush2.bf16.xpose.msra.mxu0 0
        %1450 = vmatprep.subr.bf16.mxu0 0
        %1451 = vmatpush2.bf16.xpose.msra.mxu0 0
        %1452 = vmatprep.subr.bf16.mxu0 0
        %1453 = vmatpush2.bf16.xpose.msra.mxu0 0
        %1454 = vmatprep.subr.bf16.mxu0 0
        %1455 = vmatpush2.bf16.xpose.msra.mxu0 0
        %1456 = vmatprep.subr.bf16.mxu0 0
        %1457 = vmatpush2.bf16.xpose.msra.mxu0 0
        %1458 = vmatprep.subr.bf16.mxu0 0
        %1459 = vmatpush2.bf16.xpose.msra.mxu0 0
        %1460 = vmatprep.mubr.bf16.mxu0 0
        %1461 = vmatmul.mubr.bf16.gmra.mxu0 %v1423
        %v1462 = vpop.f32.mrf.mxu0
        %v1463 = vadd.f32 0.0, %v1462
        %v1464 = vpop.f32.mrf.mxu0
        %v1465 = vpop.f32.mrf.mxu0
        %v1466 = vpop.f32.mrf.mxu0
        %1467 = vdwg.mxu0
        %v1468 = vmul.f32 %v1463, 0.17677669
        %v1469 = vsel %vm740, %v1468, -inf
        %1470 = vmax.xlane.f32.xlu0 %v1469
        %v1471 = vpop.xlane.xlu0 %1470
        %v1472 = vsub.f32 %v1468, %v1471
        %v1473 = vmul.f32 %v1472, 1.442695
        %v1474 = vpow.pop %v1473
        %v1475 = vsel %vm740, %v1474, 0.0
        %1476 = vadd.xlane.f32.xlu0 %v1475
        %v1477 = vpop.xlane.xlu0 %1476
        %v1478 = vrcp.pop %v1477
        %v1479 = vmul.f32 %v1474, %v1478
        %v1480 = vpack.c.bf16 %v1479, %v1479
        %v1482 = vsel %vm740, %v1480, 0
        %v1485 = vsel %vm756, %v1421, 0
        %1487 = vmatprep.subr.bf16.mxu0 0
        %1488 = vmatpush1.bf16.msra.mxu0 0
        %1489 = vmatprep.subr.bf16.mxu0 0
        %1490 = vmatpush1.bf16.msra.mxu0 0
        %1491 = vmatprep.subr.bf16.mxu0 0
        %1492 = vmatpush1.bf16.msra.mxu0 0
        %1493 = vmatprep.subr.bf16.mxu0 0
        %1494 = vmatpush1.bf16.msra.mxu0 0
        %1495 = vmatprep.subr.bf16.mxu0 0
        %1496 = vmatpush1.bf16.msra.mxu0 0
        %1497 = vmatprep.subr.bf16.mxu0 0
        %1498 = vmatpush1.bf16.msra.mxu0 0
        %1499 = vmatprep.subr.bf16.mxu0 0
        %1500 = vmatpush1.bf16.msra.mxu0 0
        %1501 = vmatprep.subr.bf16.mxu0 0
        %1502 = vmatpush1.bf16.msra.mxu0 %v1485
        %1503 = vmatprep.subr.bf16.mxu0 0
        %1504 = vmatpush2.bf16.msra.mxu0 0
        %1505 = vmatprep.subr.bf16.mxu0 0
        %1506 = vmatpush2.bf16.msra.mxu0 0
        %1507 = vmatprep.subr.bf16.mxu0 0
        %1508 = vmatpush2.bf16.msra.mxu0 0
        %1509 = vmatprep.subr.bf16.mxu0 0
        %1510 = vmatpush2.bf16.msra.mxu0 0
        %1511 = vmatprep.subr.bf16.mxu0 0
        %1512 = vmatpush2.bf16.msra.mxu0 0
        %1513 = vmatprep.subr.bf16.mxu0 0
        %1514 = vmatpush2.bf16.msra.mxu0 0
        %1515 = vmatprep.subr.bf16.mxu0 0
        %1516 = vmatpush2.bf16.msra.mxu0 0
        %1517 = vmatprep.subr.bf16.mxu0 0
        %1518 = vmatpush2.bf16.msra.mxu0 0
        %1519 = vmatprep.mubr.bf16.mxu0 0
        %1520 = vmatmul.mubr.bf16.gmra.mxu0 %v1482
        %v1521 = vpop.f32.mrf.mxu0
        %v1522 = vadd.f32 0.0, %v1521
        %v1523 = vpop.f32.mrf.mxu0
        %v1524 = vpop.f32.mrf.mxu0
        %v1525 = vpop.f32.mrf.mxu0
        %1526 = vdwg.mxu0
        %1528 = vrot.lane.b32.xlu0 %v1419, 96
        %v1529 = vpop.permute.xlu0 %1528
        %1531 = vrot.lane.b32.xlu0 %v1420, 96
        %v1532 = vpop.permute.xlu0 %1531
        %v1534 = vsel %vm691, %v1529, 0
        %v1537 = vsel %vm691, %v1532, 0
        %1539 = vmatprep.subr.bf16.mxu0 0
        %1540 = vmatpush1.bf16.xpose.msra.mxu0 0
        %1541 = vmatprep.subr.bf16.mxu0 0
        %1542 = vmatpush1.bf16.xpose.msra.mxu0 0
        %1543 = vmatprep.subr.bf16.mxu0 0
        %1544 = vmatpush1.bf16.xpose.msra.mxu0 0
        %1545 = vmatprep.subr.bf16.mxu0 0
        %1546 = vmatpush1.bf16.xpose.msra.mxu0 0
        %1547 = vmatprep.subr.bf16.mxu0 0
        %1548 = vmatpush1.bf16.xpose.msra.mxu0 0
        %1549 = vmatprep.subr.bf16.mxu0 0
        %1550 = vmatpush1.bf16.xpose.msra.mxu0 0
        %1551 = vmatprep.subr.bf16.mxu0 0
        %1552 = vmatpush1.bf16.xpose.msra.mxu0 0
        %1553 = vmatprep.subr.bf16.mxu0 0
        %1554 = vmatpush1.bf16.xpose.msra.mxu0 %v1537
        %1555 = vmatprep.subr.bf16.mxu0 0
        %1556 = vmatpush2.bf16.xpose.msra.mxu0 0
        %1557 = vmatprep.subr.bf16.mxu0 0
        %1558 = vmatpush2.bf16.xpose.msra.mxu0 0
        %1559 = vmatprep.subr.bf16.mxu0 0
        %1560 = vmatpush2.bf16.xpose.msra.mxu0 0
        %1561 = vmatprep.subr.bf16.mxu0 0
        %1562 = vmatpush2.bf16.xpose.msra.mxu0 0
        %1563 = vmatprep.subr.bf16.mxu0 0
        %1564 = vmatpush2.bf16.xpose.msra.mxu0 0
        %1565 = vmatprep.subr.bf16.mxu0 0
        %1566 = vmatpush2.bf16.xpose.msra.mxu0 0
        %1567 = vmatprep.subr.bf16.mxu0 0
        %1568 = vmatpush2.bf16.xpose.msra.mxu0 0
        %1569 = vmatprep.subr.bf16.mxu0 0
        %1570 = vmatpush2.bf16.xpose.msra.mxu0 0
        %1571 = vmatprep.mubr.bf16.mxu0 0
        %1572 = vmatmul.mubr.bf16.gmra.mxu0 %v1534
        %v1573 = vpop.f32.mrf.mxu0
        %v1574 = vadd.f32 0.0, %v1573
        %v1575 = vpop.f32.mrf.mxu0
        %v1576 = vpop.f32.mrf.mxu0
        %v1577 = vpop.f32.mrf.mxu0
        %1578 = vdwg.mxu0
        %v1579 = vmul.f32 %v1574, 0.17677669
        %v1580 = vsel %vm740, %v1579, -inf
        %1581 = vmax.xlane.f32.xlu0 %v1580
        %v1582 = vpop.xlane.xlu0 %1581
        %v1583 = vsub.f32 %v1579, %v1582
        %v1584 = vmul.f32 %v1583, 1.442695
        %v1585 = vpow.pop %v1584
        %v1586 = vsel %vm740, %v1585, 0.0
        %1587 = vadd.xlane.f32.xlu0 %v1586
        %v1588 = vpop.xlane.xlu0 %1587
        %v1589 = vrcp.pop %v1588
        %v1590 = vmul.f32 %v1585, %v1589
        %v1591 = vpack.c.bf16 %v1590, %v1590
        %1593 = vrot.lane.b32.xlu0 %v1421, 96
        %v1594 = vpop.permute.xlu0 %1593
        %v1596 = vsel %vm740, %v1591, 0
        %v1599 = vsel %vm756, %v1594, 0
        %1601 = vmatprep.subr.bf16.mxu0 0
        %1602 = vmatpush1.bf16.msra.mxu0 0
        %1603 = vmatprep.subr.bf16.mxu0 0
        %1604 = vmatpush1.bf16.msra.mxu0 0
        %1605 = vmatprep.subr.bf16.mxu0 0
        %1606 = vmatpush1.bf16.msra.mxu0 0
        %1607 = vmatprep.subr.bf16.mxu0 0
        %1608 = vmatpush1.bf16.msra.mxu0 0
        %1609 = vmatprep.subr.bf16.mxu0 0
        %1610 = vmatpush1.bf16.msra.mxu0 0
        %1611 = vmatprep.subr.bf16.mxu0 0
        %1612 = vmatpush1.bf16.msra.mxu0 0
        %1613 = vmatprep.subr.bf16.mxu0 0
        %1614 = vmatpush1.bf16.msra.mxu0 0
        %1615 = vmatprep.subr.bf16.mxu0 0
        %1616 = vmatpush1.bf16.msra.mxu0 %v1599
        %1617 = vmatprep.subr.bf16.mxu0 0
        %1618 = vmatpush2.bf16.msra.mxu0 0
        %1619 = vmatprep.subr.bf16.mxu0 0
        %1620 = vmatpush2.bf16.msra.mxu0 0
        %1621 = vmatprep.subr.bf16.mxu0 0
        %1622 = vmatpush2.bf16.msra.mxu0 0
        %1623 = vmatprep.subr.bf16.mxu0 0
        %1624 = vmatpush2.bf16.msra.mxu0 0
        %1625 = vmatprep.subr.bf16.mxu0 0
        %1626 = vmatpush2.bf16.msra.mxu0 0
        %1627 = vmatprep.subr.bf16.mxu0 0
        %1628 = vmatpush2.bf16.msra.mxu0 0
        %1629 = vmatprep.subr.bf16.mxu0 0
        %1630 = vmatpush2.bf16.msra.mxu0 0
        %1631 = vmatprep.subr.bf16.mxu0 0
        %1632 = vmatpush2.bf16.msra.mxu0 0
        %1633 = vmatprep.mubr.bf16.mxu0 0
        %1634 = vmatmul.mubr.bf16.gmra.mxu0 %v1596
        %v1635 = vpop.f32.mrf.mxu0
        %v1636 = vadd.f32 0.0, %v1635
        %v1637 = vpop.f32.mrf.mxu0
        %v1638 = vpop.f32.mrf.mxu0
        %v1639 = vpop.f32.mrf.mxu0
        %1640 = vdwg.mxu0
        %1641 = vrot.lane.b32.xlu0 %v1419, 64
        %v1642 = vpop.permute.xlu0 %1641
        %1643 = vrot.lane.b32.xlu0 %v1420, 64
        %v1644 = vpop.permute.xlu0 %1643
        %v1646 = vsel %vm691, %v1642, 0
        %v1649 = vsel %vm691, %v1644, 0
        %1651 = vmatprep.subr.bf16.mxu0 0
        %1652 = vmatpush1.bf16.xpose.msra.mxu0 0
        %1653 = vmatprep.subr.bf16.mxu0 0
        %1654 = vmatpush1.bf16.xpose.msra.mxu0 0
        %1655 = vmatprep.subr.bf16.mxu0 0
        %1656 = vmatpush1.bf16.xpose.msra.mxu0 0
        %1657 = vmatprep.subr.bf16.mxu0 0
        %1658 = vmatpush1.bf16.xpose.msra.mxu0 0
        %1659 = vmatprep.subr.bf16.mxu0 0
        %1660 = vmatpush1.bf16.xpose.msra.mxu0 0
        %1661 = vmatprep.subr.bf16.mxu0 0
        %1662 = vmatpush1.bf16.xpose.msra.mxu0 0
        %1663 = vmatprep.subr.bf16.mxu0 0
        %1664 = vmatpush1.bf16.xpose.msra.mxu0 0
        %1665 = vmatprep.subr.bf16.mxu0 0
        %1666 = vmatpush1.bf16.xpose.msra.mxu0 %v1649
        %1667 = vmatprep.subr.bf16.mxu0 0
        %1668 = vmatpush2.bf16.xpose.msra.mxu0 0
        %1669 = vmatprep.subr.bf16.mxu0 0
        %1670 = vmatpush2.bf16.xpose.msra.mxu0 0
        %1671 = vmatprep.subr.bf16.mxu0 0
        %1672 = vmatpush2.bf16.xpose.msra.mxu0 0
        %1673 = vmatprep.subr.bf16.mxu0 0
        %1674 = vmatpush2.bf16.xpose.msra.mxu0 0
        %1675 = vmatprep.subr.bf16.mxu0 0
        %1676 = vmatpush2.bf16.xpose.msra.mxu0 0
        %1677 = vmatprep.subr.bf16.mxu0 0
        %1678 = vmatpush2.bf16.xpose.msra.mxu0 0
        %1679 = vmatprep.subr.bf16.mxu0 0
        %1680 = vmatpush2.bf16.xpose.msra.mxu0 0
        %1681 = vmatprep.subr.bf16.mxu0 0
        %1682 = vmatpush2.bf16.xpose.msra.mxu0 0
        %1683 = vmatprep.mubr.bf16.mxu0 0
        %1684 = vmatmul.mubr.bf16.gmra.mxu0 %v1646
        %v1685 = vpop.f32.mrf.mxu0
        %v1686 = vadd.f32 0.0, %v1685
        %v1687 = vpop.f32.mrf.mxu0
        %v1688 = vpop.f32.mrf.mxu0
        %v1689 = vpop.f32.mrf.mxu0
        %1690 = vdwg.mxu0
        %v1691 = vmul.f32 %v1686, 0.17677669
        %v1692 = vsel %vm740, %v1691, -inf
        %1693 = vmax.xlane.f32.xlu0 %v1692
        %v1694 = vpop.xlane.xlu0 %1693
        %v1695 = vsub.f32 %v1691, %v1694
        %v1696 = vmul.f32 %v1695, 1.442695
        %v1697 = vpow.pop %v1696
        %v1698 = vsel %vm740, %v1697, 0.0
        %1699 = vadd.xlane.f32.xlu0 %v1698
        %v1700 = vpop.xlane.xlu0 %1699
        %v1701 = vrcp.pop %v1700
        %v1702 = vmul.f32 %v1697, %v1701
        %v1703 = vpack.c.bf16 %v1702, %v1702
        %1704 = vrot.lane.b32.xlu0 %v1421, 64
        %v1705 = vpop.permute.xlu0 %1704
        %v1707 = vsel %vm740, %v1703, 0
        %v1710 = vsel %vm756, %v1705, 0
        %1712 = vmatprep.subr.bf16.mxu0 0
        %1713 = vmatpush1.bf16.msra.mxu0 0
        %1714 = vmatprep.subr.bf16.mxu0 0
        %1715 = vmatpush1.bf16.msra.mxu0 0
        %1716 = vmatprep.subr.bf16.mxu0 0
        %1717 = vmatpush1.bf16.msra.mxu0 0
        %1718 = vmatprep.subr.bf16.mxu0 0
        %1719 = vmatpush1.bf16.msra.mxu0 0
        %1720 = vmatprep.subr.bf16.mxu0 0
        %1721 = vmatpush1.bf16.msra.mxu0 0
        %1722 = vmatprep.subr.bf16.mxu0 0
        %1723 = vmatpush1.bf16.msra.mxu0 0
        %1724 = vmatprep.subr.bf16.mxu0 0
        %1725 = vmatpush1.bf16.msra.mxu0 0
        %1726 = vmatprep.subr.bf16.mxu0 0
        %1727 = vmatpush1.bf16.msra.mxu0 %v1710
        %1728 = vmatprep.subr.bf16.mxu0 0
        %1729 = vmatpush2.bf16.msra.mxu0 0
        %1730 = vmatprep.subr.bf16.mxu0 0
        %1731 = vmatpush2.bf16.msra.mxu0 0
        %1732 = vmatprep.subr.bf16.mxu0 0
        %1733 = vmatpush2.bf16.msra.mxu0 0
        %1734 = vmatprep.subr.bf16.mxu0 0
        %1735 = vmatpush2.bf16.msra.mxu0 0
        %1736 = vmatprep.subr.bf16.mxu0 0
        %1737 = vmatpush2.bf16.msra.mxu0 0
        %1738 = vmatprep.subr.bf16.mxu0 0
        %1739 = vmatpush2.bf16.msra.mxu0 0
        %1740 = vmatprep.subr.bf16.mxu0 0
        %1741 = vmatpush2.bf16.msra.mxu0 0
        %1742 = vmatprep.subr.bf16.mxu0 0
        %1743 = vmatpush2.bf16.msra.mxu0 0
        %1744 = vmatprep.mubr.bf16.mxu0 0
        %1745 = vmatmul.mubr.bf16.gmra.mxu0 %v1707
        %v1746 = vpop.f32.mrf.mxu0
        %v1747 = vadd.f32 0.0, %v1746
        %v1748 = vpop.f32.mrf.mxu0
        %v1749 = vpop.f32.mrf.mxu0
        %v1750 = vpop.f32.mrf.mxu0
        %1751 = vdwg.mxu0
        %1752 = vrot.lane.b32.xlu0 %v1419, 32
        %v1753 = vpop.permute.xlu0 %1752
        %1754 = vrot.lane.b32.xlu0 %v1420, 32
        %v1755 = vpop.permute.xlu0 %1754
        %v1757 = vsel %vm691, %v1753, 0
        %v1760 = vsel %vm691, %v1755, 0
        %1762 = vmatprep.subr.bf16.mxu0 0
        %1763 = vmatpush1.bf16.xpose.msra.mxu0 0
        %1764 = vmatprep.subr.bf16.mxu0 0
        %1765 = vmatpush1.bf16.xpose.msra.mxu0 0
        %1766 = vmatprep.subr.bf16.mxu0 0
        %1767 = vmatpush1.bf16.xpose.msra.mxu0 0
        %1768 = vmatprep.subr.bf16.mxu0 0
        %1769 = vmatpush1.bf16.xpose.msra.mxu0 0
        %1770 = vmatprep.subr.bf16.mxu0 0
        %1771 = vmatpush1.bf16.xpose.msra.mxu0 0
        %1772 = vmatprep.subr.bf16.mxu0 0
        %1773 = vmatpush1.bf16.xpose.msra.mxu0 0
        %1774 = vmatprep.subr.bf16.mxu0 0
        %1775 = vmatpush1.bf16.xpose.msra.mxu0 0
        %1776 = vmatprep.subr.bf16.mxu0 0
        %1777 = vmatpush1.bf16.xpose.msra.mxu0 %v1760
        %1778 = vmatprep.subr.bf16.mxu0 0
        %1779 = vmatpush2.bf16.xpose.msra.mxu0 0
        %1780 = vmatprep.subr.bf16.mxu0 0
        %1781 = vmatpush2.bf16.xpose.msra.mxu0 0
        %1782 = vmatprep.subr.bf16.mxu0 0
        %1783 = vmatpush2.bf16.xpose.msra.mxu0 0
        %1784 = vmatprep.subr.bf16.mxu0 0
        %1785 = vmatpush2.bf16.xpose.msra.mxu0 0
        %1786 = vmatprep.subr.bf16.mxu0 0
        %1787 = vmatpush2.bf16.xpose.msra.mxu0 0
        %1788 = vmatprep.subr.bf16.mxu0 0
        %1789 = vmatpush2.bf16.xpose.msra.mxu0 0
        %1790 = vmatprep.subr.bf16.mxu0 0
        %1791 = vmatpush2.bf16.xpose.msra.mxu0 0
        %1792 = vmatprep.subr.bf16.mxu0 0
        %1793 = vmatpush2.bf16.xpose.msra.mxu0 0
        %1794 = vmatprep.mubr.bf16.mxu0 0
        %1795 = vmatmul.mubr.bf16.gmra.mxu0 %v1757
        %v1796 = vpop.f32.mrf.mxu0
        %v1797 = vadd.f32 0.0, %v1796
        %v1798 = vpop.f32.mrf.mxu0
        %v1799 = vpop.f32.mrf.mxu0
        %v1800 = vpop.f32.mrf.mxu0
        %1801 = vdwg.mxu0
        %v1802 = vmul.f32 %v1797, 0.17677669
        %v1803 = vsel %vm740, %v1802, -inf
        %1804 = vmax.xlane.f32.xlu0 %v1803
        %v1805 = vpop.xlane.xlu0 %1804
        %v1806 = vsub.f32 %v1802, %v1805
        %v1807 = vmul.f32 %v1806, 1.442695
        %v1808 = vpow.pop %v1807
        %v1809 = vsel %vm740, %v1808, 0.0
        %1810 = vadd.xlane.f32.xlu0 %v1809
        %v1811 = vpop.xlane.xlu0 %1810
        %v1812 = vrcp.pop %v1811
        %v1813 = vmul.f32 %v1808, %v1812
        %v1814 = vpack.c.bf16 %v1813, %v1813
        %1815 = vrot.lane.b32.xlu0 %v1421, 32
        %v1816 = vpop.permute.xlu0 %1815
        %v1818 = vsel %vm740, %v1814, 0
        %v1821 = vsel %vm756, %v1816, 0
        %1823 = vmatprep.subr.bf16.mxu0 0
        %1824 = vmatpush1.bf16.msra.mxu0 0
        %1825 = vmatprep.subr.bf16.mxu0 0
        %1826 = vmatpush1.bf16.msra.mxu0 0
        %1827 = vmatprep.subr.bf16.mxu0 0
        %1828 = vmatpush1.bf16.msra.mxu0 0
        %1829 = vmatprep.subr.bf16.mxu0 0
        %1830 = vmatpush1.bf16.msra.mxu0 0
        %1831 = vmatprep.subr.bf16.mxu0 0
        %1832 = vmatpush1.bf16.msra.mxu0 0
        %1833 = vmatprep.subr.bf16.mxu0 0
        %1834 = vmatpush1.bf16.msra.mxu0 0
        %1835 = vmatprep.subr.bf16.mxu0 0
        %1836 = vmatpush1.bf16.msra.mxu0 0
        %1837 = vmatprep.subr.bf16.mxu0 0
        %1838 = vmatpush1.bf16.msra.mxu0 %v1821
        %1839 = vmatprep.subr.bf16.mxu0 0
        %1840 = vmatpush2.bf16.msra.mxu0 0
        %1841 = vmatprep.subr.bf16.mxu0 0
        %1842 = vmatpush2.bf16.msra.mxu0 0
        %1843 = vmatprep.subr.bf16.mxu0 0
        %1844 = vmatpush2.bf16.msra.mxu0 0
        %1845 = vmatprep.subr.bf16.mxu0 0
        %1846 = vmatpush2.bf16.msra.mxu0 0
        %1847 = vmatprep.subr.bf16.mxu0 0
        %1848 = vmatpush2.bf16.msra.mxu0 0
        %1849 = vmatprep.subr.bf16.mxu0 0
        %1850 = vmatpush2.bf16.msra.mxu0 0
        %1851 = vmatprep.subr.bf16.mxu0 0
        %1852 = vmatpush2.bf16.msra.mxu0 0
        %1853 = vmatprep.subr.bf16.mxu0 0
        %1854 = vmatpush2.bf16.msra.mxu0 0
        %1855 = vmatprep.mubr.bf16.mxu0 0
        %1856 = vmatmul.mubr.bf16.gmra.mxu0 %v1818
        %v1857 = vpop.f32.mrf.mxu0
        %v1858 = vadd.f32 0.0, %v1857
        %v1859 = vpop.f32.mrf.mxu0
        %v1860 = vpop.f32.mrf.mxu0
        %v1861 = vpop.f32.mrf.mxu0
        %1862 = vdwg.mxu0
        %1864 = vrot.lane.b32.xlu0 %v1636, 32
        %v1865 = vpop.permute.xlu0 %1864
        %1868 = vrot.lane.b32.xlu0 %v1747, 64
        %v1869 = vpop.permute.xlu0 %1868
        %1872 = vrot.lane.b32.xlu0 %v1858, 96
        %v1873 = vpop.permute.xlu0 %1872
        %v1875 = vsel %vm691, %v1522, %v1865
        %v1876 = vsel %vm1152, %v1875, %v1869
        %v1877 = vsel %vm1154, %v1876, %v1873
        %v1878 = vpack.c.bf16 %v1877, %v1877
        %v1879 = vpack.c.bf16 %v1404, %v1403
        %v1880 = vpack.c.bf16 %v1406, %v1405
        %v1881 = vpack.c.bf16 %v1408, %v1407
        %v1882 = vpack.c.bf16 %v1410, %v1409
        %v1883 = vpack.c.bf16 %v1412, %v1411
        %v1884 = vpack.c.bf16 %v1414, %v1413
        %v1885 = vpack.c.bf16 %v1416, %v1415
        %v1886 = vpack.c.bf16 %v1418, %v1417
        %v1887 = vlaneseq
        %v1888 = vshrl.u32 %v1887, 7
        %v1889 = vsub.s32 2, %v1888
        %v1890 = vrot.slane %v494, %v1889
        %1891 = vmatprep.subr.bf16.mxu0 0
        %1892 = vmatpush1.bf16.msra.mxu0 %v1886
        %1893 = vmatprep.subr.bf16.mxu0 0
        %1894 = vmatpush1.bf16.msra.mxu0 %v1885
        %1895 = vmatprep.subr.bf16.mxu0 0
        %1896 = vmatpush1.bf16.msra.mxu0 %v1884
        %1897 = vmatprep.subr.bf16.mxu0 0
        %1898 = vmatpush1.bf16.msra.mxu0 %v1883
        %1899 = vmatprep.subr.bf16.mxu0 0
        %1900 = vmatpush1.bf16.msra.mxu0 %v1882
        %1901 = vmatprep.subr.bf16.mxu0 0
        %1902 = vmatpush1.bf16.msra.mxu0 %v1881
        %1903 = vmatprep.subr.bf16.mxu0 0
        %1904 = vmatpush1.bf16.msra.mxu0 %v1880
        %1905 = vmatprep.subr.bf16.mxu0 0
        %1906 = vmatpush1.bf16.msra.mxu0 %v1879
        %1907 = vmatprep.subr.bf16.mxu0 0
        %1908 = vmatpush2.bf16.msra.mxu0 0
        %1909 = vmatprep.subr.bf16.mxu0 0
        %1910 = vmatpush2.bf16.msra.mxu0 0
        %1911 = vmatprep.subr.bf16.mxu0 0
        %1912 = vmatpush2.bf16.msra.mxu0 0
        %1913 = vmatprep.subr.bf16.mxu0 0
        %1914 = vmatpush2.bf16.msra.mxu0 0
        %1915 = vmatprep.subr.bf16.mxu0 0
        %1916 = vmatpush2.bf16.msra.mxu0 0
        %1917 = vmatprep.subr.bf16.mxu0 0
        %1918 = vmatpush2.bf16.msra.mxu0 0
        %1919 = vmatprep.subr.bf16.mxu0 0
        %1920 = vmatpush2.bf16.msra.mxu0 0
        %1921 = vmatprep.subr.bf16.mxu0 0
        %1922 = vmatpush2.bf16.msra.mxu0 0
        %1923 = vmatprep.mubr.bf16.mxu0 0
        %1924 = vmatmul.mubr.bf16.gmra.mxu0 %v1878
        %v1925 = vpop.f32.mrf.mxu0
        %v1926 = vadd.f32 %v1890, %v1925
        %v1927 = vpop.f32.mrf.mxu0
        %v1928 = vpop.f32.mrf.mxu0
        %v1929 = vpop.f32.mrf.mxu0
        %1930 = vdwg.mxu0
        %v1931 = vadd.f32 %v1231, %v1926
        %1932 = vadd.xlane.f32.xlu0 %v1931
        %v1933 = vpop.xlane.xlu0 %1932
        %v1934 = vmul.f32 %v1933, %v1212
        %v1935 = vsub.f32 %v1931, %v1934
        %v1936 = vmul.f32 %v1935, %v1935
        %1937 = vadd.xlane.f32.xlu0 %v1936
        %v1938 = vpop.xlane.xlu0 %1937
        %v1939 = vmul.f32 %v1938, %v1212
        %v1940 = vadd.f32 %v1939, 1e-05
        %v1941 = vrsqrt.pop %v1940
        %v1942 = vmul.f32 %v1935, %v1941
        %v1943 = vlaneseq
        %v1944 = vshrl.u32 %v1943, 7
        %v1945 = vsub.s32 6, %v1944
        %v1946 = vrot.slane %v494, %v1945
        %v1947 = vmul.f32 %v1942, %v1946
        %v1948 = vlaneseq
        %v1949 = vshrl.u32 %v1948, 7
        %v1950 = vsub.s32 7, %v1949
        %v1951 = vrot.slane %v494, %v1950
        %v1952 = vadd.f32 %v1947, %v1951
        %v1953 = vld [vmem:[%s9] sm:$0xff]
        %v1954 = vld [vmem:[%s9 + $0x8] sm:$0xff]
        %v1955 = vld [vmem:[%s9 + $0x10] sm:$0xff]
        %v1956 = vld [vmem:[%s9 + $0x18] sm:$0xff]
        %v1957 = vld [vmem:[%s9 + $0x20] sm:$0xff]
        %v1958 = vld [vmem:[%s9 + $0x28] sm:$0xff]
        %v1959 = vld [vmem:[%s9 + $0x30] sm:$0xff]
        %v1960 = vld [vmem:[%s9 + $0x38] sm:$0xff]
        %v1961 = vld [vmem:[%s9 + $0x40] sm:$0xff]
        %v1962 = vld [vmem:[%s9 + $0x48] sm:$0xff]
        %v1963 = vld [vmem:[%s9 + $0x50] sm:$0xff]
        %v1964 = vld [vmem:[%s9 + $0x58] sm:$0xff]
        %v1965 = vld [vmem:[%s9 + $0x60] sm:$0xff]
        %v1966 = vld [vmem:[%s9 + $0x68] sm:$0xff]
        %v1967 = vld [vmem:[%s9 + $0x70] sm:$0xff]
        %v1968 = vld [vmem:[%s9 + $0x78] sm:$0xff]
        %v1969 = vld [vmem:[#allocation6] sm:$0x1]
        %v1970 = vld [vmem:[%s11] sm:$0xff]
        %v1971 = vld [vmem:[%s11 + $0x8] sm:$0xff]
        %v1972 = vld [vmem:[%s11 + $0x10] sm:$0xff]
        %v1973 = vld [vmem:[%s11 + $0x18] sm:$0xff]
        %v1974 = vld [vmem:[%s11 + $0x20] sm:$0xff]
        %v1975 = vld [vmem:[%s11 + $0x28] sm:$0xff]
        %v1976 = vld [vmem:[%s11 + $0x30] sm:$0xff]
        %v1977 = vld [vmem:[%s11 + $0x38] sm:$0xff]
        %v1978 = vld [vmem:[%s11 + $0x40] sm:$0xff]
        %v1979 = vld [vmem:[%s11 + $0x48] sm:$0xff]
        %v1980 = vld [vmem:[%s11 + $0x50] sm:$0xff]
        %v1981 = vld [vmem:[%s11 + $0x58] sm:$0xff]
        %v1982 = vld [vmem:[%s11 + $0x60] sm:$0xff]
        %v1983 = vld [vmem:[%s11 + $0x68] sm:$0xff]
        %v1984 = vld [vmem:[%s11 + $0x70] sm:$0xff]
        %v1985 = vld [vmem:[%s11 + $0x78] sm:$0xff]
        %v1986 = vpack.c.bf16 %v1952, %v1952
        %v1987 = vpack.c.bf16 %v1954, %v1953
        %v1988 = vpack.c.bf16 %v1956, %v1955
        %v1989 = vpack.c.bf16 %v1958, %v1957
        %v1990 = vpack.c.bf16 %v1960, %v1959
        %v1991 = vpack.c.bf16 %v1962, %v1961
        %v1992 = vpack.c.bf16 %v1964, %v1963
        %v1993 = vpack.c.bf16 %v1966, %v1965
        %v1994 = vpack.c.bf16 %v1968, %v1967
        %v1996 = vlaneseq
        %v1997 = vshrl.u32 %v1996, 7
        %v1998 = vsub.s32 0, %v1997
        %v1999 = vrot.slane %v1969, %v1998
        %2001 = vmatprep.subr.bf16.mxu0 0
        %2002 = vmatpush1.bf16.msra.mxu0 %v1994
        %2003 = vmatprep.subr.bf16.mxu0 0
        %2004 = vmatpush1.bf16.msra.mxu0 %v1993
        %2005 = vmatprep.subr.bf16.mxu0 0
        %2006 = vmatpush1.bf16.msra.mxu0 %v1992
        %2007 = vmatprep.subr.bf16.mxu0 0
        %2008 = vmatpush1.bf16.msra.mxu0 %v1991
        %2009 = vmatprep.subr.bf16.mxu0 0
        %2010 = vmatpush1.bf16.msra.mxu0 %v1990
        %2011 = vmatprep.subr.bf16.mxu0 0
        %2012 = vmatpush1.bf16.msra.mxu0 %v1989
        %2013 = vmatprep.subr.bf16.mxu0 0
        %2014 = vmatpush1.bf16.msra.mxu0 %v1988
        %2015 = vmatprep.subr.bf16.mxu0 0
        %2016 = vmatpush1.bf16.msra.mxu0 %v1987
        %2017 = vmatprep.subr.bf16.mxu0 0
        %2018 = vmatpush2.bf16.msra.mxu0 0
        %2019 = vmatprep.subr.bf16.mxu0 0
        %2020 = vmatpush2.bf16.msra.mxu0 0
        %2021 = vmatprep.subr.bf16.mxu0 0
        %2022 = vmatpush2.bf16.msra.mxu0 0
        %2023 = vmatprep.subr.bf16.mxu0 0
        %2024 = vmatpush2.bf16.msra.mxu0 0
        %2025 = vmatprep.subr.bf16.mxu0 0
        %2026 = vmatpush2.bf16.msra.mxu0 0
        %2027 = vmatprep.subr.bf16.mxu0 0
        %2028 = vmatpush2.bf16.msra.mxu0 0
        %2029 = vmatprep.subr.bf16.mxu0 0
        %2030 = vmatpush2.bf16.msra.mxu0 0
        %2031 = vmatprep.subr.bf16.mxu0 0
        %2032 = vmatpush2.bf16.msra.mxu0 0
        %2033 = vmatprep.mubr.bf16.mxu0 0
        %2034 = vmatmul.mubr.bf16.gmra.mxu0 %v1986
        %v2035 = vpop.f32.mrf.mxu0
        %v2036 = vadd.f32 %v1999, %v2035
        %v2037 = vpop.f32.mrf.mxu0
        %v2038 = vpop.f32.mrf.mxu0
        %v2039 = vpop.f32.mrf.mxu0
        %2040 = vdwg.mxu0
        %v2041 = vmax.f32 %v2036, 0.0
        %v2042 = vpack.c.bf16 %v2041, %v2041
        %v2043 = vpack.c.bf16 %v1971, %v1970
        %v2044 = vpack.c.bf16 %v1973, %v1972
        %v2045 = vpack.c.bf16 %v1975, %v1974
        %v2046 = vpack.c.bf16 %v1977, %v1976
        %v2047 = vpack.c.bf16 %v1979, %v1978
        %v2048 = vpack.c.bf16 %v1981, %v1980
        %v2049 = vpack.c.bf16 %v1983, %v1982
        %v2050 = vpack.c.bf16 %v1985, %v1984
        %v2051 = vlaneseq
        %v2052 = vshrl.u32 %v2051, 7
        %v2053 = vsub.s32 3, %v2052
        %v2054 = vrot.slane %v494, %v2053
        %2055 = vmatprep.subr.bf16.mxu0 0
        %2056 = vmatpush1.bf16.msra.mxu0 %v2050
        %2057 = vmatprep.subr.bf16.mxu0 0
        %2058 = vmatpush1.bf16.msra.mxu0 %v2049
        %2059 = vmatprep.subr.bf16.mxu0 0
        %2060 = vmatpush1.bf16.msra.mxu0 %v2048
        %2061 = vmatprep.subr.bf16.mxu0 0
        %2062 = vmatpush1.bf16.msra.mxu0 %v2047
        %2063 = vmatprep.subr.bf16.mxu0 0
        %2064 = vmatpush1.bf16.msra.mxu0 %v2046
        %2065 = vmatprep.subr.bf16.mxu0 0
        %2066 = vmatpush1.bf16.msra.mxu0 %v2045
        %2067 = vmatprep.subr.bf16.mxu0 0
        %2068 = vmatpush1.bf16.msra.mxu0 %v2044
        %2069 = vmatprep.subr.bf16.mxu0 0
        %2070 = vmatpush1.bf16.msra.mxu0 %v2043
        %2071 = vmatprep.subr.bf16.mxu0 0
        %2072 = vmatpush2.bf16.msra.mxu0 0
        %2073 = vmatprep.subr.bf16.mxu0 0
        %2074 = vmatpush2.bf16.msra.mxu0 0
        %2075 = vmatprep.subr.bf16.mxu0 0
        %2076 = vmatpush2.bf16.msra.mxu0 0
        %2077 = vmatprep.subr.bf16.mxu0 0
        %2078 = vmatpush2.bf16.msra.mxu0 0
        %2079 = vmatprep.subr.bf16.mxu0 0
        %2080 = vmatpush2.bf16.msra.mxu0 0
        %2081 = vmatprep.subr.bf16.mxu0 0
        %2082 = vmatpush2.bf16.msra.mxu0 0
        %2083 = vmatprep.subr.bf16.mxu0 0
        %2084 = vmatpush2.bf16.msra.mxu0 0
        %2085 = vmatprep.subr.bf16.mxu0 0
        %2086 = vmatpush2.bf16.msra.mxu0 0
        %2087 = vmatprep.mubr.bf16.mxu0 0
        %2088 = vmatmul.mubr.bf16.gmra.mxu0 %v2042
        %v2089 = vpop.f32.mrf.mxu0
        %v2090 = vadd.f32 %v2054, %v2089
        %v2091 = vpop.f32.mrf.mxu0
        %v2092 = vpop.f32.mrf.mxu0
        %v2093 = vpop.f32.mrf.mxu0
        %2094 = vdwg.mxu0
        %v2095 = vadd.f32 %v1952, %v2090
        %2096 = vadd.xlane.f32.xlu0 %v2095
        %v2097 = vpop.xlane.xlu0 %2096
        %v2098 = vmul.f32 %v2097, %v1212
        %v2099 = vsub.f32 %v2095, %v2098
        %v2100 = vmul.f32 %v2099, %v2099
        %2101 = vadd.xlane.f32.xlu0 %v2100
        %v2102 = vpop.xlane.xlu0 %2101
        %v2103 = vmul.f32 %v2102, %v1212
        %v2104 = vadd.f32 %v2103, 1e-05
        %v2105 = vrsqrt.pop %v2104
        %v2106 = vmul.f32 %v2099, %v2105
        %v2107 = vlaneseq
        %v2108 = vshrl.u32 %v2107, 7
        %v2109 = vsub.s32 0, %v2108
        %v2110 = vrot.slane %v495, %v2109
        %v2111 = vmul.f32 %v2106, %v2110
        %v2112 = vlaneseq
        %v2113 = vshrl.u32 %v2112, 7
        %v2114 = vsub.s32 1, %v2113
        %v2115 = vrot.slane %v495, %v2114
        %v2116 = vadd.f32 %v2111, %v2115
        %2117 = vst [vmem:[%s490] sm:$0xff] %v2116
        %p2118 = scmp.lt.s32.totalorder %s26, 1
        %s2119 = scalar_select %p2118, %s26, 1
        %s2120 = smul.addr %s2119, 8
        %s2121 = scalar_lea.vmem %s13, %s2120
        // Predicated region
        $region85: #{transformer_forward.7} parent=71 // pred_check
          %p2122 = pneg %p327
        $region86: #{transformer_forward.7} parent=71 // pred_check_branch
          %2124 = sbr.rel (%p2122) target = $region88
        $region87: #{transformer_forward.7} parent=71 // pred_region
          _
        $region88: #{transformer_forward.7} parent=71 // pred_fallthru
          _
      $region72: #{transformer_forward.7} parent=5 // pred_fallthru
        _
      %p2125 = scmp.le.s32.totalorder 2, %s21
      // Predicated region
      $region89: #{transformer_forward.7} parent=5 // pred_check
        %p2126 = pneg %p2125
      $region90: #{transformer_forward.7} parent=5 // pred_check_branch
        %2128 = sbr.rel (%p2126) target = $region92
      $region91: #{transformer_forward.7} parent=5 // pred_region
        %s2129 = ssub.s32 %s21, 2
        // Predicated region
        $region93: #{transformer_forward.7} parent=91 // pred_check
          %p2130 = pneg %p333
        $region94: #{transformer_forward.7} parent=91 // pred_check_branch
          %2132 = sbr.rel (%p2130) target = $region96
        $region95: #{transformer_forward.7} parent=91 // pred_region
          %p2133 = scmp.lt.s32.totalorder %s27, 1
          %s2134 = scalar_select %p2133, %s27, 1
          %s2135 = smul.addr %s2134, 8
          %s2136 = scalar_lea.vmem %s13, %s2135
        $region96: #{transformer_forward.7} parent=91 // pred_fallthru
          _
      $region92: #{transformer_forward.7} parent=5 // pred_fallthru
        _
    $region6: #{transformer_forward.7} parent=1 // loop_footer
      %s25 = sadd.s32 1, %s21
    $region7: #{transformer_forward.7} parent=1 // loop_footer_branch
      %20 = sbr.rel target = $region3
    $region8: #{transformer_forward.7} parent=1 // loop_exit
      _
    %2137 = vsyncpa [#allocation3], 1
    %s2138 = scalar_lea.sflag [#allocation3], 1
    %2139 = vsyncpa %s2138, 1
    %2140 = vsyncpa [#allocation5], 1

// kernel: transformer_forward.8
$region0: #{transformer_forward.8}
  #allocation0 [shape = 'u32[]', space=smem, size = 0x4, offset = 0x4, fixed_abs, tag = 'smem constant byte address 0x4 - core index']
  #allocation1 [shape = 'u32[144,128]{1,0:T(1,128)}', space=vmem, size = 0x12000, scoped, tag = 'internal scratch']
  %s0 = inlined_call_operand.vmem [shape: f32[2,8,128], index: 0, kind: input, shape index: {}]
  %s1 = inlined_call_operand.vmem [shape: f32[2,8,128], index: 1, kind: input, shape index: {}]
  %s2 = inlined_call_operand.vmem [shape: f32[128,384], index: 2, kind: input, shape index: {}]
  %s3 = inlined_call_operand.vmem [shape: f32[1,384], index: 3, kind: input, shape index: {}]
  %s4 = inlined_call_operand.vmem [shape: f32[128,128], index: 4, kind: input, shape index: {}]
  %s5 = inlined_call_operand.vmem [shape: f32[128,128], index: 5, kind: input, shape index: {}]
  %s6 = inlined_call_operand.vmem [shape: f32[128,256], index: 6, kind: input, shape index: {}]
  %s7 = inlined_call_operand.vmem [shape: f32[1,256], index: 7, kind: input, shape index: {}]
  %s8 = inlined_call_operand.vmem [shape: f32[128,128], index: 8, kind: input, shape index: {}]
  %s9 = inlined_call_operand.vmem [shape: f32[128,128], index: 9, kind: input, shape index: {}]
  %s10 = inlined_call_operand.vmem [shape: f32[1,128], index: 10, kind: input, shape index: {}]
  %s11 = inlined_call_operand.vmem [shape: f32[128,128], index: 11, kind: input, shape index: {}]
  %s12 = inlined_call_operand.vmem [shape: f32[10,128], index: 12, kind: input, shape index: {}]
  %s13 = inlined_call_operand.vmem [shape: f32[2,8,128], index: 13, kind: output, shape index: {}]
  %s14 = sld [smem:[#allocation0]]
  $region85: #{transformer_forward.8} parent=0
    _
  %s16 = ssub.s32 1, %s14
  %s17 = scalar_select 0, %s16, %s14
  loop: start=0, step=1, limit=4
  $region2: #{transformer_forward.8} parent=0 // loop_pre_header
    _
  $region3: #{transformer_forward.8} parent=0 // loop_header
    %s19 = sphi 0, %s23
    %p20 = scmp.ge.s32.totalorder %s19, 4
    %s29 = sphi 0, %s31
    %s32 = sphi 0, %s29
    %s33 = sphi 0, %s32
    %s49 = sphi 0, %s33
    %s55 = sphi 0, %s57
    %s58 = sphi 0, %s55
    %s59 = sphi 0, %s58
    %s75 = sphi 0, %s59
    %s79 = sphi 0, %s79
    %s81 = sphi 0, %s79
    %s82 = sphi 0, %s81
    %s96 = sphi 0, %s82
    %s100 = sphi 0, %s100
    %s102 = sphi 0, %s100
    %s103 = sphi 0, %s102
    %s117 = sphi 0, %s103
    %s121 = sphi 0, %s121
    %s123 = sphi 0, %s121
    %s124 = sphi 0, %s123
    %s138 = sphi 0, %s124
    %s142 = sphi 0, %s142
    %s144 = sphi 0, %s142
    %s145 = sphi 0, %s144
    %s159 = sphi 0, %s145
    %s163 = sphi 0, %s163
    %s165 = sphi 0, %s163
    %s166 = sphi 0, %s165
    %s180 = sphi 0, %s166
    %s184 = sphi 0, %s184
    %s186 = sphi 0, %s184
    %s187 = sphi 0, %s186
    %s201 = sphi 0, %s187
    %s205 = sphi 0, %s205
    %s207 = sphi 0, %s205
    %s208 = sphi 0, %s207
    %s222 = sphi 0, %s208
    %s226 = sphi 0, %s226
    %s228 = sphi 0, %s226
    %s229 = sphi 0, %s228
    %s243 = sphi 0, %s229
    %s247 = sphi 0, %s247
    %s249 = sphi 0, %s247
    %s250 = sphi 0, %s249
    %s264 = sphi 0, %s250
    %s268 = sphi 0, %s268
    %s270 = sphi 0, %s268
    %s271 = sphi 0, %s270
    %s285 = sphi 0, %s271
    %s289 = sphi 0, %s289
    %s291 = sphi 0, %s289
    %s292 = sphi 0, %s291
    %s306 = sphi 0, %s292
    %s312 = sphi 0, %s314
    %s315 = sphi 0, %s312
    %s316 = sphi 0, %s315
    %s332 = sphi 0, %s316
  $region4: #{transformer_forward.8} parent=0 // loop_header_branch
    %22 = sbr.rel (%p20) target = $region8
  $region5: #{transformer_forward.8} parent=0 // loop_body
    %s24 = ssub.s32 %s19, 1
    %s25 = ssub.s32 %s19, 2
    %s26 = sadd.s32 %s19, 1
    %s27 = ssub.s32 %s19, %s26
    %p28 = scmp.eq.s32.totalorder %s27, 0
    %s30 = sadd.s32 %s29, 1
    %s31 = scalar_select %p28, %s29, %s30
    %p34 = pneg %p28
    %p35 = scmp.eq.s32.totalorder %s19, 1
    %p36 = por %p34, %p35
    %p37 = scmp.ne.s32.totalorder %s29, %s32
    %p38 = scmp.eq.s32.totalorder %s19, 0
    %p39 = por %p37, %p38
    %p40 = scmp.ne.s32.totalorder %s29, %s32
    %p41 = scmp.eq.s32.totalorder %s24, 1
    %p42 = por %p40, %p41
    %p43 = scmp.ne.s32.totalorder %s32, %s33
    %p44 = scmp.eq.s32.totalorder %s24, 0
    %p45 = por %p43, %p44
    %p46 = scmp.ne.s32.totalorder %s32, %s33
    %p47 = scmp.eq.s32.totalorder %s25, 1
    %p48 = por %p46, %p47
    %p50 = scmp.ne.s32.totalorder %s33, %s49
    %p51 = scmp.eq.s32.totalorder %s25, 0
    %p52 = por %p50, %p51
    %s53 = ssub.s32 %s19, %s26
    %p54 = scmp.eq.s32.totalorder %s53, 0
    %s56 = sadd.s32 %s55, 1
    %s57 = scalar_select %p54, %s55, %s56
    %p60 = pneg %p54
    %p61 = scmp.eq.s32.totalorder %s19, 1
    %p62 = por %p60, %p61
    %p63 = scmp.ne.s32.totalorder %s55, %s58
    %p64 = scmp.eq.s32.totalorder %s19, 0
    %p65 = por %p63, %p64
    %p66 = scmp.ne.s32.totalorder %s55, %s58
    %p67 = scmp.eq.s32.totalorder %s24, 1
    %p68 = por %p66, %p67
    %p69 = scmp.ne.s32.totalorder %s58, %s59
    %p70 = scmp.eq.s32.totalorder %s24, 0
    %p71 = por %p69, %p70
    %p72 = scmp.ne.s32.totalorder %s58, %s59
    %p73 = scmp.eq.s32.totalorder %s25, 1
    %p74 = por %p72, %p73
    %p76 = scmp.ne.s32.totalorder %s59, %s75
    %p77 = scmp.eq.s32.totalorder %s25, 0
    %p78 = por %p76, %p77
    %s80 = sadd.s32 %s79, 1
    %p83 = scmp.eq.s32.totalorder %s19, 1
    %p84 = scmp.ne.s32.totalorder %s79, %s81
    %p85 = scmp.eq.s32.totalorder %s19, 0
    %p86 = por %p84, %p85
    %p87 = scmp.ne.s32.totalorder %s79, %s81
    %p88 = scmp.eq.s32.totalorder %s24, 1
    %p89 = por %p87, %p88
    %p90 = scmp.ne.s32.totalorder %s81, %s82
    %p91 = scmp.eq.s32.totalorder %s24, 0
    %p92 = por %p90, %p91
    %p93 = scmp.ne.s32.totalorder %s81, %s82
    %p94 = scmp.eq.s32.totalorder %s25, 1
    %p95 = por %p93, %p94
    %p97 = scmp.ne.s32.totalorder %s82, %s96
    %p98 = scmp.eq.s32.totalorder %s25, 0
    %p99 = por %p97, %p98
    %s101 = sadd.s32 %s100, 1
    %p104 = scmp.eq.s32.totalorder %s19, 1
    %p105 = scmp.ne.s32.totalorder %s100, %s102
    %p106 = scmp.eq.s32.totalorder %s19, 0
    %p107 = por %p105, %p106
    %p108 = scmp.ne.s32.totalorder %s100, %s102
    %p109 = scmp.eq.s32.totalorder %s24, 1
    %p110 = por %p108, %p109
    %p111 = scmp.ne.s32.totalorder %s102, %s103
    %p112 = scmp.eq.s32.totalorder %s24, 0
    %p113 = por %p111, %p112
    %p114 = scmp.ne.s32.totalorder %s102, %s103
    %p115 = scmp.eq.s32.totalorder %s25, 1
    %p116 = por %p114, %p115
    %p118 = scmp.ne.s32.totalorder %s103, %s117
    %p119 = scmp.eq.s32.totalorder %s25, 0
    %p120 = por %p118, %p119
    %s122 = sadd.s32 %s121, 1
    %p125 = scmp.eq.s32.totalorder %s19, 1
    %p126 = scmp.ne.s32.totalorder %s121, %s123
    %p127 = scmp.eq.s32.totalorder %s19, 0
    %p128 = por %p126, %p127
    %p129 = scmp.ne.s32.totalorder %s121, %s123
    %p130 = scmp.eq.s32.totalorder %s24, 1
    %p131 = por %p129, %p130
    %p132 = scmp.ne.s32.totalorder %s123, %s124
    %p133 = scmp.eq.s32.totalorder %s24, 0
    %p134 = por %p132, %p133
    %p135 = scmp.ne.s32.totalorder %s123, %s124
    %p136 = scmp.eq.s32.totalorder %s25, 1
    %p137 = por %p135, %p136
    %p139 = scmp.ne.s32.totalorder %s124, %s138
    %p140 = scmp.eq.s32.totalorder %s25, 0
    %p141 = por %p139, %p140
    %s143 = sadd.s32 %s142, 1
    %p146 = scmp.eq.s32.totalorder %s19, 1
    %p147 = scmp.ne.s32.totalorder %s142, %s144
    %p148 = scmp.eq.s32.totalorder %s19, 0
    %p149 = por %p147, %p148
    %p150 = scmp.ne.s32.totalorder %s142, %s144
    %p151 = scmp.eq.s32.totalorder %s24, 1
    %p152 = por %p150, %p151
    %p153 = scmp.ne.s32.totalorder %s144, %s145
    %p154 = scmp.eq.s32.totalorder %s24, 0
    %p155 = por %p153, %p154
    %p156 = scmp.ne.s32.totalorder %s144, %s145
    %p157 = scmp.eq.s32.totalorder %s25, 1
    %p158 = por %p156, %p157
    %p160 = scmp.ne.s32.totalorder %s145, %s159
    %p161 = scmp.eq.s32.totalorder %s25, 0
    %p162 = por %p160, %p161
    %s164 = sadd.s32 %s163, 1
    %p167 = scmp.eq.s32.totalorder %s19, 1
    %p168 = scmp.ne.s32.totalorder %s163, %s165
    %p169 = scmp.eq.s32.totalorder %s19, 0
    %p170 = por %p168, %p169
    %p171 = scmp.ne.s32.totalorder %s163, %s165
    %p172 = scmp.eq.s32.totalorder %s24, 1
    %p173 = por %p171, %p172
    %p174 = scmp.ne.s32.totalorder %s165, %s166
    %p175 = scmp.eq.s32.totalorder %s24, 0
    %p176 = por %p174, %p175
    %p177 = scmp.ne.s32.totalorder %s165, %s166
    %p178 = scmp.eq.s32.totalorder %s25, 1
    %p179 = por %p177, %p178
    %p181 = scmp.ne.s32.totalorder %s166, %s180
    %p182 = scmp.eq.s32.totalorder %s25, 0
    %p183 = por %p181, %p182
    %s185 = sadd.s32 %s184, 1
    %p188 = scmp.eq.s32.totalorder %s19, 1
    %p189 = scmp.ne.s32.totalorder %s184, %s186
    %p190 = scmp.eq.s32.totalorder %s19, 0
    %p191 = por %p189, %p190
    %p192 = scmp.ne.s32.totalorder %s184, %s186
    %p193 = scmp.eq.s32.totalorder %s24, 1
    %p194 = por %p192, %p193
    %p195 = scmp.ne.s32.totalorder %s186, %s187
    %p196 = scmp.eq.s32.totalorder %s24, 0
    %p197 = por %p195, %p196
    %p198 = scmp.ne.s32.totalorder %s186, %s187
    %p199 = scmp.eq.s32.totalorder %s25, 1
    %p200 = por %p198, %p199
    %p202 = scmp.ne.s32.totalorder %s187, %s201
    %p203 = scmp.eq.s32.totalorder %s25, 0
    %p204 = por %p202, %p203
    %s206 = sadd.s32 %s205, 1
    %p209 = scmp.eq.s32.totalorder %s19, 1
    %p210 = scmp.ne.s32.totalorder %s205, %s207
    %p211 = scmp.eq.s32.totalorder %s19, 0
    %p212 = por %p210, %p211
    %p213 = scmp.ne.s32.totalorder %s205, %s207
    %p214 = scmp.eq.s32.totalorder %s24, 1
    %p215 = por %p213, %p214
    %p216 = scmp.ne.s32.totalorder %s207, %s208
    %p217 = scmp.eq.s32.totalorder %s24, 0
    %p218 = por %p216, %p217
    %p219 = scmp.ne.s32.totalorder %s207, %s208
    %p220 = scmp.eq.s32.totalorder %s25, 1
    %p221 = por %p219, %p220
    %p223 = scmp.ne.s32.totalorder %s208, %s222
    %p224 = scmp.eq.s32.totalorder %s25, 0
    %p225 = por %p223, %p224
    %s227 = sadd.s32 %s226, 1
    %p230 = scmp.eq.s32.totalorder %s19, 1
    %p231 = scmp.ne.s32.totalorder %s226, %s228
    %p232 = scmp.eq.s32.totalorder %s19, 0
    %p233 = por %p231, %p232
    %p234 = scmp.ne.s32.totalorder %s226, %s228
    %p235 = scmp.eq.s32.totalorder %s24, 1
    %p236 = por %p234, %p235
    %p237 = scmp.ne.s32.totalorder %s228, %s229
    %p238 = scmp.eq.s32.totalorder %s24, 0
    %p239 = por %p237, %p238
    %p240 = scmp.ne.s32.totalorder %s228, %s229
    %p241 = scmp.eq.s32.totalorder %s25, 1
    %p242 = por %p240, %p241
    %p244 = scmp.ne.s32.totalorder %s229, %s243
    %p245 = scmp.eq.s32.totalorder %s25, 0
    %p246 = por %p244, %p245
    %s248 = sadd.s32 %s247, 1
    %p251 = scmp.eq.s32.totalorder %s19, 1
    %p252 = scmp.ne.s32.totalorder %s247, %s249
    %p253 = scmp.eq.s32.totalorder %s19, 0
    %p254 = por %p252, %p253
    %p255 = scmp.ne.s32.totalorder %s247, %s249
    %p256 = scmp.eq.s32.totalorder %s24, 1
    %p257 = por %p255, %p256
    %p258 = scmp.ne.s32.totalorder %s249, %s250
    %p259 = scmp.eq.s32.totalorder %s24, 0
    %p260 = por %p258, %p259
    %p261 = scmp.ne.s32.totalorder %s249, %s250
    %p262 = scmp.eq.s32.totalorder %s25, 1
    %p263 = por %p261, %p262
    %p265 = scmp.ne.s32.totalorder %s250, %s264
    %p266 = scmp.eq.s32.totalorder %s25, 0
    %p267 = por %p265, %p266
    %s269 = sadd.s32 %s268, 1
    %p272 = scmp.eq.s32.totalorder %s19, 1
    %p273 = scmp.ne.s32.totalorder %s268, %s270
    %p274 = scmp.eq.s32.totalorder %s19, 0
    %p275 = por %p273, %p274
    %p276 = scmp.ne.s32.totalorder %s268, %s270
    %p277 = scmp.eq.s32.totalorder %s24, 1
    %p278 = por %p276, %p277
    %p279 = scmp.ne.s32.totalorder %s270, %s271
    %p280 = scmp.eq.s32.totalorder %s24, 0
    %p281 = por %p279, %p280
    %p282 = scmp.ne.s32.totalorder %s270, %s271
    %p283 = scmp.eq.s32.totalorder %s25, 1
    %p284 = por %p282, %p283
    %p286 = scmp.ne.s32.totalorder %s271, %s285
    %p287 = scmp.eq.s32.totalorder %s25, 0
    %p288 = por %p286, %p287
    %s290 = sadd.s32 %s289, 1
    %p293 = scmp.eq.s32.totalorder %s19, 1
    %p294 = scmp.ne.s32.totalorder %s289, %s291
    %p295 = scmp.eq.s32.totalorder %s19, 0
    %p296 = por %p294, %p295
    %p297 = scmp.ne.s32.totalorder %s289, %s291
    %p298 = scmp.eq.s32.totalorder %s24, 1
    %p299 = por %p297, %p298
    %p300 = scmp.ne.s32.totalorder %s291, %s292
    %p301 = scmp.eq.s32.totalorder %s24, 0
    %p302 = por %p300, %p301
    %p303 = scmp.ne.s32.totalorder %s291, %s292
    %p304 = scmp.eq.s32.totalorder %s25, 1
    %p305 = por %p303, %p304
    %p307 = scmp.ne.s32.totalorder %s292, %s306
    %p308 = scmp.eq.s32.totalorder %s25, 0
    %p309 = por %p307, %p308
    %s310 = ssub.s32 %s19, %s26
    %p311 = scmp.eq.s32.totalorder %s310, 0
    %s313 = sadd.s32 %s312, 1
    %s314 = scalar_select %p311, %s312, %s313
    %p317 = pneg %p311
    %p318 = scmp.eq.s32.totalorder %s19, 1
    %p319 = por %p317, %p318
    %p320 = scmp.ne.s32.totalorder %s312, %s315
    %p321 = scmp.eq.s32.totalorder %s19, 0
    %p322 = por %p320, %p321
    %p323 = scmp.ne.s32.totalorder %s312, %s315
    %p324 = scmp.eq.s32.totalorder %s24, 1
    %p325 = por %p323, %p324
    %p326 = scmp.ne.s32.totalorder %s315, %s316
    %p327 = scmp.eq.s32.totalorder %s24, 0
    %p328 = por %p326, %p327
    %p329 = scmp.ne.s32.totalorder %s315, %s316
    %p330 = scmp.eq.s32.totalorder %s25, 1
    %p331 = por %p329, %p330
    %p333 = scmp.ne.s32.totalorder %s316, %s332
    %p334 = scmp.eq.s32.totalorder %s25, 0
    %p335 = por %p333, %p334
    %p336 = scmp.le.s32.totalorder 1, %s19
    %p337 = scmp.lt.s32.totalorder %s19, 3
    %p338 = pnand %p336, %p337
    %p339 = pneg %p338
    // Predicated region
    $region9: #{transformer_forward.8} parent=5 // pred_check
      _
    $region10: #{transformer_forward.8} parent=5 // pred_check_branch
      %341 = sbr.rel (%p338) target = $region12
    $region11: #{transformer_forward.8} parent=5 // pred_region
      %s342 = ssub.s32 %s19, 1
      // Predicated region
      $region13: #{transformer_forward.8} parent=11 // pred_check
        %p343 = pneg %p92
      $region14: #{transformer_forward.8} parent=11 // pred_check_branch
        %345 = sbr.rel (%p343) target = $region16
      $region15: #{transformer_forward.8} parent=11 // pred_region
        _
      $region16: #{transformer_forward.8} parent=11 // pred_fallthru
        _
      // Predicated region
      $region17: #{transformer_forward.8} parent=11 // pred_check
        %p346 = pneg %p113
      $region18: #{transformer_forward.8} parent=11 // pred_check_branch
        %348 = sbr.rel (%p346) target = $region20
      $region19: #{transformer_forward.8} parent=11 // pred_region
        _
      $region20: #{transformer_forward.8} parent=11 // pred_fallthru
        _
      // Predicated region
      $region21: #{transformer_forward.8} parent=11 // pred_check
        %p349 = pneg %p134
      $region22: #{transformer_forward.8} parent=11 // pred_check_branch
        %351 = sbr.rel (%p349) target = $region24
      $region23: #{transformer_forward.8} parent=11 // pred_region
        _
      $region24: #{transformer_forward.8} parent=11 // pred_fallthru
        _
      // Predicated region
      $region25: #{transformer_forward.8} parent=11 // pred_check
        %p352 = pneg %p155
      $region26: #{transformer_forward.8} parent=11 // pred_check_branch
        %354 = sbr.rel (%p352) target = $region28
      $region27: #{transformer_forward.8} parent=11 // pred_region
        _
      $region28: #{transformer_forward.8} parent=11 // pred_fallthru
        _
      // Predicated region
      $region29: #{transformer_forward.8} parent=11 // pred_check
        %p355 = pneg %p176
      $region30: #{transformer_forward.8} parent=11 // pred_check_branch
        %357 = sbr.rel (%p355) target = $region32
      $region31: #{transformer_forward.8} parent=11 // pred_region
        _
      $region32: #{transformer_forward.8} parent=11 // pred_fallthru
        _
      // Predicated region
      $region33: #{transformer_forward.8} parent=11 // pred_check
        %p358 = pneg %p197
      $region34: #{transformer_forward.8} parent=11 // pred_check_branch
        %360 = sbr.rel (%p358) target = $region36
      $region35: #{transformer_forward.8} parent=11 // pred_region
        _
      $region36: #{transformer_forward.8} parent=11 // pred_fallthru
        _
      // Predicated region
      $region37: #{transformer_forward.8} parent=11 // pred_check
        %p361 = pneg %p218
      $region38: #{transformer_forward.8} parent=11 // pred_check_branch
        %363 = sbr.rel (%p361) target = $region40
      $region39: #{transformer_forward.8} parent=11 // pred_region
        _
      $region40: #{transformer_forward.8} parent=11 // pred_fallthru
        _
      // Predicated region
      $region41: #{transformer_forward.8} parent=11 // pred_check
        %p364 = pneg %p239
      $region42: #{transformer_forward.8} parent=11 // pred_check_branch
        %366 = sbr.rel (%p364) target = $region44
      $region43: #{transformer_forward.8} parent=11 // pred_region
        _
      $region44: #{transformer_forward.8} parent=11 // pred_fallthru
        _
      // Predicated region
      $region45: #{transformer_forward.8} parent=11 // pred_check
        %p367 = pneg %p260
      $region46: #{transformer_forward.8} parent=11 // pred_check_branch
        %369 = sbr.rel (%p367) target = $region48
      $region47: #{transformer_forward.8} parent=11 // pred_region
        _
      $region48: #{transformer_forward.8} parent=11 // pred_fallthru
        _
      // Predicated region
      $region49: #{transformer_forward.8} parent=11 // pred_check
        %p370 = pneg %p281
      $region50: #{transformer_forward.8} parent=11 // pred_check_branch
        %372 = sbr.rel (%p370) target = $region52
      $region51: #{transformer_forward.8} parent=11 // pred_region
        _
      $region52: #{transformer_forward.8} parent=11 // pred_fallthru
        _
      // Predicated region
      $region53: #{transformer_forward.8} parent=11 // pred_check
        %p373 = pneg %p302
      $region54: #{transformer_forward.8} parent=11 // pred_check_branch
        %375 = sbr.rel (%p373) target = $region56
      $region55: #{transformer_forward.8} parent=11 // pred_region
        _
      $region56: #{transformer_forward.8} parent=11 // pred_fallthru
        _
    $region12: #{transformer_forward.8} parent=5 // pred_fallthru
      _
    %p376 = scmp.lt.s32.totalorder %s19, 2
    // Predicated region
    $region57: #{transformer_forward.8} parent=5 // pred_check
      %p377 = pneg %p376
    $region58: #{transformer_forward.8} parent=5 // pred_check_branch
      %379 = sbr.rel (%p377) target = $region60
    $region59: #{transformer_forward.8} parent=5 // pred_region
      // Predicated region
      $region61: #{transformer_forward.8} parent=59 // pred_check
        %p380 = pneg %p39
      $region62: #{transformer_forward.8} parent=59 // pred_check_branch
        %382 = sbr.rel (%p380) target = $region64
      $region63: #{transformer_forward.8} parent=59 // pred_region
        %p383 = scmp.lt.s32.totalorder %s19, 1
        %s384 = scalar_select %p383, %s19, 1
        %s385 = smul.addr %s384, 8
        %s386 = scalar_lea.vmem %s0, %s385
      $region64: #{transformer_forward.8} parent=59 // pred_fallthru
        _
      // Predicated region
      $region65: #{transformer_forward.8} parent=59 // pred_check
        %p387 = pneg %p65
      $region66: #{transformer_forward.8} parent=59 // pred_check_branch
        %389 = sbr.rel (%p387) target = $region68
      $region67: #{transformer_forward.8} parent=59 // pred_region
        %p390 = scmp.lt.s32.totalorder %s19, 1
        %s391 = scalar_select %p390, %s19, 1
        %s392 = smul.addr %s391, 8
        %s393 = scalar_lea.vmem %s1, %s392
      $region68: #{transformer_forward.8} parent=59 // pred_fallthru
        _
    $region60: #{transformer_forward.8} parent=5 // pred_fallthru
      _
    %p394 = scmp.le.s32.totalorder 1, %s19
    %p395 = scmp.lt.s32.totalorder %s19, 3
    %p396 = pnand %p394, %p395
    %p397 = pneg %p396
    // Predicated region
    $region69: #{transformer_forward.8} parent=5 // pred_check
      _
    $region70: #{transformer_forward.8} parent=5 // pred_check_branch
      %399 = sbr.rel (%p396) target = $region72
    $region71: #{transformer_forward.8} parent=5 // pred_region
      %s400 = ssub.s32 %s19, 1
      %p401 = scmp.lt.s32.totalorder %s24, 1
      %s402 = scalar_select %p401, %s24, 1
      %s403 = smul.addr %s402, 8
      %s404 = scalar_lea.vmem %s0, %s403
      %p405 = pneg %p45
      %p406 = pneg %p42
      %p407 = scmp.lt.s32.totalorder %s24, 1
      %s408 = scalar_select %p407, %s24, 1
      %s409 = smul.addr %s408, 8
      %s410 = scalar_lea.vmem %s1, %s409
      %p411 = pneg %p71
      %p412 = pneg %p68
      %p413 = pneg %p92
      %p414 = pneg %p89
      %p415 = pneg %p113
      %p416 = pneg %p110
      %p417 = pneg %p134
      %p418 = pneg %p131
      %p419 = pneg %p155
      %p420 = pneg %p152
      %p421 = pneg %p176
      %p422 = pneg %p173
      %p423 = pneg %p197
      %p424 = pneg %p194
      %p425 = pneg %p218
      %p426 = pneg %p215
      %p427 = pneg %p239
      %p428 = pneg %p236
      %p429 = pneg %p260
      %p430 = pneg %p257
      %p431 = pneg %p281
      %p432 = pneg %p278
      %p433 = pneg %p302
      %p434 = pneg %p299
      %p435 = pneg %p328
      %p436 = pneg %p325
      %p437 = scmp.lt.s32.totalorder %s24, 1
      %s438 = scalar_select %p437, %s24, 1
      %s439 = smul.addr %s438, 8
      %s440 = scalar_lea.vmem %s13, %s439
      %p441 = scmp.lt.s32.totalorder %s24, 1
      %s442 = scalar_select %p441, %s24, 1
      %s443 = smul.addr %s442, 8
      %s444 = scalar_lea.vmem %s0, %s443
      %p445 = scmp.lt.s32.totalorder %s24, 1
      %s446 = scalar_select %p445, %s24, 1
      %s447 = smul.addr %s446, 8
      %s448 = scalar_lea.vmem %s1, %s447
      %p449 = scmp.lt.s32.totalorder %s24, 1
      %s450 = scalar_select %p449, %s24, 1
      %s451 = smul.addr %s450, 8
      %s452 = scalar_lea.vmem %s13, %s451
      %v454 = vld [vmem:[%s444] sm:$0xff]
      %v455 = vld [vmem:[%s448] sm:$0xff]
      %v456 = vld [vmem:[%s12] sm:$0xff]
      %v457 = vld [vmem:[%s12 + $0x8] sm:$0x3]
      %v458 = vld [vmem:[%s2] sm:$0xff]
      %v459 = vld [vmem:[%s2 + $0x8] sm:$0xff]
      %v460 = vld [vmem:[%s2 + $0x10] sm:$0xff]
      %v461 = vld [vmem:[%s2 + $0x18] sm:$0xff]
      %v462 = vld [vmem:[%s2 + $0x20] sm:$0xff]
      %v463 = vld [vmem:[%s2 + $0x28] sm:$0xff]
      %v464 = vld [vmem:[%s2 + $0x30] sm:$0xff]
      %v465 = vld [vmem:[%s2 + $0x38] sm:$0xff]
      %v466 = vld [vmem:[%s2 + $0x40] sm:$0xff]
      %v467 = vld [vmem:[%s2 + $0x48] sm:$0xff]
      %v468 = vld [vmem:[%s2 + $0x50] sm:$0xff]
      %v469 = vld [vmem:[%s2 + $0x58] sm:$0xff]
      %v470 = vld [vmem:[%s2 + $0x60] sm:$0xff]
      %v471 = vld [vmem:[%s2 + $0x68] sm:$0xff]
      %v472 = vld [vmem:[%s2 + $0x70] sm:$0xff]
      %v473 = vld [vmem:[%s2 + $0x78] sm:$0xff]
      %v474 = vld [vmem:[%s2 + $0x80] sm:$0xff]
      %v475 = vld [vmem:[%s2 + $0x88] sm:$0xff]
      %v476 = vld [vmem:[%s2 + $0x90] sm:$0xff]
      %v477 = vld [vmem:[%s2 + $0x98] sm:$0xff]
      %v478 = vld [vmem:[%s2 + $0xa0] sm:$0xff]
      %v479 = vld [vmem:[%s2 + $0xa8] sm:$0xff]
      %v480 = vld [vmem:[%s2 + $0xb0] sm:$0xff]
      %v481 = vld [vmem:[%s2 + $0xb8] sm:$0xff]
      %v482 = vld [vmem:[%s2 + $0xc0] sm:$0xff]
      %v483 = vld [vmem:[%s2 + $0xc8] sm:$0xff]
      %v484 = vld [vmem:[%s2 + $0xd0] sm:$0xff]
      %v485 = vld [vmem:[%s2 + $0xd8] sm:$0xff]
      %v486 = vld [vmem:[%s2 + $0xe0] sm:$0xff]
      %v487 = vld [vmem:[%s2 + $0xe8] sm:$0xff]
      %v488 = vld [vmem:[%s2 + $0xf0] sm:$0xff]
      %v489 = vld [vmem:[%s2 + $0xf8] sm:$0xff]
      %v490 = vld [vmem:[%s2 + $0x100] sm:$0xff]
      %v491 = vld [vmem:[%s2 + $0x108] sm:$0xff]
      %v492 = vld [vmem:[%s2 + $0x110] sm:$0xff]
      %v493 = vld [vmem:[%s2 + $0x118] sm:$0xff]
      %v494 = vld [vmem:[%s2 + $0x120] sm:$0xff]
      %v495 = vld [vmem:[%s2 + $0x128] sm:$0xff]
      %v496 = vld [vmem:[%s2 + $0x130] sm:$0xff]
      %v497 = vld [vmem:[%s2 + $0x138] sm:$0xff]
      %v498 = vld [vmem:[%s2 + $0x140] sm:$0xff]
      %v499 = vld [vmem:[%s2 + $0x148] sm:$0xff]
      %v500 = vld [vmem:[%s2 + $0x150] sm:$0xff]
      %v501 = vld [vmem:[%s2 + $0x158] sm:$0xff]
      %v502 = vld [vmem:[%s2 + $0x160] sm:$0xff]
      %v503 = vld [vmem:[%s2 + $0x168] sm:$0xff]
      %v504 = vld [vmem:[%s2 + $0x170] sm:$0xff]
      %v505 = vld [vmem:[%s2 + $0x178] sm:$0xff]
      %v506 = vld [vmem:[%s3] sm:$0x7]
      %v507 = vld [vmem:[%s4] sm:$0xff]
      %v508 = vld [vmem:[%s4 + $0x8] sm:$0xff]
      %v509 = vld [vmem:[%s4 + $0x10] sm:$0xff]
      %v510 = vld [vmem:[%s4 + $0x18] sm:$0xff]
      %v511 = vld [vmem:[%s4 + $0x20] sm:$0xff]
      %v512 = vld [vmem:[%s4 + $0x28] sm:$0xff]
      %v513 = vld [vmem:[%s4 + $0x30] sm:$0xff]
      %v514 = vld [vmem:[%s4 + $0x38] sm:$0xff]
      %v515 = vld [vmem:[%s4 + $0x40] sm:$0xff]
      %v516 = vld [vmem:[%s4 + $0x48] sm:$0xff]
      %v517 = vld [vmem:[%s4 + $0x50] sm:$0xff]
      %v518 = vld [vmem:[%s4 + $0x58] sm:$0xff]
      %v519 = vld [vmem:[%s4 + $0x60] sm:$0xff]
      %v520 = vld [vmem:[%s4 + $0x68] sm:$0xff]
      %v521 = vld [vmem:[%s4 + $0x70] sm:$0xff]
      %v522 = vld [vmem:[%s4 + $0x78] sm:$0xff]
      %v523 = vpack.c.bf16 %v454, %v454
      %v524 = vpack.c.bf16 %v461, %v458
      %v525 = vpack.c.bf16 %v462, %v459
      %v526 = vpack.c.bf16 %v463, %v460
      %v527 = vpack.c.bf16 %v467, %v464
      %v528 = vpack.c.bf16 %v468, %v465
      %v529 = vpack.c.bf16 %v469, %v466
      %v530 = vpack.c.bf16 %v473, %v470
      %v531 = vpack.c.bf16 %v474, %v471
      %v532 = vpack.c.bf16 %v475, %v472
      %v533 = vpack.c.bf16 %v479, %v476
      %v534 = vpack.c.bf16 %v480, %v477
      %v535 = vpack.c.bf16 %v481, %v478
      %v536 = vpack.c.bf16 %v485, %v482
      %v537 = vpack.c.bf16 %v486, %v483
      %v538 = vpack.c.bf16 %v487, %v484
      %v539 = vpack.c.bf16 %v491, %v488
      %v540 = vpack.c.bf16 %v492, %v489
      %v541 = vpack.c.bf16 %v493, %v490
      %v542 = vpack.c.bf16 %v497, %v494
      %v543 = vpack.c.bf16 %v498, %v495
      %v544 = vpack.c.bf16 %v499, %v496
      %v545 = vpack.c.bf16 %v503, %v500
      %v546 = vpack.c.bf16 %v504, %v501
      %v547 = vpack.c.bf16 %v505, %v502
      %v549 = vlaneseq
      %v550 = vshrl.u32 %v549, 7
      %v551 = vsub.s32 0, %v550
      %v552 = vrot.slane %v506, %v551
      %v553 = vlaneseq
      %v554 = vshrl.u32 %v553, 7
      %v555 = vsub.s32 1, %v554
      %v556 = vrot.slane %v506, %v555
      %v557 = vlaneseq
      %v558 = vshrl.u32 %v557, 7
      %v559 = vsub.s32 2, %v558
      %v560 = vrot.slane %v506, %v559
      %564 = vmatprep.subr.bf16.mxu0 %v546
      %565 = vmatpush1.bf16.msra.mxu0 %v545
      %566 = vmatprep.subr.bf16.mxu0 %v543
      %567 = vmatpush1.bf16.msra.mxu0 %v542
      %568 = vmatprep.subr.bf16.mxu0 %v540
      %569 = vmatpush1.bf16.msra.mxu0 %v539
      %570 = vmatprep.subr.bf16.mxu0 %v537
      %571 = vmatpush1.bf16.msra.mxu0 %v536
      %572 = vmatprep.subr.bf16.mxu0 %v534
      %573 = vmatpush1.bf16.msra.mxu0 %v533
      %574 = vmatprep.subr.bf16.mxu0 %v531
      %575 = vmatpush1.bf16.msra.mxu0 %v530
      %576 = vmatprep.subr.bf16.mxu0 %v528
      %577 = vmatpush1.bf16.msra.mxu0 %v527
      %578 = vmatprep.subr.bf16.mxu0 %v525
      %579 = vmatpush1.bf16.msra.mxu0 %v524
      %580 = vmatprep.subr.bf16.mxu0 0
      %581 = vmatpush2.bf16.msra.mxu0 0
      %582 = vmatprep.subr.bf16.mxu0 0
      %583 = vmatpush2.bf16.msra.mxu0 0
      %584 = vmatprep.subr.bf16.mxu0 0
      %585 = vmatpush2.bf16.msra.mxu0 0
      %586 = vmatprep.subr.bf16.mxu0 0
      %587 = vmatpush2.bf16.msra.mxu0 0
      %588 = vmatprep.subr.bf16.mxu0 0
      %589 = vmatpush2.bf16.msra.mxu0 0
      %590 = vmatprep.subr.bf16.mxu0 0
      %591 = vmatpush2.bf16.msra.mxu0 0
      %592 = vmatprep.subr.bf16.mxu0 0
      %593 = vmatpush2.bf16.msra.mxu0 0
      %594 = vmatprep.subr.bf16.mxu0 0
      %595 = vmatpush2.bf16.msra.mxu0 0
      %596 = vmatprep.mubr.bf16.mxu0 0
      %597 = vmatmul.mubr.bf16.gmra.mxu0 %v523
      %v598 = vpop.f32.mrf.mxu0
      %v599 = vadd.f32 %v552, %v598
      %v600 = vpop.f32.mrf.mxu0
      %v601 = vadd.f32 %v556, %v600
      %v602 = vpop.f32.mrf.mxu0
      %v603 = vpop.f32.mrf.mxu0
      %604 = vdwg.mxu0
      %605 = vmatprep.subr.bf16.mxu0 0
      %606 = vmatpush1.bf16.msra.mxu0 %v547
      %607 = vmatprep.subr.bf16.mxu0 0
      %608 = vmatpush1.bf16.msra.mxu0 %v544
      %609 = vmatprep.subr.bf16.mxu0 0
      %610 = vmatpush1.bf16.msra.mxu0 %v541
      %611 = vmatprep.subr.bf16.mxu0 0
      %612 = vmatpush1.bf16.msra.mxu0 %v538
      %613 = vmatprep.subr.bf16.mxu0 0
      %614 = vmatpush1.bf16.msra.mxu0 %v535
      %615 = vmatprep.subr.bf16.mxu0 0
      %616 = vmatpush1.bf16.msra.mxu0 %v532
      %617 = vmatprep.subr.bf16.mxu0 0
      %618 = vmatpush1.bf16.msra.mxu0 %v529
      %619 = vmatprep.subr.bf16.mxu0 0
      %620 = vmatpush1.bf16.msra.mxu0 %v526
      %621 = vmatprep.subr.bf16.mxu0 0
      %622 = vmatpush2.bf16.msra.mxu0 0
      %623 = vmatprep.subr.bf16.mxu0 0
      %624 = vmatpush2.bf16.msra.mxu0 0
      %625 = vmatprep.subr.bf16.mxu0 0
      %626 = vmatpush2.bf16.msra.mxu0 0
      %627 = vmatprep.subr.bf16.mxu0 0
      %628 = vmatpush2.bf16.msra.mxu0 0
      %629 = vmatprep.subr.bf16.mxu0 0
      %630 = vmatpush2.bf16.msra.mxu0 0
      %631 = vmatprep.subr.bf16.mxu0 0
      %632 = vmatpush2.bf16.msra.mxu0 0
      %633 = vmatprep.subr.bf16.mxu0 0
      %634 = vmatpush2.bf16.msra.mxu0 0
      %635 = vmatprep.subr.bf16.mxu0 0
      %636 = vmatpush2.bf16.msra.mxu0 0
      %637 = vmatprep.mubr.bf16.mxu0 0
      %638 = vmatmul.mubr.bf16.gmra.mxu0 %v523
      %v639 = vpop.f32.mrf.mxu0
      %v640 = vadd.f32 %v560, %v639
      %v641 = vpop.f32.mrf.mxu0
      %v642 = vpop.f32.mrf.mxu0
      %v643 = vpop.f32.mrf.mxu0
      %644 = vdwg.mxu0
      %v645 = vlaneseq
      %v646 = vshrl.u32 %v645, 7
      %v647 = vlaneseq
      %v648 = vand.u32 %v647, 127
      %vm649 = vcmp.le.s32.totalorder %v648, %v646
      %v650 = vpack.c.bf16 %v599, %v599
      %v651 = vpack.c.bf16 %v601, %v601
      %v652 = vpack.c.bf16 %v640, %v640
      %vm653 = vcmask 261120
      %v655 = vsel %vm653, %v650, 0
      %v658 = vsel %vm653, %v651, 0
      %660 = vmatprep.subr.bf16.mxu0 0
      %661 = vmatpush1.bf16.xpose.msra.mxu0 0
      %662 = vmatprep.subr.bf16.mxu0 0
      %663 = vmatpush1.bf16.xpose.msra.mxu0 0
      %664 = vmatprep.subr.bf16.mxu0 0
      %665 = vmatpush1.bf16.xpose.msra.mxu0 0
      %666 = vmatprep.subr.bf16.mxu0 0
      %667 = vmatpush1.bf16.xpose.msra.mxu0 0
      %668 = vmatprep.subr.bf16.mxu0 0
      %669 = vmatpush1.bf16.xpose.msra.mxu0 0
      %670 = vmatprep.subr.bf16.mxu0 0
      %671 = vmatpush1.bf16.xpose.msra.mxu0 0
      %672 = vmatprep.subr.bf16.mxu0 0
      %673 = vmatpush1.bf16.xpose.msra.mxu0 0
      %674 = vmatprep.subr.bf16.mxu0 0
      %675 = vmatpush1.bf16.xpose.msra.mxu0 %v658
      %676 = vmatprep.subr.bf16.mxu0 0
      %677 = vmatpush2.bf16.xpose.msra.mxu0 0
      %678 = vmatprep.subr.bf16.mxu0 0
      %679 = vmatpush2.bf16.xpose.msra.mxu0 0
      %680 = vmatprep.subr.bf16.mxu0 0
      %681 = vmatpush2.bf16.xpose.msra.mxu0 0
      %682 = vmatprep.subr.bf16.mxu0 0
      %683 = vmatpush2.bf16.xpose.msra.mxu0 0
      %684 = vmatprep.subr.bf16.mxu0 0
      %685 = vmatpush2.bf16.xpose.msra.mxu0 0
      %686 = vmatprep.subr.bf16.mxu0 0
      %687 = vmatpush2.bf16.xpose.msra.mxu0 0
      %688 = vmatprep.subr.bf16.mxu0 0
      %689 = vmatpush2.bf16.xpose.msra.mxu0 0
      %690 = vmatprep.subr.bf16.mxu0 0
      %691 = vmatpush2.bf16.xpose.msra.mxu0 0
      %692 = vmatprep.mubr.bf16.mxu0 0
      %693 = vmatmul.mubr.bf16.gmra.mxu0 %v655
      %v694 = vpop.f32.mrf.mxu0
      %v695 = vadd.f32 0.0, %v694
      %v696 = vpop.f32.mrf.mxu0
      %v697 = vpop.f32.mrf.mxu0
      %v698 = vpop.f32.mrf.mxu0
      %699 = vdwg.mxu0
      %v700 = vmul.f32 %v695, 0.17677669
      %v701 = vsel %vm649, %v700, -1e+30
      %vm702 = vcmask 64512
      %v703 = vsel %vm702, %v701, -inf
      %704 = vmax.xlane.f32.xlu0 %v703
      %v705 = vpop.xlane.xlu0 %704
      %v706 = vsub.f32 %v701, %v705
      %v707 = vmul.f32 %v706, 1.442695
      %v708 = vpow.pop %v707
      %v709 = vsel %vm702, %v708, 0.0
      %710 = vadd.xlane.f32.xlu0 %v709
      %v711 = vpop.xlane.xlu0 %710
      %v712 = vrcp.pop %v711
      %v713 = vmul.f32 %v708, %v712
      %v714 = vpack.c.bf16 %v713, %v713
      %v716 = vsel %vm702, %v714, 0
      %vm718 = vcmask 1043456
      %v720 = vsel %vm718, %v652, 0
      %722 = vmatprep.subr.bf16.mxu0 0
      %723 = vmatpush1.bf16.msra.mxu0 0
      %724 = vmatprep.subr.bf16.mxu0 0
      %725 = vmatpush1.bf16.msra.mxu0 0
      %726 = vmatprep.subr.bf16.mxu0 0
      %727 = vmatpush1.bf16.msra.mxu0 0
      %728 = vmatprep.subr.bf16.mxu0 0
      %729 = vmatpush1.bf16.msra.mxu0 0
      %730 = vmatprep.subr.bf16.mxu0 0
      %731 = vmatpush1.bf16.msra.mxu0 0
      %732 = vmatprep.subr.bf16.mxu0 0
      %733 = vmatpush1.bf16.msra.mxu0 0
      %734 = vmatprep.subr.bf16.mxu0 0
      %735 = vmatpush1.bf16.msra.mxu0 0
      %736 = vmatprep.subr.bf16.mxu0 0
      %737 = vmatpush1.bf16.msra.mxu0 %v720
      %738 = vmatprep.subr.bf16.mxu0 0
      %739 = vmatpush2.bf16.msra.mxu0 0
      %740 = vmatprep.subr.bf16.mxu0 0
      %741 = vmatpush2.bf16.msra.mxu0 0
      %742 = vmatprep.subr.bf16.mxu0 0
      %743 = vmatpush2.bf16.msra.mxu0 0
      %744 = vmatprep.subr.bf16.mxu0 0
      %745 = vmatpush2.bf16.msra.mxu0 0
      %746 = vmatprep.subr.bf16.mxu0 0
      %747 = vmatpush2.bf16.msra.mxu0 0
      %748 = vmatprep.subr.bf16.mxu0 0
      %749 = vmatpush2.bf16.msra.mxu0 0
      %750 = vmatprep.subr.bf16.mxu0 0
      %751 = vmatpush2.bf16.msra.mxu0 0
      %752 = vmatprep.subr.bf16.mxu0 0
      %753 = vmatpush2.bf16.msra.mxu0 0
      %754 = vmatprep.mubr.bf16.mxu0 0
      %755 = vmatmul.mubr.bf16.gmra.mxu0 %v716
      %v756 = vpop.f32.mrf.mxu0
      %v757 = vadd.f32 0.0, %v756
      %v758 = vpop.f32.mrf.mxu0
      %v759 = vpop.f32.mrf.mxu0
      %v760 = vpop.f32.mrf.mxu0
      %761 = vdwg.mxu0
      %763 = vrot.lane.b32.xlu0 %v650, 96
      %v764 = vpop.permute.xlu0 %763
      %766 = vrot.lane.b32.xlu0 %v651, 96
      %v767 = vpop.permute.xlu0 %766
      %v769 = vsel %vm653, %v764, 0
      %v772 = vsel %vm653, %v767, 0
      %774 = vmatprep.subr.bf16.mxu0 0
      %775 = vmatpush1.bf16.xpose.msra.mxu0 0
      %776 = vmatprep.subr.bf16.mxu0 0
      %777 = vmatpush1.bf16.xpose.msra.mxu0 0
      %778 = vmatprep.subr.bf16.mxu0 0
      %779 = vmatpush1.bf16.xpose.msra.mxu0 0
      %780 = vmatprep.subr.bf16.mxu0 0
      %781 = vmatpush1.bf16.xpose.msra.mxu0 0
      %782 = vmatprep.subr.bf16.mxu0 0
      %783 = vmatpush1.bf16.xpose.msra.mxu0 0
      %784 = vmatprep.subr.bf16.mxu0 0
      %785 = vmatpush1.bf16.xpose.msra.mxu0 0
      %786 = vmatprep.subr.bf16.mxu0 0
      %787 = vmatpush1.bf16.xpose.msra.mxu0 0
      %788 = vmatprep.subr.bf16.mxu0 0
      %789 = vmatpush1.bf16.xpose.msra.mxu0 %v772
      %790 = vmatprep.subr.bf16.mxu0 0
      %791 = vmatpush2.bf16.xpose.msra.mxu0 0
      %792 = vmatprep.subr.bf16.mxu0 0
      %793 = vmatpush2.bf16.xpose.msra.mxu0 0
      %794 = vmatprep.subr.bf16.mxu0 0
      %795 = vmatpush2.bf16.xpose.msra.mxu0 0
      %796 = vmatprep.subr.bf16.mxu0 0
      %797 = vmatpush2.bf16.xpose.msra.mxu0 0
      %798 = vmatprep.subr.bf16.mxu0 0
      %799 = vmatpush2.bf16.xpose.msra.mxu0 0
      %800 = vmatprep.subr.bf16.mxu0 0
      %801 = vmatpush2.bf16.xpose.msra.mxu0 0
      %802 = vmatprep.subr.bf16.mxu0 0
      %803 = vmatpush2.bf16.xpose.msra.mxu0 0
      %804 = vmatprep.subr.bf16.mxu0 0
      %805 = vmatpush2.bf16.xpose.msra.mxu0 0
      %806 = vmatprep.mubr.bf16.mxu0 0
      %807 = vmatmul.mubr.bf16.gmra.mxu0 %v769
      %v808 = vpop.f32.mrf.mxu0
      %v809 = vadd.f32 0.0, %v808
      %v810 = vpop.f32.mrf.mxu0
      %v811 = vpop.f32.mrf.mxu0
      %v812 = vpop.f32.mrf.mxu0
      %813 = vdwg.mxu0
      %v814 = vmul.f32 %v809, 0.17677669
      %v815 = vsel %vm649, %v814, -1e+30
      %v816 = vsel %vm702, %v815, -inf
      %817 = vmax.xlane.f32.xlu0 %v816
      %v818 = vpop.xlane.xlu0 %817
      %v819 = vsub.f32 %v815, %v818
      %v820 = vmul.f32 %v819, 1.442695
      %v821 = vpow.pop %v820
      %v822 = vsel %vm702, %v821, 0.0
      %823 = vadd.xlane.f32.xlu0 %v822
      %v824 = vpop.xlane.xlu0 %823
      %v825 = vrcp.pop %v824
      %v826 = vmul.f32 %v821, %v825
      %v827 = vpack.c.bf16 %v826, %v826
      %829 = vrot.lane.b32.xlu0 %v652, 96
      %v830 = vpop.permute.xlu0 %829
      %v832 = vsel %vm702, %v827, 0
      %v835 = vsel %vm718, %v830, 0
      %837 = vmatprep.subr.bf16.mxu0 0
      %838 = vmatpush1.bf16.msra.mxu0 0
      %839 = vmatprep.subr.bf16.mxu0 0
      %840 = vmatpush1.bf16.msra.mxu0 0
      %841 = vmatprep.subr.bf16.mxu0 0
      %842 = vmatpush1.bf16.msra.mxu0 0
      %843 = vmatprep.subr.bf16.mxu0 0
      %844 = vmatpush1.bf16.msra.mxu0 0
      %845 = vmatprep.subr.bf16.mxu0 0
      %846 = vmatpush1.bf16.msra.mxu0 0
      %847 = vmatprep.subr.bf16.mxu0 0
      %848 = vmatpush1.bf16.msra.mxu0 0
      %849 = vmatprep.subr.bf16.mxu0 0
      %850 = vmatpush1.bf16.msra.mxu0 0
      %851 = vmatprep.subr.bf16.mxu0 0
      %852 = vmatpush1.bf16.msra.mxu0 %v835
      %853 = vmatprep.subr.bf16.mxu0 0
      %854 = vmatpush2.bf16.msra.mxu0 0
      %855 = vmatprep.subr.bf16.mxu0 0
      %856 = vmatpush2.bf16.msra.mxu0 0
      %857 = vmatprep.subr.bf16.mxu0 0
      %858 = vmatpush2.bf16.msra.mxu0 0
      %859 = vmatprep.subr.bf16.mxu0 0
      %860 = vmatpush2.bf16.msra.mxu0 0
      %861 = vmatprep.subr.bf16.mxu0 0
      %862 = vmatpush2.bf16.msra.mxu0 0
      %863 = vmatprep.subr.bf16.mxu0 0
      %864 = vmatpush2.bf16.msra.mxu0 0
      %865 = vmatprep.subr.bf16.mxu0 0
      %866 = vmatpush2.bf16.msra.mxu0 0
      %867 = vmatprep.subr.bf16.mxu0 0
      %868 = vmatpush2.bf16.msra.mxu0 0
      %869 = vmatprep.mubr.bf16.mxu0 0
      %870 = vmatmul.mubr.bf16.gmra.mxu0 %v832
      %v871 = vpop.f32.mrf.mxu0
      %v872 = vadd.f32 0.0, %v871
      %v873 = vpop.f32.mrf.mxu0
      %v874 = vpop.f32.mrf.mxu0
      %v875 = vpop.f32.mrf.mxu0
      %876 = vdwg.mxu0
      %877 = vrot.lane.b32.xlu0 %v650, 64
      %v878 = vpop.permute.xlu0 %877
      %879 = vrot.lane.b32.xlu0 %v651, 64
      %v880 = vpop.permute.xlu0 %879
      %v882 = vsel %vm653, %v878, 0
      %v885 = vsel %vm653, %v880, 0
      %887 = vmatprep.subr.bf16.mxu0 0
      %888 = vmatpush1.bf16.xpose.msra.mxu0 0
      %889 = vmatprep.subr.bf16.mxu0 0
      %890 = vmatpush1.bf16.xpose.msra.mxu0 0
      %891 = vmatprep.subr.bf16.mxu0 0
      %892 = vmatpush1.bf16.xpose.msra.mxu0 0
      %893 = vmatprep.subr.bf16.mxu0 0
      %894 = vmatpush1.bf16.xpose.msra.mxu0 0
      %895 = vmatprep.subr.bf16.mxu0 0
      %896 = vmatpush1.bf16.xpose.msra.mxu0 0
      %897 = vmatprep.subr.bf16.mxu0 0
      %898 = vmatpush1.bf16.xpose.msra.mxu0 0
      %899 = vmatprep.subr.bf16.mxu0 0
      %900 = vmatpush1.bf16.xpose.msra.mxu0 0
      %901 = vmatprep.subr.bf16.mxu0 0
      %902 = vmatpush1.bf16.xpose.msra.mxu0 %v885
      %903 = vmatprep.subr.bf16.mxu0 0
      %904 = vmatpush2.bf16.xpose.msra.mxu0 0
      %905 = vmatprep.subr.bf16.mxu0 0
      %906 = vmatpush2.bf16.xpose.msra.mxu0 0
      %907 = vmatprep.subr.bf16.mxu0 0
      %908 = vmatpush2.bf16.xpose.msra.mxu0 0
      %909 = vmatprep.subr.bf16.mxu0 0
      %910 = vmatpush2.bf16.xpose.msra.mxu0 0
      %911 = vmatprep.subr.bf16.mxu0 0
      %912 = vmatpush2.bf16.xpose.msra.mxu0 0
      %913 = vmatprep.subr.bf16.mxu0 0
      %914 = vmatpush2.bf16.xpose.msra.mxu0 0
      %915 = vmatprep.subr.bf16.mxu0 0
      %916 = vmatpush2.bf16.xpose.msra.mxu0 0
      %917 = vmatprep.subr.bf16.mxu0 0
      %918 = vmatpush2.bf16.xpose.msra.mxu0 0
      %919 = vmatprep.mubr.bf16.mxu0 0
      %920 = vmatmul.mubr.bf16.gmra.mxu0 %v882
      %v921 = vpop.f32.mrf.mxu0
      %v922 = vadd.f32 0.0, %v921
      %v923 = vpop.f32.mrf.mxu0
      %v924 = vpop.f32.mrf.mxu0
      %v925 = vpop.f32.mrf.mxu0
      %926 = vdwg.mxu0
      %v927 = vmul.f32 %v922, 0.17677669
      %v928 = vsel %vm649, %v927, -1e+30
      %v929 = vsel %vm702, %v928, -inf
      %930 = vmax.xlane.f32.xlu0 %v929
      %v931 = vpop.xlane.xlu0 %930
      %v932 = vsub.f32 %v928, %v931
      %v933 = vmul.f32 %v932, 1.442695
      %v934 = vpow.pop %v933
      %v935 = vsel %vm702, %v934, 0.0
      %936 = vadd.xlane.f32.xlu0 %v935
      %v937 = vpop.xlane.xlu0 %936
      %v938 = vrcp.pop %v937
      %v939 = vmul.f32 %v934, %v938
      %v940 = vpack.c.bf16 %v939, %v939
      %941 = vrot.lane.b32.xlu0 %v652, 64
      %v942 = vpop.permute.xlu0 %941
      %v944 = vsel %vm702, %v940, 0
      %v947 = vsel %vm718, %v942, 0
      %949 = vmatprep.subr.bf16.mxu0 0
      %950 = vmatpush1.bf16.msra.mxu0 0
      %951 = vmatprep.subr.bf16.mxu0 0
      %952 = vmatpush1.bf16.msra.mxu0 0
      %953 = vmatprep.subr.bf16.mxu0 0
      %954 = vmatpush1.bf16.msra.mxu0 0
      %955 = vmatprep.subr.bf16.mxu0 0
      %956 = vmatpush1.bf16.msra.mxu0 0
      %957 = vmatprep.subr.bf16.mxu0 0
      %958 = vmatpush1.bf16.msra.mxu0 0
      %959 = vmatprep.subr.bf16.mxu0 0
      %960 = vmatpush1.bf16.msra.mxu0 0
      %961 = vmatprep.subr.bf16.mxu0 0
      %962 = vmatpush1.bf16.msra.mxu0 0
      %963 = vmatprep.subr.bf16.mxu0 0
      %964 = vmatpush1.bf16.msra.mxu0 %v947
      %965 = vmatprep.subr.bf16.mxu0 0
      %966 = vmatpush2.bf16.msra.mxu0 0
      %967 = vmatprep.subr.bf16.mxu0 0
      %968 = vmatpush2.bf16.msra.mxu0 0
      %969 = vmatprep.subr.bf16.mxu0 0
      %970 = vmatpush2.bf16.msra.mxu0 0
      %971 = vmatprep.subr.bf16.mxu0 0
      %972 = vmatpush2.bf16.msra.mxu0 0
      %973 = vmatprep.subr.bf16.mxu0 0
      %974 = vmatpush2.bf16.msra.mxu0 0
      %975 = vmatprep.subr.bf16.mxu0 0
      %976 = vmatpush2.bf16.msra.mxu0 0
      %977 = vmatprep.subr.bf16.mxu0 0
      %978 = vmatpush2.bf16.msra.mxu0 0
      %979 = vmatprep.subr.bf16.mxu0 0
      %980 = vmatpush2.bf16.msra.mxu0 0
      %981 = vmatprep.mubr.bf16.mxu0 0
      %982 = vmatmul.mubr.bf16.gmra.mxu0 %v944
      %v983 = vpop.f32.mrf.mxu0
      %v984 = vadd.f32 0.0, %v983
      %v985 = vpop.f32.mrf.mxu0
      %v986 = vpop.f32.mrf.mxu0
      %v987 = vpop.f32.mrf.mxu0
      %988 = vdwg.mxu0
      %989 = vrot.lane.b32.xlu0 %v650, 32
      %v990 = vpop.permute.xlu0 %989
      %991 = vrot.lane.b32.xlu0 %v651, 32
      %v992 = vpop.permute.xlu0 %991
      %v994 = vsel %vm653, %v990, 0
      %v997 = vsel %vm653, %v992, 0
      %999 = vmatprep.subr.bf16.mxu0 0
      %1000 = vmatpush1.bf16.xpose.msra.mxu0 0
      %1001 = vmatprep.subr.bf16.mxu0 0
      %1002 = vmatpush1.bf16.xpose.msra.mxu0 0
      %1003 = vmatprep.subr.bf16.mxu0 0
      %1004 = vmatpush1.bf16.xpose.msra.mxu0 0
      %1005 = vmatprep.subr.bf16.mxu0 0
      %1006 = vmatpush1.bf16.xpose.msra.mxu0 0
      %1007 = vmatprep.subr.bf16.mxu0 0
      %1008 = vmatpush1.bf16.xpose.msra.mxu0 0
      %1009 = vmatprep.subr.bf16.mxu0 0
      %1010 = vmatpush1.bf16.xpose.msra.mxu0 0
      %1011 = vmatprep.subr.bf16.mxu0 0
      %1012 = vmatpush1.bf16.xpose.msra.mxu0 0
      %1013 = vmatprep.subr.bf16.mxu0 0
      %1014 = vmatpush1.bf16.xpose.msra.mxu0 %v997
      %1015 = vmatprep.subr.bf16.mxu0 0
      %1016 = vmatpush2.bf16.xpose.msra.mxu0 0
      %1017 = vmatprep.subr.bf16.mxu0 0
      %1018 = vmatpush2.bf16.xpose.msra.mxu0 0
      %1019 = vmatprep.subr.bf16.mxu0 0
      %1020 = vmatpush2.bf16.xpose.msra.mxu0 0
      %1021 = vmatprep.subr.bf16.mxu0 0
      %1022 = vmatpush2.bf16.xpose.msra.mxu0 0
      %1023 = vmatprep.subr.bf16.mxu0 0
      %1024 = vmatpush2.bf16.xpose.msra.mxu0 0
      %1025 = vmatprep.subr.bf16.mxu0 0
      %1026 = vmatpush2.bf16.xpose.msra.mxu0 0
      %1027 = vmatprep.subr.bf16.mxu0 0
      %1028 = vmatpush2.bf16.xpose.msra.mxu0 0
      %1029 = vmatprep.subr.bf16.mxu0 0
      %1030 = vmatpush2.bf16.xpose.msra.mxu0 0
      %1031 = vmatprep.mubr.bf16.mxu0 0
      %1032 = vmatmul.mubr.bf16.gmra.mxu0 %v994
      %v1033 = vpop.f32.mrf.mxu0
      %v1034 = vadd.f32 0.0, %v1033
      %v1035 = vpop.f32.mrf.mxu0
      %v1036 = vpop.f32.mrf.mxu0
      %v1037 = vpop.f32.mrf.mxu0
      %1038 = vdwg.mxu0
      %v1039 = vmul.f32 %v1034, 0.17677669
      %v1040 = vsel %vm649, %v1039, -1e+30
      %v1041 = vsel %vm702, %v1040, -inf
      %1042 = vmax.xlane.f32.xlu0 %v1041
      %v1043 = vpop.xlane.xlu0 %1042
      %v1044 = vsub.f32 %v1040, %v1043
      %v1045 = vmul.f32 %v1044, 1.442695
      %v1046 = vpow.pop %v1045
      %v1047 = vsel %vm702, %v1046, 0.0
      %1048 = vadd.xlane.f32.xlu0 %v1047
      %v1049 = vpop.xlane.xlu0 %1048
      %v1050 = vrcp.pop %v1049
      %v1051 = vmul.f32 %v1046, %v1050
      %v1052 = vpack.c.bf16 %v1051, %v1051
      %1053 = vrot.lane.b32.xlu0 %v652, 32
      %v1054 = vpop.permute.xlu0 %1053
      %v1056 = vsel %vm702, %v1052, 0
      %v1059 = vsel %vm718, %v1054, 0
      %1061 = vmatprep.subr.bf16.mxu0 0
      %1062 = vmatpush1.bf16.msra.mxu0 0
      %1063 = vmatprep.subr.bf16.mxu0 0
      %1064 = vmatpush1.bf16.msra.mxu0 0
      %1065 = vmatprep.subr.bf16.mxu0 0
      %1066 = vmatpush1.bf16.msra.mxu0 0
      %1067 = vmatprep.subr.bf16.mxu0 0
      %1068 = vmatpush1.bf16.msra.mxu0 0
      %1069 = vmatprep.subr.bf16.mxu0 0
      %1070 = vmatpush1.bf16.msra.mxu0 0
      %1071 = vmatprep.subr.bf16.mxu0 0
      %1072 = vmatpush1.bf16.msra.mxu0 0
      %1073 = vmatprep.subr.bf16.mxu0 0
      %1074 = vmatpush1.bf16.msra.mxu0 0
      %1075 = vmatprep.subr.bf16.mxu0 0
      %1076 = vmatpush1.bf16.msra.mxu0 %v1059
      %1077 = vmatprep.subr.bf16.mxu0 0
      %1078 = vmatpush2.bf16.msra.mxu0 0
      %1079 = vmatprep.subr.bf16.mxu0 0
      %1080 = vmatpush2.bf16.msra.mxu0 0
      %1081 = vmatprep.subr.bf16.mxu0 0
      %1082 = vmatpush2.bf16.msra.mxu0 0
      %1083 = vmatprep.subr.bf16.mxu0 0
      %1084 = vmatpush2.bf16.msra.mxu0 0
      %1085 = vmatprep.subr.bf16.mxu0 0
      %1086 = vmatpush2.bf16.msra.mxu0 0
      %1087 = vmatprep.subr.bf16.mxu0 0
      %1088 = vmatpush2.bf16.msra.mxu0 0
      %1089 = vmatprep.subr.bf16.mxu0 0
      %1090 = vmatpush2.bf16.msra.mxu0 0
      %1091 = vmatprep.subr.bf16.mxu0 0
      %1092 = vmatpush2.bf16.msra.mxu0 0
      %1093 = vmatprep.mubr.bf16.mxu0 0
      %1094 = vmatmul.mubr.bf16.gmra.mxu0 %v1056
      %v1095 = vpop.f32.mrf.mxu0
      %v1096 = vadd.f32 0.0, %v1095
      %v1097 = vpop.f32.mrf.mxu0
      %v1098 = vpop.f32.mrf.mxu0
      %v1099 = vpop.f32.mrf.mxu0
      %1100 = vdwg.mxu0
      %1102 = vrot.lane.b32.xlu0 %v872, 32
      %v1103 = vpop.permute.xlu0 %1102
      %1106 = vrot.lane.b32.xlu0 %v984, 64
      %v1107 = vpop.permute.xlu0 %1106
      %1110 = vrot.lane.b32.xlu0 %v1096, 96
      %v1111 = vpop.permute.xlu0 %1110
      %v1113 = vsel %vm653, %v757, %v1103
      %vm1114 = vcmask 523264
      %v1115 = vsel %vm1114, %v1113, %v1107
      %vm1116 = vcmask 785408
      %v1117 = vsel %vm1116, %v1115, %v1111
      %v1118 = vpack.c.bf16 %v1117, %v1117
      %v1119 = vpack.c.bf16 %v508, %v507
      %v1120 = vpack.c.bf16 %v510, %v509
      %v1121 = vpack.c.bf16 %v512, %v511
      %v1122 = vpack.c.bf16 %v514, %v513
      %v1123 = vpack.c.bf16 %v516, %v515
      %v1124 = vpack.c.bf16 %v518, %v517
      %v1125 = vpack.c.bf16 %v520, %v519
      %v1126 = vpack.c.bf16 %v522, %v521
      %v1127 = vlaneseq
      %v1128 = vshrl.u32 %v1127, 7
      %v1129 = vsub.s32 0, %v1128
      %v1130 = vrot.slane %v456, %v1129
      %1131 = vmatprep.subr.bf16.mxu0 0
      %1132 = vmatpush1.bf16.msra.mxu0 %v1126
      %1133 = vmatprep.subr.bf16.mxu0 0
      %1134 = vmatpush1.bf16.msra.mxu0 %v1125
      %1135 = vmatprep.subr.bf16.mxu0 0
      %1136 = vmatpush1.bf16.msra.mxu0 %v1124
      %1137 = vmatprep.subr.bf16.mxu0 0
      %1138 = vmatpush1.bf16.msra.mxu0 %v1123
      %1139 = vmatprep.subr.bf16.mxu0 0
      %1140 = vmatpush1.bf16.msra.mxu0 %v1122
      %1141 = vmatprep.subr.bf16.mxu0 0
      %1142 = vmatpush1.bf16.msra.mxu0 %v1121
      %1143 = vmatprep.subr.bf16.mxu0 0
      %1144 = vmatpush1.bf16.msra.mxu0 %v1120
      %1145 = vmatprep.subr.bf16.mxu0 0
      %1146 = vmatpush1.bf16.msra.mxu0 %v1119
      %1147 = vmatprep.subr.bf16.mxu0 0
      %1148 = vmatpush2.bf16.msra.mxu0 0
      %1149 = vmatprep.subr.bf16.mxu0 0
      %1150 = vmatpush2.bf16.msra.mxu0 0
      %1151 = vmatprep.subr.bf16.mxu0 0
      %1152 = vmatpush2.bf16.msra.mxu0 0
      %1153 = vmatprep.subr.bf16.mxu0 0
      %1154 = vmatpush2.bf16.msra.mxu0 0
      %1155 = vmatprep.subr.bf16.mxu0 0
      %1156 = vmatpush2.bf16.msra.mxu0 0
      %1157 = vmatprep.subr.bf16.mxu0 0
      %1158 = vmatpush2.bf16.msra.mxu0 0
      %1159 = vmatprep.subr.bf16.mxu0 0
      %1160 = vmatpush2.bf16.msra.mxu0 0
      %1161 = vmatprep.subr.bf16.mxu0 0
      %1162 = vmatpush2.bf16.msra.mxu0 0
      %1163 = vmatprep.mubr.bf16.mxu0 0
      %1164 = vmatmul.mubr.bf16.gmra.mxu0 %v1118
      %v1165 = vpop.f32.mrf.mxu0
      %v1166 = vadd.f32 %v1130, %v1165
      %v1167 = vpop.f32.mrf.mxu0
      %v1168 = vpop.f32.mrf.mxu0
      %v1169 = vpop.f32.mrf.mxu0
      %1170 = vdwg.mxu0
      %v1171 = vadd.f32 %v454, %v1166
      %1172 = vadd.xlane.f32.xlu0 %v1171
      %v1173 = vpop.xlane.xlu0 %1172
      %v1174 = vrcp.pop 128.0
      %v1175 = vmul.f32 %v1173, %v1174
      %v1176 = vsub.f32 %v1171, %v1175
      %v1177 = vmul.f32 %v1176, %v1176
      %1178 = vadd.xlane.f32.xlu0 %v1177
      %v1179 = vpop.xlane.xlu0 %1178
      %v1180 = vmul.f32 %v1179, %v1174
      %v1181 = vadd.f32 %v1180, 1e-05
      %v1182 = vrsqrt.pop %v1181
      %v1183 = vmul.f32 %v1176, %v1182
      %v1184 = vlaneseq
      %v1185 = vshrl.u32 %v1184, 7
      %v1186 = vsub.s32 4, %v1185
      %v1187 = vrot.slane %v456, %v1186
      %v1188 = vmul.f32 %v1183, %v1187
      %v1189 = vlaneseq
      %v1190 = vshrl.u32 %v1189, 7
      %v1191 = vsub.s32 5, %v1190
      %v1192 = vrot.slane %v456, %v1191
      %v1193 = vadd.f32 %v1188, %v1192
      %v1194 = vpack.c.bf16 %v1193, %v1193
      %v1195 = vld [vmem:[%s5] sm:$0xff]
      %v1196 = vld [vmem:[%s5 + $0x8] sm:$0xff]
      %v1197 = vld [vmem:[%s5 + $0x10] sm:$0xff]
      %v1198 = vld [vmem:[%s5 + $0x18] sm:$0xff]
      %v1199 = vld [vmem:[%s5 + $0x20] sm:$0xff]
      %v1200 = vld [vmem:[%s5 + $0x28] sm:$0xff]
      %v1201 = vld [vmem:[%s5 + $0x30] sm:$0xff]
      %v1202 = vld [vmem:[%s5 + $0x38] sm:$0xff]
      %v1203 = vld [vmem:[%s5 + $0x40] sm:$0xff]
      %v1204 = vld [vmem:[%s5 + $0x48] sm:$0xff]
      %v1205 = vld [vmem:[%s5 + $0x50] sm:$0xff]
      %v1206 = vld [vmem:[%s5 + $0x58] sm:$0xff]
      %v1207 = vld [vmem:[%s5 + $0x60] sm:$0xff]
      %v1208 = vld [vmem:[%s5 + $0x68] sm:$0xff]
      %v1209 = vld [vmem:[%s5 + $0x70] sm:$0xff]
      %v1210 = vld [vmem:[%s5 + $0x78] sm:$0xff]
      %v1211 = vpack.c.bf16 %v1196, %v1195
      %v1212 = vpack.c.bf16 %v1198, %v1197
      %v1213 = vpack.c.bf16 %v1200, %v1199
      %v1214 = vpack.c.bf16 %v1202, %v1201
      %v1215 = vpack.c.bf16 %v1204, %v1203
      %v1216 = vpack.c.bf16 %v1206, %v1205
      %v1217 = vpack.c.bf16 %v1208, %v1207
      %v1218 = vpack.c.bf16 %v1210, %v1209
      %v1219 = vlaneseq
      %v1220 = vshrl.u32 %v1219, 7
      %v1221 = vsub.s32 1, %v1220
      %v1222 = vrot.slane %v456, %v1221
      %1223 = vmatprep.subr.bf16.mxu0 0
      %1224 = vmatpush1.bf16.msra.mxu0 %v1218
      %1225 = vmatprep.subr.bf16.mxu0 0
      %1226 = vmatpush1.bf16.msra.mxu0 %v1217
      %1227 = vmatprep.subr.bf16.mxu0 0
      %1228 = vmatpush1.bf16.msra.mxu0 %v1216
      %1229 = vmatprep.subr.bf16.mxu0 0
      %1230 = vmatpush1.bf16.msra.mxu0 %v1215
      %1231 = vmatprep.subr.bf16.mxu0 0
      %1232 = vmatpush1.bf16.msra.mxu0 %v1214
      %1233 = vmatprep.subr.bf16.mxu0 0
      %1234 = vmatpush1.bf16.msra.mxu0 %v1213
      %1235 = vmatprep.subr.bf16.mxu0 0
      %1236 = vmatpush1.bf16.msra.mxu0 %v1212
      %1237 = vmatprep.subr.bf16.mxu0 0
      %1238 = vmatpush1.bf16.msra.mxu0 %v1211
      %1239 = vmatprep.subr.bf16.mxu0 0
      %1240 = vmatpush2.bf16.msra.mxu0 0
      %1241 = vmatprep.subr.bf16.mxu0 0
      %1242 = vmatpush2.bf16.msra.mxu0 0
      %1243 = vmatprep.subr.bf16.mxu0 0
      %1244 = vmatpush2.bf16.msra.mxu0 0
      %1245 = vmatprep.subr.bf16.mxu0 0
      %1246 = vmatpush2.bf16.msra.mxu0 0
      %1247 = vmatprep.subr.bf16.mxu0 0
      %1248 = vmatpush2.bf16.msra.mxu0 0
      %1249 = vmatprep.subr.bf16.mxu0 0
      %1250 = vmatpush2.bf16.msra.mxu0 0
      %1251 = vmatprep.subr.bf16.mxu0 0
      %1252 = vmatpush2.bf16.msra.mxu0 0
      %1253 = vmatprep.subr.bf16.mxu0 0
      %1254 = vmatpush2.bf16.msra.mxu0 0
      %1255 = vmatprep.mubr.bf16.mxu0 0
      %1256 = vmatmul.mubr.bf16.gmra.mxu0 %v1194
      %v1257 = vpop.f32.mrf.mxu0
      %v1258 = vadd.f32 %v1222, %v1257
      %v1259 = vpop.f32.mrf.mxu0
      %v1260 = vpop.f32.mrf.mxu0
      %v1261 = vpop.f32.mrf.mxu0
      %1262 = vdwg.mxu0
      %v1263 = vpack.c.bf16 %v455, %v455
      %v1264 = vld [vmem:[%s6] sm:$0xff]
      %v1265 = vld [vmem:[%s6 + $0x8] sm:$0xff]
      %v1266 = vld [vmem:[%s6 + $0x10] sm:$0xff]
      %v1267 = vld [vmem:[%s6 + $0x18] sm:$0xff]
      %v1268 = vld [vmem:[%s6 + $0x20] sm:$0xff]
      %v1269 = vld [vmem:[%s6 + $0x28] sm:$0xff]
      %v1270 = vld [vmem:[%s6 + $0x30] sm:$0xff]
      %v1271 = vld [vmem:[%s6 + $0x38] sm:$0xff]
      %v1272 = vld [vmem:[%s6 + $0x40] sm:$0xff]
      %v1273 = vld [vmem:[%s6 + $0x48] sm:$0xff]
      %v1274 = vld [vmem:[%s6 + $0x50] sm:$0xff]
      %v1275 = vld [vmem:[%s6 + $0x58] sm:$0xff]
      %v1276 = vld [vmem:[%s6 + $0x60] sm:$0xff]
      %v1277 = vld [vmem:[%s6 + $0x68] sm:$0xff]
      %v1278 = vld [vmem:[%s6 + $0x70] sm:$0xff]
      %v1279 = vld [vmem:[%s6 + $0x78] sm:$0xff]
      %v1280 = vld [vmem:[%s6 + $0x80] sm:$0xff]
      %v1281 = vld [vmem:[%s6 + $0x88] sm:$0xff]
      %v1282 = vld [vmem:[%s6 + $0x90] sm:$0xff]
      %v1283 = vld [vmem:[%s6 + $0x98] sm:$0xff]
      %v1284 = vld [vmem:[%s6 + $0xa0] sm:$0xff]
      %v1285 = vld [vmem:[%s6 + $0xa8] sm:$0xff]
      %v1286 = vld [vmem:[%s6 + $0xb0] sm:$0xff]
      %v1287 = vld [vmem:[%s6 + $0xb8] sm:$0xff]
      %v1288 = vld [vmem:[%s6 + $0xc0] sm:$0xff]
      %v1289 = vld [vmem:[%s6 + $0xc8] sm:$0xff]
      %v1290 = vld [vmem:[%s6 + $0xd0] sm:$0xff]
      %v1291 = vld [vmem:[%s6 + $0xd8] sm:$0xff]
      %v1292 = vld [vmem:[%s6 + $0xe0] sm:$0xff]
      %v1293 = vld [vmem:[%s6 + $0xe8] sm:$0xff]
      %v1294 = vld [vmem:[%s6 + $0xf0] sm:$0xff]
      %v1295 = vld [vmem:[%s6 + $0xf8] sm:$0xff]
      %v1296 = vpack.c.bf16 %v1266, %v1264
      %v1297 = vpack.c.bf16 %v1267, %v1265
      %v1298 = vpack.c.bf16 %v1270, %v1268
      %v1299 = vpack.c.bf16 %v1271, %v1269
      %v1300 = vpack.c.bf16 %v1274, %v1272
      %v1301 = vpack.c.bf16 %v1275, %v1273
      %v1302 = vpack.c.bf16 %v1278, %v1276
      %v1303 = vpack.c.bf16 %v1279, %v1277
      %v1304 = vpack.c.bf16 %v1282, %v1280
      %v1305 = vpack.c.bf16 %v1283, %v1281
      %v1306 = vpack.c.bf16 %v1286, %v1284
      %v1307 = vpack.c.bf16 %v1287, %v1285
      %v1308 = vpack.c.bf16 %v1290, %v1288
      %v1309 = vpack.c.bf16 %v1291, %v1289
      %v1310 = vpack.c.bf16 %v1294, %v1292
      %v1311 = vpack.c.bf16 %v1295, %v1293
      %v1312 = vld [vmem:[%s7] sm:$0x3]
      %v1314 = vlaneseq
      %v1315 = vshrl.u32 %v1314, 7
      %v1316 = vsub.s32 0, %v1315
      %v1317 = vrot.slane %v1312, %v1316
      %v1318 = vlaneseq
      %v1319 = vshrl.u32 %v1318, 7
      %v1320 = vsub.s32 1, %v1319
      %v1321 = vrot.slane %v1312, %v1320
      %1324 = vmatprep.subr.bf16.mxu0 %v1311
      %1325 = vmatpush1.bf16.msra.mxu0 %v1310
      %1326 = vmatprep.subr.bf16.mxu0 %v1309
      %1327 = vmatpush1.bf16.msra.mxu0 %v1308
      %1328 = vmatprep.subr.bf16.mxu0 %v1307
      %1329 = vmatpush1.bf16.msra.mxu0 %v1306
      %1330 = vmatprep.subr.bf16.mxu0 %v1305
      %1331 = vmatpush1.bf16.msra.mxu0 %v1304
      %1332 = vmatprep.subr.bf16.mxu0 %v1303
      %1333 = vmatpush1.bf16.msra.mxu0 %v1302
      %1334 = vmatprep.subr.bf16.mxu0 %v1301
      %1335 = vmatpush1.bf16.msra.mxu0 %v1300
      %1336 = vmatprep.subr.bf16.mxu0 %v1299
      %1337 = vmatpush1.bf16.msra.mxu0 %v1298
      %1338 = vmatprep.subr.bf16.mxu0 %v1297
      %1339 = vmatpush1.bf16.msra.mxu0 %v1296
      %1340 = vmatprep.subr.bf16.mxu0 0
      %1341 = vmatpush2.bf16.msra.mxu0 0
      %1342 = vmatprep.subr.bf16.mxu0 0
      %1343 = vmatpush2.bf16.msra.mxu0 0
      %1344 = vmatprep.subr.bf16.mxu0 0
      %1345 = vmatpush2.bf16.msra.mxu0 0
      %1346 = vmatprep.subr.bf16.mxu0 0
      %1347 = vmatpush2.bf16.msra.mxu0 0
      %1348 = vmatprep.subr.bf16.mxu0 0
      %1349 = vmatpush2.bf16.msra.mxu0 0
      %1350 = vmatprep.subr.bf16.mxu0 0
      %1351 = vmatpush2.bf16.msra.mxu0 0
      %1352 = vmatprep.subr.bf16.mxu0 0
      %1353 = vmatpush2.bf16.msra.mxu0 0
      %1354 = vmatprep.subr.bf16.mxu0 0
      %1355 = vmatpush2.bf16.msra.mxu0 0
      %1356 = vmatprep.mubr.bf16.mxu0 0
      %1357 = vmatmul.mubr.bf16.gmra.mxu0 %v1263
      %v1358 = vpop.f32.mrf.mxu0
      %v1359 = vadd.f32 %v1317, %v1358
      %v1360 = vpop.f32.mrf.mxu0
      %v1361 = vadd.f32 %v1321, %v1360
      %v1362 = vpop.f32.mrf.mxu0
      %v1363 = vpop.f32.mrf.mxu0
      %1364 = vdwg.mxu0
      %v1365 = vld [vmem:[%s8] sm:$0xff]
      %v1366 = vld [vmem:[%s8 + $0x8] sm:$0xff]
      %v1367 = vld [vmem:[%s8 + $0x10] sm:$0xff]
      %v1368 = vld [vmem:[%s8 + $0x18] sm:$0xff]
      %v1369 = vld [vmem:[%s8 + $0x20] sm:$0xff]
      %v1370 = vld [vmem:[%s8 + $0x28] sm:$0xff]
      %v1371 = vld [vmem:[%s8 + $0x30] sm:$0xff]
      %v1372 = vld [vmem:[%s8 + $0x38] sm:$0xff]
      %v1373 = vld [vmem:[%s8 + $0x40] sm:$0xff]
      %v1374 = vld [vmem:[%s8 + $0x48] sm:$0xff]
      %v1375 = vld [vmem:[%s8 + $0x50] sm:$0xff]
      %v1376 = vld [vmem:[%s8 + $0x58] sm:$0xff]
      %v1377 = vld [vmem:[%s8 + $0x60] sm:$0xff]
      %v1378 = vld [vmem:[%s8 + $0x68] sm:$0xff]
      %v1379 = vld [vmem:[%s8 + $0x70] sm:$0xff]
      %v1380 = vld [vmem:[%s8 + $0x78] sm:$0xff]
      %v1381 = vpack.c.bf16 %v1258, %v1258
      %v1382 = vpack.c.bf16 %v1359, %v1359
      %v1383 = vpack.c.bf16 %v1361, %v1361
      %v1385 = vsel %vm653, %v1381, 0
      %v1388 = vsel %vm653, %v1382, 0
      %1390 = vmatprep.subr.bf16.mxu0 0
      %1391 = vmatpush1.bf16.xpose.msra.mxu0 0
      %1392 = vmatprep.subr.bf16.mxu0 0
      %1393 = vmatpush1.bf16.xpose.msra.mxu0 0
      %1394 = vmatprep.subr.bf16.mxu0 0
      %1395 = vmatpush1.bf16.xpose.msra.mxu0 0
      %1396 = vmatprep.subr.bf16.mxu0 0
      %1397 = vmatpush1.bf16.xpose.msra.mxu0 0
      %1398 = vmatprep.subr.bf16.mxu0 0
      %1399 = vmatpush1.bf16.xpose.msra.mxu0 0
      %1400 = vmatprep.subr.bf16.mxu0 0
      %1401 = vmatpush1.bf16.xpose.msra.mxu0 0
      %1402 = vmatprep.subr.bf16.mxu0 0
      %1403 = vmatpush1.bf16.xpose.msra.mxu0 0
      %1404 = vmatprep.subr.bf16.mxu0 0
      %1405 = vmatpush1.bf16.xpose.msra.mxu0 %v1388
      %1406 = vmatprep.subr.bf16.mxu0 0
      %1407 = vmatpush2.bf16.xpose.msra.mxu0 0
      %1408 = vmatprep.subr.bf16.mxu0 0
      %1409 = vmatpush2.bf16.xpose.msra.mxu0 0
      %1410 = vmatprep.subr.bf16.mxu0 0
      %1411 = vmatpush2.bf16.xpose.msra.mxu0 0
      %1412 = vmatprep.subr.bf16.mxu0 0
      %1413 = vmatpush2.bf16.xpose.msra.mxu0 0
      %1414 = vmatprep.subr.bf16.mxu0 0
      %1415 = vmatpush2.bf16.xpose.msra.mxu0 0
      %1416 = vmatprep.subr.bf16.mxu0 0
      %1417 = vmatpush2.bf16.xpose.msra.mxu0 0
      %1418 = vmatprep.subr.bf16.mxu0 0
      %1419 = vmatpush2.bf16.xpose.msra.mxu0 0
      %1420 = vmatprep.subr.bf16.mxu0 0
      %1421 = vmatpush2.bf16.xpose.msra.mxu0 0
      %1422 = vmatprep.mubr.bf16.mxu0 0
      %1423 = vmatmul.mubr.bf16.gmra.mxu0 %v1385
      %v1424 = vpop.f32.mrf.mxu0
      %v1425 = vadd.f32 0.0, %v1424
      %v1426 = vpop.f32.mrf.mxu0
      %v1427 = vpop.f32.mrf.mxu0
      %v1428 = vpop.f32.mrf.mxu0
      %1429 = vdwg.mxu0
      %v1430 = vmul.f32 %v1425, 0.17677669
      %v1431 = vsel %vm702, %v1430, -inf
      %1432 = vmax.xlane.f32.xlu0 %v1431
      %v1433 = vpop.xlane.xlu0 %1432
      %v1434 = vsub.f32 %v1430, %v1433
      %v1435 = vmul.f32 %v1434, 1.442695
      %v1436 = vpow.pop %v1435
      %v1437 = vsel %vm702, %v1436, 0.0
      %1438 = vadd.xlane.f32.xlu0 %v1437
      %v1439 = vpop.xlane.xlu0 %1438
      %v1440 = vrcp.pop %v1439
      %v1441 = vmul.f32 %v1436, %v1440
      %v1442 = vpack.c.bf16 %v1441, %v1441
      %v1444 = vsel %vm702, %v1442, 0
      %v1447 = vsel %vm718, %v1383, 0
      %1449 = vmatprep.subr.bf16.mxu0 0
      %1450 = vmatpush1.bf16.msra.mxu0 0
      %1451 = vmatprep.subr.bf16.mxu0 0
      %1452 = vmatpush1.bf16.msra.mxu0 0
      %1453 = vmatprep.subr.bf16.mxu0 0
      %1454 = vmatpush1.bf16.msra.mxu0 0
      %1455 = vmatprep.subr.bf16.mxu0 0
      %1456 = vmatpush1.bf16.msra.mxu0 0
      %1457 = vmatprep.subr.bf16.mxu0 0
      %1458 = vmatpush1.bf16.msra.mxu0 0
      %1459 = vmatprep.subr.bf16.mxu0 0
      %1460 = vmatpush1.bf16.msra.mxu0 0
      %1461 = vmatprep.subr.bf16.mxu0 0
      %1462 = vmatpush1.bf16.msra.mxu0 0
      %1463 = vmatprep.subr.bf16.mxu0 0
      %1464 = vmatpush1.bf16.msra.mxu0 %v1447
      %1465 = vmatprep.subr.bf16.mxu0 0
      %1466 = vmatpush2.bf16.msra.mxu0 0
      %1467 = vmatprep.subr.bf16.mxu0 0
      %1468 = vmatpush2.bf16.msra.mxu0 0
      %1469 = vmatprep.subr.bf16.mxu0 0
      %1470 = vmatpush2.bf16.msra.mxu0 0
      %1471 = vmatprep.subr.bf16.mxu0 0
      %1472 = vmatpush2.bf16.msra.mxu0 0
      %1473 = vmatprep.subr.bf16.mxu0 0
      %1474 = vmatpush2.bf16.msra.mxu0 0
      %1475 = vmatprep.subr.bf16.mxu0 0
      %1476 = vmatpush2.bf16.msra.mxu0 0
      %1477 = vmatprep.subr.bf16.mxu0 0
      %1478 = vmatpush2.bf16.msra.mxu0 0
      %1479 = vmatprep.subr.bf16.mxu0 0
      %1480 = vmatpush2.bf16.msra.mxu0 0
      %1481 = vmatprep.mubr.bf16.mxu0 0
      %1482 = vmatmul.mubr.bf16.gmra.mxu0 %v1444
      %v1483 = vpop.f32.mrf.mxu0
      %v1484 = vadd.f32 0.0, %v1483
      %v1485 = vpop.f32.mrf.mxu0
      %v1486 = vpop.f32.mrf.mxu0
      %v1487 = vpop.f32.mrf.mxu0
      %1488 = vdwg.mxu0
      %1490 = vrot.lane.b32.xlu0 %v1381, 96
      %v1491 = vpop.permute.xlu0 %1490
      %1493 = vrot.lane.b32.xlu0 %v1382, 96
      %v1494 = vpop.permute.xlu0 %1493
      %v1496 = vsel %vm653, %v1491, 0
      %v1499 = vsel %vm653, %v1494, 0
      %1501 = vmatprep.subr.bf16.mxu0 0
      %1502 = vmatpush1.bf16.xpose.msra.mxu0 0
      %1503 = vmatprep.subr.bf16.mxu0 0
      %1504 = vmatpush1.bf16.xpose.msra.mxu0 0
      %1505 = vmatprep.subr.bf16.mxu0 0
      %1506 = vmatpush1.bf16.xpose.msra.mxu0 0
      %1507 = vmatprep.subr.bf16.mxu0 0
      %1508 = vmatpush1.bf16.xpose.msra.mxu0 0
      %1509 = vmatprep.subr.bf16.mxu0 0
      %1510 = vmatpush1.bf16.xpose.msra.mxu0 0
      %1511 = vmatprep.subr.bf16.mxu0 0
      %1512 = vmatpush1.bf16.xpose.msra.mxu0 0
      %1513 = vmatprep.subr.bf16.mxu0 0
      %1514 = vmatpush1.bf16.xpose.msra.mxu0 0
      %1515 = vmatprep.subr.bf16.mxu0 0
      %1516 = vmatpush1.bf16.xpose.msra.mxu0 %v1499
      %1517 = vmatprep.subr.bf16.mxu0 0
      %1518 = vmatpush2.bf16.xpose.msra.mxu0 0
      %1519 = vmatprep.subr.bf16.mxu0 0
      %1520 = vmatpush2.bf16.xpose.msra.mxu0 0
      %1521 = vmatprep.subr.bf16.mxu0 0
      %1522 = vmatpush2.bf16.xpose.msra.mxu0 0
      %1523 = vmatprep.subr.bf16.mxu0 0
      %1524 = vmatpush2.bf16.xpose.msra.mxu0 0
      %1525 = vmatprep.subr.bf16.mxu0 0
      %1526 = vmatpush2.bf16.xpose.msra.mxu0 0
      %1527 = vmatprep.subr.bf16.mxu0 0
      %1528 = vmatpush2.bf16.xpose.msra.mxu0 0
      %1529 = vmatprep.subr.bf16.mxu0 0
      %1530 = vmatpush2.bf16.xpose.msra.mxu0 0
      %1531 = vmatprep.subr.bf16.mxu0 0
      %1532 = vmatpush2.bf16.xpose.msra.mxu0 0
      %1533 = vmatprep.mubr.bf16.mxu0 0
      %1534 = vmatmul.mubr.bf16.gmra.mxu0 %v1496
      %v1535 = vpop.f32.mrf.mxu0
      %v1536 = vadd.f32 0.0, %v1535
      %v1537 = vpop.f32.mrf.mxu0
      %v1538 = vpop.f32.mrf.mxu0
      %v1539 = vpop.f32.mrf.mxu0
      %1540 = vdwg.mxu0
      %v1541 = vmul.f32 %v1536, 0.17677669
      %v1542 = vsel %vm702, %v1541, -inf
      %1543 = vmax.xlane.f32.xlu0 %v1542
      %v1544 = vpop.xlane.xlu0 %1543
      %v1545 = vsub.f32 %v1541, %v1544
      %v1546 = vmul.f32 %v1545, 1.442695
      %v1547 = vpow.pop %v1546
      %v1548 = vsel %vm702, %v1547, 0.0
      %1549 = vadd.xlane.f32.xlu0 %v1548
      %v1550 = vpop.xlane.xlu0 %1549
      %v1551 = vrcp.pop %v1550
      %v1552 = vmul.f32 %v1547, %v1551
      %v1553 = vpack.c.bf16 %v1552, %v1552
      %1555 = vrot.lane.b32.xlu0 %v1383, 96
      %v1556 = vpop.permute.xlu0 %1555
      %v1558 = vsel %vm702, %v1553, 0
      %v1561 = vsel %vm718, %v1556, 0
      %1563 = vmatprep.subr.bf16.mxu0 0
      %1564 = vmatpush1.bf16.msra.mxu0 0
      %1565 = vmatprep.subr.bf16.mxu0 0
      %1566 = vmatpush1.bf16.msra.mxu0 0
      %1567 = vmatprep.subr.bf16.mxu0 0
      %1568 = vmatpush1.bf16.msra.mxu0 0
      %1569 = vmatprep.subr.bf16.mxu0 0
      %1570 = vmatpush1.bf16.msra.mxu0 0
      %1571 = vmatprep.subr.bf16.mxu0 0
      %1572 = vmatpush1.bf16.msra.mxu0 0
      %1573 = vmatprep.subr.bf16.mxu0 0
      %1574 = vmatpush1.bf16.msra.mxu0 0
      %1575 = vmatprep.subr.bf16.mxu0 0
      %1576 = vmatpush1.bf16.msra.mxu0 0
      %1577 = vmatprep.subr.bf16.mxu0 0
      %1578 = vmatpush1.bf16.msra.mxu0 %v1561
      %1579 = vmatprep.subr.bf16.mxu0 0
      %1580 = vmatpush2.bf16.msra.mxu0 0
      %1581 = vmatprep.subr.bf16.mxu0 0
      %1582 = vmatpush2.bf16.msra.mxu0 0
      %1583 = vmatprep.subr.bf16.mxu0 0
      %1584 = vmatpush2.bf16.msra.mxu0 0
      %1585 = vmatprep.subr.bf16.mxu0 0
      %1586 = vmatpush2.bf16.msra.mxu0 0
      %1587 = vmatprep.subr.bf16.mxu0 0
      %1588 = vmatpush2.bf16.msra.mxu0 0
      %1589 = vmatprep.subr.bf16.mxu0 0
      %1590 = vmatpush2.bf16.msra.mxu0 0
      %1591 = vmatprep.subr.bf16.mxu0 0
      %1592 = vmatpush2.bf16.msra.mxu0 0
      %1593 = vmatprep.subr.bf16.mxu0 0
      %1594 = vmatpush2.bf16.msra.mxu0 0
      %1595 = vmatprep.mubr.bf16.mxu0 0
      %1596 = vmatmul.mubr.bf16.gmra.mxu0 %v1558
      %v1597 = vpop.f32.mrf.mxu0
      %v1598 = vadd.f32 0.0, %v1597
      %v1599 = vpop.f32.mrf.mxu0
      %v1600 = vpop.f32.mrf.mxu0
      %v1601 = vpop.f32.mrf.mxu0
      %1602 = vdwg.mxu0
      %1603 = vrot.lane.b32.xlu0 %v1381, 64
      %v1604 = vpop.permute.xlu0 %1603
      %1605 = vrot.lane.b32.xlu0 %v1382, 64
      %v1606 = vpop.permute.xlu0 %1605
      %v1608 = vsel %vm653, %v1604, 0
      %v1611 = vsel %vm653, %v1606, 0
      %1613 = vmatprep.subr.bf16.mxu0 0
      %1614 = vmatpush1.bf16.xpose.msra.mxu0 0
      %1615 = vmatprep.subr.bf16.mxu0 0
      %1616 = vmatpush1.bf16.xpose.msra.mxu0 0
      %1617 = vmatprep.subr.bf16.mxu0 0
      %1618 = vmatpush1.bf16.xpose.msra.mxu0 0
      %1619 = vmatprep.subr.bf16.mxu0 0
      %1620 = vmatpush1.bf16.xpose.msra.mxu0 0
      %1621 = vmatprep.subr.bf16.mxu0 0
      %1622 = vmatpush1.bf16.xpose.msra.mxu0 0
      %1623 = vmatprep.subr.bf16.mxu0 0
      %1624 = vmatpush1.bf16.xpose.msra.mxu0 0
      %1625 = vmatprep.subr.bf16.mxu0 0
      %1626 = vmatpush1.bf16.xpose.msra.mxu0 0
      %1627 = vmatprep.subr.bf16.mxu0 0
      %1628 = vmatpush1.bf16.xpose.msra.mxu0 %v1611
      %1629 = vmatprep.subr.bf16.mxu0 0
      %1630 = vmatpush2.bf16.xpose.msra.mxu0 0
      %1631 = vmatprep.subr.bf16.mxu0 0
      %1632 = vmatpush2.bf16.xpose.msra.mxu0 0
      %1633 = vmatprep.subr.bf16.mxu0 0
      %1634 = vmatpush2.bf16.xpose.msra.mxu0 0
      %1635 = vmatprep.subr.bf16.mxu0 0
      %1636 = vmatpush2.bf16.xpose.msra.mxu0 0
      %1637 = vmatprep.subr.bf16.mxu0 0
      %1638 = vmatpush2.bf16.xpose.msra.mxu0 0
      %1639 = vmatprep.subr.bf16.mxu0 0
      %1640 = vmatpush2.bf16.xpose.msra.mxu0 0
      %1641 = vmatprep.subr.bf16.mxu0 0
      %1642 = vmatpush2.bf16.xpose.msra.mxu0 0
      %1643 = vmatprep.subr.bf16.mxu0 0
      %1644 = vmatpush2.bf16.xpose.msra.mxu0 0
      %1645 = vmatprep.mubr.bf16.mxu0 0
      %1646 = vmatmul.mubr.bf16.gmra.mxu0 %v1608
      %v1647 = vpop.f32.mrf.mxu0
      %v1648 = vadd.f32 0.0, %v1647
      %v1649 = vpop.f32.mrf.mxu0
      %v1650 = vpop.f32.mrf.mxu0
      %v1651 = vpop.f32.mrf.mxu0
      %1652 = vdwg.mxu0
      %v1653 = vmul.f32 %v1648, 0.17677669
      %v1654 = vsel %vm702, %v1653, -inf
      %1655 = vmax.xlane.f32.xlu0 %v1654
      %v1656 = vpop.xlane.xlu0 %1655
      %v1657 = vsub.f32 %v1653, %v1656
      %v1658 = vmul.f32 %v1657, 1.442695
      %v1659 = vpow.pop %v1658
      %v1660 = vsel %vm702, %v1659, 0.0
      %1661 = vadd.xlane.f32.xlu0 %v1660
      %v1662 = vpop.xlane.xlu0 %1661
      %v1663 = vrcp.pop %v1662
      %v1664 = vmul.f32 %v1659, %v1663
      %v1665 = vpack.c.bf16 %v1664, %v1664
      %1666 = vrot.lane.b32.xlu0 %v1383, 64
      %v1667 = vpop.permute.xlu0 %1666
      %v1669 = vsel %vm702, %v1665, 0
      %v1672 = vsel %vm718, %v1667, 0
      %1674 = vmatprep.subr.bf16.mxu0 0
      %1675 = vmatpush1.bf16.msra.mxu0 0
      %1676 = vmatprep.subr.bf16.mxu0 0
      %1677 = vmatpush1.bf16.msra.mxu0 0
      %1678 = vmatprep.subr.bf16.mxu0 0
      %1679 = vmatpush1.bf16.msra.mxu0 0
      %1680 = vmatprep.subr.bf16.mxu0 0
      %1681 = vmatpush1.bf16.msra.mxu0 0
      %1682 = vmatprep.subr.bf16.mxu0 0
      %1683 = vmatpush1.bf16.msra.mxu0 0
      %1684 = vmatprep.subr.bf16.mxu0 0
      %1685 = vmatpush1.bf16.msra.mxu0 0
      %1686 = vmatprep.subr.bf16.mxu0 0
      %1687 = vmatpush1.bf16.msra.mxu0 0
      %1688 = vmatprep.subr.bf16.mxu0 0
      %1689 = vmatpush1.bf16.msra.mxu0 %v1672
      %1690 = vmatprep.subr.bf16.mxu0 0
      %1691 = vmatpush2.bf16.msra.mxu0 0
      %1692 = vmatprep.subr.bf16.mxu0 0
      %1693 = vmatpush2.bf16.msra.mxu0 0
      %1694 = vmatprep.subr.bf16.mxu0 0
      %1695 = vmatpush2.bf16.msra.mxu0 0
      %1696 = vmatprep.subr.bf16.mxu0 0
      %1697 = vmatpush2.bf16.msra.mxu0 0
      %1698 = vmatprep.subr.bf16.mxu0 0
      %1699 = vmatpush2.bf16.msra.mxu0 0
      %1700 = vmatprep.subr.bf16.mxu0 0
      %1701 = vmatpush2.bf16.msra.mxu0 0
      %1702 = vmatprep.subr.bf16.mxu0 0
      %1703 = vmatpush2.bf16.msra.mxu0 0
      %1704 = vmatprep.subr.bf16.mxu0 0
      %1705 = vmatpush2.bf16.msra.mxu0 0
      %1706 = vmatprep.mubr.bf16.mxu0 0
      %1707 = vmatmul.mubr.bf16.gmra.mxu0 %v1669
      %v1708 = vpop.f32.mrf.mxu0
      %v1709 = vadd.f32 0.0, %v1708
      %v1710 = vpop.f32.mrf.mxu0
      %v1711 = vpop.f32.mrf.mxu0
      %v1712 = vpop.f32.mrf.mxu0
      %1713 = vdwg.mxu0
      %1714 = vrot.lane.b32.xlu0 %v1381, 32
      %v1715 = vpop.permute.xlu0 %1714
      %1716 = vrot.lane.b32.xlu0 %v1382, 32
      %v1717 = vpop.permute.xlu0 %1716
      %v1719 = vsel %vm653, %v1715, 0
      %v1722 = vsel %vm653, %v1717, 0
      %1724 = vmatprep.subr.bf16.mxu0 0
      %1725 = vmatpush1.bf16.xpose.msra.mxu0 0
      %1726 = vmatprep.subr.bf16.mxu0 0
      %1727 = vmatpush1.bf16.xpose.msra.mxu0 0
      %1728 = vmatprep.subr.bf16.mxu0 0
      %1729 = vmatpush1.bf16.xpose.msra.mxu0 0
      %1730 = vmatprep.subr.bf16.mxu0 0
      %1731 = vmatpush1.bf16.xpose.msra.mxu0 0
      %1732 = vmatprep.subr.bf16.mxu0 0
      %1733 = vmatpush1.bf16.xpose.msra.mxu0 0
      %1734 = vmatprep.subr.bf16.mxu0 0
      %1735 = vmatpush1.bf16.xpose.msra.mxu0 0
      %1736 = vmatprep.subr.bf16.mxu0 0
      %1737 = vmatpush1.bf16.xpose.msra.mxu0 0
      %1738 = vmatprep.subr.bf16.mxu0 0
      %1739 = vmatpush1.bf16.xpose.msra.mxu0 %v1722
      %1740 = vmatprep.subr.bf16.mxu0 0
      %1741 = vmatpush2.bf16.xpose.msra.mxu0 0
      %1742 = vmatprep.subr.bf16.mxu0 0
      %1743 = vmatpush2.bf16.xpose.msra.mxu0 0
      %1744 = vmatprep.subr.bf16.mxu0 0
      %1745 = vmatpush2.bf16.xpose.msra.mxu0 0
      %1746 = vmatprep.subr.bf16.mxu0 0
      %1747 = vmatpush2.bf16.xpose.msra.mxu0 0
      %1748 = vmatprep.subr.bf16.mxu0 0
      %1749 = vmatpush2.bf16.xpose.msra.mxu0 0
      %1750 = vmatprep.subr.bf16.mxu0 0
      %1751 = vmatpush2.bf16.xpose.msra.mxu0 0
      %1752 = vmatprep.subr.bf16.mxu0 0
      %1753 = vmatpush2.bf16.xpose.msra.mxu0 0
      %1754 = vmatprep.subr.bf16.mxu0 0
      %1755 = vmatpush2.bf16.xpose.msra.mxu0 0
      %1756 = vmatprep.mubr.bf16.mxu0 0
      %1757 = vmatmul.mubr.bf16.gmra.mxu0 %v1719
      %v1758 = vpop.f32.mrf.mxu0
      %v1759 = vadd.f32 0.0, %v1758
      %v1760 = vpop.f32.mrf.mxu0
      %v1761 = vpop.f32.mrf.mxu0
      %v1762 = vpop.f32.mrf.mxu0
      %1763 = vdwg.mxu0
      %v1764 = vmul.f32 %v1759, 0.17677669
      %v1765 = vsel %vm702, %v1764, -inf
      %1766 = vmax.xlane.f32.xlu0 %v1765
      %v1767 = vpop.xlane.xlu0 %1766
      %v1768 = vsub.f32 %v1764, %v1767
      %v1769 = vmul.f32 %v1768, 1.442695
      %v1770 = vpow.pop %v1769
      %v1771 = vsel %vm702, %v1770, 0.0
      %1772 = vadd.xlane.f32.xlu0 %v1771
      %v1773 = vpop.xlane.xlu0 %1772
      %v1774 = vrcp.pop %v1773
      %v1775 = vmul.f32 %v1770, %v1774
      %v1776 = vpack.c.bf16 %v1775, %v1775
      %1777 = vrot.lane.b32.xlu0 %v1383, 32
      %v1778 = vpop.permute.xlu0 %1777
      %v1780 = vsel %vm702, %v1776, 0
      %v1783 = vsel %vm718, %v1778, 0
      %1785 = vmatprep.subr.bf16.mxu0 0
      %1786 = vmatpush1.bf16.msra.mxu0 0
      %1787 = vmatprep.subr.bf16.mxu0 0
      %1788 = vmatpush1.bf16.msra.mxu0 0
      %1789 = vmatprep.subr.bf16.mxu0 0
      %1790 = vmatpush1.bf16.msra.mxu0 0
      %1791 = vmatprep.subr.bf16.mxu0 0
      %1792 = vmatpush1.bf16.msra.mxu0 0
      %1793 = vmatprep.subr.bf16.mxu0 0
      %1794 = vmatpush1.bf16.msra.mxu0 0
      %1795 = vmatprep.subr.bf16.mxu0 0
      %1796 = vmatpush1.bf16.msra.mxu0 0
      %1797 = vmatprep.subr.bf16.mxu0 0
      %1798 = vmatpush1.bf16.msra.mxu0 0
      %1799 = vmatprep.subr.bf16.mxu0 0
      %1800 = vmatpush1.bf16.msra.mxu0 %v1783
      %1801 = vmatprep.subr.bf16.mxu0 0
      %1802 = vmatpush2.bf16.msra.mxu0 0
      %1803 = vmatprep.subr.bf16.mxu0 0
      %1804 = vmatpush2.bf16.msra.mxu0 0
      %1805 = vmatprep.subr.bf16.mxu0 0
      %1806 = vmatpush2.bf16.msra.mxu0 0
      %1807 = vmatprep.subr.bf16.mxu0 0
      %1808 = vmatpush2.bf16.msra.mxu0 0
      %1809 = vmatprep.subr.bf16.mxu0 0
      %1810 = vmatpush2.bf16.msra.mxu0 0
      %1811 = vmatprep.subr.bf16.mxu0 0
      %1812 = vmatpush2.bf16.msra.mxu0 0
      %1813 = vmatprep.subr.bf16.mxu0 0
      %1814 = vmatpush2.bf16.msra.mxu0 0
      %1815 = vmatprep.subr.bf16.mxu0 0
      %1816 = vmatpush2.bf16.msra.mxu0 0
      %1817 = vmatprep.mubr.bf16.mxu0 0
      %1818 = vmatmul.mubr.bf16.gmra.mxu0 %v1780
      %v1819 = vpop.f32.mrf.mxu0
      %v1820 = vadd.f32 0.0, %v1819
      %v1821 = vpop.f32.mrf.mxu0
      %v1822 = vpop.f32.mrf.mxu0
      %v1823 = vpop.f32.mrf.mxu0
      %1824 = vdwg.mxu0
      %1826 = vrot.lane.b32.xlu0 %v1598, 32
      %v1827 = vpop.permute.xlu0 %1826
      %1830 = vrot.lane.b32.xlu0 %v1709, 64
      %v1831 = vpop.permute.xlu0 %1830
      %1834 = vrot.lane.b32.xlu0 %v1820, 96
      %v1835 = vpop.permute.xlu0 %1834
      %v1837 = vsel %vm653, %v1484, %v1827
      %v1838 = vsel %vm1114, %v1837, %v1831
      %v1839 = vsel %vm1116, %v1838, %v1835
      %v1840 = vpack.c.bf16 %v1839, %v1839
      %v1841 = vpack.c.bf16 %v1366, %v1365
      %v1842 = vpack.c.bf16 %v1368, %v1367
      %v1843 = vpack.c.bf16 %v1370, %v1369
      %v1844 = vpack.c.bf16 %v1372, %v1371
      %v1845 = vpack.c.bf16 %v1374, %v1373
      %v1846 = vpack.c.bf16 %v1376, %v1375
      %v1847 = vpack.c.bf16 %v1378, %v1377
      %v1848 = vpack.c.bf16 %v1380, %v1379
      %v1849 = vlaneseq
      %v1850 = vshrl.u32 %v1849, 7
      %v1851 = vsub.s32 2, %v1850
      %v1852 = vrot.slane %v456, %v1851
      %1853 = vmatprep.subr.bf16.mxu0 0
      %1854 = vmatpush1.bf16.msra.mxu0 %v1848
      %1855 = vmatprep.subr.bf16.mxu0 0
      %1856 = vmatpush1.bf16.msra.mxu0 %v1847
      %1857 = vmatprep.subr.bf16.mxu0 0
      %1858 = vmatpush1.bf16.msra.mxu0 %v1846
      %1859 = vmatprep.subr.bf16.mxu0 0
      %1860 = vmatpush1.bf16.msra.mxu0 %v1845
      %1861 = vmatprep.subr.bf16.mxu0 0
      %1862 = vmatpush1.bf16.msra.mxu0 %v1844
      %1863 = vmatprep.subr.bf16.mxu0 0
      %1864 = vmatpush1.bf16.msra.mxu0 %v1843
      %1865 = vmatprep.subr.bf16.mxu0 0
      %1866 = vmatpush1.bf16.msra.mxu0 %v1842
      %1867 = vmatprep.subr.bf16.mxu0 0
      %1868 = vmatpush1.bf16.msra.mxu0 %v1841
      %1869 = vmatprep.subr.bf16.mxu0 0
      %1870 = vmatpush2.bf16.msra.mxu0 0
      %1871 = vmatprep.subr.bf16.mxu0 0
      %1872 = vmatpush2.bf16.msra.mxu0 0
      %1873 = vmatprep.subr.bf16.mxu0 0
      %1874 = vmatpush2.bf16.msra.mxu0 0
      %1875 = vmatprep.subr.bf16.mxu0 0
      %1876 = vmatpush2.bf16.msra.mxu0 0
      %1877 = vmatprep.subr.bf16.mxu0 0
      %1878 = vmatpush2.bf16.msra.mxu0 0
      %1879 = vmatprep.subr.bf16.mxu0 0
      %1880 = vmatpush2.bf16.msra.mxu0 0
      %1881 = vmatprep.subr.bf16.mxu0 0
      %1882 = vmatpush2.bf16.msra.mxu0 0
      %1883 = vmatprep.subr.bf16.mxu0 0
      %1884 = vmatpush2.bf16.msra.mxu0 0
      %1885 = vmatprep.mubr.bf16.mxu0 0
      %1886 = vmatmul.mubr.bf16.gmra.mxu0 %v1840
      %v1887 = vpop.f32.mrf.mxu0
      %v1888 = vadd.f32 %v1852, %v1887
      %v1889 = vpop.f32.mrf.mxu0
      %v1890 = vpop.f32.mrf.mxu0
      %v1891 = vpop.f32.mrf.mxu0
      %1892 = vdwg.mxu0
      %v1893 = vadd.f32 %v1193, %v1888
      %1894 = vadd.xlane.f32.xlu0 %v1893
      %v1895 = vpop.xlane.xlu0 %1894
      %v1896 = vmul.f32 %v1895, %v1174
      %v1897 = vsub.f32 %v1893, %v1896
      %v1898 = vmul.f32 %v1897, %v1897
      %1899 = vadd.xlane.f32.xlu0 %v1898
      %v1900 = vpop.xlane.xlu0 %1899
      %v1901 = vmul.f32 %v1900, %v1174
      %v1902 = vadd.f32 %v1901, 1e-05
      %v1903 = vrsqrt.pop %v1902
      %v1904 = vmul.f32 %v1897, %v1903
      %v1905 = vlaneseq
      %v1906 = vshrl.u32 %v1905, 7
      %v1907 = vsub.s32 6, %v1906
      %v1908 = vrot.slane %v456, %v1907
      %v1909 = vmul.f32 %v1904, %v1908
      %v1910 = vlaneseq
      %v1911 = vshrl.u32 %v1910, 7
      %v1912 = vsub.s32 7, %v1911
      %v1913 = vrot.slane %v456, %v1912
      %v1914 = vadd.f32 %v1909, %v1913
      %v1915 = vld [vmem:[%s9] sm:$0xff]
      %v1916 = vld [vmem:[%s9 + $0x8] sm:$0xff]
      %v1917 = vld [vmem:[%s9 + $0x10] sm:$0xff]
      %v1918 = vld [vmem:[%s9 + $0x18] sm:$0xff]
      %v1919 = vld [vmem:[%s9 + $0x20] sm:$0xff]
      %v1920 = vld [vmem:[%s9 + $0x28] sm:$0xff]
      %v1921 = vld [vmem:[%s9 + $0x30] sm:$0xff]
      %v1922 = vld [vmem:[%s9 + $0x38] sm:$0xff]
      %v1923 = vld [vmem:[%s9 + $0x40] sm:$0xff]
      %v1924 = vld [vmem:[%s9 + $0x48] sm:$0xff]
      %v1925 = vld [vmem:[%s9 + $0x50] sm:$0xff]
      %v1926 = vld [vmem:[%s9 + $0x58] sm:$0xff]
      %v1927 = vld [vmem:[%s9 + $0x60] sm:$0xff]
      %v1928 = vld [vmem:[%s9 + $0x68] sm:$0xff]
      %v1929 = vld [vmem:[%s9 + $0x70] sm:$0xff]
      %v1930 = vld [vmem:[%s9 + $0x78] sm:$0xff]
      %v1931 = vld [vmem:[%s10] sm:$0x1]
      %v1932 = vld [vmem:[%s11] sm:$0xff]
      %v1933 = vld [vmem:[%s11 + $0x8] sm:$0xff]
      %v1934 = vld [vmem:[%s11 + $0x10] sm:$0xff]
      %v1935 = vld [vmem:[%s11 + $0x18] sm:$0xff]
      %v1936 = vld [vmem:[%s11 + $0x20] sm:$0xff]
      %v1937 = vld [vmem:[%s11 + $0x28] sm:$0xff]
      %v1938 = vld [vmem:[%s11 + $0x30] sm:$0xff]
      %v1939 = vld [vmem:[%s11 + $0x38] sm:$0xff]
      %v1940 = vld [vmem:[%s11 + $0x40] sm:$0xff]
      %v1941 = vld [vmem:[%s11 + $0x48] sm:$0xff]
      %v1942 = vld [vmem:[%s11 + $0x50] sm:$0xff]
      %v1943 = vld [vmem:[%s11 + $0x58] sm:$0xff]
      %v1944 = vld [vmem:[%s11 + $0x60] sm:$0xff]
      %v1945 = vld [vmem:[%s11 + $0x68] sm:$0xff]
      %v1946 = vld [vmem:[%s11 + $0x70] sm:$0xff]
      %v1947 = vld [vmem:[%s11 + $0x78] sm:$0xff]
      %v1948 = vpack.c.bf16 %v1914, %v1914
      %v1949 = vpack.c.bf16 %v1916, %v1915
      %v1950 = vpack.c.bf16 %v1918, %v1917
      %v1951 = vpack.c.bf16 %v1920, %v1919
      %v1952 = vpack.c.bf16 %v1922, %v1921
      %v1953 = vpack.c.bf16 %v1924, %v1923
      %v1954 = vpack.c.bf16 %v1926, %v1925
      %v1955 = vpack.c.bf16 %v1928, %v1927
      %v1956 = vpack.c.bf16 %v1930, %v1929
      %v1958 = vlaneseq
      %v1959 = vshrl.u32 %v1958, 7
      %v1960 = vsub.s32 0, %v1959
      %v1961 = vrot.slane %v1931, %v1960
      %1963 = vmatprep.subr.bf16.mxu0 0
      %1964 = vmatpush1.bf16.msra.mxu0 %v1956
      %1965 = vmatprep.subr.bf16.mxu0 0
      %1966 = vmatpush1.bf16.msra.mxu0 %v1955
      %1967 = vmatprep.subr.bf16.mxu0 0
      %1968 = vmatpush1.bf16.msra.mxu0 %v1954
      %1969 = vmatprep.subr.bf16.mxu0 0
      %1970 = vmatpush1.bf16.msra.mxu0 %v1953
      %1971 = vmatprep.subr.bf16.mxu0 0
      %1972 = vmatpush1.bf16.msra.mxu0 %v1952
      %1973 = vmatprep.subr.bf16.mxu0 0
      %1974 = vmatpush1.bf16.msra.mxu0 %v1951
      %1975 = vmatprep.subr.bf16.mxu0 0
      %1976 = vmatpush1.bf16.msra.mxu0 %v1950
      %1977 = vmatprep.subr.bf16.mxu0 0
      %1978 = vmatpush1.bf16.msra.mxu0 %v1949
      %1979 = vmatprep.subr.bf16.mxu0 0
      %1980 = vmatpush2.bf16.msra.mxu0 0
      %1981 = vmatprep.subr.bf16.mxu0 0
      %1982 = vmatpush2.bf16.msra.mxu0 0
      %1983 = vmatprep.subr.bf16.mxu0 0
      %1984 = vmatpush2.bf16.msra.mxu0 0
      %1985 = vmatprep.subr.bf16.mxu0 0
      %1986 = vmatpush2.bf16.msra.mxu0 0
      %1987 = vmatprep.subr.bf16.mxu0 0
      %1988 = vmatpush2.bf16.msra.mxu0 0
      %1989 = vmatprep.subr.bf16.mxu0 0
      %1990 = vmatpush2.bf16.msra.mxu0 0
      %1991 = vmatprep.subr.bf16.mxu0 0
      %1992 = vmatpush2.bf16.msra.mxu0 0
      %1993 = vmatprep.subr.bf16.mxu0 0
      %1994 = vmatpush2.bf16.msra.mxu0 0
      %1995 = vmatprep.mubr.bf16.mxu0 0
      %1996 = vmatmul.mubr.bf16.gmra.mxu0 %v1948
      %v1997 = vpop.f32.mrf.mxu0
      %v1998 = vadd.f32 %v1961, %v1997
      %v1999 = vpop.f32.mrf.mxu0
      %v2000 = vpop.f32.mrf.mxu0
      %v2001 = vpop.f32.mrf.mxu0
      %2002 = vdwg.mxu0
      %v2003 = vmax.f32 %v1998, 0.0
      %v2004 = vpack.c.bf16 %v2003, %v2003
      %v2005 = vpack.c.bf16 %v1933, %v1932
      %v2006 = vpack.c.bf16 %v1935, %v1934
      %v2007 = vpack.c.bf16 %v1937, %v1936
      %v2008 = vpack.c.bf16 %v1939, %v1938
      %v2009 = vpack.c.bf16 %v1941, %v1940
      %v2010 = vpack.c.bf16 %v1943, %v1942
      %v2011 = vpack.c.bf16 %v1945, %v1944
      %v2012 = vpack.c.bf16 %v1947, %v1946
      %v2013 = vlaneseq
      %v2014 = vshrl.u32 %v2013, 7
      %v2015 = vsub.s32 3, %v2014
      %v2016 = vrot.slane %v456, %v2015
      %2017 = vmatprep.subr.bf16.mxu0 0
      %2018 = vmatpush1.bf16.msra.mxu0 %v2012
      %2019 = vmatprep.subr.bf16.mxu0 0
      %2020 = vmatpush1.bf16.msra.mxu0 %v2011
      %2021 = vmatprep.subr.bf16.mxu0 0
      %2022 = vmatpush1.bf16.msra.mxu0 %v2010
      %2023 = vmatprep.subr.bf16.mxu0 0
      %2024 = vmatpush1.bf16.msra.mxu0 %v2009
      %2025 = vmatprep.subr.bf16.mxu0 0
      %2026 = vmatpush1.bf16.msra.mxu0 %v2008
      %2027 = vmatprep.subr.bf16.mxu0 0
      %2028 = vmatpush1.bf16.msra.mxu0 %v2007
      %2029 = vmatprep.subr.bf16.mxu0 0
      %2030 = vmatpush1.bf16.msra.mxu0 %v2006
      %2031 = vmatprep.subr.bf16.mxu0 0
      %2032 = vmatpush1.bf16.msra.mxu0 %v2005
      %2033 = vmatprep.subr.bf16.mxu0 0
      %2034 = vmatpush2.bf16.msra.mxu0 0
      %2035 = vmatprep.subr.bf16.mxu0 0
      %2036 = vmatpush2.bf16.msra.mxu0 0
      %2037 = vmatprep.subr.bf16.mxu0 0
      %2038 = vmatpush2.bf16.msra.mxu0 0
      %2039 = vmatprep.subr.bf16.mxu0 0
      %2040 = vmatpush2.bf16.msra.mxu0 0
      %2041 = vmatprep.subr.bf16.mxu0 0
      %2042 = vmatpush2.bf16.msra.mxu0 0
      %2043 = vmatprep.subr.bf16.mxu0 0
      %2044 = vmatpush2.bf16.msra.mxu0 0
      %2045 = vmatprep.subr.bf16.mxu0 0
      %2046 = vmatpush2.bf16.msra.mxu0 0
      %2047 = vmatprep.subr.bf16.mxu0 0
      %2048 = vmatpush2.bf16.msra.mxu0 0
      %2049 = vmatprep.mubr.bf16.mxu0 0
      %2050 = vmatmul.mubr.bf16.gmra.mxu0 %v2004
      %v2051 = vpop.f32.mrf.mxu0
      %v2052 = vadd.f32 %v2016, %v2051
      %v2053 = vpop.f32.mrf.mxu0
      %v2054 = vpop.f32.mrf.mxu0
      %v2055 = vpop.f32.mrf.mxu0
      %2056 = vdwg.mxu0
      %v2057 = vadd.f32 %v1914, %v2052
      %2058 = vadd.xlane.f32.xlu0 %v2057
      %v2059 = vpop.xlane.xlu0 %2058
      %v2060 = vmul.f32 %v2059, %v1174
      %v2061 = vsub.f32 %v2057, %v2060
      %v2062 = vmul.f32 %v2061, %v2061
      %2063 = vadd.xlane.f32.xlu0 %v2062
      %v2064 = vpop.xlane.xlu0 %2063
      %v2065 = vmul.f32 %v2064, %v1174
      %v2066 = vadd.f32 %v2065, 1e-05
      %v2067 = vrsqrt.pop %v2066
      %v2068 = vmul.f32 %v2061, %v2067
      %v2069 = vlaneseq
      %v2070 = vshrl.u32 %v2069, 7
      %v2071 = vsub.s32 0, %v2070
      %v2072 = vrot.slane %v457, %v2071
      %v2073 = vmul.f32 %v2068, %v2072
      %v2074 = vlaneseq
      %v2075 = vshrl.u32 %v2074, 7
      %v2076 = vsub.s32 1, %v2075
      %v2077 = vrot.slane %v457, %v2076
      %v2078 = vadd.f32 %v2073, %v2077
      %2079 = vst [vmem:[%s452] sm:$0xff] %v2078
      %p2080 = scmp.lt.s32.totalorder %s24, 1
      %s2081 = scalar_select %p2080, %s24, 1
      %s2082 = smul.addr %s2081, 8
      %s2083 = scalar_lea.vmem %s13, %s2082
      // Predicated region
      $region73: #{transformer_forward.8} parent=71 // pred_check
        %p2084 = pneg %p325
      $region74: #{transformer_forward.8} parent=71 // pred_check_branch
        %2086 = sbr.rel (%p2084) target = $region76
      $region75: #{transformer_forward.8} parent=71 // pred_region
        _
      $region76: #{transformer_forward.8} parent=71 // pred_fallthru
        _
    $region72: #{transformer_forward.8} parent=5 // pred_fallthru
      _
    %p2087 = scmp.le.s32.totalorder 2, %s19
    // Predicated region
    $region77: #{transformer_forward.8} parent=5 // pred_check
      %p2088 = pneg %p2087
    $region78: #{transformer_forward.8} parent=5 // pred_check_branch
      %2090 = sbr.rel (%p2088) target = $region80
    $region79: #{transformer_forward.8} parent=5 // pred_region
      %s2091 = ssub.s32 %s19, 2
      // Predicated region
      $region81: #{transformer_forward.8} parent=79 // pred_check
        %p2092 = pneg %p331
      $region82: #{transformer_forward.8} parent=79 // pred_check_branch
        %2094 = sbr.rel (%p2092) target = $region84
      $region83: #{transformer_forward.8} parent=79 // pred_region
        %p2095 = scmp.lt.s32.totalorder %s25, 1
        %s2096 = scalar_select %p2095, %s25, 1
        %s2097 = smul.addr %s2096, 8
        %s2098 = scalar_lea.vmem %s13, %s2097
      $region84: #{transformer_forward.8} parent=79 // pred_fallthru
        _
    $region80: #{transformer_forward.8} parent=5 // pred_fallthru
      _
  $region6: #{transformer_forward.8} parent=0 // loop_footer
    %s23 = sadd.s32 1, %s19
  $region7: #{transformer_forward.8} parent=0 // loop_footer_branch
    %18 = sbr.rel target = $region3
  $region8: #{transformer_forward.8} parent=0 // loop_exit
    _

// kernel: transformer_forward.9
$region0: #{transformer_forward.9}
  #allocation0 [shape = 'u32[]', space=smem, size = 0x4, offset = 0x4, fixed_abs, tag = 'smem constant byte address 0x4 - core index']
  #allocation1 [shape = 'u32[144,128]{1,0:T(1,128)}', space=vmem, size = 0x12000, scoped, tag = 'internal scratch']
  %s0 = inlined_call_operand.vmem [shape: f32[16,128], index: 0, kind: input, shape index: {}]
  %s1 = inlined_call_operand.vmem [shape: f32[2,128], index: 1, kind: input, shape index: {}]
  %s2 = inlined_call_operand.vmem [shape: f32[128,128], index: 2, kind: input, shape index: {}]
  %s3 = inlined_call_operand.vmem [shape: f32[1,128], index: 3, kind: input, shape index: {}]
  %s4 = inlined_call_operand.hbm [shape: f32[16,128], index: 4, kind: output, shape index: {}]
  %s5 = sld [smem:[#allocation0]]
  $region26: #{transformer_forward.9} parent=0
    _
  %s7 = ssub.s32 1, %s5
  %s8 = scalar_select 0, %s7, %s5
  $region1: #{transformer_forward.9} parent=0
    #allocation2 [shape = 'u8[8192]{0}', space=vmem, size = 0x2000, scoped, tag = 'output window, operand 0, single buffered']
    #allocation3 [shape = 's32[1]{0}', space=sflag, size = 0x4, scoped, tag = 'scoped memory for transformer_forward.9']
    %9 = vsyncpa [#allocation3], 0
    // Predicated region
    $region2: #{transformer_forward.9} parent=1 // pred_check
      _
    $region3: #{transformer_forward.9} parent=1 // pred_check_branch
      %11 = sbr.rel (0) target = $region5
    $region4: #{transformer_forward.9} parent=1 // pred_region
      _
    $region5: #{transformer_forward.9} parent=1 // pred_fallthru
      _
    // Predicated region
    $region6: #{transformer_forward.9} parent=1 // pred_check
      _
    $region7: #{transformer_forward.9} parent=1 // pred_check_branch
      %13 = sbr.rel (0) target = $region9
    $region8: #{transformer_forward.9} parent=1 // pred_region
      _
    $region9: #{transformer_forward.9} parent=1 // pred_fallthru
      _
    // Predicated region
    $region10: #{transformer_forward.9} parent=1 // pred_check
      _
    $region11: #{transformer_forward.9} parent=1 // pred_check_branch
      %15 = sbr.rel (0) target = $region13
    $region12: #{transformer_forward.9} parent=1 // pred_region
      _
    $region13: #{transformer_forward.9} parent=1 // pred_fallthru
      _
    // Predicated region
    $region14: #{transformer_forward.9} parent=1 // pred_check
      _
    $region15: #{transformer_forward.9} parent=1 // pred_check_branch
      %17 = sbr.rel (0) target = $region17
    $region16: #{transformer_forward.9} parent=1 // pred_region
      _
    $region17: #{transformer_forward.9} parent=1 // pred_fallthru
      _
    %v19 = vld [vmem:[%s1] sm:$0x3]
    %v20 = vld [vmem:[%s0] sm:$0xff]
    %v21 = vld [vmem:[%s0 + $0x8] sm:$0xff]
    %22 = vadd.xlane.f32.xlu0 %v20
    %v23 = vpop.xlane.xlu0 %22
    %24 = vadd.xlane.f32.xlu0 %v21
    %v25 = vpop.xlane.xlu0 %24
    %v26 = vrcp.pop 128.0
    %v27 = vmul.f32 %v23, %v26
    %v28 = vmul.f32 %v25, %v26
    %v29 = vsub.f32 %v20, %v27
    %v30 = vsub.f32 %v21, %v28
    %v31 = vmul.f32 %v29, %v29
    %v32 = vmul.f32 %v30, %v30
    %33 = vadd.xlane.f32.xlu0 %v31
    %v34 = vpop.xlane.xlu0 %33
    %35 = vadd.xlane.f32.xlu0 %v32
    %v36 = vpop.xlane.xlu0 %35
    %v37 = vmul.f32 %v34, %v26
    %v38 = vmul.f32 %v36, %v26
    %v39 = vadd.f32 %v37, 1e-05
    %v40 = vadd.f32 %v38, 1e-05
    %v41 = vrsqrt.pop %v39
    %v42 = vrsqrt.pop %v40
    %v43 = vmul.f32 %v29, %v41
    %v44 = vmul.f32 %v30, %v42
    %v45 = vlaneseq
    %v46 = vshrl.u32 %v45, 7
    %v47 = vsub.s32 0, %v46
    %v48 = vrot.slane %v19, %v47
    %v49 = vmul.f32 %v43, %v48
    %v50 = vmul.f32 %v44, %v48
    %v51 = vlaneseq
    %v52 = vshrl.u32 %v51, 7
    %v53 = vsub.s32 1, %v52
    %v54 = vrot.slane %v19, %v53
    %v55 = vadd.f32 %v49, %v54
    %v56 = vadd.f32 %v50, %v54
    %v57 = vpack.c.bf16 %v56, %v55
    %v58 = vld [vmem:[%s2] sm:$0xff]
    %v59 = vld [vmem:[%s2 + $0x8] sm:$0xff]
    %v60 = vld [vmem:[%s2 + $0x10] sm:$0xff]
    %v61 = vld [vmem:[%s2 + $0x18] sm:$0xff]
    %v62 = vld [vmem:[%s2 + $0x20] sm:$0xff]
    %v63 = vld [vmem:[%s2 + $0x28] sm:$0xff]
    %v64 = vld [vmem:[%s2 + $0x30] sm:$0xff]
    %v65 = vld [vmem:[%s2 + $0x38] sm:$0xff]
    %v66 = vld [vmem:[%s2 + $0x40] sm:$0xff]
    %v67 = vld [vmem:[%s2 + $0x48] sm:$0xff]
    %v68 = vld [vmem:[%s2 + $0x50] sm:$0xff]
    %v69 = vld [vmem:[%s2 + $0x58] sm:$0xff]
    %v70 = vld [vmem:[%s2 + $0x60] sm:$0xff]
    %v71 = vld [vmem:[%s2 + $0x68] sm:$0xff]
    %v72 = vld [vmem:[%s2 + $0x70] sm:$0xff]
    %v73 = vld [vmem:[%s2 + $0x78] sm:$0xff]
    %v74 = vpack.c.bf16 %v59, %v58
    %v75 = vpack.c.bf16 %v61, %v60
    %v76 = vpack.c.bf16 %v63, %v62
    %v77 = vpack.c.bf16 %v65, %v64
    %v78 = vpack.c.bf16 %v67, %v66
    %v79 = vpack.c.bf16 %v69, %v68
    %v80 = vpack.c.bf16 %v71, %v70
    %v81 = vpack.c.bf16 %v73, %v72
    %v82 = vld [vmem:[%s3] sm:$0x1]
    %v84 = vlaneseq
    %v85 = vshrl.u32 %v84, 7
    %v86 = vsub.s32 0, %v85
    %v87 = vrot.slane %v82, %v86
    %89 = vmatprep.subr.bf16.mxu0 0
    %90 = vmatpush1.bf16.msra.mxu0 %v81
    %91 = vmatprep.subr.bf16.mxu0 0
    %92 = vmatpush1.bf16.msra.mxu0 %v80
    %93 = vmatprep.subr.bf16.mxu0 0
    %94 = vmatpush1.bf16.msra.mxu0 %v79
    %95 = vmatprep.subr.bf16.mxu0 0
    %96 = vmatpush1.bf16.msra.mxu0 %v78
    %97 = vmatprep.subr.bf16.mxu0 0
    %98 = vmatpush1.bf16.msra.mxu0 %v77
    %99 = vmatprep.subr.bf16.mxu0 0
    %100 = vmatpush1.bf16.msra.mxu0 %v76
    %101 = vmatprep.subr.bf16.mxu0 0
    %102 = vmatpush1.bf16.msra.mxu0 %v75
    %103 = vmatprep.subr.bf16.mxu0 0
    %104 = vmatpush1.bf16.msra.mxu0 %v74
    %105 = vmatprep.subr.bf16.mxu0 0
    %106 = vmatpush2.bf16.msra.mxu0 0
    %107 = vmatprep.subr.bf16.mxu0 0
    %108 = vmatpush2.bf16.msra.mxu0 0
    %109 = vmatprep.subr.bf16.mxu0 0
    %110 = vmatpush2.bf16.msra.mxu0 0
    %111 = vmatprep.subr.bf16.mxu0 0
    %112 = vmatpush2.bf16.msra.mxu0 0
    %113 = vmatprep.subr.bf16.mxu0 0
    %114 = vmatpush2.bf16.msra.mxu0 0
    %115 = vmatprep.subr.bf16.mxu0 0
    %116 = vmatpush2.bf16.msra.mxu0 0
    %117 = vmatprep.subr.bf16.mxu0 0
    %118 = vmatpush2.bf16.msra.mxu0 0
    %119 = vmatprep.subr.bf16.mxu0 0
    %120 = vmatpush2.bf16.msra.mxu0 0
    %121 = vmatprep.mubr.bf16.mxu0 0
    %122 = vmatmul.mubr.bf16.gmra.mxu0 %v57
    %v123 = vpop.f32.mrf.mxu0
    %v124 = vadd.f32 %v87, %v123
    %v125 = vpop.f32.mrf.mxu0
    %v126 = vpop.f32.mrf.mxu0
    %v127 = vadd.f32 %v87, %v126
    %v128 = vpop.f32.mrf.mxu0
    %129 = vdwg.mxu0
    %130 = vmax.xlane.f32.xlu0 %v124
    %v131 = vpop.xlane.xlu0 %130
    %132 = vmax.xlane.f32.xlu0 %v127
    %v133 = vpop.xlane.xlu0 %132
    %v134 = vsub.f32 %v124, %v131
    %v135 = vsub.f32 %v127, %v133
    %v136 = vmul.f32 %v134, 1.442695
    %v137 = vpow.pop %v136
    %v138 = vmul.f32 %v135, 1.442695
    %v139 = vpow.pop %v138
    %140 = vadd.xlane.f32.xlu0 %v137
    %v141 = vpop.xlane.xlu0 %140
    %142 = vadd.xlane.f32.xlu0 %v139
    %v143 = vpop.xlane.xlu0 %142
    %v144 = vlog2.pop %v141
    %v145 = vmul.f32 %v144, 0.6931472
    %v146 = vlog2.pop %v143
    %v147 = vmul.f32 %v146, 0.6931472
    %v148 = vsub.f32 %v134, %v145
    %v149 = vsub.f32 %v135, %v147
    %150 = vst [vmem:[#allocation2] sm:$0xff] %v148
    %151 = vst [vmem:[#allocation2 + $0x8] sm:$0xff] %v149
    // Predicated region
    $region18: #{transformer_forward.9} parent=1 // pred_check
      _
    $region19: #{transformer_forward.9} parent=1 // pred_check_branch
      %153 = sbr.rel (0) target = $region21
    $region20: #{transformer_forward.9} parent=1 // pred_region
      %s155 = ssub.s32 256, 256
      %156 = vsyncadd [#allocation3], %s155
      %s157 = sshll.u32 [#allocation2], 4
      %s158 = int_to_ptr.vmem [resolvable:$true] %s157
      %163 = dma.vmem_to_hbm [thread:$0]  %s158, 256, %s4, [#allocation3], 128, 128, 8
    $region21: #{transformer_forward.9} parent=1 // pred_fallthru
      _
    // Predicated region
    $region22: #{transformer_forward.9} parent=1 // pred_check
      _
    $region23: #{transformer_forward.9} parent=1 // pred_check_branch
      %165 = sbr.rel (0) target = $region25
    $region24: #{transformer_forward.9} parent=1 // pred_region
      %166 = dma.done [#allocation3], 256
    $region25: #{transformer_forward.9} parent=1 // pred_fallthru
      _
    %167 = vsyncpa [#allocation3], 1

</llo_original>
